<compile_context>
chip_gen: v5e
topology: v5e:2x2
jax: 0.10.0
libtpu: 0.0.40
codegen_flags: <defaults>
</compile_context>

<pallas_src>
import functools
import random

import numpy as np
import jax
import jax.numpy as jnp
from jax.experimental import pallas as pl
from jax.experimental.pallas import tpu as pltpu

C = 64          # channels (in == out)
H = 56
W = 56
HW = H * W      # 3136
K = 3           # 1x3 conv taps


def _num_channel_blocks():
    """2-way output-channel split only on 2-TensorCore chips (v7x); else 1."""
    try:
        kind = jax.devices()[0].device_kind.lower()
    except Exception:
        return 1
    return 2 if ("v7" in kind or "7x" in kind) else 1


NUM_CHANNEL_BLOCKS = _num_channel_blocks()


def _kernel(x_ref, w2_ref, w1_ref, m_ref, y_ref, *, shift):
    # x_ref : (C, HW)      full input, H-major / W-minor on the lane axis
    # w2_ref: (K, CB, C)   w2[k, i, j] = W2[i, j, k]   (CB = this core's out-channel block)
    # w1_ref: (CB, 2)      columns already ordered for this shift sign
    # m_ref : (2, HW)      row 0: 0 where w==0, row 1: 0 where w==W-1 (else 1)
    # y_ref : (CB, HW)
    x = x_ref[...]

    # Center tap (k=1): initializes the accumulator directly (no zeros fill).
    acc = jnp.dot(w2_ref[1], x, preferred_element_type=jnp.float32)

    # k=0 tap needs x[., w-1]: roll the tap's matmul result right by one lane and
    # zero the w==0 columns (they would contain the wrapped previous-row edge).
    a0 = jnp.dot(w2_ref[0], x, preferred_element_type=jnp.float32)
    acc = acc + m_ref[0:1, :] * pltpu.roll(a0, 1, axis=1)

    # k=2 tap needs x[., w+1]: roll left by one lane and zero the w==W-1 columns.
    a2 = jnp.dot(w2_ref[2], x, preferred_element_type=jnp.float32)
    acc = acc + m_ref[1:2, :] * pltpu.roll(a2, HW - 1, axis=1)

    # Epilogue: circular roll along H == lane roll by shift*W on the flat H-major
    # axis (HW is a multiple of W).  Two independent rolls from `acc` (no serial
    # roll-of-roll), combined and written with one store.
    d1 = (shift * W) % HW
    d2 = (2 * shift * W) % HW
    r1 = pltpu.roll(acc, d1, axis=1)          # t4[i, (h - s)  % H, w]
    r2 = pltpu.roll(acc, d2, axis=1)          # t4[i, (h - 2s) % H, w]
    y_ref[...] = r1 * w1_ref[:, 0:1] + r2 * w1_ref[:, 1:2]


@functools.partial(jax.jit, static_argnames=("shift",))
def kernel_generated_0_forward(x, w1, w2, shift):
    """x: (1, C, H, W) f32; w1: (C, 2); w2: (C, C, 3); shift: +/-1 (python int)."""
    assert shift in (1, -1)
    xf = x.reshape(C, HW).astype(jnp.float32)                      # single read of x
    w2k = jnp.transpose(w2.astype(jnp.float32), (2, 0, 1))         # (K, C, C)
    w1f = w1.astype(jnp.float32)
    # Pair W1 columns with the (h-s) / (h-2s) rolls according to the shift sign.
    w1_pair = w1f if shift == 1 else w1f[:, ::-1]

    # Boundary masks for the zero-padded 1x3 conv (constant-folded under jit).
    col = jnp.arange(HW, dtype=jnp.int32) % W
    masks = jnp.stack([(col != 0), (col != W - 1)]).astype(jnp.float32)  # (2, HW)

    nb = NUM_CHANNEL_BLOCKS
    cb = C // nb

    flops = 2 * C * (K * C) * HW + 6 * C * HW
    bytes_accessed = 4 * (xf.size + w2k.size + w1_pair.size + masks.size + C * HW)

    y_flat = pl.pallas_call(
        functools.partial(_kernel, shift=int(shift)),
        out_shape=jax.ShapeDtypeStruct((C, HW), jnp.float32),
        grid=(nb,),
        in_specs=[
            pl.BlockSpec((C, HW), lambda i: (0, 0)),        # x: replicated across blocks
            pl.BlockSpec((K, cb, C), lambda i: (0, i, 0)),  # W2 taps: out-channel block
            pl.BlockSpec((cb, 2), lambda i: (i, 0)),        # W1 (column-paired)
            pl.BlockSpec((2, HW), lambda i: (0, 0)),        # boundary masks
        ],
        out_specs=pl.BlockSpec((cb, HW), lambda i: (i, 0)),
        compiler_params=pltpu.CompilerParams(
            dimension_semantics=("parallel",)),
        cost_estimate=pl.CostEstimate(
            flops=flops, transcendentals=0, bytes_accessed=bytes_accessed),
    )(xf, w2k, w1_pair, masks)
    return y_flat.reshape(1, C, H, W)


def reference_forward(x, w1, w2, shift):
    """Literal JAX translation of the PyTorch forward (for verification)."""
    t3 = x.reshape(1, 3584, 56, 1)
    t3p = jnp.pad(t3, ((0, 0), (0, 0), (1, 1), (0, 0)))
    # unfold kernel (3,1), padding (1,0): out[n, c*3+k, l] = pad[n, c, l+k, 0]
    cols = jnp.stack([t3p[:, :, k:k + 56, 0] for k in range(3)], axis=2)  # (1,3584,3,56)
    t3u = cols.reshape(1, 3584 * 3, 56)
    t3r = t3u.reshape(1, 64, 56, 3, 56)
    t4 = jnp.einsum('ljnkm,ijk->linm', t3r, w2)
    t5 = jnp.einsum('kiml,ij->kimjl', t4, w1)
    t6 = jnp.roll(t5, shift, axis=2)
    t6 = t6.reshape(1, 64, 112, 56)
    t6 = jnp.roll(t6, shift, axis=2)
    t6 = t6.reshape(1, 64, 56, 2, 56)
    return jnp.sum(t6, axis=3)


if __name__ == "__main__":
    # Deterministic "random" init (mirrors the module's __init__).
    random.seed(0)
    shift_direction = int((random.random() > 0.5) * 2 - 1)

    key = jax.random.PRNGKey(0)
    k1, k2, kx = jax.random.split(key, 3)
    w1 = jax.random.normal(k1, (64, 2), dtype=jnp.float32)       # weights[0]
    w2 = jax.random.normal(k2, (64, 64, 3), dtype=jnp.float32)   # weights[1]
    # Shapes are fixed by the module's hardcoded reshape to (1, 3584, 56, 1).
    x = jax.random.normal(kx, (1, 64, 56, 56), dtype=jnp.float32)

    # Verify both roll directions (the module picks one at init time).
    for s in (shift_direction, -shift_direction):
        y = jax.block_until_ready(kernel_generated_0_forward(x, w1, w2, shift=s))
        y_ref = jax.block_until_ready(reference_forward(x, w1, w2, s))
        np.testing.assert_allclose(np.asarray(y), np.asarray(y_ref),
                                   rtol=2e-3, atol=2e-2)

    print("KERNEL_OK")
</pallas_src>

<mosaic_0001>
module attributes {stable_mosaic.version = 11 : i64} {
  func.func @_kernel(%arg0: i32, %arg1: memref<64x3136xf32, #tpu.memory_space<vmem>>, %arg2: memref<3x64x64xf32, #tpu.memory_space<vmem>>, %arg3: memref<64x2xf32, #tpu.memory_space<vmem>>, %arg4: memref<2x3136xf32, #tpu.memory_space<vmem>>, %arg5: memref<64x3136xf32, #tpu.memory_space<vmem>>) attributes {dimension_semantics = [#tpu.dimension_semantics<parallel>], iteration_bounds = array<i64: 1>, scalar_prefetch = 0 : i64, scratch_operands = 0 : i64, tpu.core_type = #tpu.core_type<tc>, window_params = [{pipeline_mode = #tpu.pipeline_mode<synchronous>, transform_indices = @transform_0, window_bounds = array<i64: 64, 3136>}, {transform_indices = @transform_1, window_bounds = array<i64: 3, 64, 64>}, {transform_indices = @transform_2, window_bounds = array<i64: 64, 2>}, {pipeline_mode = #tpu.pipeline_mode<synchronous>, transform_indices = @transform_3, window_bounds = array<i64: 2, 3136>}, {transform_indices = @transform_4, window_bounds = array<i64: 64, 3136>}]} {
    %c0 = arith.constant 0 : index
    %c0_0 = arith.constant 0 : index
    %0 = vector.load %arg1[%c0, %c0_0] : memref<64x3136xf32, #tpu.memory_space<vmem>>, vector<64x3136xf32>
    %c1 = arith.constant 1 : index
    %c0_1 = arith.constant 0 : index
    %c0_2 = arith.constant 0 : index
    %1 = vector.load %arg2[%c1, %c0_1, %c0_2] : memref<3x64x64xf32, #tpu.memory_space<vmem>>, vector<1x64x64xf32>
    %2 = vector.shape_cast %1 : vector<1x64x64xf32> to vector<64x64xf32>
    %cst = arith.constant dense<0.000000e+00> : vector<64x3136xf32>
    %3 = tpu.matmul %2, %0, %cst {dimension_numbers = #tpu.dot_dimension_numbers<[1], [0], [0], [1], [0, 0, 1, 1], [], []>} : vector<64x64xf32>, vector<64x3136xf32>, vector<64x3136xf32> -> vector<64x3136xf32>
    %c0_3 = arith.constant 0 : index
    %c0_4 = arith.constant 0 : index
    %c0_5 = arith.constant 0 : index
    %4 = vector.load %arg2[%c0_3, %c0_4, %c0_5] : memref<3x64x64xf32, #tpu.memory_space<vmem>>, vector<1x64x64xf32>
    %5 = vector.shape_cast %4 : vector<1x64x64xf32> to vector<64x64xf32>
    %cst_6 = arith.constant dense<0.000000e+00> : vector<64x3136xf32>
    %6 = tpu.matmul %5, %0, %cst_6 {dimension_numbers = #tpu.dot_dimension_numbers<[1], [0], [0], [1], [0, 0, 1, 1], [], []>} : vector<64x64xf32>, vector<64x3136xf32>, vector<64x3136xf32> -> vector<64x3136xf32>
    %c0_7 = arith.constant 0 : index
    %c0_8 = arith.constant 0 : index
    %7 = vector.load %arg4[%c0_7, %c0_8] : memref<2x3136xf32, #tpu.memory_space<vmem>>, vector<1x3136xf32>
    %c1_i32 = arith.constant 1 : i32
    %8 = tpu.dynamic_rotate %6 by %c1_i32 dim 1 : vector<64x3136xf32>, i32 -> vector<64x3136xf32>
    %9 = vector.broadcast %7 : vector<1x3136xf32> to vector<64x3136xf32>
    %10 = arith.mulf %9, %8 : vector<64x3136xf32>
    %11 = arith.addf %3, %10 : vector<64x3136xf32>
    %c2 = arith.constant 2 : index
    %c0_9 = arith.constant 0 : index
    %c0_10 = arith.constant 0 : index
    %12 = vector.load %arg2[%c2, %c0_9, %c0_10] : memref<3x64x64xf32, #tpu.memory_space<vmem>>, vector<1x64x64xf32>
    %13 = vector.shape_cast %12 : vector<1x64x64xf32> to vector<64x64xf32>
    %cst_11 = arith.constant dense<0.000000e+00> : vector<64x3136xf32>
    %14 = tpu.matmul %13, %0, %cst_11 {dimension_numbers = #tpu.dot_dimension_numbers<[1], [0], [0], [1], [0, 0, 1, 1], [], []>} : vector<64x64xf32>, vector<64x3136xf32>, vector<64x3136xf32> -> vector<64x3136xf32>
    %c1_12 = arith.constant 1 : index
    %c0_13 = arith.constant 0 : index
    %15 = vector.load %arg4[%c1_12, %c0_13] : memref<2x3136xf32, #tpu.memory_space<vmem>>, vector<1x3136xf32>
    %c3135_i32 = arith.constant 3135 : i32
    %16 = tpu.dynamic_rotate %14 by %c3135_i32 dim 1 : vector<64x3136xf32>, i32 -> vector<64x3136xf32>
    %17 = vector.broadcast %15 : vector<1x3136xf32> to vector<64x3136xf32>
    %18 = arith.mulf %17, %16 : vector<64x3136xf32>
    %19 = arith.addf %11, %18 : vector<64x3136xf32>
    %c56_i32 = arith.constant 56 : i32
    %20 = tpu.dynamic_rotate %19 by %c56_i32 dim 1 : vector<64x3136xf32>, i32 -> vector<64x3136xf32>
    %c112_i32 = arith.constant 112 : i32
    %21 = tpu.dynamic_rotate %19 by %c112_i32 dim 1 : vector<64x3136xf32>, i32 -> vector<64x3136xf32>
    %c0_14 = arith.constant 0 : index
    %c0_15 = arith.constant 0 : index
    %22 = vector.load %arg3[%c0_14, %c0_15] : memref<64x2xf32, #tpu.memory_space<vmem>>, vector<64x1xf32>
    %23 = vector.broadcast %22 : vector<64x1xf32> to vector<64x3136xf32>
    %24 = arith.mulf %20, %23 : vector<64x3136xf32>
    %c0_16 = arith.constant 0 : index
    %c1_17 = arith.constant 1 : index
    %25 = vector.load %arg3[%c0_16, %c1_17] : memref<64x2xf32, #tpu.memory_space<vmem>>, vector<64x1xf32>
    %26 = vector.broadcast %25 : vector<64x1xf32> to vector<64x3136xf32>
    %27 = arith.mulf %21, %26 : vector<64x3136xf32>
    %28 = arith.addf %24, %27 : vector<64x3136xf32>
    %c0_18 = arith.constant 0 : index
    %c0_19 = arith.constant 0 : index
    %29 = vector.load %arg5[%c0_18, %c0_19] : memref<64x3136xf32, #tpu.memory_space<vmem>>, vector<64x3136xf32>
    tpu.vector_store %arg5[%c0_18, %c0_19], %28 {strides = array<i32>} : memref<64x3136xf32, #tpu.memory_space<vmem>>, vector<64x3136xf32>,
    return
  }
  func.func @transform_0(%arg0: i32) -> (i32, i32) {
    %c0_i32 = arith.constant 0 : i32
    %c0_i32_0 = arith.constant 0 : i32
    %c0_i32_1 = arith.constant 0 : i32
    return %c0_i32, %c0_i32_0 : i32, i32
  }
  func.func @transform_1(%arg0: i32) -> (i32, i32, i32) {
    %c0_i32 = arith.constant 0 : i32
    %c0_i32_0 = arith.constant 0 : i32
    %c0_i32_1 = arith.constant 0 : i32
    return %c0_i32, %arg0, %c0_i32_0 : i32, i32, i32
  }
  func.func @transform_2(%arg0: i32) -> (i32, i32) {
    %c0_i32 = arith.constant 0 : i32
    %c0_i32_0 = arith.constant 0 : i32
    return %arg0, %c0_i32 : i32, i32
  }
  func.func @transform_3(%arg0: i32) -> (i32, i32) {
    %c0_i32 = arith.constant 0 : i32
    %c0_i32_0 = arith.constant 0 : i32
    %c0_i32_1 = arith.constant 0 : i32
    return %c0_i32, %c0_i32_0 : i32, i32
  }
  func.func @transform_4(%arg0: i32) -> (i32, i32) {
    %c0_i32 = arith.constant 0 : i32
    %c0_i32_0 = arith.constant 0 : i32
    return %arg0, %c0_i32 : i32, i32
  }
}

</mosaic_0001>

<llo_original>
// kernel: kernel_generated_0_forward.1
$region0: #{kernel_generated_0_forward.1}
  #allocation0 [shape = 'u32[]', space=smem, size = 0x4, offset = 0x4, fixed_abs, tag = 'smem constant byte address 0x4 - core index']
  #allocation1 [shape = 'u32[72,128]{1,0:T(1,128)}', space=vmem, size = 0x9000, scoped, tag = 'internal scratch']
  %s0 = inlined_call_operand.vmem [shape: f32[64,3136], index: 0, kind: input, shape index: {}]
  %s1 = inlined_call_operand.vmem [shape: f32[3,64,64], index: 1, kind: input, shape index: {}]
  %s2 = inlined_call_operand.vmem [shape: f32[64,2], index: 2, kind: input, shape index: {}]
  %s3 = inlined_call_operand.vmem [shape: f32[2,3136], index: 3, kind: input, shape index: {}]
  %s4 = inlined_call_operand.vmem [shape: f32[64,3136], index: 4, kind: output, shape index: {}]
  %s5 = sld [smem:[#allocation0]]
  $region26: #{kernel_generated_0_forward.1} parent=0
    _
  %s7 = ssub.s32 1, %s5
  %s8 = scalar_select 0, %s7, %s5
  // Predicated region
  $region2: #{kernel_generated_0_forward.1} parent=0 // pred_check
    _
  $region3: #{kernel_generated_0_forward.1} parent=0 // pred_check_branch
    %10 = sbr.rel (0) target = $region5
  $region4: #{kernel_generated_0_forward.1} parent=0 // pred_region
    _
  $region5: #{kernel_generated_0_forward.1} parent=0 // pred_fallthru
    _
  // Predicated region
  $region6: #{kernel_generated_0_forward.1} parent=0 // pred_check
    _
  $region7: #{kernel_generated_0_forward.1} parent=0 // pred_check_branch
    %12 = sbr.rel (0) target = $region9
  $region8: #{kernel_generated_0_forward.1} parent=0 // pred_region
    _
  $region9: #{kernel_generated_0_forward.1} parent=0 // pred_fallthru
    _
  // Predicated region
  $region10: #{kernel_generated_0_forward.1} parent=0 // pred_check
    _
  $region11: #{kernel_generated_0_forward.1} parent=0 // pred_check_branch
    %14 = sbr.rel (0) target = $region13
  $region12: #{kernel_generated_0_forward.1} parent=0 // pred_region
    _
  $region13: #{kernel_generated_0_forward.1} parent=0 // pred_fallthru
    _
  // Predicated region
  $region14: #{kernel_generated_0_forward.1} parent=0 // pred_check
    _
  $region15: #{kernel_generated_0_forward.1} parent=0 // pred_check_branch
    %16 = sbr.rel (0) target = $region17
  $region16: #{kernel_generated_0_forward.1} parent=0 // pred_region
    _
  $region17: #{kernel_generated_0_forward.1} parent=0 // pred_fallthru
    _
  %v17 = vld [vmem:[%s0] sm:$0xff]
  %v18 = vld [vmem:[%s0 + $0x8] sm:$0xff]
  %v19 = vld [vmem:[%s0 + $0x10] sm:$0xff]
  %v20 = vld [vmem:[%s0 + $0x18] sm:$0xff]
  %v21 = vld [vmem:[%s0 + $0x20] sm:$0xff]
  %v22 = vld [vmem:[%s0 + $0x28] sm:$0xff]
  %v23 = vld [vmem:[%s0 + $0x30] sm:$0xff]
  %v24 = vld [vmem:[%s0 + $0x38] sm:$0xff]
  %v25 = vld [vmem:[%s0 + $0x40] sm:$0xff]
  %v26 = vld [vmem:[%s0 + $0x48] sm:$0xff]
  %v27 = vld [vmem:[%s0 + $0x50] sm:$0xff]
  %v28 = vld [vmem:[%s0 + $0x58] sm:$0xff]
  %v29 = vld [vmem:[%s0 + $0x60] sm:$0xff]
  %v30 = vld [vmem:[%s0 + $0x68] sm:$0xff]
  %v31 = vld [vmem:[%s0 + $0x70] sm:$0xff]
  %v32 = vld [vmem:[%s0 + $0x78] sm:$0xff]
  %v33 = vld [vmem:[%s0 + $0x80] sm:$0xff]
  %v34 = vld [vmem:[%s0 + $0x88] sm:$0xff]
  %v35 = vld [vmem:[%s0 + $0x90] sm:$0xff]
  %v36 = vld [vmem:[%s0 + $0x98] sm:$0xff]
  %v37 = vld [vmem:[%s0 + $0xa0] sm:$0xff]
  %v38 = vld [vmem:[%s0 + $0xa8] sm:$0xff]
  %v39 = vld [vmem:[%s0 + $0xb0] sm:$0xff]
  %v40 = vld [vmem:[%s0 + $0xb8] sm:$0xff]
  %v41 = vld [vmem:[%s0 + $0xc0] sm:$0xff]
  %v42 = vld [vmem:[%s0 + $0xc8] sm:$0xff]
  %v43 = vld [vmem:[%s0 + $0xd0] sm:$0xff]
  %v44 = vld [vmem:[%s0 + $0xd8] sm:$0xff]
  %v45 = vld [vmem:[%s0 + $0xe0] sm:$0xff]
  %v46 = vld [vmem:[%s0 + $0xe8] sm:$0xff]
  %v47 = vld [vmem:[%s0 + $0xf0] sm:$0xff]
  %v48 = vld [vmem:[%s0 + $0xf8] sm:$0xff]
  %v49 = vld [vmem:[%s0 + $0x100] sm:$0xff]
  %v50 = vld [vmem:[%s0 + $0x108] sm:$0xff]
  %v51 = vld [vmem:[%s0 + $0x110] sm:$0xff]
  %v52 = vld [vmem:[%s0 + $0x118] sm:$0xff]
  %v53 = vld [vmem:[%s0 + $0x120] sm:$0xff]
  %v54 = vld [vmem:[%s0 + $0x128] sm:$0xff]
  %v55 = vld [vmem:[%s0 + $0x130] sm:$0xff]
  %v56 = vld [vmem:[%s0 + $0x138] sm:$0xff]
  %v57 = vld [vmem:[%s0 + $0x140] sm:$0xff]
  %v58 = vld [vmem:[%s0 + $0x148] sm:$0xff]
  %v59 = vld [vmem:[%s0 + $0x150] sm:$0xff]
  %v60 = vld [vmem:[%s0 + $0x158] sm:$0xff]
  %v61 = vld [vmem:[%s0 + $0x160] sm:$0xff]
  %v62 = vld [vmem:[%s0 + $0x168] sm:$0xff]
  %v63 = vld [vmem:[%s0 + $0x170] sm:$0xff]
  %v64 = vld [vmem:[%s0 + $0x178] sm:$0xff]
  %v65 = vld [vmem:[%s0 + $0x180] sm:$0xff]
  %v66 = vld [vmem:[%s0 + $0x188] sm:$0xff]
  %v67 = vld [vmem:[%s0 + $0x190] sm:$0xff]
  %v68 = vld [vmem:[%s0 + $0x198] sm:$0xff]
  %v69 = vld [vmem:[%s0 + $0x1a0] sm:$0xff]
  %v70 = vld [vmem:[%s0 + $0x1a8] sm:$0xff]
  %v71 = vld [vmem:[%s0 + $0x1b0] sm:$0xff]
  %v72 = vld [vmem:[%s0 + $0x1b8] sm:$0xff]
  %v73 = vld [vmem:[%s0 + $0x1c0] sm:$0xff]
  %v74 = vld [vmem:[%s0 + $0x1c8] sm:$0xff]
  %v75 = vld [vmem:[%s0 + $0x1d0] sm:$0xff]
  %v76 = vld [vmem:[%s0 + $0x1d8] sm:$0xff]
  %v77 = vld [vmem:[%s0 + $0x1e0] sm:$0xff]
  %v78 = vld [vmem:[%s0 + $0x1e8] sm:$0xff]
  %v79 = vld [vmem:[%s0 + $0x1f0] sm:$0xff]
  %v80 = vld [vmem:[%s0 + $0x1f8] sm:$0xff]
  %v81 = vld [vmem:[%s0 + $0x200] sm:$0xff]
  %v82 = vld [vmem:[%s0 + $0x208] sm:$0xff]
  %v83 = vld [vmem:[%s0 + $0x210] sm:$0xff]
  %v84 = vld [vmem:[%s0 + $0x218] sm:$0xff]
  %v85 = vld [vmem:[%s0 + $0x220] sm:$0xff]
  %v86 = vld [vmem:[%s0 + $0x228] sm:$0xff]
  %v87 = vld [vmem:[%s0 + $0x230] sm:$0xff]
  %v88 = vld [vmem:[%s0 + $0x238] sm:$0xff]
  %v89 = vld [vmem:[%s0 + $0x240] sm:$0xff]
  %v90 = vld [vmem:[%s0 + $0x248] sm:$0xff]
  %v91 = vld [vmem:[%s0 + $0x250] sm:$0xff]
  %v92 = vld [vmem:[%s0 + $0x258] sm:$0xff]
  %v93 = vld [vmem:[%s0 + $0x260] sm:$0xff]
  %v94 = vld [vmem:[%s0 + $0x268] sm:$0xff]
  %v95 = vld [vmem:[%s0 + $0x270] sm:$0xff]
  %v96 = vld [vmem:[%s0 + $0x278] sm:$0xff]
  %v97 = vld [vmem:[%s0 + $0x280] sm:$0xff]
  %v98 = vld [vmem:[%s0 + $0x288] sm:$0xff]
  %v99 = vld [vmem:[%s0 + $0x290] sm:$0xff]
  %v100 = vld [vmem:[%s0 + $0x298] sm:$0xff]
  %v101 = vld [vmem:[%s0 + $0x2a0] sm:$0xff]
  %v102 = vld [vmem:[%s0 + $0x2a8] sm:$0xff]
  %v103 = vld [vmem:[%s0 + $0x2b0] sm:$0xff]
  %v104 = vld [vmem:[%s0 + $0x2b8] sm:$0xff]
  %v105 = vld [vmem:[%s0 + $0x2c0] sm:$0xff]
  %v106 = vld [vmem:[%s0 + $0x2c8] sm:$0xff]
  %v107 = vld [vmem:[%s0 + $0x2d0] sm:$0xff]
  %v108 = vld [vmem:[%s0 + $0x2d8] sm:$0xff]
  %v109 = vld [vmem:[%s0 + $0x2e0] sm:$0xff]
  %v110 = vld [vmem:[%s0 + $0x2e8] sm:$0xff]
  %v111 = vld [vmem:[%s0 + $0x2f0] sm:$0xff]
  %v112 = vld [vmem:[%s0 + $0x2f8] sm:$0xff]
  %v113 = vld [vmem:[%s0 + $0x300] sm:$0xff]
  %v114 = vld [vmem:[%s0 + $0x308] sm:$0xff]
  %v115 = vld [vmem:[%s0 + $0x310] sm:$0xff]
  %v116 = vld [vmem:[%s0 + $0x318] sm:$0xff]
  %v117 = vld [vmem:[%s0 + $0x320] sm:$0xff]
  %v118 = vld [vmem:[%s0 + $0x328] sm:$0xff]
  %v119 = vld [vmem:[%s0 + $0x330] sm:$0xff]
  %v120 = vld [vmem:[%s0 + $0x338] sm:$0xff]
  %v121 = vld [vmem:[%s0 + $0x340] sm:$0xff]
  %v122 = vld [vmem:[%s0 + $0x348] sm:$0xff]
  %v123 = vld [vmem:[%s0 + $0x350] sm:$0xff]
  %v124 = vld [vmem:[%s0 + $0x358] sm:$0xff]
  %v125 = vld [vmem:[%s0 + $0x360] sm:$0xff]
  %v126 = vld [vmem:[%s0 + $0x368] sm:$0xff]
  %v127 = vld [vmem:[%s0 + $0x370] sm:$0xff]
  %v128 = vld [vmem:[%s0 + $0x378] sm:$0xff]
  %v129 = vld [vmem:[%s0 + $0x380] sm:$0xff]
  %v130 = vld [vmem:[%s0 + $0x388] sm:$0xff]
  %v131 = vld [vmem:[%s0 + $0x390] sm:$0xff]
  %v132 = vld [vmem:[%s0 + $0x398] sm:$0xff]
  %v133 = vld [vmem:[%s0 + $0x3a0] sm:$0xff]
  %v134 = vld [vmem:[%s0 + $0x3a8] sm:$0xff]
  %v135 = vld [vmem:[%s0 + $0x3b0] sm:$0xff]
  %v136 = vld [vmem:[%s0 + $0x3b8] sm:$0xff]
  %v137 = vld [vmem:[%s0 + $0x3c0] sm:$0xff]
  %v138 = vld [vmem:[%s0 + $0x3c8] sm:$0xff]
  %v139 = vld [vmem:[%s0 + $0x3d0] sm:$0xff]
  %v140 = vld [vmem:[%s0 + $0x3d8] sm:$0xff]
  %v141 = vld [vmem:[%s0 + $0x3e0] sm:$0xff]
  %v142 = vld [vmem:[%s0 + $0x3e8] sm:$0xff]
  %v143 = vld [vmem:[%s0 + $0x3f0] sm:$0xff]
  %v144 = vld [vmem:[%s0 + $0x3f8] sm:$0xff]
  %v145 = vld [vmem:[%s0 + $0x400] sm:$0xff]
  %v146 = vld [vmem:[%s0 + $0x408] sm:$0xff]
  %v147 = vld [vmem:[%s0 + $0x410] sm:$0xff]
  %v148 = vld [vmem:[%s0 + $0x418] sm:$0xff]
  %v149 = vld [vmem:[%s0 + $0x420] sm:$0xff]
  %v150 = vld [vmem:[%s0 + $0x428] sm:$0xff]
  %v151 = vld [vmem:[%s0 + $0x430] sm:$0xff]
  %v152 = vld [vmem:[%s0 + $0x438] sm:$0xff]
  %v153 = vld [vmem:[%s0 + $0x440] sm:$0xff]
  %v154 = vld [vmem:[%s0 + $0x448] sm:$0xff]
  %v155 = vld [vmem:[%s0 + $0x450] sm:$0xff]
  %v156 = vld [vmem:[%s0 + $0x458] sm:$0xff]
  %v157 = vld [vmem:[%s0 + $0x460] sm:$0xff]
  %v158 = vld [vmem:[%s0 + $0x468] sm:$0xff]
  %v159 = vld [vmem:[%s0 + $0x470] sm:$0xff]
  %v160 = vld [vmem:[%s0 + $0x478] sm:$0xff]
  %v161 = vld [vmem:[%s0 + $0x480] sm:$0xff]
  %v162 = vld [vmem:[%s0 + $0x488] sm:$0xff]
  %v163 = vld [vmem:[%s0 + $0x490] sm:$0xff]
  %v164 = vld [vmem:[%s0 + $0x498] sm:$0xff]
  %v165 = vld [vmem:[%s0 + $0x4a0] sm:$0xff]
  %v166 = vld [vmem:[%s0 + $0x4a8] sm:$0xff]
  %v167 = vld [vmem:[%s0 + $0x4b0] sm:$0xff]
  %v168 = vld [vmem:[%s0 + $0x4b8] sm:$0xff]
  %v169 = vld [vmem:[%s0 + $0x4c0] sm:$0xff]
  %v170 = vld [vmem:[%s0 + $0x4c8] sm:$0xff]
  %v171 = vld [vmem:[%s0 + $0x4d0] sm:$0xff]
  %v172 = vld [vmem:[%s0 + $0x4d8] sm:$0xff]
  %v173 = vld [vmem:[%s0 + $0x4e0] sm:$0xff]
  %v174 = vld [vmem:[%s0 + $0x4e8] sm:$0xff]
  %v175 = vld [vmem:[%s0 + $0x4f0] sm:$0xff]
  %v176 = vld [vmem:[%s0 + $0x4f8] sm:$0xff]
  %v177 = vld [vmem:[%s0 + $0x500] sm:$0xff]
  %v178 = vld [vmem:[%s0 + $0x508] sm:$0xff]
  %v179 = vld [vmem:[%s0 + $0x510] sm:$0xff]
  %v180 = vld [vmem:[%s0 + $0x518] sm:$0xff]
  %v181 = vld [vmem:[%s0 + $0x520] sm:$0xff]
  %v182 = vld [vmem:[%s0 + $0x528] sm:$0xff]
  %v183 = vld [vmem:[%s0 + $0x530] sm:$0xff]
  %v184 = vld [vmem:[%s0 + $0x538] sm:$0xff]
  %v185 = vld [vmem:[%s0 + $0x540] sm:$0xff]
  %v186 = vld [vmem:[%s0 + $0x548] sm:$0xff]
  %v187 = vld [vmem:[%s0 + $0x550] sm:$0xff]
  %v188 = vld [vmem:[%s0 + $0x558] sm:$0xff]
  %v189 = vld [vmem:[%s0 + $0x560] sm:$0xff]
  %v190 = vld [vmem:[%s0 + $0x568] sm:$0xff]
  %v191 = vld [vmem:[%s0 + $0x570] sm:$0xff]
  %v192 = vld [vmem:[%s0 + $0x578] sm:$0xff]
  %v193 = vld [vmem:[%s0 + $0x580] sm:$0xff]
  %v194 = vld [vmem:[%s0 + $0x588] sm:$0xff]
  %v195 = vld [vmem:[%s0 + $0x590] sm:$0xff]
  %v196 = vld [vmem:[%s0 + $0x598] sm:$0xff]
  %v197 = vld [vmem:[%s0 + $0x5a0] sm:$0xff]
  %v198 = vld [vmem:[%s0 + $0x5a8] sm:$0xff]
  %v199 = vld [vmem:[%s0 + $0x5b0] sm:$0xff]
  %v200 = vld [vmem:[%s0 + $0x5b8] sm:$0xff]
  %v201 = vld [vmem:[%s0 + $0x5c0] sm:$0xff]
  %v202 = vld [vmem:[%s0 + $0x5c8] sm:$0xff]
  %v203 = vld [vmem:[%s0 + $0x5d0] sm:$0xff]
  %v204 = vld [vmem:[%s0 + $0x5d8] sm:$0xff]
  %v205 = vld [vmem:[%s0 + $0x5e0] sm:$0xff]
  %v206 = vld [vmem:[%s0 + $0x5e8] sm:$0xff]
  %v207 = vld [vmem:[%s0 + $0x5f0] sm:$0xff]
  %v208 = vld [vmem:[%s0 + $0x5f8] sm:$0xff]
  %v209 = vld [vmem:[%s0 + $0x600] sm:$0xff]
  %v210 = vld [vmem:[%s0 + $0x608] sm:$0xff]
  %v211 = vld [vmem:[%s0 + $0x610] sm:$0xff]
  %v212 = vld [vmem:[%s0 + $0x618] sm:$0xff]
  %v213 = vld [vmem:[%s0 + $0x620] sm:$0xff]
  %v214 = vld [vmem:[%s0 + $0x628] sm:$0xff]
  %v215 = vld [vmem:[%s0 + $0x630] sm:$0xff]
  %v216 = vld [vmem:[%s0 + $0x638] sm:$0xff]
  %s217 = scalar_lea.vmem %s1, 64
  %v218 = vld [vmem:[%s217] sm:$0xff]
  %v219 = vld [vmem:[%s217 + $0x8] sm:$0xff]
  %v220 = vld [vmem:[%s217 + $0x10] sm:$0xff]
  %v221 = vld [vmem:[%s217 + $0x18] sm:$0xff]
  %v222 = vld [vmem:[%s217 + $0x20] sm:$0xff]
  %v223 = vld [vmem:[%s217 + $0x28] sm:$0xff]
  %v224 = vld [vmem:[%s217 + $0x30] sm:$0xff]
  %v225 = vld [vmem:[%s217 + $0x38] sm:$0xff]
  %v226 = vld [vmem:[%s1] sm:$0xff]
  %v227 = vld [vmem:[%s1 + $0x8] sm:$0xff]
  %v228 = vld [vmem:[%s1 + $0x10] sm:$0xff]
  %v229 = vld [vmem:[%s1 + $0x18] sm:$0xff]
  %v230 = vld [vmem:[%s1 + $0x20] sm:$0xff]
  %v231 = vld [vmem:[%s1 + $0x28] sm:$0xff]
  %v232 = vld [vmem:[%s1 + $0x30] sm:$0xff]
  %v233 = vld [vmem:[%s1 + $0x38] sm:$0xff]
  %vm234 = vcmask 523264
  %v236 = vsel %vm234, %v226, 0
  %v239 = vsel %vm234, %v227, 0
  %v242 = vsel %vm234, %v228, 0
  %v245 = vsel %vm234, %v229, 0
  %v248 = vsel %vm234, %v230, 0
  %v251 = vsel %vm234, %v231, 0
  %v254 = vsel %vm234, %v232, 0
  %v257 = vsel %vm234, %v233, 0
  %259 = vmatpush.msra.mxu0 0.0
  %260 = vmatpush.msra.mxu0 0.0
  %261 = vmatpush.msra.mxu0 0.0
  %262 = vmatpush.msra.mxu0 0.0
  %263 = vmatpush.msra.mxu0 0.0
  %264 = vmatpush.msra.mxu0 0.0
  %265 = vmatpush.msra.mxu0 0.0
  %266 = vmatpush.msra.mxu0 0.0
  %267 = vmatpush.msra.mxu0 %v192
  %268 = vmatpush.msra.mxu0 %v167
  %269 = vmatpush.msra.mxu0 %v142
  %270 = vmatpush.msra.mxu0 %v117
  %271 = vmatpush.msra.mxu0 %v92
  %272 = vmatpush.msra.mxu0 %v67
  %273 = vmatpush.msra.mxu0 %v42
  %274 = vmatpush.msra.mxu0 %v17
  %275 = vmatmul.f32.gmra.mxu0 %v236
  %v276 = vpop.f32.mrf.mxu0
  %v277 = vadd.f32 0.0, %v276
  %278 = vmatmul.f32.gmra.mxu0 %v239
  %v279 = vpop.f32.mrf.mxu0
  %v280 = vadd.f32 0.0, %v279
  %281 = vmatmul.f32.gmra.mxu0 %v242
  %v282 = vpop.f32.mrf.mxu0
  %v283 = vadd.f32 0.0, %v282
  %284 = vmatmul.f32.gmra.mxu0 %v245
  %v285 = vpop.f32.mrf.mxu0
  %v286 = vadd.f32 0.0, %v285
  %287 = vmatmul.f32.gmra.mxu0 %v248
  %v288 = vpop.f32.mrf.mxu0
  %v289 = vadd.f32 0.0, %v288
  %290 = vmatmul.f32.gmra.mxu0 %v251
  %v291 = vpop.f32.mrf.mxu0
  %v292 = vadd.f32 0.0, %v291
  %293 = vmatmul.f32.gmra.mxu0 %v254
  %v294 = vpop.f32.mrf.mxu0
  %v295 = vadd.f32 0.0, %v294
  %296 = vmatmul.f32.gmra.mxu0 %v257
  %v297 = vpop.f32.mrf.mxu0
  %v298 = vadd.f32 0.0, %v297
  %299 = vdwg.mxu0
  %300 = vmatpush.msra.mxu0 0.0
  %301 = vmatpush.msra.mxu0 0.0
  %302 = vmatpush.msra.mxu0 0.0
  %303 = vmatpush.msra.mxu0 0.0
  %304 = vmatpush.msra.mxu0 0.0
  %305 = vmatpush.msra.mxu0 0.0
  %306 = vmatpush.msra.mxu0 0.0
  %307 = vmatpush.msra.mxu0 0.0
  %308 = vmatpush.msra.mxu0 %v193
  %309 = vmatpush.msra.mxu0 %v168
  %310 = vmatpush.msra.mxu0 %v143
  %311 = vmatpush.msra.mxu0 %v118
  %312 = vmatpush.msra.mxu0 %v93
  %313 = vmatpush.msra.mxu0 %v68
  %314 = vmatpush.msra.mxu0 %v43
  %315 = vmatpush.msra.mxu0 %v18
  %316 = vmatmul.f32.gmra.mxu0 %v236
  %v317 = vpop.f32.mrf.mxu0
  %v318 = vadd.f32 0.0, %v317
  %319 = vmatmul.f32.gmra.mxu0 %v239
  %v320 = vpop.f32.mrf.mxu0
  %v321 = vadd.f32 0.0, %v320
  %322 = vmatmul.f32.gmra.mxu0 %v242
  %v323 = vpop.f32.mrf.mxu0
  %v324 = vadd.f32 0.0, %v323
  %325 = vmatmul.f32.gmra.mxu0 %v245
  %v326 = vpop.f32.mrf.mxu0
  %v327 = vadd.f32 0.0, %v326
  %328 = vmatmul.f32.gmra.mxu0 %v248
  %v329 = vpop.f32.mrf.mxu0
  %v330 = vadd.f32 0.0, %v329
  %331 = vmatmul.f32.gmra.mxu0 %v251
  %v332 = vpop.f32.mrf.mxu0
  %v333 = vadd.f32 0.0, %v332
  %334 = vmatmul.f32.gmra.mxu0 %v254
  %v335 = vpop.f32.mrf.mxu0
  %v336 = vadd.f32 0.0, %v335
  %337 = vmatmul.f32.gmra.mxu0 %v257
  %v338 = vpop.f32.mrf.mxu0
  %v339 = vadd.f32 0.0, %v338
  %340 = vdwg.mxu0
  %341 = vmatpush.msra.mxu0 0.0
  %342 = vmatpush.msra.mxu0 0.0
  %343 = vmatpush.msra.mxu0 0.0
  %344 = vmatpush.msra.mxu0 0.0
  %345 = vmatpush.msra.mxu0 0.0
  %346 = vmatpush.msra.mxu0 0.0
  %347 = vmatpush.msra.mxu0 0.0
  %348 = vmatpush.msra.mxu0 0.0
  %349 = vmatpush.msra.mxu0 %v194
  %350 = vmatpush.msra.mxu0 %v169
  %351 = vmatpush.msra.mxu0 %v144
  %352 = vmatpush.msra.mxu0 %v119
  %353 = vmatpush.msra.mxu0 %v94
  %354 = vmatpush.msra.mxu0 %v69
  %355 = vmatpush.msra.mxu0 %v44
  %356 = vmatpush.msra.mxu0 %v19
  %357 = vmatmul.f32.gmra.mxu0 %v236
  %v358 = vpop.f32.mrf.mxu0
  %v359 = vadd.f32 0.0, %v358
  %360 = vmatmul.f32.gmra.mxu0 %v239
  %v361 = vpop.f32.mrf.mxu0
  %v362 = vadd.f32 0.0, %v361
  %363 = vmatmul.f32.gmra.mxu0 %v242
  %v364 = vpop.f32.mrf.mxu0
  %v365 = vadd.f32 0.0, %v364
  %366 = vmatmul.f32.gmra.mxu0 %v245
  %v367 = vpop.f32.mrf.mxu0
  %v368 = vadd.f32 0.0, %v367
  %369 = vmatmul.f32.gmra.mxu0 %v248
  %v370 = vpop.f32.mrf.mxu0
  %v371 = vadd.f32 0.0, %v370
  %372 = vmatmul.f32.gmra.mxu0 %v251
  %v373 = vpop.f32.mrf.mxu0
  %v374 = vadd.f32 0.0, %v373
  %375 = vmatmul.f32.gmra.mxu0 %v254
  %v376 = vpop.f32.mrf.mxu0
  %v377 = vadd.f32 0.0, %v376
  %378 = vmatmul.f32.gmra.mxu0 %v257
  %v379 = vpop.f32.mrf.mxu0
  %v380 = vadd.f32 0.0, %v379
  %381 = vdwg.mxu0
  %382 = vmatpush.msra.mxu0 0.0
  %383 = vmatpush.msra.mxu0 0.0
  %384 = vmatpush.msra.mxu0 0.0
  %385 = vmatpush.msra.mxu0 0.0
  %386 = vmatpush.msra.mxu0 0.0
  %387 = vmatpush.msra.mxu0 0.0
  %388 = vmatpush.msra.mxu0 0.0
  %389 = vmatpush.msra.mxu0 0.0
  %390 = vmatpush.msra.mxu0 %v195
  %391 = vmatpush.msra.mxu0 %v170
  %392 = vmatpush.msra.mxu0 %v145
  %393 = vmatpush.msra.mxu0 %v120
  %394 = vmatpush.msra.mxu0 %v95
  %395 = vmatpush.msra.mxu0 %v70
  %396 = vmatpush.msra.mxu0 %v45
  %397 = vmatpush.msra.mxu0 %v20
  %398 = vmatmul.f32.gmra.mxu0 %v236
  %v399 = vpop.f32.mrf.mxu0
  %v400 = vadd.f32 0.0, %v399
  %401 = vmatmul.f32.gmra.mxu0 %v239
  %v402 = vpop.f32.mrf.mxu0
  %v403 = vadd.f32 0.0, %v402
  %404 = vmatmul.f32.gmra.mxu0 %v242
  %v405 = vpop.f32.mrf.mxu0
  %v406 = vadd.f32 0.0, %v405
  %407 = vmatmul.f32.gmra.mxu0 %v245
  %v408 = vpop.f32.mrf.mxu0
  %v409 = vadd.f32 0.0, %v408
  %410 = vmatmul.f32.gmra.mxu0 %v248
  %v411 = vpop.f32.mrf.mxu0
  %v412 = vadd.f32 0.0, %v411
  %413 = vmatmul.f32.gmra.mxu0 %v251
  %v414 = vpop.f32.mrf.mxu0
  %v415 = vadd.f32 0.0, %v414
  %416 = vmatmul.f32.gmra.mxu0 %v254
  %v417 = vpop.f32.mrf.mxu0
  %v418 = vadd.f32 0.0, %v417
  %419 = vmatmul.f32.gmra.mxu0 %v257
  %v420 = vpop.f32.mrf.mxu0
  %v421 = vadd.f32 0.0, %v420
  %422 = vdwg.mxu0
  %423 = vmatpush.msra.mxu0 0.0
  %424 = vmatpush.msra.mxu0 0.0
  %425 = vmatpush.msra.mxu0 0.0
  %426 = vmatpush.msra.mxu0 0.0
  %427 = vmatpush.msra.mxu0 0.0
  %428 = vmatpush.msra.mxu0 0.0
  %429 = vmatpush.msra.mxu0 0.0
  %430 = vmatpush.msra.mxu0 0.0
  %431 = vmatpush.msra.mxu0 %v196
  %432 = vmatpush.msra.mxu0 %v171
  %433 = vmatpush.msra.mxu0 %v146
  %434 = vmatpush.msra.mxu0 %v121
  %435 = vmatpush.msra.mxu0 %v96
  %436 = vmatpush.msra.mxu0 %v71
  %437 = vmatpush.msra.mxu0 %v46
  %438 = vmatpush.msra.mxu0 %v21
  %439 = vmatmul.f32.gmra.mxu0 %v236
  %v440 = vpop.f32.mrf.mxu0
  %v441 = vadd.f32 0.0, %v440
  %442 = vmatmul.f32.gmra.mxu0 %v239
  %v443 = vpop.f32.mrf.mxu0
  %v444 = vadd.f32 0.0, %v443
  %445 = vmatmul.f32.gmra.mxu0 %v242
  %v446 = vpop.f32.mrf.mxu0
  %v447 = vadd.f32 0.0, %v446
  %448 = vmatmul.f32.gmra.mxu0 %v245
  %v449 = vpop.f32.mrf.mxu0
  %v450 = vadd.f32 0.0, %v449
  %451 = vmatmul.f32.gmra.mxu0 %v248
  %v452 = vpop.f32.mrf.mxu0
  %v453 = vadd.f32 0.0, %v452
  %454 = vmatmul.f32.gmra.mxu0 %v251
  %v455 = vpop.f32.mrf.mxu0
  %v456 = vadd.f32 0.0, %v455
  %457 = vmatmul.f32.gmra.mxu0 %v254
  %v458 = vpop.f32.mrf.mxu0
  %v459 = vadd.f32 0.0, %v458
  %460 = vmatmul.f32.gmra.mxu0 %v257
  %v461 = vpop.f32.mrf.mxu0
  %v462 = vadd.f32 0.0, %v461
  %463 = vdwg.mxu0
  %464 = vmatpush.msra.mxu0 0.0
  %465 = vmatpush.msra.mxu0 0.0
  %466 = vmatpush.msra.mxu0 0.0
  %467 = vmatpush.msra.mxu0 0.0
  %468 = vmatpush.msra.mxu0 0.0
  %469 = vmatpush.msra.mxu0 0.0
  %470 = vmatpush.msra.mxu0 0.0
  %471 = vmatpush.msra.mxu0 0.0
  %472 = vmatpush.msra.mxu0 %v197
  %473 = vmatpush.msra.mxu0 %v172
  %474 = vmatpush.msra.mxu0 %v147
  %475 = vmatpush.msra.mxu0 %v122
  %476 = vmatpush.msra.mxu0 %v97
  %477 = vmatpush.msra.mxu0 %v72
  %478 = vmatpush.msra.mxu0 %v47
  %479 = vmatpush.msra.mxu0 %v22
  %480 = vmatmul.f32.gmra.mxu0 %v236
  %v481 = vpop.f32.mrf.mxu0
  %v482 = vadd.f32 0.0, %v481
  %483 = vmatmul.f32.gmra.mxu0 %v239
  %v484 = vpop.f32.mrf.mxu0
  %v485 = vadd.f32 0.0, %v484
  %486 = vmatmul.f32.gmra.mxu0 %v242
  %v487 = vpop.f32.mrf.mxu0
  %v488 = vadd.f32 0.0, %v487
  %489 = vmatmul.f32.gmra.mxu0 %v245
  %v490 = vpop.f32.mrf.mxu0
  %v491 = vadd.f32 0.0, %v490
  %492 = vmatmul.f32.gmra.mxu0 %v248
  %v493 = vpop.f32.mrf.mxu0
  %v494 = vadd.f32 0.0, %v493
  %495 = vmatmul.f32.gmra.mxu0 %v251
  %v496 = vpop.f32.mrf.mxu0
  %v497 = vadd.f32 0.0, %v496
  %498 = vmatmul.f32.gmra.mxu0 %v254
  %v499 = vpop.f32.mrf.mxu0
  %v500 = vadd.f32 0.0, %v499
  %501 = vmatmul.f32.gmra.mxu0 %v257
  %v502 = vpop.f32.mrf.mxu0
  %v503 = vadd.f32 0.0, %v502
  %504 = vdwg.mxu0
  %505 = vmatpush.msra.mxu0 0.0
  %506 = vmatpush.msra.mxu0 0.0
  %507 = vmatpush.msra.mxu0 0.0
  %508 = vmatpush.msra.mxu0 0.0
  %509 = vmatpush.msra.mxu0 0.0
  %510 = vmatpush.msra.mxu0 0.0
  %511 = vmatpush.msra.mxu0 0.0
  %512 = vmatpush.msra.mxu0 0.0
  %513 = vmatpush.msra.mxu0 %v198
  %514 = vmatpush.msra.mxu0 %v173
  %515 = vmatpush.msra.mxu0 %v148
  %516 = vmatpush.msra.mxu0 %v123
  %517 = vmatpush.msra.mxu0 %v98
  %518 = vmatpush.msra.mxu0 %v73
  %519 = vmatpush.msra.mxu0 %v48
  %520 = vmatpush.msra.mxu0 %v23
  %521 = vmatmul.f32.gmra.mxu0 %v236
  %v522 = vpop.f32.mrf.mxu0
  %v523 = vadd.f32 0.0, %v522
  %524 = vmatmul.f32.gmra.mxu0 %v239
  %v525 = vpop.f32.mrf.mxu0
  %v526 = vadd.f32 0.0, %v525
  %527 = vmatmul.f32.gmra.mxu0 %v242
  %v528 = vpop.f32.mrf.mxu0
  %v529 = vadd.f32 0.0, %v528
  %530 = vmatmul.f32.gmra.mxu0 %v245
  %v531 = vpop.f32.mrf.mxu0
  %v532 = vadd.f32 0.0, %v531
  %533 = vmatmul.f32.gmra.mxu0 %v248
  %v534 = vpop.f32.mrf.mxu0
  %v535 = vadd.f32 0.0, %v534
  %536 = vmatmul.f32.gmra.mxu0 %v251
  %v537 = vpop.f32.mrf.mxu0
  %v538 = vadd.f32 0.0, %v537
  %539 = vmatmul.f32.gmra.mxu0 %v254
  %v540 = vpop.f32.mrf.mxu0
  %v541 = vadd.f32 0.0, %v540
  %542 = vmatmul.f32.gmra.mxu0 %v257
  %v543 = vpop.f32.mrf.mxu0
  %v544 = vadd.f32 0.0, %v543
  %545 = vdwg.mxu0
  %546 = vmatpush.msra.mxu0 0.0
  %547 = vmatpush.msra.mxu0 0.0
  %548 = vmatpush.msra.mxu0 0.0
  %549 = vmatpush.msra.mxu0 0.0
  %550 = vmatpush.msra.mxu0 0.0
  %551 = vmatpush.msra.mxu0 0.0
  %552 = vmatpush.msra.mxu0 0.0
  %553 = vmatpush.msra.mxu0 0.0
  %554 = vmatpush.msra.mxu0 %v199
  %555 = vmatpush.msra.mxu0 %v174
  %556 = vmatpush.msra.mxu0 %v149
  %557 = vmatpush.msra.mxu0 %v124
  %558 = vmatpush.msra.mxu0 %v99
  %559 = vmatpush.msra.mxu0 %v74
  %560 = vmatpush.msra.mxu0 %v49
  %561 = vmatpush.msra.mxu0 %v24
  %562 = vmatmul.f32.gmra.mxu0 %v236
  %v563 = vpop.f32.mrf.mxu0
  %v564 = vadd.f32 0.0, %v563
  %565 = vmatmul.f32.gmra.mxu0 %v239
  %v566 = vpop.f32.mrf.mxu0
  %v567 = vadd.f32 0.0, %v566
  %568 = vmatmul.f32.gmra.mxu0 %v242
  %v569 = vpop.f32.mrf.mxu0
  %v570 = vadd.f32 0.0, %v569
  %571 = vmatmul.f32.gmra.mxu0 %v245
  %v572 = vpop.f32.mrf.mxu0
  %v573 = vadd.f32 0.0, %v572
  %574 = vmatmul.f32.gmra.mxu0 %v248
  %v575 = vpop.f32.mrf.mxu0
  %v576 = vadd.f32 0.0, %v575
  %577 = vmatmul.f32.gmra.mxu0 %v251
  %v578 = vpop.f32.mrf.mxu0
  %v579 = vadd.f32 0.0, %v578
  %580 = vmatmul.f32.gmra.mxu0 %v254
  %v581 = vpop.f32.mrf.mxu0
  %v582 = vadd.f32 0.0, %v581
  %583 = vmatmul.f32.gmra.mxu0 %v257
  %v584 = vpop.f32.mrf.mxu0
  %v585 = vadd.f32 0.0, %v584
  %586 = vdwg.mxu0
  %587 = vmatpush.msra.mxu0 0.0
  %588 = vmatpush.msra.mxu0 0.0
  %589 = vmatpush.msra.mxu0 0.0
  %590 = vmatpush.msra.mxu0 0.0
  %591 = vmatpush.msra.mxu0 0.0
  %592 = vmatpush.msra.mxu0 0.0
  %593 = vmatpush.msra.mxu0 0.0
  %594 = vmatpush.msra.mxu0 0.0
  %595 = vmatpush.msra.mxu0 %v200
  %596 = vmatpush.msra.mxu0 %v175
  %597 = vmatpush.msra.mxu0 %v150
  %598 = vmatpush.msra.mxu0 %v125
  %599 = vmatpush.msra.mxu0 %v100
  %600 = vmatpush.msra.mxu0 %v75
  %601 = vmatpush.msra.mxu0 %v50
  %602 = vmatpush.msra.mxu0 %v25
  %603 = vmatmul.f32.gmra.mxu0 %v236
  %v604 = vpop.f32.mrf.mxu0
  %v605 = vadd.f32 0.0, %v604
  %606 = vmatmul.f32.gmra.mxu0 %v239
  %v607 = vpop.f32.mrf.mxu0
  %v608 = vadd.f32 0.0, %v607
  %609 = vmatmul.f32.gmra.mxu0 %v242
  %v610 = vpop.f32.mrf.mxu0
  %v611 = vadd.f32 0.0, %v610
  %612 = vmatmul.f32.gmra.mxu0 %v245
  %v613 = vpop.f32.mrf.mxu0
  %v614 = vadd.f32 0.0, %v613
  %615 = vmatmul.f32.gmra.mxu0 %v248
  %v616 = vpop.f32.mrf.mxu0
  %v617 = vadd.f32 0.0, %v616
  %618 = vmatmul.f32.gmra.mxu0 %v251
  %v619 = vpop.f32.mrf.mxu0
  %v620 = vadd.f32 0.0, %v619
  %621 = vmatmul.f32.gmra.mxu0 %v254
  %v622 = vpop.f32.mrf.mxu0
  %v623 = vadd.f32 0.0, %v622
  %624 = vmatmul.f32.gmra.mxu0 %v257
  %v625 = vpop.f32.mrf.mxu0
  %v626 = vadd.f32 0.0, %v625
  %627 = vdwg.mxu0
  %628 = vmatpush.msra.mxu0 0.0
  %629 = vmatpush.msra.mxu0 0.0
  %630 = vmatpush.msra.mxu0 0.0
  %631 = vmatpush.msra.mxu0 0.0
  %632 = vmatpush.msra.mxu0 0.0
  %633 = vmatpush.msra.mxu0 0.0
  %634 = vmatpush.msra.mxu0 0.0
  %635 = vmatpush.msra.mxu0 0.0
  %636 = vmatpush.msra.mxu0 %v201
  %637 = vmatpush.msra.mxu0 %v176
  %638 = vmatpush.msra.mxu0 %v151
  %639 = vmatpush.msra.mxu0 %v126
  %640 = vmatpush.msra.mxu0 %v101
  %641 = vmatpush.msra.mxu0 %v76
  %642 = vmatpush.msra.mxu0 %v51
  %643 = vmatpush.msra.mxu0 %v26
  %644 = vmatmul.f32.gmra.mxu0 %v236
  %v645 = vpop.f32.mrf.mxu0
  %v646 = vadd.f32 0.0, %v645
  %647 = vmatmul.f32.gmra.mxu0 %v239
  %v648 = vpop.f32.mrf.mxu0
  %v649 = vadd.f32 0.0, %v648
  %650 = vmatmul.f32.gmra.mxu0 %v242
  %v651 = vpop.f32.mrf.mxu0
  %v652 = vadd.f32 0.0, %v651
  %653 = vmatmul.f32.gmra.mxu0 %v245
  %v654 = vpop.f32.mrf.mxu0
  %v655 = vadd.f32 0.0, %v654
  %656 = vmatmul.f32.gmra.mxu0 %v248
  %v657 = vpop.f32.mrf.mxu0
  %v658 = vadd.f32 0.0, %v657
  %659 = vmatmul.f32.gmra.mxu0 %v251
  %v660 = vpop.f32.mrf.mxu0
  %v661 = vadd.f32 0.0, %v660
  %662 = vmatmul.f32.gmra.mxu0 %v254
  %v663 = vpop.f32.mrf.mxu0
  %v664 = vadd.f32 0.0, %v663
  %665 = vmatmul.f32.gmra.mxu0 %v257
  %v666 = vpop.f32.mrf.mxu0
  %v667 = vadd.f32 0.0, %v666
  %668 = vdwg.mxu0
  %669 = vmatpush.msra.mxu0 0.0
  %670 = vmatpush.msra.mxu0 0.0
  %671 = vmatpush.msra.mxu0 0.0
  %672 = vmatpush.msra.mxu0 0.0
  %673 = vmatpush.msra.mxu0 0.0
  %674 = vmatpush.msra.mxu0 0.0
  %675 = vmatpush.msra.mxu0 0.0
  %676 = vmatpush.msra.mxu0 0.0
  %677 = vmatpush.msra.mxu0 %v202
  %678 = vmatpush.msra.mxu0 %v177
  %679 = vmatpush.msra.mxu0 %v152
  %680 = vmatpush.msra.mxu0 %v127
  %681 = vmatpush.msra.mxu0 %v102
  %682 = vmatpush.msra.mxu0 %v77
  %683 = vmatpush.msra.mxu0 %v52
  %684 = vmatpush.msra.mxu0 %v27
  %685 = vmatmul.f32.gmra.mxu0 %v236
  %v686 = vpop.f32.mrf.mxu0
  %v687 = vadd.f32 0.0, %v686
  %688 = vmatmul.f32.gmra.mxu0 %v239
  %v689 = vpop.f32.mrf.mxu0
  %v690 = vadd.f32 0.0, %v689
  %691 = vmatmul.f32.gmra.mxu0 %v242
  %v692 = vpop.f32.mrf.mxu0
  %v693 = vadd.f32 0.0, %v692
  %694 = vmatmul.f32.gmra.mxu0 %v245
  %v695 = vpop.f32.mrf.mxu0
  %v696 = vadd.f32 0.0, %v695
  %697 = vmatmul.f32.gmra.mxu0 %v248
  %v698 = vpop.f32.mrf.mxu0
  %v699 = vadd.f32 0.0, %v698
  %700 = vmatmul.f32.gmra.mxu0 %v251
  %v701 = vpop.f32.mrf.mxu0
  %v702 = vadd.f32 0.0, %v701
  %703 = vmatmul.f32.gmra.mxu0 %v254
  %v704 = vpop.f32.mrf.mxu0
  %v705 = vadd.f32 0.0, %v704
  %706 = vmatmul.f32.gmra.mxu0 %v257
  %v707 = vpop.f32.mrf.mxu0
  %v708 = vadd.f32 0.0, %v707
  %709 = vdwg.mxu0
  %710 = vmatpush.msra.mxu0 0.0
  %711 = vmatpush.msra.mxu0 0.0
  %712 = vmatpush.msra.mxu0 0.0
  %713 = vmatpush.msra.mxu0 0.0
  %714 = vmatpush.msra.mxu0 0.0
  %715 = vmatpush.msra.mxu0 0.0
  %716 = vmatpush.msra.mxu0 0.0
  %717 = vmatpush.msra.mxu0 0.0
  %718 = vmatpush.msra.mxu0 %v203
  %719 = vmatpush.msra.mxu0 %v178
  %720 = vmatpush.msra.mxu0 %v153
  %721 = vmatpush.msra.mxu0 %v128
  %722 = vmatpush.msra.mxu0 %v103
  %723 = vmatpush.msra.mxu0 %v78
  %724 = vmatpush.msra.mxu0 %v53
  %725 = vmatpush.msra.mxu0 %v28
  %726 = vmatmul.f32.gmra.mxu0 %v236
  %v727 = vpop.f32.mrf.mxu0
  %v728 = vadd.f32 0.0, %v727
  %729 = vmatmul.f32.gmra.mxu0 %v239
  %v730 = vpop.f32.mrf.mxu0
  %v731 = vadd.f32 0.0, %v730
  %732 = vmatmul.f32.gmra.mxu0 %v242
  %v733 = vpop.f32.mrf.mxu0
  %v734 = vadd.f32 0.0, %v733
  %735 = vmatmul.f32.gmra.mxu0 %v245
  %v736 = vpop.f32.mrf.mxu0
  %v737 = vadd.f32 0.0, %v736
  %738 = vmatmul.f32.gmra.mxu0 %v248
  %v739 = vpop.f32.mrf.mxu0
  %v740 = vadd.f32 0.0, %v739
  %741 = vmatmul.f32.gmra.mxu0 %v251
  %v742 = vpop.f32.mrf.mxu0
  %v743 = vadd.f32 0.0, %v742
  %744 = vmatmul.f32.gmra.mxu0 %v254
  %v745 = vpop.f32.mrf.mxu0
  %v746 = vadd.f32 0.0, %v745
  %747 = vmatmul.f32.gmra.mxu0 %v257
  %v748 = vpop.f32.mrf.mxu0
  %v749 = vadd.f32 0.0, %v748
  %750 = vdwg.mxu0
  %751 = vmatpush.msra.mxu0 0.0
  %752 = vmatpush.msra.mxu0 0.0
  %753 = vmatpush.msra.mxu0 0.0
  %754 = vmatpush.msra.mxu0 0.0
  %755 = vmatpush.msra.mxu0 0.0
  %756 = vmatpush.msra.mxu0 0.0
  %757 = vmatpush.msra.mxu0 0.0
  %758 = vmatpush.msra.mxu0 0.0
  %759 = vmatpush.msra.mxu0 %v204
  %760 = vmatpush.msra.mxu0 %v179
  %761 = vmatpush.msra.mxu0 %v154
  %762 = vmatpush.msra.mxu0 %v129
  %763 = vmatpush.msra.mxu0 %v104
  %764 = vmatpush.msra.mxu0 %v79
  %765 = vmatpush.msra.mxu0 %v54
  %766 = vmatpush.msra.mxu0 %v29
  %767 = vmatmul.f32.gmra.mxu0 %v236
  %v768 = vpop.f32.mrf.mxu0
  %v769 = vadd.f32 0.0, %v768
  %770 = vmatmul.f32.gmra.mxu0 %v239
  %v771 = vpop.f32.mrf.mxu0
  %v772 = vadd.f32 0.0, %v771
  %773 = vmatmul.f32.gmra.mxu0 %v242
  %v774 = vpop.f32.mrf.mxu0
  %v775 = vadd.f32 0.0, %v774
  %776 = vmatmul.f32.gmra.mxu0 %v245
  %v777 = vpop.f32.mrf.mxu0
  %v778 = vadd.f32 0.0, %v777
  %779 = vmatmul.f32.gmra.mxu0 %v248
  %v780 = vpop.f32.mrf.mxu0
  %v781 = vadd.f32 0.0, %v780
  %782 = vmatmul.f32.gmra.mxu0 %v251
  %v783 = vpop.f32.mrf.mxu0
  %v784 = vadd.f32 0.0, %v783
  %785 = vmatmul.f32.gmra.mxu0 %v254
  %v786 = vpop.f32.mrf.mxu0
  %v787 = vadd.f32 0.0, %v786
  %788 = vmatmul.f32.gmra.mxu0 %v257
  %v789 = vpop.f32.mrf.mxu0
  %v790 = vadd.f32 0.0, %v789
  %791 = vdwg.mxu0
  %792 = vmatpush.msra.mxu0 0.0
  %793 = vmatpush.msra.mxu0 0.0
  %794 = vmatpush.msra.mxu0 0.0
  %795 = vmatpush.msra.mxu0 0.0
  %796 = vmatpush.msra.mxu0 0.0
  %797 = vmatpush.msra.mxu0 0.0
  %798 = vmatpush.msra.mxu0 0.0
  %799 = vmatpush.msra.mxu0 0.0
  %800 = vmatpush.msra.mxu0 %v205
  %801 = vmatpush.msra.mxu0 %v180
  %802 = vmatpush.msra.mxu0 %v155
  %803 = vmatpush.msra.mxu0 %v130
  %804 = vmatpush.msra.mxu0 %v105
  %805 = vmatpush.msra.mxu0 %v80
  %806 = vmatpush.msra.mxu0 %v55
  %807 = vmatpush.msra.mxu0 %v30
  %808 = vmatmul.f32.gmra.mxu0 %v236
  %v809 = vpop.f32.mrf.mxu0
  %v810 = vadd.f32 0.0, %v809
  %811 = vmatmul.f32.gmra.mxu0 %v239
  %v812 = vpop.f32.mrf.mxu0
  %v813 = vadd.f32 0.0, %v812
  %814 = vmatmul.f32.gmra.mxu0 %v242
  %v815 = vpop.f32.mrf.mxu0
  %v816 = vadd.f32 0.0, %v815
  %817 = vmatmul.f32.gmra.mxu0 %v245
  %v818 = vpop.f32.mrf.mxu0
  %v819 = vadd.f32 0.0, %v818
  %820 = vmatmul.f32.gmra.mxu0 %v248
  %v821 = vpop.f32.mrf.mxu0
  %v822 = vadd.f32 0.0, %v821
  %823 = vmatmul.f32.gmra.mxu0 %v251
  %v824 = vpop.f32.mrf.mxu0
  %v825 = vadd.f32 0.0, %v824
  %826 = vmatmul.f32.gmra.mxu0 %v254
  %v827 = vpop.f32.mrf.mxu0
  %v828 = vadd.f32 0.0, %v827
  %829 = vmatmul.f32.gmra.mxu0 %v257
  %v830 = vpop.f32.mrf.mxu0
  %v831 = vadd.f32 0.0, %v830
  %832 = vdwg.mxu0
  %833 = vmatpush.msra.mxu0 0.0
  %834 = vmatpush.msra.mxu0 0.0
  %835 = vmatpush.msra.mxu0 0.0
  %836 = vmatpush.msra.mxu0 0.0
  %837 = vmatpush.msra.mxu0 0.0
  %838 = vmatpush.msra.mxu0 0.0
  %839 = vmatpush.msra.mxu0 0.0
  %840 = vmatpush.msra.mxu0 0.0
  %841 = vmatpush.msra.mxu0 %v206
  %842 = vmatpush.msra.mxu0 %v181
  %843 = vmatpush.msra.mxu0 %v156
  %844 = vmatpush.msra.mxu0 %v131
  %845 = vmatpush.msra.mxu0 %v106
  %846 = vmatpush.msra.mxu0 %v81
  %847 = vmatpush.msra.mxu0 %v56
  %848 = vmatpush.msra.mxu0 %v31
  %849 = vmatmul.f32.gmra.mxu0 %v236
  %v850 = vpop.f32.mrf.mxu0
  %v851 = vadd.f32 0.0, %v850
  %852 = vmatmul.f32.gmra.mxu0 %v239
  %v853 = vpop.f32.mrf.mxu0
  %v854 = vadd.f32 0.0, %v853
  %855 = vmatmul.f32.gmra.mxu0 %v242
  %v856 = vpop.f32.mrf.mxu0
  %v857 = vadd.f32 0.0, %v856
  %858 = vmatmul.f32.gmra.mxu0 %v245
  %v859 = vpop.f32.mrf.mxu0
  %v860 = vadd.f32 0.0, %v859
  %861 = vmatmul.f32.gmra.mxu0 %v248
  %v862 = vpop.f32.mrf.mxu0
  %v863 = vadd.f32 0.0, %v862
  %864 = vmatmul.f32.gmra.mxu0 %v251
  %v865 = vpop.f32.mrf.mxu0
  %v866 = vadd.f32 0.0, %v865
  %867 = vmatmul.f32.gmra.mxu0 %v254
  %v868 = vpop.f32.mrf.mxu0
  %v869 = vadd.f32 0.0, %v868
  %870 = vmatmul.f32.gmra.mxu0 %v257
  %v871 = vpop.f32.mrf.mxu0
  %v872 = vadd.f32 0.0, %v871
  %873 = vdwg.mxu0
  %874 = vmatpush.msra.mxu0 0.0
  %875 = vmatpush.msra.mxu0 0.0
  %876 = vmatpush.msra.mxu0 0.0
  %877 = vmatpush.msra.mxu0 0.0
  %878 = vmatpush.msra.mxu0 0.0
  %879 = vmatpush.msra.mxu0 0.0
  %880 = vmatpush.msra.mxu0 0.0
  %881 = vmatpush.msra.mxu0 0.0
  %882 = vmatpush.msra.mxu0 %v207
  %883 = vmatpush.msra.mxu0 %v182
  %884 = vmatpush.msra.mxu0 %v157
  %885 = vmatpush.msra.mxu0 %v132
  %886 = vmatpush.msra.mxu0 %v107
  %887 = vmatpush.msra.mxu0 %v82
  %888 = vmatpush.msra.mxu0 %v57
  %889 = vmatpush.msra.mxu0 %v32
  %890 = vmatmul.f32.gmra.mxu0 %v236
  %v891 = vpop.f32.mrf.mxu0
  %v892 = vadd.f32 0.0, %v891
  %893 = vmatmul.f32.gmra.mxu0 %v239
  %v894 = vpop.f32.mrf.mxu0
  %v895 = vadd.f32 0.0, %v894
  %896 = vmatmul.f32.gmra.mxu0 %v242
  %v897 = vpop.f32.mrf.mxu0
  %v898 = vadd.f32 0.0, %v897
  %899 = vmatmul.f32.gmra.mxu0 %v245
  %v900 = vpop.f32.mrf.mxu0
  %v901 = vadd.f32 0.0, %v900
  %902 = vmatmul.f32.gmra.mxu0 %v248
  %v903 = vpop.f32.mrf.mxu0
  %v904 = vadd.f32 0.0, %v903
  %905 = vmatmul.f32.gmra.mxu0 %v251
  %v906 = vpop.f32.mrf.mxu0
  %v907 = vadd.f32 0.0, %v906
  %908 = vmatmul.f32.gmra.mxu0 %v254
  %v909 = vpop.f32.mrf.mxu0
  %v910 = vadd.f32 0.0, %v909
  %911 = vmatmul.f32.gmra.mxu0 %v257
  %v912 = vpop.f32.mrf.mxu0
  %v913 = vadd.f32 0.0, %v912
  %914 = vdwg.mxu0
  %915 = vmatpush.msra.mxu0 0.0
  %916 = vmatpush.msra.mxu0 0.0
  %917 = vmatpush.msra.mxu0 0.0
  %918 = vmatpush.msra.mxu0 0.0
  %919 = vmatpush.msra.mxu0 0.0
  %920 = vmatpush.msra.mxu0 0.0
  %921 = vmatpush.msra.mxu0 0.0
  %922 = vmatpush.msra.mxu0 0.0
  %923 = vmatpush.msra.mxu0 %v208
  %924 = vmatpush.msra.mxu0 %v183
  %925 = vmatpush.msra.mxu0 %v158
  %926 = vmatpush.msra.mxu0 %v133
  %927 = vmatpush.msra.mxu0 %v108
  %928 = vmatpush.msra.mxu0 %v83
  %929 = vmatpush.msra.mxu0 %v58
  %930 = vmatpush.msra.mxu0 %v33
  %931 = vmatmul.f32.gmra.mxu0 %v236
  %v932 = vpop.f32.mrf.mxu0
  %v933 = vadd.f32 0.0, %v932
  %934 = vmatmul.f32.gmra.mxu0 %v239
  %v935 = vpop.f32.mrf.mxu0
  %v936 = vadd.f32 0.0, %v935
  %937 = vmatmul.f32.gmra.mxu0 %v242
  %v938 = vpop.f32.mrf.mxu0
  %v939 = vadd.f32 0.0, %v938
  %940 = vmatmul.f32.gmra.mxu0 %v245
  %v941 = vpop.f32.mrf.mxu0
  %v942 = vadd.f32 0.0, %v941
  %943 = vmatmul.f32.gmra.mxu0 %v248
  %v944 = vpop.f32.mrf.mxu0
  %v945 = vadd.f32 0.0, %v944
  %946 = vmatmul.f32.gmra.mxu0 %v251
  %v947 = vpop.f32.mrf.mxu0
  %v948 = vadd.f32 0.0, %v947
  %949 = vmatmul.f32.gmra.mxu0 %v254
  %v950 = vpop.f32.mrf.mxu0
  %v951 = vadd.f32 0.0, %v950
  %952 = vmatmul.f32.gmra.mxu0 %v257
  %v953 = vpop.f32.mrf.mxu0
  %v954 = vadd.f32 0.0, %v953
  %955 = vdwg.mxu0
  %956 = vmatpush.msra.mxu0 0.0
  %957 = vmatpush.msra.mxu0 0.0
  %958 = vmatpush.msra.mxu0 0.0
  %959 = vmatpush.msra.mxu0 0.0
  %960 = vmatpush.msra.mxu0 0.0
  %961 = vmatpush.msra.mxu0 0.0
  %962 = vmatpush.msra.mxu0 0.0
  %963 = vmatpush.msra.mxu0 0.0
  %964 = vmatpush.msra.mxu0 %v209
  %965 = vmatpush.msra.mxu0 %v184
  %966 = vmatpush.msra.mxu0 %v159
  %967 = vmatpush.msra.mxu0 %v134
  %968 = vmatpush.msra.mxu0 %v109
  %969 = vmatpush.msra.mxu0 %v84
  %970 = vmatpush.msra.mxu0 %v59
  %971 = vmatpush.msra.mxu0 %v34
  %972 = vmatmul.f32.gmra.mxu0 %v236
  %v973 = vpop.f32.mrf.mxu0
  %v974 = vadd.f32 0.0, %v973
  %975 = vmatmul.f32.gmra.mxu0 %v239
  %v976 = vpop.f32.mrf.mxu0
  %v977 = vadd.f32 0.0, %v976
  %978 = vmatmul.f32.gmra.mxu0 %v242
  %v979 = vpop.f32.mrf.mxu0
  %v980 = vadd.f32 0.0, %v979
  %981 = vmatmul.f32.gmra.mxu0 %v245
  %v982 = vpop.f32.mrf.mxu0
  %v983 = vadd.f32 0.0, %v982
  %984 = vmatmul.f32.gmra.mxu0 %v248
  %v985 = vpop.f32.mrf.mxu0
  %v986 = vadd.f32 0.0, %v985
  %987 = vmatmul.f32.gmra.mxu0 %v251
  %v988 = vpop.f32.mrf.mxu0
  %v989 = vadd.f32 0.0, %v988
  %990 = vmatmul.f32.gmra.mxu0 %v254
  %v991 = vpop.f32.mrf.mxu0
  %v992 = vadd.f32 0.0, %v991
  %993 = vmatmul.f32.gmra.mxu0 %v257
  %v994 = vpop.f32.mrf.mxu0
  %v995 = vadd.f32 0.0, %v994
  %996 = vdwg.mxu0
  %997 = vmatpush.msra.mxu0 0.0
  %998 = vmatpush.msra.mxu0 0.0
  %999 = vmatpush.msra.mxu0 0.0
  %1000 = vmatpush.msra.mxu0 0.0
  %1001 = vmatpush.msra.mxu0 0.0
  %1002 = vmatpush.msra.mxu0 0.0
  %1003 = vmatpush.msra.mxu0 0.0
  %1004 = vmatpush.msra.mxu0 0.0
  %1005 = vmatpush.msra.mxu0 %v210
  %1006 = vmatpush.msra.mxu0 %v185
  %1007 = vmatpush.msra.mxu0 %v160
  %1008 = vmatpush.msra.mxu0 %v135
  %1009 = vmatpush.msra.mxu0 %v110
  %1010 = vmatpush.msra.mxu0 %v85
  %1011 = vmatpush.msra.mxu0 %v60
  %1012 = vmatpush.msra.mxu0 %v35
  %1013 = vmatmul.f32.gmra.mxu0 %v236
  %v1014 = vpop.f32.mrf.mxu0
  %v1015 = vadd.f32 0.0, %v1014
  %1016 = vmatmul.f32.gmra.mxu0 %v239
  %v1017 = vpop.f32.mrf.mxu0
  %v1018 = vadd.f32 0.0, %v1017
  %1019 = vmatmul.f32.gmra.mxu0 %v242
  %v1020 = vpop.f32.mrf.mxu0
  %v1021 = vadd.f32 0.0, %v1020
  %1022 = vmatmul.f32.gmra.mxu0 %v245
  %v1023 = vpop.f32.mrf.mxu0
  %v1024 = vadd.f32 0.0, %v1023
  %1025 = vmatmul.f32.gmra.mxu0 %v248
  %v1026 = vpop.f32.mrf.mxu0
  %v1027 = vadd.f32 0.0, %v1026
  %1028 = vmatmul.f32.gmra.mxu0 %v251
  %v1029 = vpop.f32.mrf.mxu0
  %v1030 = vadd.f32 0.0, %v1029
  %1031 = vmatmul.f32.gmra.mxu0 %v254
  %v1032 = vpop.f32.mrf.mxu0
  %v1033 = vadd.f32 0.0, %v1032
  %1034 = vmatmul.f32.gmra.mxu0 %v257
  %v1035 = vpop.f32.mrf.mxu0
  %v1036 = vadd.f32 0.0, %v1035
  %1037 = vdwg.mxu0
  %1038 = vmatpush.msra.mxu0 0.0
  %1039 = vmatpush.msra.mxu0 0.0
  %1040 = vmatpush.msra.mxu0 0.0
  %1041 = vmatpush.msra.mxu0 0.0
  %1042 = vmatpush.msra.mxu0 0.0
  %1043 = vmatpush.msra.mxu0 0.0
  %1044 = vmatpush.msra.mxu0 0.0
  %1045 = vmatpush.msra.mxu0 0.0
  %1046 = vmatpush.msra.mxu0 %v211
  %1047 = vmatpush.msra.mxu0 %v186
  %1048 = vmatpush.msra.mxu0 %v161
  %1049 = vmatpush.msra.mxu0 %v136
  %1050 = vmatpush.msra.mxu0 %v111
  %1051 = vmatpush.msra.mxu0 %v86
  %1052 = vmatpush.msra.mxu0 %v61
  %1053 = vmatpush.msra.mxu0 %v36
  %1054 = vmatmul.f32.gmra.mxu0 %v236
  %v1055 = vpop.f32.mrf.mxu0
  %v1056 = vadd.f32 0.0, %v1055
  %1057 = vmatmul.f32.gmra.mxu0 %v239
  %v1058 = vpop.f32.mrf.mxu0
  %v1059 = vadd.f32 0.0, %v1058
  %1060 = vmatmul.f32.gmra.mxu0 %v242
  %v1061 = vpop.f32.mrf.mxu0
  %v1062 = vadd.f32 0.0, %v1061
  %1063 = vmatmul.f32.gmra.mxu0 %v245
  %v1064 = vpop.f32.mrf.mxu0
  %v1065 = vadd.f32 0.0, %v1064
  %1066 = vmatmul.f32.gmra.mxu0 %v248
  %v1067 = vpop.f32.mrf.mxu0
  %v1068 = vadd.f32 0.0, %v1067
  %1069 = vmatmul.f32.gmra.mxu0 %v251
  %v1070 = vpop.f32.mrf.mxu0
  %v1071 = vadd.f32 0.0, %v1070
  %1072 = vmatmul.f32.gmra.mxu0 %v254
  %v1073 = vpop.f32.mrf.mxu0
  %v1074 = vadd.f32 0.0, %v1073
  %1075 = vmatmul.f32.gmra.mxu0 %v257
  %v1076 = vpop.f32.mrf.mxu0
  %v1077 = vadd.f32 0.0, %v1076
  %1078 = vdwg.mxu0
  %1079 = vmatpush.msra.mxu0 0.0
  %1080 = vmatpush.msra.mxu0 0.0
  %1081 = vmatpush.msra.mxu0 0.0
  %1082 = vmatpush.msra.mxu0 0.0
  %1083 = vmatpush.msra.mxu0 0.0
  %1084 = vmatpush.msra.mxu0 0.0
  %1085 = vmatpush.msra.mxu0 0.0
  %1086 = vmatpush.msra.mxu0 0.0
  %1087 = vmatpush.msra.mxu0 %v212
  %1088 = vmatpush.msra.mxu0 %v187
  %1089 = vmatpush.msra.mxu0 %v162
  %1090 = vmatpush.msra.mxu0 %v137
  %1091 = vmatpush.msra.mxu0 %v112
  %1092 = vmatpush.msra.mxu0 %v87
  %1093 = vmatpush.msra.mxu0 %v62
  %1094 = vmatpush.msra.mxu0 %v37
  %1095 = vmatmul.f32.gmra.mxu0 %v236
  %v1096 = vpop.f32.mrf.mxu0
  %v1097 = vadd.f32 0.0, %v1096
  %1098 = vmatmul.f32.gmra.mxu0 %v239
  %v1099 = vpop.f32.mrf.mxu0
  %v1100 = vadd.f32 0.0, %v1099
  %1101 = vmatmul.f32.gmra.mxu0 %v242
  %v1102 = vpop.f32.mrf.mxu0
  %v1103 = vadd.f32 0.0, %v1102
  %1104 = vmatmul.f32.gmra.mxu0 %v245
  %v1105 = vpop.f32.mrf.mxu0
  %v1106 = vadd.f32 0.0, %v1105
  %1107 = vmatmul.f32.gmra.mxu0 %v248
  %v1108 = vpop.f32.mrf.mxu0
  %v1109 = vadd.f32 0.0, %v1108
  %1110 = vmatmul.f32.gmra.mxu0 %v251
  %v1111 = vpop.f32.mrf.mxu0
  %v1112 = vadd.f32 0.0, %v1111
  %1113 = vmatmul.f32.gmra.mxu0 %v254
  %v1114 = vpop.f32.mrf.mxu0
  %v1115 = vadd.f32 0.0, %v1114
  %1116 = vmatmul.f32.gmra.mxu0 %v257
  %v1117 = vpop.f32.mrf.mxu0
  %v1118 = vadd.f32 0.0, %v1117
  %1119 = vdwg.mxu0
  %1120 = vmatpush.msra.mxu0 0.0
  %1121 = vmatpush.msra.mxu0 0.0
  %1122 = vmatpush.msra.mxu0 0.0
  %1123 = vmatpush.msra.mxu0 0.0
  %1124 = vmatpush.msra.mxu0 0.0
  %1125 = vmatpush.msra.mxu0 0.0
  %1126 = vmatpush.msra.mxu0 0.0
  %1127 = vmatpush.msra.mxu0 0.0
  %1128 = vmatpush.msra.mxu0 %v213
  %1129 = vmatpush.msra.mxu0 %v188
  %1130 = vmatpush.msra.mxu0 %v163
  %1131 = vmatpush.msra.mxu0 %v138
  %1132 = vmatpush.msra.mxu0 %v113
  %1133 = vmatpush.msra.mxu0 %v88
  %1134 = vmatpush.msra.mxu0 %v63
  %1135 = vmatpush.msra.mxu0 %v38
  %1136 = vmatmul.f32.gmra.mxu0 %v236
  %v1137 = vpop.f32.mrf.mxu0
  %v1138 = vadd.f32 0.0, %v1137
  %1139 = vmatmul.f32.gmra.mxu0 %v239
  %v1140 = vpop.f32.mrf.mxu0
  %v1141 = vadd.f32 0.0, %v1140
  %1142 = vmatmul.f32.gmra.mxu0 %v242
  %v1143 = vpop.f32.mrf.mxu0
  %v1144 = vadd.f32 0.0, %v1143
  %1145 = vmatmul.f32.gmra.mxu0 %v245
  %v1146 = vpop.f32.mrf.mxu0
  %v1147 = vadd.f32 0.0, %v1146
  %1148 = vmatmul.f32.gmra.mxu0 %v248
  %v1149 = vpop.f32.mrf.mxu0
  %v1150 = vadd.f32 0.0, %v1149
  %1151 = vmatmul.f32.gmra.mxu0 %v251
  %v1152 = vpop.f32.mrf.mxu0
  %v1153 = vadd.f32 0.0, %v1152
  %1154 = vmatmul.f32.gmra.mxu0 %v254
  %v1155 = vpop.f32.mrf.mxu0
  %v1156 = vadd.f32 0.0, %v1155
  %1157 = vmatmul.f32.gmra.mxu0 %v257
  %v1158 = vpop.f32.mrf.mxu0
  %v1159 = vadd.f32 0.0, %v1158
  %1160 = vdwg.mxu0
  %1161 = vmatpush.msra.mxu0 0.0
  %1162 = vmatpush.msra.mxu0 0.0
  %1163 = vmatpush.msra.mxu0 0.0
  %1164 = vmatpush.msra.mxu0 0.0
  %1165 = vmatpush.msra.mxu0 0.0
  %1166 = vmatpush.msra.mxu0 0.0
  %1167 = vmatpush.msra.mxu0 0.0
  %1168 = vmatpush.msra.mxu0 0.0
  %1169 = vmatpush.msra.mxu0 %v214
  %1170 = vmatpush.msra.mxu0 %v189
  %1171 = vmatpush.msra.mxu0 %v164
  %1172 = vmatpush.msra.mxu0 %v139
  %1173 = vmatpush.msra.mxu0 %v114
  %1174 = vmatpush.msra.mxu0 %v89
  %1175 = vmatpush.msra.mxu0 %v64
  %1176 = vmatpush.msra.mxu0 %v39
  %1177 = vmatmul.f32.gmra.mxu0 %v236
  %v1178 = vpop.f32.mrf.mxu0
  %v1179 = vadd.f32 0.0, %v1178
  %1180 = vmatmul.f32.gmra.mxu0 %v239
  %v1181 = vpop.f32.mrf.mxu0
  %v1182 = vadd.f32 0.0, %v1181
  %1183 = vmatmul.f32.gmra.mxu0 %v242
  %v1184 = vpop.f32.mrf.mxu0
  %v1185 = vadd.f32 0.0, %v1184
  %1186 = vmatmul.f32.gmra.mxu0 %v245
  %v1187 = vpop.f32.mrf.mxu0
  %v1188 = vadd.f32 0.0, %v1187
  %1189 = vmatmul.f32.gmra.mxu0 %v248
  %v1190 = vpop.f32.mrf.mxu0
  %v1191 = vadd.f32 0.0, %v1190
  %1192 = vmatmul.f32.gmra.mxu0 %v251
  %v1193 = vpop.f32.mrf.mxu0
  %v1194 = vadd.f32 0.0, %v1193
  %1195 = vmatmul.f32.gmra.mxu0 %v254
  %v1196 = vpop.f32.mrf.mxu0
  %v1197 = vadd.f32 0.0, %v1196
  %1198 = vmatmul.f32.gmra.mxu0 %v257
  %v1199 = vpop.f32.mrf.mxu0
  %v1200 = vadd.f32 0.0, %v1199
  %1201 = vdwg.mxu0
  %1202 = vmatpush.msra.mxu0 0.0
  %1203 = vmatpush.msra.mxu0 0.0
  %1204 = vmatpush.msra.mxu0 0.0
  %1205 = vmatpush.msra.mxu0 0.0
  %1206 = vmatpush.msra.mxu0 0.0
  %1207 = vmatpush.msra.mxu0 0.0
  %1208 = vmatpush.msra.mxu0 0.0
  %1209 = vmatpush.msra.mxu0 0.0
  %1210 = vmatpush.msra.mxu0 %v215
  %1211 = vmatpush.msra.mxu0 %v190
  %1212 = vmatpush.msra.mxu0 %v165
  %1213 = vmatpush.msra.mxu0 %v140
  %1214 = vmatpush.msra.mxu0 %v115
  %1215 = vmatpush.msra.mxu0 %v90
  %1216 = vmatpush.msra.mxu0 %v65
  %1217 = vmatpush.msra.mxu0 %v40
  %1218 = vmatmul.f32.gmra.mxu0 %v236
  %v1219 = vpop.f32.mrf.mxu0
  %v1220 = vadd.f32 0.0, %v1219
  %1221 = vmatmul.f32.gmra.mxu0 %v239
  %v1222 = vpop.f32.mrf.mxu0
  %v1223 = vadd.f32 0.0, %v1222
  %1224 = vmatmul.f32.gmra.mxu0 %v242
  %v1225 = vpop.f32.mrf.mxu0
  %v1226 = vadd.f32 0.0, %v1225
  %1227 = vmatmul.f32.gmra.mxu0 %v245
  %v1228 = vpop.f32.mrf.mxu0
  %v1229 = vadd.f32 0.0, %v1228
  %1230 = vmatmul.f32.gmra.mxu0 %v248
  %v1231 = vpop.f32.mrf.mxu0
  %v1232 = vadd.f32 0.0, %v1231
  %1233 = vmatmul.f32.gmra.mxu0 %v251
  %v1234 = vpop.f32.mrf.mxu0
  %v1235 = vadd.f32 0.0, %v1234
  %1236 = vmatmul.f32.gmra.mxu0 %v254
  %v1237 = vpop.f32.mrf.mxu0
  %v1238 = vadd.f32 0.0, %v1237
  %1239 = vmatmul.f32.gmra.mxu0 %v257
  %v1240 = vpop.f32.mrf.mxu0
  %v1241 = vadd.f32 0.0, %v1240
  %1242 = vdwg.mxu0
  %1243 = vmatpush.msra.mxu0 0.0
  %1244 = vmatpush.msra.mxu0 0.0
  %1245 = vmatpush.msra.mxu0 0.0
  %1246 = vmatpush.msra.mxu0 0.0
  %1247 = vmatpush.msra.mxu0 0.0
  %1248 = vmatpush.msra.mxu0 0.0
  %1249 = vmatpush.msra.mxu0 0.0
  %1250 = vmatpush.msra.mxu0 0.0
  %1251 = vmatpush.msra.mxu0 %v216
  %1252 = vmatpush.msra.mxu0 %v191
  %1253 = vmatpush.msra.mxu0 %v166
  %1254 = vmatpush.msra.mxu0 %v141
  %1255 = vmatpush.msra.mxu0 %v116
  %1256 = vmatpush.msra.mxu0 %v91
  %1257 = vmatpush.msra.mxu0 %v66
  %1258 = vmatpush.msra.mxu0 %v41
  %1259 = vmatmul.f32.gmra.mxu0 %v236
  %v1260 = vpop.f32.mrf.mxu0
  %v1261 = vadd.f32 0.0, %v1260
  %1262 = vmatmul.f32.gmra.mxu0 %v239
  %v1263 = vpop.f32.mrf.mxu0
  %v1264 = vadd.f32 0.0, %v1263
  %1265 = vmatmul.f32.gmra.mxu0 %v242
  %v1266 = vpop.f32.mrf.mxu0
  %v1267 = vadd.f32 0.0, %v1266
  %1268 = vmatmul.f32.gmra.mxu0 %v245
  %v1269 = vpop.f32.mrf.mxu0
  %v1270 = vadd.f32 0.0, %v1269
  %1271 = vmatmul.f32.gmra.mxu0 %v248
  %v1272 = vpop.f32.mrf.mxu0
  %v1273 = vadd.f32 0.0, %v1272
  %1274 = vmatmul.f32.gmra.mxu0 %v251
  %v1275 = vpop.f32.mrf.mxu0
  %v1276 = vadd.f32 0.0, %v1275
  %1277 = vmatmul.f32.gmra.mxu0 %v254
  %v1278 = vpop.f32.mrf.mxu0
  %v1279 = vadd.f32 0.0, %v1278
  %1280 = vmatmul.f32.gmra.mxu0 %v257
  %v1281 = vpop.f32.mrf.mxu0
  %v1282 = vadd.f32 0.0, %v1281
  %1283 = vdwg.mxu0
  %v1284 = vld [vmem:[%s3] ss:$2 sm:$0xff]
  %s1285 = scalar_lea.vmem %s3, 16
  %v1286 = vld [vmem:[%s1285] ss:$2 sm:$0xff]
  %s1287 = scalar_lea.vmem %s3, 32
  %v1288 = vld [vmem:[%s1287] ss:$2 sm:$0xff]
  %s1289 = scalar_lea.vmem %s3, 48
  %v1290 = vld [vmem:[%s1289] ss:$2 sm:$0x1]
  %vm1291 = vcmask 1048064
  %1292 = vrot.lane.b32.xlu0 %v277, 64
  %v1293 = vpop.permute.xlu0 %1292
  %v1294 = vsel %vm1291, %v1293, %v1261
  %1295 = vrot.lane.b32.xlu0 %v280, 64
  %v1296 = vpop.permute.xlu0 %1295
  %v1297 = vsel %vm1291, %v1296, %v1264
  %1298 = vrot.lane.b32.xlu0 %v283, 64
  %v1299 = vpop.permute.xlu0 %1298
  %v1300 = vsel %vm1291, %v1299, %v1267
  %1301 = vrot.lane.b32.xlu0 %v286, 64
  %v1302 = vpop.permute.xlu0 %1301
  %v1303 = vsel %vm1291, %v1302, %v1270
  %1304 = vrot.lane.b32.xlu0 %v289, 64
  %v1305 = vpop.permute.xlu0 %1304
  %v1306 = vsel %vm1291, %v1305, %v1273
  %1307 = vrot.lane.b32.xlu0 %v292, 64
  %v1308 = vpop.permute.xlu0 %1307
  %v1309 = vsel %vm1291, %v1308, %v1276
  %1310 = vrot.lane.b32.xlu0 %v295, 64
  %v1311 = vpop.permute.xlu0 %1310
  %v1312 = vsel %vm1291, %v1311, %v1279
  %1313 = vrot.lane.b32.xlu0 %v298, 64
  %v1314 = vpop.permute.xlu0 %1313
  %v1315 = vsel %vm1291, %v1314, %v1282
  %1316 = vrot.lane.b32.xlu0 %v318, 64
  %v1317 = vpop.permute.xlu0 %1316
  %1318 = vrot.lane.b32.xlu0 %v321, 64
  %v1319 = vpop.permute.xlu0 %1318
  %1320 = vrot.lane.b32.xlu0 %v324, 64
  %v1321 = vpop.permute.xlu0 %1320
  %1322 = vrot.lane.b32.xlu0 %v327, 64
  %v1323 = vpop.permute.xlu0 %1322
  %1324 = vrot.lane.b32.xlu0 %v330, 64
  %v1325 = vpop.permute.xlu0 %1324
  %1326 = vrot.lane.b32.xlu0 %v333, 64
  %v1327 = vpop.permute.xlu0 %1326
  %1328 = vrot.lane.b32.xlu0 %v336, 64
  %v1329 = vpop.permute.xlu0 %1328
  %1330 = vrot.lane.b32.xlu0 %v339, 64
  %v1331 = vpop.permute.xlu0 %1330
  %1332 = vrot.lane.b32.xlu0 %v359, 64
  %v1333 = vpop.permute.xlu0 %1332
  %1334 = vrot.lane.b32.xlu0 %v362, 64
  %v1335 = vpop.permute.xlu0 %1334
  %1336 = vrot.lane.b32.xlu0 %v365, 64
  %v1337 = vpop.permute.xlu0 %1336
  %1338 = vrot.lane.b32.xlu0 %v368, 64
  %v1339 = vpop.permute.xlu0 %1338
  %1340 = vrot.lane.b32.xlu0 %v371, 64
  %v1341 = vpop.permute.xlu0 %1340
  %1342 = vrot.lane.b32.xlu0 %v374, 64
  %v1343 = vpop.permute.xlu0 %1342
  %1344 = vrot.lane.b32.xlu0 %v377, 64
  %v1345 = vpop.permute.xlu0 %1344
  %1346 = vrot.lane.b32.xlu0 %v380, 64
  %v1347 = vpop.permute.xlu0 %1346
  %1348 = vrot.lane.b32.xlu0 %v400, 64
  %v1349 = vpop.permute.xlu0 %1348
  %1350 = vrot.lane.b32.xlu0 %v403, 64
  %v1351 = vpop.permute.xlu0 %1350
  %1352 = vrot.lane.b32.xlu0 %v406, 64
  %v1353 = vpop.permute.xlu0 %1352
  %1354 = vrot.lane.b32.xlu0 %v409, 64
  %v1355 = vpop.permute.xlu0 %1354
  %1356 = vrot.lane.b32.xlu0 %v412, 64
  %v1357 = vpop.permute.xlu0 %1356
  %1358 = vrot.lane.b32.xlu0 %v415, 64
  %v1359 = vpop.permute.xlu0 %1358
  %1360 = vrot.lane.b32.xlu0 %v418, 64
  %v1361 = vpop.permute.xlu0 %1360
  %1362 = vrot.lane.b32.xlu0 %v421, 64
  %v1363 = vpop.permute.xlu0 %1362
  %1364 = vrot.lane.b32.xlu0 %v441, 64
  %v1365 = vpop.permute.xlu0 %1364
  %1366 = vrot.lane.b32.xlu0 %v444, 64
  %v1367 = vpop.permute.xlu0 %1366
  %1368 = vrot.lane.b32.xlu0 %v447, 64
  %v1369 = vpop.permute.xlu0 %1368
  %1370 = vrot.lane.b32.xlu0 %v450, 64
  %v1371 = vpop.permute.xlu0 %1370
  %1372 = vrot.lane.b32.xlu0 %v453, 64
  %v1373 = vpop.permute.xlu0 %1372
  %1374 = vrot.lane.b32.xlu0 %v456, 64
  %v1375 = vpop.permute.xlu0 %1374
  %1376 = vrot.lane.b32.xlu0 %v459, 64
  %v1377 = vpop.permute.xlu0 %1376
  %1378 = vrot.lane.b32.xlu0 %v462, 64
  %v1379 = vpop.permute.xlu0 %1378
  %1380 = vrot.lane.b32.xlu0 %v482, 64
  %v1381 = vpop.permute.xlu0 %1380
  %1382 = vrot.lane.b32.xlu0 %v485, 64
  %v1383 = vpop.permute.xlu0 %1382
  %1384 = vrot.lane.b32.xlu0 %v488, 64
  %v1385 = vpop.permute.xlu0 %1384
  %1386 = vrot.lane.b32.xlu0 %v491, 64
  %v1387 = vpop.permute.xlu0 %1386
  %1388 = vrot.lane.b32.xlu0 %v494, 64
  %v1389 = vpop.permute.xlu0 %1388
  %1390 = vrot.lane.b32.xlu0 %v497, 64
  %v1391 = vpop.permute.xlu0 %1390
  %1392 = vrot.lane.b32.xlu0 %v500, 64
  %v1393 = vpop.permute.xlu0 %1392
  %1394 = vrot.lane.b32.xlu0 %v503, 64
  %v1395 = vpop.permute.xlu0 %1394
  %1396 = vrot.lane.b32.xlu0 %v523, 64
  %v1397 = vpop.permute.xlu0 %1396
  %1398 = vrot.lane.b32.xlu0 %v526, 64
  %v1399 = vpop.permute.xlu0 %1398
  %1400 = vrot.lane.b32.xlu0 %v529, 64
  %v1401 = vpop.permute.xlu0 %1400
  %1402 = vrot.lane.b32.xlu0 %v532, 64
  %v1403 = vpop.permute.xlu0 %1402
  %1404 = vrot.lane.b32.xlu0 %v535, 64
  %v1405 = vpop.permute.xlu0 %1404
  %1406 = vrot.lane.b32.xlu0 %v538, 64
  %v1407 = vpop.permute.xlu0 %1406
  %1408 = vrot.lane.b32.xlu0 %v541, 64
  %v1409 = vpop.permute.xlu0 %1408
  %1410 = vrot.lane.b32.xlu0 %v544, 64
  %v1411 = vpop.permute.xlu0 %1410
  %1412 = vrot.lane.b32.xlu0 %v564, 64
  %v1413 = vpop.permute.xlu0 %1412
  %1414 = vrot.lane.b32.xlu0 %v567, 64
  %v1415 = vpop.permute.xlu0 %1414
  %1416 = vrot.lane.b32.xlu0 %v570, 64
  %v1417 = vpop.permute.xlu0 %1416
  %1418 = vrot.lane.b32.xlu0 %v573, 64
  %v1419 = vpop.permute.xlu0 %1418
  %1420 = vrot.lane.b32.xlu0 %v576, 64
  %v1421 = vpop.permute.xlu0 %1420
  %1422 = vrot.lane.b32.xlu0 %v579, 64
  %v1423 = vpop.permute.xlu0 %1422
  %1424 = vrot.lane.b32.xlu0 %v582, 64
  %v1425 = vpop.permute.xlu0 %1424
  %1426 = vrot.lane.b32.xlu0 %v585, 64
  %v1427 = vpop.permute.xlu0 %1426
  %1428 = vrot.lane.b32.xlu0 %v605, 64
  %v1429 = vpop.permute.xlu0 %1428
  %1430 = vrot.lane.b32.xlu0 %v608, 64
  %v1431 = vpop.permute.xlu0 %1430
  %1432 = vrot.lane.b32.xlu0 %v611, 64
  %v1433 = vpop.permute.xlu0 %1432
  %1434 = vrot.lane.b32.xlu0 %v614, 64
  %v1435 = vpop.permute.xlu0 %1434
  %1436 = vrot.lane.b32.xlu0 %v617, 64
  %v1437 = vpop.permute.xlu0 %1436
  %1438 = vrot.lane.b32.xlu0 %v620, 64
  %v1439 = vpop.permute.xlu0 %1438
  %1440 = vrot.lane.b32.xlu0 %v623, 64
  %v1441 = vpop.permute.xlu0 %1440
  %1442 = vrot.lane.b32.xlu0 %v626, 64
  %v1443 = vpop.permute.xlu0 %1442
  %1444 = vrot.lane.b32.xlu0 %v646, 64
  %v1445 = vpop.permute.xlu0 %1444
  %1446 = vrot.lane.b32.xlu0 %v649, 64
  %v1447 = vpop.permute.xlu0 %1446
  %1448 = vrot.lane.b32.xlu0 %v652, 64
  %v1449 = vpop.permute.xlu0 %1448
  %1450 = vrot.lane.b32.xlu0 %v655, 64
  %v1451 = vpop.permute.xlu0 %1450
  %1452 = vrot.lane.b32.xlu0 %v658, 64
  %v1453 = vpop.permute.xlu0 %1452
  %1454 = vrot.lane.b32.xlu0 %v661, 64
  %v1455 = vpop.permute.xlu0 %1454
  %1456 = vrot.lane.b32.xlu0 %v664, 64
  %v1457 = vpop.permute.xlu0 %1456
  %1458 = vrot.lane.b32.xlu0 %v667, 64
  %v1459 = vpop.permute.xlu0 %1458
  %1460 = vrot.lane.b32.xlu0 %v687, 64
  %v1461 = vpop.permute.xlu0 %1460
  %1462 = vrot.lane.b32.xlu0 %v690, 64
  %v1463 = vpop.permute.xlu0 %1462
  %1464 = vrot.lane.b32.xlu0 %v693, 64
  %v1465 = vpop.permute.xlu0 %1464
  %1466 = vrot.lane.b32.xlu0 %v696, 64
  %v1467 = vpop.permute.xlu0 %1466
  %1468 = vrot.lane.b32.xlu0 %v699, 64
  %v1469 = vpop.permute.xlu0 %1468
  %1470 = vrot.lane.b32.xlu0 %v702, 64
  %v1471 = vpop.permute.xlu0 %1470
  %1472 = vrot.lane.b32.xlu0 %v705, 64
  %v1473 = vpop.permute.xlu0 %1472
  %1474 = vrot.lane.b32.xlu0 %v708, 64
  %v1475 = vpop.permute.xlu0 %1474
  %1476 = vrot.lane.b32.xlu0 %v728, 64
  %v1477 = vpop.permute.xlu0 %1476
  %1478 = vrot.lane.b32.xlu0 %v731, 64
  %v1479 = vpop.permute.xlu0 %1478
  %1480 = vrot.lane.b32.xlu0 %v734, 64
  %v1481 = vpop.permute.xlu0 %1480
  %1482 = vrot.lane.b32.xlu0 %v737, 64
  %v1483 = vpop.permute.xlu0 %1482
  %1484 = vrot.lane.b32.xlu0 %v740, 64
  %v1485 = vpop.permute.xlu0 %1484
  %1486 = vrot.lane.b32.xlu0 %v743, 64
  %v1487 = vpop.permute.xlu0 %1486
  %1488 = vrot.lane.b32.xlu0 %v746, 64
  %v1489 = vpop.permute.xlu0 %1488
  %1490 = vrot.lane.b32.xlu0 %v749, 64
  %v1491 = vpop.permute.xlu0 %1490
  %1492 = vrot.lane.b32.xlu0 %v769, 64
  %v1493 = vpop.permute.xlu0 %1492
  %1494 = vrot.lane.b32.xlu0 %v772, 64
  %v1495 = vpop.permute.xlu0 %1494
  %1496 = vrot.lane.b32.xlu0 %v775, 64
  %v1497 = vpop.permute.xlu0 %1496
  %1498 = vrot.lane.b32.xlu0 %v778, 64
  %v1499 = vpop.permute.xlu0 %1498
  %1500 = vrot.lane.b32.xlu0 %v781, 64
  %v1501 = vpop.permute.xlu0 %1500
  %1502 = vrot.lane.b32.xlu0 %v784, 64
  %v1503 = vpop.permute.xlu0 %1502
  %1504 = vrot.lane.b32.xlu0 %v787, 64
  %v1505 = vpop.permute.xlu0 %1504
  %1506 = vrot.lane.b32.xlu0 %v790, 64
  %v1507 = vpop.permute.xlu0 %1506
  %1508 = vrot.lane.b32.xlu0 %v810, 64
  %v1509 = vpop.permute.xlu0 %1508
  %1510 = vrot.lane.b32.xlu0 %v813, 64
  %v1511 = vpop.permute.xlu0 %1510
  %1512 = vrot.lane.b32.xlu0 %v816, 64
  %v1513 = vpop.permute.xlu0 %1512
  %1514 = vrot.lane.b32.xlu0 %v819, 64
  %v1515 = vpop.permute.xlu0 %1514
  %1516 = vrot.lane.b32.xlu0 %v822, 64
  %v1517 = vpop.permute.xlu0 %1516
  %1518 = vrot.lane.b32.xlu0 %v825, 64
  %v1519 = vpop.permute.xlu0 %1518
  %1520 = vrot.lane.b32.xlu0 %v828, 64
  %v1521 = vpop.permute.xlu0 %1520
  %1522 = vrot.lane.b32.xlu0 %v831, 64
  %v1523 = vpop.permute.xlu0 %1522
  %1524 = vrot.lane.b32.xlu0 %v851, 64
  %v1525 = vpop.permute.xlu0 %1524
  %1526 = vrot.lane.b32.xlu0 %v854, 64
  %v1527 = vpop.permute.xlu0 %1526
  %1528 = vrot.lane.b32.xlu0 %v857, 64
  %v1529 = vpop.permute.xlu0 %1528
  %1530 = vrot.lane.b32.xlu0 %v860, 64
  %v1531 = vpop.permute.xlu0 %1530
  %1532 = vrot.lane.b32.xlu0 %v863, 64
  %v1533 = vpop.permute.xlu0 %1532
  %1534 = vrot.lane.b32.xlu0 %v866, 64
  %v1535 = vpop.permute.xlu0 %1534
  %1536 = vrot.lane.b32.xlu0 %v869, 64
  %v1537 = vpop.permute.xlu0 %1536
  %1538 = vrot.lane.b32.xlu0 %v872, 64
  %v1539 = vpop.permute.xlu0 %1538
  %1540 = vrot.lane.b32.xlu0 %v892, 64
  %v1541 = vpop.permute.xlu0 %1540
  %1542 = vrot.lane.b32.xlu0 %v895, 64
  %v1543 = vpop.permute.xlu0 %1542
  %1544 = vrot.lane.b32.xlu0 %v898, 64
  %v1545 = vpop.permute.xlu0 %1544
  %1546 = vrot.lane.b32.xlu0 %v901, 64
  %v1547 = vpop.permute.xlu0 %1546
  %1548 = vrot.lane.b32.xlu0 %v904, 64
  %v1549 = vpop.permute.xlu0 %1548
  %1550 = vrot.lane.b32.xlu0 %v907, 64
  %v1551 = vpop.permute.xlu0 %1550
  %1552 = vrot.lane.b32.xlu0 %v910, 64
  %v1553 = vpop.permute.xlu0 %1552
  %1554 = vrot.lane.b32.xlu0 %v913, 64
  %v1555 = vpop.permute.xlu0 %1554
  %1556 = vrot.lane.b32.xlu0 %v933, 64
  %v1557 = vpop.permute.xlu0 %1556
  %1558 = vrot.lane.b32.xlu0 %v936, 64
  %v1559 = vpop.permute.xlu0 %1558
  %1560 = vrot.lane.b32.xlu0 %v939, 64
  %v1561 = vpop.permute.xlu0 %1560
  %1562 = vrot.lane.b32.xlu0 %v942, 64
  %v1563 = vpop.permute.xlu0 %1562
  %1564 = vrot.lane.b32.xlu0 %v945, 64
  %v1565 = vpop.permute.xlu0 %1564
  %1566 = vrot.lane.b32.xlu0 %v948, 64
  %v1567 = vpop.permute.xlu0 %1566
  %1568 = vrot.lane.b32.xlu0 %v951, 64
  %v1569 = vpop.permute.xlu0 %1568
  %1570 = vrot.lane.b32.xlu0 %v954, 64
  %v1571 = vpop.permute.xlu0 %1570
  %1572 = vrot.lane.b32.xlu0 %v974, 64
  %v1573 = vpop.permute.xlu0 %1572
  %1574 = vrot.lane.b32.xlu0 %v977, 64
  %v1575 = vpop.permute.xlu0 %1574
  %1576 = vrot.lane.b32.xlu0 %v980, 64
  %v1577 = vpop.permute.xlu0 %1576
  %1578 = vrot.lane.b32.xlu0 %v983, 64
  %v1579 = vpop.permute.xlu0 %1578
  %1580 = vrot.lane.b32.xlu0 %v986, 64
  %v1581 = vpop.permute.xlu0 %1580
  %1582 = vrot.lane.b32.xlu0 %v989, 64
  %v1583 = vpop.permute.xlu0 %1582
  %1584 = vrot.lane.b32.xlu0 %v992, 64
  %v1585 = vpop.permute.xlu0 %1584
  %1586 = vrot.lane.b32.xlu0 %v995, 64
  %v1587 = vpop.permute.xlu0 %1586
  %1588 = vrot.lane.b32.xlu0 %v1015, 64
  %v1589 = vpop.permute.xlu0 %1588
  %1590 = vrot.lane.b32.xlu0 %v1018, 64
  %v1591 = vpop.permute.xlu0 %1590
  %1592 = vrot.lane.b32.xlu0 %v1021, 64
  %v1593 = vpop.permute.xlu0 %1592
  %1594 = vrot.lane.b32.xlu0 %v1024, 64
  %v1595 = vpop.permute.xlu0 %1594
  %1596 = vrot.lane.b32.xlu0 %v1027, 64
  %v1597 = vpop.permute.xlu0 %1596
  %1598 = vrot.lane.b32.xlu0 %v1030, 64
  %v1599 = vpop.permute.xlu0 %1598
  %1600 = vrot.lane.b32.xlu0 %v1033, 64
  %v1601 = vpop.permute.xlu0 %1600
  %1602 = vrot.lane.b32.xlu0 %v1036, 64
  %v1603 = vpop.permute.xlu0 %1602
  %1604 = vrot.lane.b32.xlu0 %v1056, 64
  %v1605 = vpop.permute.xlu0 %1604
  %1606 = vrot.lane.b32.xlu0 %v1059, 64
  %v1607 = vpop.permute.xlu0 %1606
  %1608 = vrot.lane.b32.xlu0 %v1062, 64
  %v1609 = vpop.permute.xlu0 %1608
  %1610 = vrot.lane.b32.xlu0 %v1065, 64
  %v1611 = vpop.permute.xlu0 %1610
  %1612 = vrot.lane.b32.xlu0 %v1068, 64
  %v1613 = vpop.permute.xlu0 %1612
  %1614 = vrot.lane.b32.xlu0 %v1071, 64
  %v1615 = vpop.permute.xlu0 %1614
  %1616 = vrot.lane.b32.xlu0 %v1074, 64
  %v1617 = vpop.permute.xlu0 %1616
  %1618 = vrot.lane.b32.xlu0 %v1077, 64
  %v1619 = vpop.permute.xlu0 %1618
  %1620 = vrot.lane.b32.xlu0 %v1097, 64
  %v1621 = vpop.permute.xlu0 %1620
  %1622 = vrot.lane.b32.xlu0 %v1100, 64
  %v1623 = vpop.permute.xlu0 %1622
  %1624 = vrot.lane.b32.xlu0 %v1103, 64
  %v1625 = vpop.permute.xlu0 %1624
  %1626 = vrot.lane.b32.xlu0 %v1106, 64
  %v1627 = vpop.permute.xlu0 %1626
  %1628 = vrot.lane.b32.xlu0 %v1109, 64
  %v1629 = vpop.permute.xlu0 %1628
  %1630 = vrot.lane.b32.xlu0 %v1112, 64
  %v1631 = vpop.permute.xlu0 %1630
  %1632 = vrot.lane.b32.xlu0 %v1115, 64
  %v1633 = vpop.permute.xlu0 %1632
  %1634 = vrot.lane.b32.xlu0 %v1118, 64
  %v1635 = vpop.permute.xlu0 %1634
  %1636 = vrot.lane.b32.xlu0 %v1138, 64
  %v1637 = vpop.permute.xlu0 %1636
  %1638 = vrot.lane.b32.xlu0 %v1141, 64
  %v1639 = vpop.permute.xlu0 %1638
  %1640 = vrot.lane.b32.xlu0 %v1144, 64
  %v1641 = vpop.permute.xlu0 %1640
  %1642 = vrot.lane.b32.xlu0 %v1147, 64
  %v1643 = vpop.permute.xlu0 %1642
  %1644 = vrot.lane.b32.xlu0 %v1150, 64
  %v1645 = vpop.permute.xlu0 %1644
  %1646 = vrot.lane.b32.xlu0 %v1153, 64
  %v1647 = vpop.permute.xlu0 %1646
  %1648 = vrot.lane.b32.xlu0 %v1156, 64
  %v1649 = vpop.permute.xlu0 %1648
  %1650 = vrot.lane.b32.xlu0 %v1159, 64
  %v1651 = vpop.permute.xlu0 %1650
  %1652 = vrot.lane.b32.xlu0 %v1179, 64
  %v1653 = vpop.permute.xlu0 %1652
  %1654 = vrot.lane.b32.xlu0 %v1182, 64
  %v1655 = vpop.permute.xlu0 %1654
  %1656 = vrot.lane.b32.xlu0 %v1185, 64
  %v1657 = vpop.permute.xlu0 %1656
  %1658 = vrot.lane.b32.xlu0 %v1188, 64
  %v1659 = vpop.permute.xlu0 %1658
  %1660 = vrot.lane.b32.xlu0 %v1191, 64
  %v1661 = vpop.permute.xlu0 %1660
  %1662 = vrot.lane.b32.xlu0 %v1194, 64
  %v1663 = vpop.permute.xlu0 %1662
  %1664 = vrot.lane.b32.xlu0 %v1197, 64
  %v1665 = vpop.permute.xlu0 %1664
  %1666 = vrot.lane.b32.xlu0 %v1200, 64
  %v1667 = vpop.permute.xlu0 %1666
  %1668 = vrot.lane.b32.xlu0 %v1220, 64
  %v1669 = vpop.permute.xlu0 %1668
  %1670 = vrot.lane.b32.xlu0 %v1223, 64
  %v1671 = vpop.permute.xlu0 %1670
  %1672 = vrot.lane.b32.xlu0 %v1226, 64
  %v1673 = vpop.permute.xlu0 %1672
  %1674 = vrot.lane.b32.xlu0 %v1229, 64
  %v1675 = vpop.permute.xlu0 %1674
  %1676 = vrot.lane.b32.xlu0 %v1232, 64
  %v1677 = vpop.permute.xlu0 %1676
  %1678 = vrot.lane.b32.xlu0 %v1235, 64
  %v1679 = vpop.permute.xlu0 %1678
  %1680 = vrot.lane.b32.xlu0 %v1238, 64
  %v1681 = vpop.permute.xlu0 %1680
  %1682 = vrot.lane.b32.xlu0 %v1241, 64
  %v1683 = vpop.permute.xlu0 %1682
  %1684 = vrot.lane.b32.xlu0 %v1294, 64
  %v1685 = vpop.permute.xlu0 %1684
  %1686 = vrot.lane.b32.xlu0 %v1297, 64
  %v1687 = vpop.permute.xlu0 %1686
  %1688 = vrot.lane.b32.xlu0 %v1300, 64
  %v1689 = vpop.permute.xlu0 %1688
  %1690 = vrot.lane.b32.xlu0 %v1303, 64
  %v1691 = vpop.permute.xlu0 %1690
  %1692 = vrot.lane.b32.xlu0 %v1306, 64
  %v1693 = vpop.permute.xlu0 %1692
  %1694 = vrot.lane.b32.xlu0 %v1309, 64
  %v1695 = vpop.permute.xlu0 %1694
  %1696 = vrot.lane.b32.xlu0 %v1312, 64
  %v1697 = vpop.permute.xlu0 %1696
  %1698 = vrot.lane.b32.xlu0 %v1315, 64
  %v1699 = vpop.permute.xlu0 %1698
  %v1700 = vsel %vm1291, %v1317, %v1293
  %v1701 = vsel %vm1291, %v1319, %v1296
  %v1702 = vsel %vm1291, %v1321, %v1299
  %v1703 = vsel %vm1291, %v1323, %v1302
  %v1704 = vsel %vm1291, %v1325, %v1305
  %v1705 = vsel %vm1291, %v1327, %v1308
  %v1706 = vsel %vm1291, %v1329, %v1311
  %v1707 = vsel %vm1291, %v1331, %v1314
  %v1708 = vsel %vm1291, %v1333, %v1317
  %v1709 = vsel %vm1291, %v1335, %v1319
  %v1710 = vsel %vm1291, %v1337, %v1321
  %v1711 = vsel %vm1291, %v1339, %v1323
  %v1712 = vsel %vm1291, %v1341, %v1325
  %v1713 = vsel %vm1291, %v1343, %v1327
  %v1714 = vsel %vm1291, %v1345, %v1329
  %v1715 = vsel %vm1291, %v1347, %v1331
  %v1716 = vsel %vm1291, %v1349, %v1333
  %v1717 = vsel %vm1291, %v1351, %v1335
  %v1718 = vsel %vm1291, %v1353, %v1337
  %v1719 = vsel %vm1291, %v1355, %v1339
  %v1720 = vsel %vm1291, %v1357, %v1341
  %v1721 = vsel %vm1291, %v1359, %v1343
  %v1722 = vsel %vm1291, %v1361, %v1345
  %v1723 = vsel %vm1291, %v1363, %v1347
  %v1724 = vsel %vm1291, %v1365, %v1349
  %v1725 = vsel %vm1291, %v1367, %v1351
  %v1726 = vsel %vm1291, %v1369, %v1353
  %v1727 = vsel %vm1291, %v1371, %v1355
  %v1728 = vsel %vm1291, %v1373, %v1357
  %v1729 = vsel %vm1291, %v1375, %v1359
  %v1730 = vsel %vm1291, %v1377, %v1361
  %v1731 = vsel %vm1291, %v1379, %v1363
  %v1732 = vsel %vm1291, %v1381, %v1365
  %v1733 = vsel %vm1291, %v1383, %v1367
  %v1734 = vsel %vm1291, %v1385, %v1369
  %v1735 = vsel %vm1291, %v1387, %v1371
  %v1736 = vsel %vm1291, %v1389, %v1373
  %v1737 = vsel %vm1291, %v1391, %v1375
  %v1738 = vsel %vm1291, %v1393, %v1377
  %v1739 = vsel %vm1291, %v1395, %v1379
  %v1740 = vsel %vm1291, %v1397, %v1381
  %v1741 = vsel %vm1291, %v1399, %v1383
  %v1742 = vsel %vm1291, %v1401, %v1385
  %v1743 = vsel %vm1291, %v1403, %v1387
  %v1744 = vsel %vm1291, %v1405, %v1389
  %v1745 = vsel %vm1291, %v1407, %v1391
  %v1746 = vsel %vm1291, %v1409, %v1393
  %v1747 = vsel %vm1291, %v1411, %v1395
  %v1748 = vsel %vm1291, %v1413, %v1397
  %v1749 = vsel %vm1291, %v1415, %v1399
  %v1750 = vsel %vm1291, %v1417, %v1401
  %v1751 = vsel %vm1291, %v1419, %v1403
  %v1752 = vsel %vm1291, %v1421, %v1405
  %v1753 = vsel %vm1291, %v1423, %v1407
  %v1754 = vsel %vm1291, %v1425, %v1409
  %v1755 = vsel %vm1291, %v1427, %v1411
  %v1756 = vsel %vm1291, %v1429, %v1413
  %v1757 = vsel %vm1291, %v1431, %v1415
  %v1758 = vsel %vm1291, %v1433, %v1417
  %v1759 = vsel %vm1291, %v1435, %v1419
  %v1760 = vsel %vm1291, %v1437, %v1421
  %v1761 = vsel %vm1291, %v1439, %v1423
  %v1762 = vsel %vm1291, %v1441, %v1425
  %v1763 = vsel %vm1291, %v1443, %v1427
  %v1764 = vsel %vm1291, %v1445, %v1429
  %v1765 = vsel %vm1291, %v1447, %v1431
  %v1766 = vsel %vm1291, %v1449, %v1433
  %v1767 = vsel %vm1291, %v1451, %v1435
  %v1768 = vsel %vm1291, %v1453, %v1437
  %v1769 = vsel %vm1291, %v1455, %v1439
  %v1770 = vsel %vm1291, %v1457, %v1441
  %v1771 = vsel %vm1291, %v1459, %v1443
  %v1772 = vsel %vm1291, %v1461, %v1445
  %v1773 = vsel %vm1291, %v1463, %v1447
  %v1774 = vsel %vm1291, %v1465, %v1449
  %v1775 = vsel %vm1291, %v1467, %v1451
  %v1776 = vsel %vm1291, %v1469, %v1453
  %v1777 = vsel %vm1291, %v1471, %v1455
  %v1778 = vsel %vm1291, %v1473, %v1457
  %v1779 = vsel %vm1291, %v1475, %v1459
  %v1780 = vsel %vm1291, %v1477, %v1461
  %v1781 = vsel %vm1291, %v1479, %v1463
  %v1782 = vsel %vm1291, %v1481, %v1465
  %v1783 = vsel %vm1291, %v1483, %v1467
  %v1784 = vsel %vm1291, %v1485, %v1469
  %v1785 = vsel %vm1291, %v1487, %v1471
  %v1786 = vsel %vm1291, %v1489, %v1473
  %v1787 = vsel %vm1291, %v1491, %v1475
  %v1788 = vsel %vm1291, %v1493, %v1477
  %v1789 = vsel %vm1291, %v1495, %v1479
  %v1790 = vsel %vm1291, %v1497, %v1481
  %v1791 = vsel %vm1291, %v1499, %v1483
  %v1792 = vsel %vm1291, %v1501, %v1485
  %v1793 = vsel %vm1291, %v1503, %v1487
  %v1794 = vsel %vm1291, %v1505, %v1489
  %v1795 = vsel %vm1291, %v1507, %v1491
  %v1796 = vsel %vm1291, %v1509, %v1493
  %v1797 = vsel %vm1291, %v1511, %v1495
  %v1798 = vsel %vm1291, %v1513, %v1497
  %v1799 = vsel %vm1291, %v1515, %v1499
  %v1800 = vsel %vm1291, %v1517, %v1501
  %v1801 = vsel %vm1291, %v1519, %v1503
  %v1802 = vsel %vm1291, %v1521, %v1505
  %v1803 = vsel %vm1291, %v1523, %v1507
  %v1804 = vsel %vm1291, %v1525, %v1509
  %v1805 = vsel %vm1291, %v1527, %v1511
  %v1806 = vsel %vm1291, %v1529, %v1513
  %v1807 = vsel %vm1291, %v1531, %v1515
  %v1808 = vsel %vm1291, %v1533, %v1517
  %v1809 = vsel %vm1291, %v1535, %v1519
  %v1810 = vsel %vm1291, %v1537, %v1521
  %v1811 = vsel %vm1291, %v1539, %v1523
  %v1812 = vsel %vm1291, %v1541, %v1525
  %v1813 = vsel %vm1291, %v1543, %v1527
  %v1814 = vsel %vm1291, %v1545, %v1529
  %v1815 = vsel %vm1291, %v1547, %v1531
  %v1816 = vsel %vm1291, %v1549, %v1533
  %v1817 = vsel %vm1291, %v1551, %v1535
  %v1818 = vsel %vm1291, %v1553, %v1537
  %v1819 = vsel %vm1291, %v1555, %v1539
  %v1820 = vsel %vm1291, %v1557, %v1541
  %v1821 = vsel %vm1291, %v1559, %v1543
  %v1822 = vsel %vm1291, %v1561, %v1545
  %v1823 = vsel %vm1291, %v1563, %v1547
  %v1824 = vsel %vm1291, %v1565, %v1549
  %v1825 = vsel %vm1291, %v1567, %v1551
  %v1826 = vsel %vm1291, %v1569, %v1553
  %v1827 = vsel %vm1291, %v1571, %v1555
  %v1828 = vsel %vm1291, %v1573, %v1557
  %v1829 = vsel %vm1291, %v1575, %v1559
  %v1830 = vsel %vm1291, %v1577, %v1561
  %v1831 = vsel %vm1291, %v1579, %v1563
  %v1832 = vsel %vm1291, %v1581, %v1565
  %v1833 = vsel %vm1291, %v1583, %v1567
  %v1834 = vsel %vm1291, %v1585, %v1569
  %v1835 = vsel %vm1291, %v1587, %v1571
  %v1836 = vsel %vm1291, %v1589, %v1573
  %v1837 = vsel %vm1291, %v1591, %v1575
  %v1838 = vsel %vm1291, %v1593, %v1577
  %v1839 = vsel %vm1291, %v1595, %v1579
  %v1840 = vsel %vm1291, %v1597, %v1581
  %v1841 = vsel %vm1291, %v1599, %v1583
  %v1842 = vsel %vm1291, %v1601, %v1585
  %v1843 = vsel %vm1291, %v1603, %v1587
  %v1844 = vsel %vm1291, %v1605, %v1589
  %v1845 = vsel %vm1291, %v1607, %v1591
  %v1846 = vsel %vm1291, %v1609, %v1593
  %v1847 = vsel %vm1291, %v1611, %v1595
  %v1848 = vsel %vm1291, %v1613, %v1597
  %v1849 = vsel %vm1291, %v1615, %v1599
  %v1850 = vsel %vm1291, %v1617, %v1601
  %v1851 = vsel %vm1291, %v1619, %v1603
  %v1852 = vsel %vm1291, %v1621, %v1605
  %v1853 = vsel %vm1291, %v1623, %v1607
  %v1854 = vsel %vm1291, %v1625, %v1609
  %v1855 = vsel %vm1291, %v1627, %v1611
  %v1856 = vsel %vm1291, %v1629, %v1613
  %v1857 = vsel %vm1291, %v1631, %v1615
  %v1858 = vsel %vm1291, %v1633, %v1617
  %v1859 = vsel %vm1291, %v1635, %v1619
  %v1860 = vsel %vm1291, %v1637, %v1621
  %v1861 = vsel %vm1291, %v1639, %v1623
  %v1862 = vsel %vm1291, %v1641, %v1625
  %v1863 = vsel %vm1291, %v1643, %v1627
  %v1864 = vsel %vm1291, %v1645, %v1629
  %v1865 = vsel %vm1291, %v1647, %v1631
  %v1866 = vsel %vm1291, %v1649, %v1633
  %v1867 = vsel %vm1291, %v1651, %v1635
  %v1868 = vsel %vm1291, %v1653, %v1637
  %v1869 = vsel %vm1291, %v1655, %v1639
  %v1870 = vsel %vm1291, %v1657, %v1641
  %v1871 = vsel %vm1291, %v1659, %v1643
  %v1872 = vsel %vm1291, %v1661, %v1645
  %v1873 = vsel %vm1291, %v1663, %v1647
  %v1874 = vsel %vm1291, %v1665, %v1649
  %v1875 = vsel %vm1291, %v1667, %v1651
  %v1876 = vsel %vm1291, %v1669, %v1653
  %v1877 = vsel %vm1291, %v1671, %v1655
  %v1878 = vsel %vm1291, %v1673, %v1657
  %v1879 = vsel %vm1291, %v1675, %v1659
  %v1880 = vsel %vm1291, %v1677, %v1661
  %v1881 = vsel %vm1291, %v1679, %v1663
  %v1882 = vsel %vm1291, %v1681, %v1665
  %v1883 = vsel %vm1291, %v1683, %v1667
  %v1884 = vsel %vm1291, %v1685, %v1669
  %v1885 = vsel %vm1291, %v1687, %v1671
  %v1886 = vsel %vm1291, %v1689, %v1673
  %v1887 = vsel %vm1291, %v1691, %v1675
  %v1888 = vsel %vm1291, %v1693, %v1677
  %v1889 = vsel %vm1291, %v1695, %v1679
  %v1890 = vsel %vm1291, %v1697, %v1681
  %v1891 = vsel %vm1291, %v1699, %v1683
  %v1896 = vperm.slane %v1284, 0
  %v1897 = vperm.slane %v1284, 1
  %v1898 = vperm.slane %v1284, 2
  %v1899 = vperm.slane %v1284, 3
  %v1900 = vperm.slane %v1284, 4
  %v1901 = vperm.slane %v1284, 5
  %v1902 = vperm.slane %v1284, 6
  %v1903 = vperm.slane %v1284, 7
  %v1904 = vperm.slane %v1286, 0
  %v1905 = vperm.slane %v1286, 1
  %v1906 = vperm.slane %v1286, 2
  %v1907 = vperm.slane %v1286, 3
  %v1908 = vperm.slane %v1286, 4
  %v1909 = vperm.slane %v1286, 5
  %v1910 = vperm.slane %v1286, 6
  %v1911 = vperm.slane %v1286, 7
  %v1912 = vperm.slane %v1288, 0
  %v1913 = vperm.slane %v1288, 1
  %v1914 = vperm.slane %v1288, 2
  %v1915 = vperm.slane %v1288, 3
  %v1916 = vperm.slane %v1288, 4
  %v1917 = vperm.slane %v1288, 5
  %v1918 = vperm.slane %v1288, 6
  %v1919 = vperm.slane %v1288, 7
  %v1920 = vperm.slane %v1290, 0
  %2146 = vrot.lane.b32.xlu0 %v1294, 65
  %v2147 = vpop.permute.xlu0 %2146
  %2148 = vrot.lane.b32.xlu0 %v1700, 65
  %v2149 = vpop.permute.xlu0 %2148
  %2150 = vrot.lane.b32.xlu0 %v1708, 65
  %v2151 = vpop.permute.xlu0 %2150
  %2152 = vrot.lane.b32.xlu0 %v1716, 65
  %v2153 = vpop.permute.xlu0 %2152
  %2154 = vrot.lane.b32.xlu0 %v1724, 65
  %v2155 = vpop.permute.xlu0 %2154
  %2156 = vrot.lane.b32.xlu0 %v1732, 65
  %v2157 = vpop.permute.xlu0 %2156
  %2158 = vrot.lane.b32.xlu0 %v1740, 65
  %v2159 = vpop.permute.xlu0 %2158
  %2160 = vrot.lane.b32.xlu0 %v1748, 65
  %v2161 = vpop.permute.xlu0 %2160
  %2162 = vrot.lane.b32.xlu0 %v1756, 65
  %v2163 = vpop.permute.xlu0 %2162
  %2164 = vrot.lane.b32.xlu0 %v1764, 65
  %v2165 = vpop.permute.xlu0 %2164
  %2166 = vrot.lane.b32.xlu0 %v1772, 65
  %v2167 = vpop.permute.xlu0 %2166
  %2168 = vrot.lane.b32.xlu0 %v1780, 65
  %v2169 = vpop.permute.xlu0 %2168
  %2170 = vrot.lane.b32.xlu0 %v1788, 65
  %v2171 = vpop.permute.xlu0 %2170
  %2172 = vrot.lane.b32.xlu0 %v1796, 65
  %v2173 = vpop.permute.xlu0 %2172
  %2174 = vrot.lane.b32.xlu0 %v1804, 65
  %v2175 = vpop.permute.xlu0 %2174
  %2176 = vrot.lane.b32.xlu0 %v1812, 65
  %v2177 = vpop.permute.xlu0 %2176
  %2178 = vrot.lane.b32.xlu0 %v1820, 65
  %v2179 = vpop.permute.xlu0 %2178
  %2180 = vrot.lane.b32.xlu0 %v1828, 65
  %v2181 = vpop.permute.xlu0 %2180
  %2182 = vrot.lane.b32.xlu0 %v1836, 65
  %v2183 = vpop.permute.xlu0 %2182
  %2184 = vrot.lane.b32.xlu0 %v1844, 65
  %v2185 = vpop.permute.xlu0 %2184
  %2186 = vrot.lane.b32.xlu0 %v1852, 65
  %v2187 = vpop.permute.xlu0 %2186
  %2188 = vrot.lane.b32.xlu0 %v1860, 65
  %v2189 = vpop.permute.xlu0 %2188
  %2190 = vrot.lane.b32.xlu0 %v1868, 65
  %v2191 = vpop.permute.xlu0 %2190
  %2192 = vrot.lane.b32.xlu0 %v1876, 65
  %v2193 = vpop.permute.xlu0 %2192
  %2194 = vrot.lane.b32.xlu0 %v1884, 65
  %v2195 = vpop.permute.xlu0 %2194
  %2196 = vrot.lane.b32.xlu0 %v1297, 65
  %v2197 = vpop.permute.xlu0 %2196
  %2198 = vrot.lane.b32.xlu0 %v1701, 65
  %v2199 = vpop.permute.xlu0 %2198
  %2200 = vrot.lane.b32.xlu0 %v1709, 65
  %v2201 = vpop.permute.xlu0 %2200
  %2202 = vrot.lane.b32.xlu0 %v1717, 65
  %v2203 = vpop.permute.xlu0 %2202
  %2204 = vrot.lane.b32.xlu0 %v1725, 65
  %v2205 = vpop.permute.xlu0 %2204
  %2206 = vrot.lane.b32.xlu0 %v1733, 65
  %v2207 = vpop.permute.xlu0 %2206
  %2208 = vrot.lane.b32.xlu0 %v1741, 65
  %v2209 = vpop.permute.xlu0 %2208
  %2210 = vrot.lane.b32.xlu0 %v1749, 65
  %v2211 = vpop.permute.xlu0 %2210
  %2212 = vrot.lane.b32.xlu0 %v1757, 65
  %v2213 = vpop.permute.xlu0 %2212
  %2214 = vrot.lane.b32.xlu0 %v1765, 65
  %v2215 = vpop.permute.xlu0 %2214
  %2216 = vrot.lane.b32.xlu0 %v1773, 65
  %v2217 = vpop.permute.xlu0 %2216
  %2218 = vrot.lane.b32.xlu0 %v1781, 65
  %v2219 = vpop.permute.xlu0 %2218
  %2220 = vrot.lane.b32.xlu0 %v1789, 65
  %v2221 = vpop.permute.xlu0 %2220
  %2222 = vrot.lane.b32.xlu0 %v1797, 65
  %v2223 = vpop.permute.xlu0 %2222
  %2224 = vrot.lane.b32.xlu0 %v1805, 65
  %v2225 = vpop.permute.xlu0 %2224
  %2226 = vrot.lane.b32.xlu0 %v1813, 65
  %v2227 = vpop.permute.xlu0 %2226
  %2228 = vrot.lane.b32.xlu0 %v1821, 65
  %v2229 = vpop.permute.xlu0 %2228
  %2230 = vrot.lane.b32.xlu0 %v1829, 65
  %v2231 = vpop.permute.xlu0 %2230
  %2232 = vrot.lane.b32.xlu0 %v1837, 65
  %v2233 = vpop.permute.xlu0 %2232
  %2234 = vrot.lane.b32.xlu0 %v1845, 65
  %v2235 = vpop.permute.xlu0 %2234
  %2236 = vrot.lane.b32.xlu0 %v1853, 65
  %v2237 = vpop.permute.xlu0 %2236
  %2238 = vrot.lane.b32.xlu0 %v1861, 65
  %v2239 = vpop.permute.xlu0 %2238
  %2240 = vrot.lane.b32.xlu0 %v1869, 65
  %v2241 = vpop.permute.xlu0 %2240
  %2242 = vrot.lane.b32.xlu0 %v1877, 65
  %v2243 = vpop.permute.xlu0 %2242
  %2244 = vrot.lane.b32.xlu0 %v1885, 65
  %v2245 = vpop.permute.xlu0 %2244
  %2246 = vrot.lane.b32.xlu0 %v1300, 65
  %v2247 = vpop.permute.xlu0 %2246
  %2248 = vrot.lane.b32.xlu0 %v1702, 65
  %v2249 = vpop.permute.xlu0 %2248
  %2250 = vrot.lane.b32.xlu0 %v1710, 65
  %v2251 = vpop.permute.xlu0 %2250
  %2252 = vrot.lane.b32.xlu0 %v1718, 65
  %v2253 = vpop.permute.xlu0 %2252
  %2254 = vrot.lane.b32.xlu0 %v1726, 65
  %v2255 = vpop.permute.xlu0 %2254
  %2256 = vrot.lane.b32.xlu0 %v1734, 65
  %v2257 = vpop.permute.xlu0 %2256
  %2258 = vrot.lane.b32.xlu0 %v1742, 65
  %v2259 = vpop.permute.xlu0 %2258
  %2260 = vrot.lane.b32.xlu0 %v1750, 65
  %v2261 = vpop.permute.xlu0 %2260
  %2262 = vrot.lane.b32.xlu0 %v1758, 65
  %v2263 = vpop.permute.xlu0 %2262
  %2264 = vrot.lane.b32.xlu0 %v1766, 65
  %v2265 = vpop.permute.xlu0 %2264
  %2266 = vrot.lane.b32.xlu0 %v1774, 65
  %v2267 = vpop.permute.xlu0 %2266
  %2268 = vrot.lane.b32.xlu0 %v1782, 65
  %v2269 = vpop.permute.xlu0 %2268
  %2270 = vrot.lane.b32.xlu0 %v1790, 65
  %v2271 = vpop.permute.xlu0 %2270
  %2272 = vrot.lane.b32.xlu0 %v1798, 65
  %v2273 = vpop.permute.xlu0 %2272
  %2274 = vrot.lane.b32.xlu0 %v1806, 65
  %v2275 = vpop.permute.xlu0 %2274
  %2276 = vrot.lane.b32.xlu0 %v1814, 65
  %v2277 = vpop.permute.xlu0 %2276
  %2278 = vrot.lane.b32.xlu0 %v1822, 65
  %v2279 = vpop.permute.xlu0 %2278
  %2280 = vrot.lane.b32.xlu0 %v1830, 65
  %v2281 = vpop.permute.xlu0 %2280
  %2282 = vrot.lane.b32.xlu0 %v1838, 65
  %v2283 = vpop.permute.xlu0 %2282
  %2284 = vrot.lane.b32.xlu0 %v1846, 65
  %v2285 = vpop.permute.xlu0 %2284
  %2286 = vrot.lane.b32.xlu0 %v1854, 65
  %v2287 = vpop.permute.xlu0 %2286
  %2288 = vrot.lane.b32.xlu0 %v1862, 65
  %v2289 = vpop.permute.xlu0 %2288
  %2290 = vrot.lane.b32.xlu0 %v1870, 65
  %v2291 = vpop.permute.xlu0 %2290
  %2292 = vrot.lane.b32.xlu0 %v1878, 65
  %v2293 = vpop.permute.xlu0 %2292
  %2294 = vrot.lane.b32.xlu0 %v1886, 65
  %v2295 = vpop.permute.xlu0 %2294
  %2296 = vrot.lane.b32.xlu0 %v1303, 65
  %v2297 = vpop.permute.xlu0 %2296
  %2298 = vrot.lane.b32.xlu0 %v1703, 65
  %v2299 = vpop.permute.xlu0 %2298
  %2300 = vrot.lane.b32.xlu0 %v1711, 65
  %v2301 = vpop.permute.xlu0 %2300
  %2302 = vrot.lane.b32.xlu0 %v1719, 65
  %v2303 = vpop.permute.xlu0 %2302
  %2304 = vrot.lane.b32.xlu0 %v1727, 65
  %v2305 = vpop.permute.xlu0 %2304
  %2306 = vrot.lane.b32.xlu0 %v1735, 65
  %v2307 = vpop.permute.xlu0 %2306
  %2308 = vrot.lane.b32.xlu0 %v1743, 65
  %v2309 = vpop.permute.xlu0 %2308
  %2310 = vrot.lane.b32.xlu0 %v1751, 65
  %v2311 = vpop.permute.xlu0 %2310
  %2312 = vrot.lane.b32.xlu0 %v1759, 65
  %v2313 = vpop.permute.xlu0 %2312
  %2314 = vrot.lane.b32.xlu0 %v1767, 65
  %v2315 = vpop.permute.xlu0 %2314
  %2316 = vrot.lane.b32.xlu0 %v1775, 65
  %v2317 = vpop.permute.xlu0 %2316
  %2318 = vrot.lane.b32.xlu0 %v1783, 65
  %v2319 = vpop.permute.xlu0 %2318
  %2320 = vrot.lane.b32.xlu0 %v1791, 65
  %v2321 = vpop.permute.xlu0 %2320
  %2322 = vrot.lane.b32.xlu0 %v1799, 65
  %v2323 = vpop.permute.xlu0 %2322
  %2324 = vrot.lane.b32.xlu0 %v1807, 65
  %v2325 = vpop.permute.xlu0 %2324
  %2326 = vrot.lane.b32.xlu0 %v1815, 65
  %v2327 = vpop.permute.xlu0 %2326
  %2328 = vrot.lane.b32.xlu0 %v1823, 65
  %v2329 = vpop.permute.xlu0 %2328
  %2330 = vrot.lane.b32.xlu0 %v1831, 65
  %v2331 = vpop.permute.xlu0 %2330
  %2332 = vrot.lane.b32.xlu0 %v1839, 65
  %v2333 = vpop.permute.xlu0 %2332
  %2334 = vrot.lane.b32.xlu0 %v1847, 65
  %v2335 = vpop.permute.xlu0 %2334
  %2336 = vrot.lane.b32.xlu0 %v1855, 65
  %v2337 = vpop.permute.xlu0 %2336
  %2338 = vrot.lane.b32.xlu0 %v1863, 65
  %v2339 = vpop.permute.xlu0 %2338
  %2340 = vrot.lane.b32.xlu0 %v1871, 65
  %v2341 = vpop.permute.xlu0 %2340
  %2342 = vrot.lane.b32.xlu0 %v1879, 65
  %v2343 = vpop.permute.xlu0 %2342
  %2344 = vrot.lane.b32.xlu0 %v1887, 65
  %v2345 = vpop.permute.xlu0 %2344
  %2346 = vrot.lane.b32.xlu0 %v1306, 65
  %v2347 = vpop.permute.xlu0 %2346
  %2348 = vrot.lane.b32.xlu0 %v1704, 65
  %v2349 = vpop.permute.xlu0 %2348
  %2350 = vrot.lane.b32.xlu0 %v1712, 65
  %v2351 = vpop.permute.xlu0 %2350
  %2352 = vrot.lane.b32.xlu0 %v1720, 65
  %v2353 = vpop.permute.xlu0 %2352
  %2354 = vrot.lane.b32.xlu0 %v1728, 65
  %v2355 = vpop.permute.xlu0 %2354
  %2356 = vrot.lane.b32.xlu0 %v1736, 65
  %v2357 = vpop.permute.xlu0 %2356
  %2358 = vrot.lane.b32.xlu0 %v1744, 65
  %v2359 = vpop.permute.xlu0 %2358
  %2360 = vrot.lane.b32.xlu0 %v1752, 65
  %v2361 = vpop.permute.xlu0 %2360
  %2362 = vrot.lane.b32.xlu0 %v1760, 65
  %v2363 = vpop.permute.xlu0 %2362
  %2364 = vrot.lane.b32.xlu0 %v1768, 65
  %v2365 = vpop.permute.xlu0 %2364
  %2366 = vrot.lane.b32.xlu0 %v1776, 65
  %v2367 = vpop.permute.xlu0 %2366
  %2368 = vrot.lane.b32.xlu0 %v1784, 65
  %v2369 = vpop.permute.xlu0 %2368
  %2370 = vrot.lane.b32.xlu0 %v1792, 65
  %v2371 = vpop.permute.xlu0 %2370
  %2372 = vrot.lane.b32.xlu0 %v1800, 65
  %v2373 = vpop.permute.xlu0 %2372
  %2374 = vrot.lane.b32.xlu0 %v1808, 65
  %v2375 = vpop.permute.xlu0 %2374
  %2376 = vrot.lane.b32.xlu0 %v1816, 65
  %v2377 = vpop.permute.xlu0 %2376
  %2378 = vrot.lane.b32.xlu0 %v1824, 65
  %v2379 = vpop.permute.xlu0 %2378
  %2380 = vrot.lane.b32.xlu0 %v1832, 65
  %v2381 = vpop.permute.xlu0 %2380
  %2382 = vrot.lane.b32.xlu0 %v1840, 65
  %v2383 = vpop.permute.xlu0 %2382
  %2384 = vrot.lane.b32.xlu0 %v1848, 65
  %v2385 = vpop.permute.xlu0 %2384
  %2386 = vrot.lane.b32.xlu0 %v1856, 65
  %v2387 = vpop.permute.xlu0 %2386
  %2388 = vrot.lane.b32.xlu0 %v1864, 65
  %v2389 = vpop.permute.xlu0 %2388
  %2390 = vrot.lane.b32.xlu0 %v1872, 65
  %v2391 = vpop.permute.xlu0 %2390
  %2392 = vrot.lane.b32.xlu0 %v1880, 65
  %v2393 = vpop.permute.xlu0 %2392
  %2394 = vrot.lane.b32.xlu0 %v1888, 65
  %v2395 = vpop.permute.xlu0 %2394
  %2396 = vrot.lane.b32.xlu0 %v1309, 65
  %v2397 = vpop.permute.xlu0 %2396
  %2398 = vrot.lane.b32.xlu0 %v1705, 65
  %v2399 = vpop.permute.xlu0 %2398
  %2400 = vrot.lane.b32.xlu0 %v1713, 65
  %v2401 = vpop.permute.xlu0 %2400
  %2402 = vrot.lane.b32.xlu0 %v1721, 65
  %v2403 = vpop.permute.xlu0 %2402
  %2404 = vrot.lane.b32.xlu0 %v1729, 65
  %v2405 = vpop.permute.xlu0 %2404
  %2406 = vrot.lane.b32.xlu0 %v1737, 65
  %v2407 = vpop.permute.xlu0 %2406
  %2408 = vrot.lane.b32.xlu0 %v1745, 65
  %v2409 = vpop.permute.xlu0 %2408
  %2410 = vrot.lane.b32.xlu0 %v1753, 65
  %v2411 = vpop.permute.xlu0 %2410
  %2412 = vrot.lane.b32.xlu0 %v1761, 65
  %v2413 = vpop.permute.xlu0 %2412
  %2414 = vrot.lane.b32.xlu0 %v1769, 65
  %v2415 = vpop.permute.xlu0 %2414
  %2416 = vrot.lane.b32.xlu0 %v1777, 65
  %v2417 = vpop.permute.xlu0 %2416
  %2418 = vrot.lane.b32.xlu0 %v1785, 65
  %v2419 = vpop.permute.xlu0 %2418
  %2420 = vrot.lane.b32.xlu0 %v1793, 65
  %v2421 = vpop.permute.xlu0 %2420
  %2422 = vrot.lane.b32.xlu0 %v1801, 65
  %v2423 = vpop.permute.xlu0 %2422
  %2424 = vrot.lane.b32.xlu0 %v1809, 65
  %v2425 = vpop.permute.xlu0 %2424
  %2426 = vrot.lane.b32.xlu0 %v1817, 65
  %v2427 = vpop.permute.xlu0 %2426
  %2428 = vrot.lane.b32.xlu0 %v1825, 65
  %v2429 = vpop.permute.xlu0 %2428
  %2430 = vrot.lane.b32.xlu0 %v1833, 65
  %v2431 = vpop.permute.xlu0 %2430
  %2432 = vrot.lane.b32.xlu0 %v1841, 65
  %v2433 = vpop.permute.xlu0 %2432
  %2434 = vrot.lane.b32.xlu0 %v1849, 65
  %v2435 = vpop.permute.xlu0 %2434
  %2436 = vrot.lane.b32.xlu0 %v1857, 65
  %v2437 = vpop.permute.xlu0 %2436
  %2438 = vrot.lane.b32.xlu0 %v1865, 65
  %v2439 = vpop.permute.xlu0 %2438
  %2440 = vrot.lane.b32.xlu0 %v1873, 65
  %v2441 = vpop.permute.xlu0 %2440
  %2442 = vrot.lane.b32.xlu0 %v1881, 65
  %v2443 = vpop.permute.xlu0 %2442
  %2444 = vrot.lane.b32.xlu0 %v1889, 65
  %v2445 = vpop.permute.xlu0 %2444
  %2446 = vrot.lane.b32.xlu0 %v1312, 65
  %v2447 = vpop.permute.xlu0 %2446
  %2448 = vrot.lane.b32.xlu0 %v1706, 65
  %v2449 = vpop.permute.xlu0 %2448
  %2450 = vrot.lane.b32.xlu0 %v1714, 65
  %v2451 = vpop.permute.xlu0 %2450
  %2452 = vrot.lane.b32.xlu0 %v1722, 65
  %v2453 = vpop.permute.xlu0 %2452
  %2454 = vrot.lane.b32.xlu0 %v1730, 65
  %v2455 = vpop.permute.xlu0 %2454
  %2456 = vrot.lane.b32.xlu0 %v1738, 65
  %v2457 = vpop.permute.xlu0 %2456
  %2458 = vrot.lane.b32.xlu0 %v1746, 65
  %v2459 = vpop.permute.xlu0 %2458
  %2460 = vrot.lane.b32.xlu0 %v1754, 65
  %v2461 = vpop.permute.xlu0 %2460
  %2462 = vrot.lane.b32.xlu0 %v1762, 65
  %v2463 = vpop.permute.xlu0 %2462
  %2464 = vrot.lane.b32.xlu0 %v1770, 65
  %v2465 = vpop.permute.xlu0 %2464
  %2466 = vrot.lane.b32.xlu0 %v1778, 65
  %v2467 = vpop.permute.xlu0 %2466
  %2468 = vrot.lane.b32.xlu0 %v1786, 65
  %v2469 = vpop.permute.xlu0 %2468
  %2470 = vrot.lane.b32.xlu0 %v1794, 65
  %v2471 = vpop.permute.xlu0 %2470
  %2472 = vrot.lane.b32.xlu0 %v1802, 65
  %v2473 = vpop.permute.xlu0 %2472
  %2474 = vrot.lane.b32.xlu0 %v1810, 65
  %v2475 = vpop.permute.xlu0 %2474
  %2476 = vrot.lane.b32.xlu0 %v1818, 65
  %v2477 = vpop.permute.xlu0 %2476
  %2478 = vrot.lane.b32.xlu0 %v1826, 65
  %v2479 = vpop.permute.xlu0 %2478
  %2480 = vrot.lane.b32.xlu0 %v1834, 65
  %v2481 = vpop.permute.xlu0 %2480
  %2482 = vrot.lane.b32.xlu0 %v1842, 65
  %v2483 = vpop.permute.xlu0 %2482
  %2484 = vrot.lane.b32.xlu0 %v1850, 65
  %v2485 = vpop.permute.xlu0 %2484
  %2486 = vrot.lane.b32.xlu0 %v1858, 65
  %v2487 = vpop.permute.xlu0 %2486
  %2488 = vrot.lane.b32.xlu0 %v1866, 65
  %v2489 = vpop.permute.xlu0 %2488
  %2490 = vrot.lane.b32.xlu0 %v1874, 65
  %v2491 = vpop.permute.xlu0 %2490
  %2492 = vrot.lane.b32.xlu0 %v1882, 65
  %v2493 = vpop.permute.xlu0 %2492
  %2494 = vrot.lane.b32.xlu0 %v1890, 65
  %v2495 = vpop.permute.xlu0 %2494
  %2496 = vrot.lane.b32.xlu0 %v1315, 65
  %v2497 = vpop.permute.xlu0 %2496
  %2498 = vrot.lane.b32.xlu0 %v1707, 65
  %v2499 = vpop.permute.xlu0 %2498
  %2500 = vrot.lane.b32.xlu0 %v1715, 65
  %v2501 = vpop.permute.xlu0 %2500
  %2502 = vrot.lane.b32.xlu0 %v1723, 65
  %v2503 = vpop.permute.xlu0 %2502
  %2504 = vrot.lane.b32.xlu0 %v1731, 65
  %v2505 = vpop.permute.xlu0 %2504
  %2506 = vrot.lane.b32.xlu0 %v1739, 65
  %v2507 = vpop.permute.xlu0 %2506
  %2508 = vrot.lane.b32.xlu0 %v1747, 65
  %v2509 = vpop.permute.xlu0 %2508
  %2510 = vrot.lane.b32.xlu0 %v1755, 65
  %v2511 = vpop.permute.xlu0 %2510
  %2512 = vrot.lane.b32.xlu0 %v1763, 65
  %v2513 = vpop.permute.xlu0 %2512
  %2514 = vrot.lane.b32.xlu0 %v1771, 65
  %v2515 = vpop.permute.xlu0 %2514
  %2516 = vrot.lane.b32.xlu0 %v1779, 65
  %v2517 = vpop.permute.xlu0 %2516
  %2518 = vrot.lane.b32.xlu0 %v1787, 65
  %v2519 = vpop.permute.xlu0 %2518
  %2520 = vrot.lane.b32.xlu0 %v1795, 65
  %v2521 = vpop.permute.xlu0 %2520
  %2522 = vrot.lane.b32.xlu0 %v1803, 65
  %v2523 = vpop.permute.xlu0 %2522
  %2524 = vrot.lane.b32.xlu0 %v1811, 65
  %v2525 = vpop.permute.xlu0 %2524
  %2526 = vrot.lane.b32.xlu0 %v1819, 65
  %v2527 = vpop.permute.xlu0 %2526
  %2528 = vrot.lane.b32.xlu0 %v1827, 65
  %v2529 = vpop.permute.xlu0 %2528
  %2530 = vrot.lane.b32.xlu0 %v1835, 65
  %v2531 = vpop.permute.xlu0 %2530
  %2532 = vrot.lane.b32.xlu0 %v1843, 65
  %v2533 = vpop.permute.xlu0 %2532
  %2534 = vrot.lane.b32.xlu0 %v1851, 65
  %v2535 = vpop.permute.xlu0 %2534
  %2536 = vrot.lane.b32.xlu0 %v1859, 65
  %v2537 = vpop.permute.xlu0 %2536
  %2538 = vrot.lane.b32.xlu0 %v1867, 65
  %v2539 = vpop.permute.xlu0 %2538
  %2540 = vrot.lane.b32.xlu0 %v1875, 65
  %v2541 = vpop.permute.xlu0 %2540
  %2542 = vrot.lane.b32.xlu0 %v1883, 65
  %v2543 = vpop.permute.xlu0 %2542
  %2544 = vrot.lane.b32.xlu0 %v1891, 65
  %v2545 = vpop.permute.xlu0 %2544
  %vm2546 = vcmask 531456
  %v2547 = vsel %vm2546, %v2147, %v2149
  %v2548 = vsel %vm2546, %v2149, %v2151
  %v2549 = vsel %vm2546, %v2151, %v2153
  %v2550 = vsel %vm2546, %v2153, %v2155
  %v2551 = vsel %vm2546, %v2155, %v2157
  %v2552 = vsel %vm2546, %v2157, %v2159
  %v2553 = vsel %vm2546, %v2159, %v2161
  %v2554 = vsel %vm2546, %v2161, %v2163
  %v2555 = vsel %vm2546, %v2163, %v2165
  %v2556 = vsel %vm2546, %v2165, %v2167
  %v2557 = vsel %vm2546, %v2167, %v2169
  %v2558 = vsel %vm2546, %v2169, %v2171
  %v2559 = vsel %vm2546, %v2171, %v2173
  %v2560 = vsel %vm2546, %v2173, %v2175
  %v2561 = vsel %vm2546, %v2175, %v2177
  %v2562 = vsel %vm2546, %v2177, %v2179
  %v2563 = vsel %vm2546, %v2179, %v2181
  %v2564 = vsel %vm2546, %v2181, %v2183
  %v2565 = vsel %vm2546, %v2183, %v2185
  %v2566 = vsel %vm2546, %v2185, %v2187
  %v2567 = vsel %vm2546, %v2187, %v2189
  %v2568 = vsel %vm2546, %v2189, %v2191
  %v2569 = vsel %vm2546, %v2191, %v2193
  %v2570 = vsel %vm2546, %v2193, %v2195
  %v2571 = vsel %vm2546, %v2197, %v2199
  %v2572 = vsel %vm2546, %v2199, %v2201
  %v2573 = vsel %vm2546, %v2201, %v2203
  %v2574 = vsel %vm2546, %v2203, %v2205
  %v2575 = vsel %vm2546, %v2205, %v2207
  %v2576 = vsel %vm2546, %v2207, %v2209
  %v2577 = vsel %vm2546, %v2209, %v2211
  %v2578 = vsel %vm2546, %v2211, %v2213
  %v2579 = vsel %vm2546, %v2213, %v2215
  %v2580 = vsel %vm2546, %v2215, %v2217
  %v2581 = vsel %vm2546, %v2217, %v2219
  %v2582 = vsel %vm2546, %v2219, %v2221
  %v2583 = vsel %vm2546, %v2221, %v2223
  %v2584 = vsel %vm2546, %v2223, %v2225
  %v2585 = vsel %vm2546, %v2225, %v2227
  %v2586 = vsel %vm2546, %v2227, %v2229
  %v2587 = vsel %vm2546, %v2229, %v2231
  %v2588 = vsel %vm2546, %v2231, %v2233
  %v2589 = vsel %vm2546, %v2233, %v2235
  %v2590 = vsel %vm2546, %v2235, %v2237
  %v2591 = vsel %vm2546, %v2237, %v2239
  %v2592 = vsel %vm2546, %v2239, %v2241
  %v2593 = vsel %vm2546, %v2241, %v2243
  %v2594 = vsel %vm2546, %v2243, %v2245
  %v2595 = vsel %vm2546, %v2247, %v2249
  %v2596 = vsel %vm2546, %v2249, %v2251
  %v2597 = vsel %vm2546, %v2251, %v2253
  %v2598 = vsel %vm2546, %v2253, %v2255
  %v2599 = vsel %vm2546, %v2255, %v2257
  %v2600 = vsel %vm2546, %v2257, %v2259
  %v2601 = vsel %vm2546, %v2259, %v2261
  %v2602 = vsel %vm2546, %v2261, %v2263
  %v2603 = vsel %vm2546, %v2263, %v2265
  %v2604 = vsel %vm2546, %v2265, %v2267
  %v2605 = vsel %vm2546, %v2267, %v2269
  %v2606 = vsel %vm2546, %v2269, %v2271
  %v2607 = vsel %vm2546, %v2271, %v2273
  %v2608 = vsel %vm2546, %v2273, %v2275
  %v2609 = vsel %vm2546, %v2275, %v2277
  %v2610 = vsel %vm2546, %v2277, %v2279
  %v2611 = vsel %vm2546, %v2279, %v2281
  %v2612 = vsel %vm2546, %v2281, %v2283
  %v2613 = vsel %vm2546, %v2283, %v2285
  %v2614 = vsel %vm2546, %v2285, %v2287
  %v2615 = vsel %vm2546, %v2287, %v2289
  %v2616 = vsel %vm2546, %v2289, %v2291
  %v2617 = vsel %vm2546, %v2291, %v2293
  %v2618 = vsel %vm2546, %v2293, %v2295
  %v2619 = vsel %vm2546, %v2297, %v2299
  %v2620 = vsel %vm2546, %v2299, %v2301
  %v2621 = vsel %vm2546, %v2301, %v2303
  %v2622 = vsel %vm2546, %v2303, %v2305
  %v2623 = vsel %vm2546, %v2305, %v2307
  %v2624 = vsel %vm2546, %v2307, %v2309
  %v2625 = vsel %vm2546, %v2309, %v2311
  %v2626 = vsel %vm2546, %v2311, %v2313
  %v2627 = vsel %vm2546, %v2313, %v2315
  %v2628 = vsel %vm2546, %v2315, %v2317
  %v2629 = vsel %vm2546, %v2317, %v2319
  %v2630 = vsel %vm2546, %v2319, %v2321
  %v2631 = vsel %vm2546, %v2321, %v2323
  %v2632 = vsel %vm2546, %v2323, %v2325
  %v2633 = vsel %vm2546, %v2325, %v2327
  %v2634 = vsel %vm2546, %v2327, %v2329
  %v2635 = vsel %vm2546, %v2329, %v2331
  %v2636 = vsel %vm2546, %v2331, %v2333
  %v2637 = vsel %vm2546, %v2333, %v2335
  %v2638 = vsel %vm2546, %v2335, %v2337
  %v2639 = vsel %vm2546, %v2337, %v2339
  %v2640 = vsel %vm2546, %v2339, %v2341
  %v2641 = vsel %vm2546, %v2341, %v2343
  %v2642 = vsel %vm2546, %v2343, %v2345
  %v2643 = vsel %vm2546, %v2347, %v2349
  %v2644 = vsel %vm2546, %v2349, %v2351
  %v2645 = vsel %vm2546, %v2351, %v2353
  %v2646 = vsel %vm2546, %v2353, %v2355
  %v2647 = vsel %vm2546, %v2355, %v2357
  %v2648 = vsel %vm2546, %v2357, %v2359
  %v2649 = vsel %vm2546, %v2359, %v2361
  %v2650 = vsel %vm2546, %v2361, %v2363
  %v2651 = vsel %vm2546, %v2363, %v2365
  %v2652 = vsel %vm2546, %v2365, %v2367
  %v2653 = vsel %vm2546, %v2367, %v2369
  %v2654 = vsel %vm2546, %v2369, %v2371
  %v2655 = vsel %vm2546, %v2371, %v2373
  %v2656 = vsel %vm2546, %v2373, %v2375
  %v2657 = vsel %vm2546, %v2375, %v2377
  %v2658 = vsel %vm2546, %v2377, %v2379
  %v2659 = vsel %vm2546, %v2379, %v2381
  %v2660 = vsel %vm2546, %v2381, %v2383
  %v2661 = vsel %vm2546, %v2383, %v2385
  %v2662 = vsel %vm2546, %v2385, %v2387
  %v2663 = vsel %vm2546, %v2387, %v2389
  %v2664 = vsel %vm2546, %v2389, %v2391
  %v2665 = vsel %vm2546, %v2391, %v2393
  %v2666 = vsel %vm2546, %v2393, %v2395
  %v2667 = vsel %vm2546, %v2397, %v2399
  %v2668 = vsel %vm2546, %v2399, %v2401
  %v2669 = vsel %vm2546, %v2401, %v2403
  %v2670 = vsel %vm2546, %v2403, %v2405
  %v2671 = vsel %vm2546, %v2405, %v2407
  %v2672 = vsel %vm2546, %v2407, %v2409
  %v2673 = vsel %vm2546, %v2409, %v2411
  %v2674 = vsel %vm2546, %v2411, %v2413
  %v2675 = vsel %vm2546, %v2413, %v2415
  %v2676 = vsel %vm2546, %v2415, %v2417
  %v2677 = vsel %vm2546, %v2417, %v2419
  %v2678 = vsel %vm2546, %v2419, %v2421
  %v2679 = vsel %vm2546, %v2421, %v2423
  %v2680 = vsel %vm2546, %v2423, %v2425
  %v2681 = vsel %vm2546, %v2425, %v2427
  %v2682 = vsel %vm2546, %v2427, %v2429
  %v2683 = vsel %vm2546, %v2429, %v2431
  %v2684 = vsel %vm2546, %v2431, %v2433
  %v2685 = vsel %vm2546, %v2433, %v2435
  %v2686 = vsel %vm2546, %v2435, %v2437
  %v2687 = vsel %vm2546, %v2437, %v2439
  %v2688 = vsel %vm2546, %v2439, %v2441
  %v2689 = vsel %vm2546, %v2441, %v2443
  %v2690 = vsel %vm2546, %v2443, %v2445
  %v2691 = vsel %vm2546, %v2447, %v2449
  %v2692 = vsel %vm2546, %v2449, %v2451
  %v2693 = vsel %vm2546, %v2451, %v2453
  %v2694 = vsel %vm2546, %v2453, %v2455
  %v2695 = vsel %vm2546, %v2455, %v2457
  %v2696 = vsel %vm2546, %v2457, %v2459
  %v2697 = vsel %vm2546, %v2459, %v2461
  %v2698 = vsel %vm2546, %v2461, %v2463
  %v2699 = vsel %vm2546, %v2463, %v2465
  %v2700 = vsel %vm2546, %v2465, %v2467
  %v2701 = vsel %vm2546, %v2467, %v2469
  %v2702 = vsel %vm2546, %v2469, %v2471
  %v2703 = vsel %vm2546, %v2471, %v2473
  %v2704 = vsel %vm2546, %v2473, %v2475
  %v2705 = vsel %vm2546, %v2475, %v2477
  %v2706 = vsel %vm2546, %v2477, %v2479
  %v2707 = vsel %vm2546, %v2479, %v2481
  %v2708 = vsel %vm2546, %v2481, %v2483
  %v2709 = vsel %vm2546, %v2483, %v2485
  %v2710 = vsel %vm2546, %v2485, %v2487
  %v2711 = vsel %vm2546, %v2487, %v2489
  %v2712 = vsel %vm2546, %v2489, %v2491
  %v2713 = vsel %vm2546, %v2491, %v2493
  %v2714 = vsel %vm2546, %v2493, %v2495
  %v2715 = vsel %vm2546, %v2497, %v2499
  %v2716 = vsel %vm2546, %v2499, %v2501
  %v2717 = vsel %vm2546, %v2501, %v2503
  %v2718 = vsel %vm2546, %v2503, %v2505
  %v2719 = vsel %vm2546, %v2505, %v2507
  %v2720 = vsel %vm2546, %v2507, %v2509
  %v2721 = vsel %vm2546, %v2509, %v2511
  %v2722 = vsel %vm2546, %v2511, %v2513
  %v2723 = vsel %vm2546, %v2513, %v2515
  %v2724 = vsel %vm2546, %v2515, %v2517
  %v2725 = vsel %vm2546, %v2517, %v2519
  %v2726 = vsel %vm2546, %v2519, %v2521
  %v2727 = vsel %vm2546, %v2521, %v2523
  %v2728 = vsel %vm2546, %v2523, %v2525
  %v2729 = vsel %vm2546, %v2525, %v2527
  %v2730 = vsel %vm2546, %v2527, %v2529
  %v2731 = vsel %vm2546, %v2529, %v2531
  %v2732 = vsel %vm2546, %v2531, %v2533
  %v2733 = vsel %vm2546, %v2533, %v2535
  %v2734 = vsel %vm2546, %v2535, %v2537
  %v2735 = vsel %vm2546, %v2537, %v2539
  %v2736 = vsel %vm2546, %v2539, %v2541
  %v2737 = vsel %vm2546, %v2541, %v2543
  %v2738 = vsel %vm2546, %v2543, %v2545
  %v2939 = vmul.f32 %v1896, %v2547
  %v2940 = vmul.f32 %v1897, %v2548
  %v2941 = vmul.f32 %v1898, %v2549
  %v2942 = vmul.f32 %v1899, %v2550
  %v2943 = vmul.f32 %v1900, %v2551
  %v2944 = vmul.f32 %v1901, %v2552
  %v2945 = vmul.f32 %v1902, %v2553
  %v2946 = vmul.f32 %v1903, %v2554
  %v2947 = vmul.f32 %v1904, %v2555
  %v2948 = vmul.f32 %v1905, %v2556
  %v2949 = vmul.f32 %v1906, %v2557
  %v2950 = vmul.f32 %v1907, %v2558
  %v2951 = vmul.f32 %v1908, %v2559
  %v2952 = vmul.f32 %v1909, %v2560
  %v2953 = vmul.f32 %v1910, %v2561
  %v2954 = vmul.f32 %v1911, %v2562
  %v2955 = vmul.f32 %v1912, %v2563
  %v2956 = vmul.f32 %v1913, %v2564
  %v2957 = vmul.f32 %v1914, %v2565
  %v2958 = vmul.f32 %v1915, %v2566
  %v2959 = vmul.f32 %v1916, %v2567
  %v2960 = vmul.f32 %v1917, %v2568
  %v2961 = vmul.f32 %v1918, %v2569
  %v2962 = vmul.f32 %v1919, %v2570
  %v2963 = vmul.f32 %v1920, %v2195
  %v2964 = vmul.f32 %v1896, %v2571
  %v2965 = vmul.f32 %v1897, %v2572
  %v2966 = vmul.f32 %v1898, %v2573
  %v2967 = vmul.f32 %v1899, %v2574
  %v2968 = vmul.f32 %v1900, %v2575
  %v2969 = vmul.f32 %v1901, %v2576
  %v2970 = vmul.f32 %v1902, %v2577
  %v2971 = vmul.f32 %v1903, %v2578
  %v2972 = vmul.f32 %v1904, %v2579
  %v2973 = vmul.f32 %v1905, %v2580
  %v2974 = vmul.f32 %v1906, %v2581
  %v2975 = vmul.f32 %v1907, %v2582
  %v2976 = vmul.f32 %v1908, %v2583
  %v2977 = vmul.f32 %v1909, %v2584
  %v2978 = vmul.f32 %v1910, %v2585
  %v2979 = vmul.f32 %v1911, %v2586
  %v2980 = vmul.f32 %v1912, %v2587
  %v2981 = vmul.f32 %v1913, %v2588
  %v2982 = vmul.f32 %v1914, %v2589
  %v2983 = vmul.f32 %v1915, %v2590
  %v2984 = vmul.f32 %v1916, %v2591
  %v2985 = vmul.f32 %v1917, %v2592
  %v2986 = vmul.f32 %v1918, %v2593
  %v2987 = vmul.f32 %v1919, %v2594
  %v2988 = vmul.f32 %v1920, %v2245
  %v2989 = vmul.f32 %v1896, %v2595
  %v2990 = vmul.f32 %v1897, %v2596
  %v2991 = vmul.f32 %v1898, %v2597
  %v2992 = vmul.f32 %v1899, %v2598
  %v2993 = vmul.f32 %v1900, %v2599
  %v2994 = vmul.f32 %v1901, %v2600
  %v2995 = vmul.f32 %v1902, %v2601
  %v2996 = vmul.f32 %v1903, %v2602
  %v2997 = vmul.f32 %v1904, %v2603
  %v2998 = vmul.f32 %v1905, %v2604
  %v2999 = vmul.f32 %v1906, %v2605
  %v3000 = vmul.f32 %v1907, %v2606
  %v3001 = vmul.f32 %v1908, %v2607
  %v3002 = vmul.f32 %v1909, %v2608
  %v3003 = vmul.f32 %v1910, %v2609
  %v3004 = vmul.f32 %v1911, %v2610
  %v3005 = vmul.f32 %v1912, %v2611
  %v3006 = vmul.f32 %v1913, %v2612
  %v3007 = vmul.f32 %v1914, %v2613
  %v3008 = vmul.f32 %v1915, %v2614
  %v3009 = vmul.f32 %v1916, %v2615
  %v3010 = vmul.f32 %v1917, %v2616
  %v3011 = vmul.f32 %v1918, %v2617
  %v3012 = vmul.f32 %v1919, %v2618
  %v3013 = vmul.f32 %v1920, %v2295
  %v3014 = vmul.f32 %v1896, %v2619
  %v3015 = vmul.f32 %v1897, %v2620
  %v3016 = vmul.f32 %v1898, %v2621
  %v3017 = vmul.f32 %v1899, %v2622
  %v3018 = vmul.f32 %v1900, %v2623
  %v3019 = vmul.f32 %v1901, %v2624
  %v3020 = vmul.f32 %v1902, %v2625
  %v3021 = vmul.f32 %v1903, %v2626
  %v3022 = vmul.f32 %v1904, %v2627
  %v3023 = vmul.f32 %v1905, %v2628
  %v3024 = vmul.f32 %v1906, %v2629
  %v3025 = vmul.f32 %v1907, %v2630
  %v3026 = vmul.f32 %v1908, %v2631
  %v3027 = vmul.f32 %v1909, %v2632
  %v3028 = vmul.f32 %v1910, %v2633
  %v3029 = vmul.f32 %v1911, %v2634
  %v3030 = vmul.f32 %v1912, %v2635
  %v3031 = vmul.f32 %v1913, %v2636
  %v3032 = vmul.f32 %v1914, %v2637
  %v3033 = vmul.f32 %v1915, %v2638
  %v3034 = vmul.f32 %v1916, %v2639
  %v3035 = vmul.f32 %v1917, %v2640
  %v3036 = vmul.f32 %v1918, %v2641
  %v3037 = vmul.f32 %v1919, %v2642
  %v3038 = vmul.f32 %v1920, %v2345
  %v3039 = vmul.f32 %v1896, %v2643
  %v3040 = vmul.f32 %v1897, %v2644
  %v3041 = vmul.f32 %v1898, %v2645
  %v3042 = vmul.f32 %v1899, %v2646
  %v3043 = vmul.f32 %v1900, %v2647
  %v3044 = vmul.f32 %v1901, %v2648
  %v3045 = vmul.f32 %v1902, %v2649
  %v3046 = vmul.f32 %v1903, %v2650
  %v3047 = vmul.f32 %v1904, %v2651
  %v3048 = vmul.f32 %v1905, %v2652
  %v3049 = vmul.f32 %v1906, %v2653
  %v3050 = vmul.f32 %v1907, %v2654
  %v3051 = vmul.f32 %v1908, %v2655
  %v3052 = vmul.f32 %v1909, %v2656
  %v3053 = vmul.f32 %v1910, %v2657
  %v3054 = vmul.f32 %v1911, %v2658
  %v3055 = vmul.f32 %v1912, %v2659
  %v3056 = vmul.f32 %v1913, %v2660
  %v3057 = vmul.f32 %v1914, %v2661
  %v3058 = vmul.f32 %v1915, %v2662
  %v3059 = vmul.f32 %v1916, %v2663
  %v3060 = vmul.f32 %v1917, %v2664
  %v3061 = vmul.f32 %v1918, %v2665
  %v3062 = vmul.f32 %v1919, %v2666
  %v3063 = vmul.f32 %v1920, %v2395
  %v3064 = vmul.f32 %v1896, %v2667
  %v3065 = vmul.f32 %v1897, %v2668
  %v3066 = vmul.f32 %v1898, %v2669
  %v3067 = vmul.f32 %v1899, %v2670
  %v3068 = vmul.f32 %v1900, %v2671
  %v3069 = vmul.f32 %v1901, %v2672
  %v3070 = vmul.f32 %v1902, %v2673
  %v3071 = vmul.f32 %v1903, %v2674
  %v3072 = vmul.f32 %v1904, %v2675
  %v3073 = vmul.f32 %v1905, %v2676
  %v3074 = vmul.f32 %v1906, %v2677
  %v3075 = vmul.f32 %v1907, %v2678
  %v3076 = vmul.f32 %v1908, %v2679
  %v3077 = vmul.f32 %v1909, %v2680
  %v3078 = vmul.f32 %v1910, %v2681
  %v3079 = vmul.f32 %v1911, %v2682
  %v3080 = vmul.f32 %v1912, %v2683
  %v3081 = vmul.f32 %v1913, %v2684
  %v3082 = vmul.f32 %v1914, %v2685
  %v3083 = vmul.f32 %v1915, %v2686
  %v3084 = vmul.f32 %v1916, %v2687
  %v3085 = vmul.f32 %v1917, %v2688
  %v3086 = vmul.f32 %v1918, %v2689
  %v3087 = vmul.f32 %v1919, %v2690
  %v3088 = vmul.f32 %v1920, %v2445
  %v3089 = vmul.f32 %v1896, %v2691
  %v3090 = vmul.f32 %v1897, %v2692
  %v3091 = vmul.f32 %v1898, %v2693
  %v3092 = vmul.f32 %v1899, %v2694
  %v3093 = vmul.f32 %v1900, %v2695
  %v3094 = vmul.f32 %v1901, %v2696
  %v3095 = vmul.f32 %v1902, %v2697
  %v3096 = vmul.f32 %v1903, %v2698
  %v3097 = vmul.f32 %v1904, %v2699
  %v3098 = vmul.f32 %v1905, %v2700
  %v3099 = vmul.f32 %v1906, %v2701
  %v3100 = vmul.f32 %v1907, %v2702
  %v3101 = vmul.f32 %v1908, %v2703
  %v3102 = vmul.f32 %v1909, %v2704
  %v3103 = vmul.f32 %v1910, %v2705
  %v3104 = vmul.f32 %v1911, %v2706
  %v3105 = vmul.f32 %v1912, %v2707
  %v3106 = vmul.f32 %v1913, %v2708
  %v3107 = vmul.f32 %v1914, %v2709
  %v3108 = vmul.f32 %v1915, %v2710
  %v3109 = vmul.f32 %v1916, %v2711
  %v3110 = vmul.f32 %v1917, %v2712
  %v3111 = vmul.f32 %v1918, %v2713
  %v3112 = vmul.f32 %v1919, %v2714
  %v3113 = vmul.f32 %v1920, %v2495
  %v3114 = vmul.f32 %v1896, %v2715
  %v3115 = vmul.f32 %v1897, %v2716
  %v3116 = vmul.f32 %v1898, %v2717
  %v3117 = vmul.f32 %v1899, %v2718
  %v3118 = vmul.f32 %v1900, %v2719
  %v3119 = vmul.f32 %v1901, %v2720
  %v3120 = vmul.f32 %v1902, %v2721
  %v3121 = vmul.f32 %v1903, %v2722
  %v3122 = vmul.f32 %v1904, %v2723
  %v3123 = vmul.f32 %v1905, %v2724
  %v3124 = vmul.f32 %v1906, %v2725
  %v3125 = vmul.f32 %v1907, %v2726
  %v3126 = vmul.f32 %v1908, %v2727
  %v3127 = vmul.f32 %v1909, %v2728
  %v3128 = vmul.f32 %v1910, %v2729
  %v3129 = vmul.f32 %v1911, %v2730
  %v3130 = vmul.f32 %v1912, %v2731
  %v3131 = vmul.f32 %v1913, %v2732
  %v3132 = vmul.f32 %v1914, %v2733
  %v3133 = vmul.f32 %v1915, %v2734
  %v3134 = vmul.f32 %v1916, %v2735
  %v3135 = vmul.f32 %v1917, %v2736
  %v3136 = vmul.f32 %v1918, %v2737
  %v3137 = vmul.f32 %v1919, %v2738
  %v3138 = vmul.f32 %v1920, %v2545
  %v3140 = vsel %vm234, %v218, 0
  %v3143 = vsel %vm234, %v219, 0
  %v3146 = vsel %vm234, %v220, 0
  %v3149 = vsel %vm234, %v221, 0
  %v3152 = vsel %vm234, %v222, 0
  %v3155 = vsel %vm234, %v223, 0
  %v3158 = vsel %vm234, %v224, 0
  %v3161 = vsel %vm234, %v225, 0
  %3163 = vmatpush.msra.mxu0 0.0
  %3164 = vmatpush.msra.mxu0 0.0
  %3165 = vmatpush.msra.mxu0 0.0
  %3166 = vmatpush.msra.mxu0 0.0
  %3167 = vmatpush.msra.mxu0 0.0
  %3168 = vmatpush.msra.mxu0 0.0
  %3169 = vmatpush.msra.mxu0 0.0
  %3170 = vmatpush.msra.mxu0 0.0
  %3171 = vmatpush.msra.mxu0 %v192
  %3172 = vmatpush.msra.mxu0 %v167
  %3173 = vmatpush.msra.mxu0 %v142
  %3174 = vmatpush.msra.mxu0 %v117
  %3175 = vmatpush.msra.mxu0 %v92
  %3176 = vmatpush.msra.mxu0 %v67
  %3177 = vmatpush.msra.mxu0 %v42
  %3178 = vmatpush.msra.mxu0 %v17
  %3179 = vmatmul.f32.gmra.mxu0 %v3140
  %v3180 = vpop.f32.mrf.mxu0
  %v3181 = vadd.f32 %v2939, %v3180
  %3182 = vmatmul.f32.gmra.mxu0 %v3143
  %v3183 = vpop.f32.mrf.mxu0
  %v3184 = vadd.f32 %v2964, %v3183
  %3185 = vmatmul.f32.gmra.mxu0 %v3146
  %v3186 = vpop.f32.mrf.mxu0
  %v3187 = vadd.f32 %v2989, %v3186
  %3188 = vmatmul.f32.gmra.mxu0 %v3149
  %v3189 = vpop.f32.mrf.mxu0
  %v3190 = vadd.f32 %v3014, %v3189
  %3191 = vmatmul.f32.gmra.mxu0 %v3152
  %v3192 = vpop.f32.mrf.mxu0
  %v3193 = vadd.f32 %v3039, %v3192
  %3194 = vmatmul.f32.gmra.mxu0 %v3155
  %v3195 = vpop.f32.mrf.mxu0
  %v3196 = vadd.f32 %v3064, %v3195
  %3197 = vmatmul.f32.gmra.mxu0 %v3158
  %v3198 = vpop.f32.mrf.mxu0
  %v3199 = vadd.f32 %v3089, %v3198
  %3200 = vmatmul.f32.gmra.mxu0 %v3161
  %v3201 = vpop.f32.mrf.mxu0
  %v3202 = vadd.f32 %v3114, %v3201
  %3203 = vdwg.mxu0
  %3204 = vmatpush.msra.mxu0 0.0
  %3205 = vmatpush.msra.mxu0 0.0
  %3206 = vmatpush.msra.mxu0 0.0
  %3207 = vmatpush.msra.mxu0 0.0
  %3208 = vmatpush.msra.mxu0 0.0
  %3209 = vmatpush.msra.mxu0 0.0
  %3210 = vmatpush.msra.mxu0 0.0
  %3211 = vmatpush.msra.mxu0 0.0
  %3212 = vmatpush.msra.mxu0 %v193
  %3213 = vmatpush.msra.mxu0 %v168
  %3214 = vmatpush.msra.mxu0 %v143
  %3215 = vmatpush.msra.mxu0 %v118
  %3216 = vmatpush.msra.mxu0 %v93
  %3217 = vmatpush.msra.mxu0 %v68
  %3218 = vmatpush.msra.mxu0 %v43
  %3219 = vmatpush.msra.mxu0 %v18
  %3220 = vmatmul.f32.gmra.mxu0 %v3140
  %v3221 = vpop.f32.mrf.mxu0
  %v3222 = vadd.f32 %v2940, %v3221
  %3223 = vmatmul.f32.gmra.mxu0 %v3143
  %v3224 = vpop.f32.mrf.mxu0
  %v3225 = vadd.f32 %v2965, %v3224
  %3226 = vmatmul.f32.gmra.mxu0 %v3146
  %v3227 = vpop.f32.mrf.mxu0
  %v3228 = vadd.f32 %v2990, %v3227
  %3229 = vmatmul.f32.gmra.mxu0 %v3149
  %v3230 = vpop.f32.mrf.mxu0
  %v3231 = vadd.f32 %v3015, %v3230
  %3232 = vmatmul.f32.gmra.mxu0 %v3152
  %v3233 = vpop.f32.mrf.mxu0
  %v3234 = vadd.f32 %v3040, %v3233
  %3235 = vmatmul.f32.gmra.mxu0 %v3155
  %v3236 = vpop.f32.mrf.mxu0
  %v3237 = vadd.f32 %v3065, %v3236
  %3238 = vmatmul.f32.gmra.mxu0 %v3158
  %v3239 = vpop.f32.mrf.mxu0
  %v3240 = vadd.f32 %v3090, %v3239
  %3241 = vmatmul.f32.gmra.mxu0 %v3161
  %v3242 = vpop.f32.mrf.mxu0
  %v3243 = vadd.f32 %v3115, %v3242
  %3244 = vdwg.mxu0
  %3245 = vmatpush.msra.mxu0 0.0
  %3246 = vmatpush.msra.mxu0 0.0
  %3247 = vmatpush.msra.mxu0 0.0
  %3248 = vmatpush.msra.mxu0 0.0
  %3249 = vmatpush.msra.mxu0 0.0
  %3250 = vmatpush.msra.mxu0 0.0
  %3251 = vmatpush.msra.mxu0 0.0
  %3252 = vmatpush.msra.mxu0 0.0
  %3253 = vmatpush.msra.mxu0 %v194
  %3254 = vmatpush.msra.mxu0 %v169
  %3255 = vmatpush.msra.mxu0 %v144
  %3256 = vmatpush.msra.mxu0 %v119
  %3257 = vmatpush.msra.mxu0 %v94
  %3258 = vmatpush.msra.mxu0 %v69
  %3259 = vmatpush.msra.mxu0 %v44
  %3260 = vmatpush.msra.mxu0 %v19
  %3261 = vmatmul.f32.gmra.mxu0 %v3140
  %v3262 = vpop.f32.mrf.mxu0
  %v3263 = vadd.f32 %v2941, %v3262
  %3264 = vmatmul.f32.gmra.mxu0 %v3143
  %v3265 = vpop.f32.mrf.mxu0
  %v3266 = vadd.f32 %v2966, %v3265
  %3267 = vmatmul.f32.gmra.mxu0 %v3146
  %v3268 = vpop.f32.mrf.mxu0
  %v3269 = vadd.f32 %v2991, %v3268
  %3270 = vmatmul.f32.gmra.mxu0 %v3149
  %v3271 = vpop.f32.mrf.mxu0
  %v3272 = vadd.f32 %v3016, %v3271
  %3273 = vmatmul.f32.gmra.mxu0 %v3152
  %v3274 = vpop.f32.mrf.mxu0
  %v3275 = vadd.f32 %v3041, %v3274
  %3276 = vmatmul.f32.gmra.mxu0 %v3155
  %v3277 = vpop.f32.mrf.mxu0
  %v3278 = vadd.f32 %v3066, %v3277
  %3279 = vmatmul.f32.gmra.mxu0 %v3158
  %v3280 = vpop.f32.mrf.mxu0
  %v3281 = vadd.f32 %v3091, %v3280
  %3282 = vmatmul.f32.gmra.mxu0 %v3161
  %v3283 = vpop.f32.mrf.mxu0
  %v3284 = vadd.f32 %v3116, %v3283
  %3285 = vdwg.mxu0
  %3286 = vmatpush.msra.mxu0 0.0
  %3287 = vmatpush.msra.mxu0 0.0
  %3288 = vmatpush.msra.mxu0 0.0
  %3289 = vmatpush.msra.mxu0 0.0
  %3290 = vmatpush.msra.mxu0 0.0
  %3291 = vmatpush.msra.mxu0 0.0
  %3292 = vmatpush.msra.mxu0 0.0
  %3293 = vmatpush.msra.mxu0 0.0
  %3294 = vmatpush.msra.mxu0 %v195
  %3295 = vmatpush.msra.mxu0 %v170
  %3296 = vmatpush.msra.mxu0 %v145
  %3297 = vmatpush.msra.mxu0 %v120
  %3298 = vmatpush.msra.mxu0 %v95
  %3299 = vmatpush.msra.mxu0 %v70
  %3300 = vmatpush.msra.mxu0 %v45
  %3301 = vmatpush.msra.mxu0 %v20
  %3302 = vmatmul.f32.gmra.mxu0 %v3140
  %v3303 = vpop.f32.mrf.mxu0
  %v3304 = vadd.f32 %v2942, %v3303
  %3305 = vmatmul.f32.gmra.mxu0 %v3143
  %v3306 = vpop.f32.mrf.mxu0
  %v3307 = vadd.f32 %v2967, %v3306
  %3308 = vmatmul.f32.gmra.mxu0 %v3146
  %v3309 = vpop.f32.mrf.mxu0
  %v3310 = vadd.f32 %v2992, %v3309
  %3311 = vmatmul.f32.gmra.mxu0 %v3149
  %v3312 = vpop.f32.mrf.mxu0
  %v3313 = vadd.f32 %v3017, %v3312
  %3314 = vmatmul.f32.gmra.mxu0 %v3152
  %v3315 = vpop.f32.mrf.mxu0
  %v3316 = vadd.f32 %v3042, %v3315
  %3317 = vmatmul.f32.gmra.mxu0 %v3155
  %v3318 = vpop.f32.mrf.mxu0
  %v3319 = vadd.f32 %v3067, %v3318
  %3320 = vmatmul.f32.gmra.mxu0 %v3158
  %v3321 = vpop.f32.mrf.mxu0
  %v3322 = vadd.f32 %v3092, %v3321
  %3323 = vmatmul.f32.gmra.mxu0 %v3161
  %v3324 = vpop.f32.mrf.mxu0
  %v3325 = vadd.f32 %v3117, %v3324
  %3326 = vdwg.mxu0
  %3327 = vmatpush.msra.mxu0 0.0
  %3328 = vmatpush.msra.mxu0 0.0
  %3329 = vmatpush.msra.mxu0 0.0
  %3330 = vmatpush.msra.mxu0 0.0
  %3331 = vmatpush.msra.mxu0 0.0
  %3332 = vmatpush.msra.mxu0 0.0
  %3333 = vmatpush.msra.mxu0 0.0
  %3334 = vmatpush.msra.mxu0 0.0
  %3335 = vmatpush.msra.mxu0 %v196
  %3336 = vmatpush.msra.mxu0 %v171
  %3337 = vmatpush.msra.mxu0 %v146
  %3338 = vmatpush.msra.mxu0 %v121
  %3339 = vmatpush.msra.mxu0 %v96
  %3340 = vmatpush.msra.mxu0 %v71
  %3341 = vmatpush.msra.mxu0 %v46
  %3342 = vmatpush.msra.mxu0 %v21
  %3343 = vmatmul.f32.gmra.mxu0 %v3140
  %v3344 = vpop.f32.mrf.mxu0
  %v3345 = vadd.f32 %v2943, %v3344
  %3346 = vmatmul.f32.gmra.mxu0 %v3143
  %v3347 = vpop.f32.mrf.mxu0
  %v3348 = vadd.f32 %v2968, %v3347
  %3349 = vmatmul.f32.gmra.mxu0 %v3146
  %v3350 = vpop.f32.mrf.mxu0
  %v3351 = vadd.f32 %v2993, %v3350
  %3352 = vmatmul.f32.gmra.mxu0 %v3149
  %v3353 = vpop.f32.mrf.mxu0
  %v3354 = vadd.f32 %v3018, %v3353
  %3355 = vmatmul.f32.gmra.mxu0 %v3152
  %v3356 = vpop.f32.mrf.mxu0
  %v3357 = vadd.f32 %v3043, %v3356
  %3358 = vmatmul.f32.gmra.mxu0 %v3155
  %v3359 = vpop.f32.mrf.mxu0
  %v3360 = vadd.f32 %v3068, %v3359
  %3361 = vmatmul.f32.gmra.mxu0 %v3158
  %v3362 = vpop.f32.mrf.mxu0
  %v3363 = vadd.f32 %v3093, %v3362
  %3364 = vmatmul.f32.gmra.mxu0 %v3161
  %v3365 = vpop.f32.mrf.mxu0
  %v3366 = vadd.f32 %v3118, %v3365
  %3367 = vdwg.mxu0
  %3368 = vmatpush.msra.mxu0 0.0
  %3369 = vmatpush.msra.mxu0 0.0
  %3370 = vmatpush.msra.mxu0 0.0
  %3371 = vmatpush.msra.mxu0 0.0
  %3372 = vmatpush.msra.mxu0 0.0
  %3373 = vmatpush.msra.mxu0 0.0
  %3374 = vmatpush.msra.mxu0 0.0
  %3375 = vmatpush.msra.mxu0 0.0
  %3376 = vmatpush.msra.mxu0 %v197
  %3377 = vmatpush.msra.mxu0 %v172
  %3378 = vmatpush.msra.mxu0 %v147
  %3379 = vmatpush.msra.mxu0 %v122
  %3380 = vmatpush.msra.mxu0 %v97
  %3381 = vmatpush.msra.mxu0 %v72
  %3382 = vmatpush.msra.mxu0 %v47
  %3383 = vmatpush.msra.mxu0 %v22
  %3384 = vmatmul.f32.gmra.mxu0 %v3140
  %v3385 = vpop.f32.mrf.mxu0
  %v3386 = vadd.f32 %v2944, %v3385
  %3387 = vmatmul.f32.gmra.mxu0 %v3143
  %v3388 = vpop.f32.mrf.mxu0
  %v3389 = vadd.f32 %v2969, %v3388
  %3390 = vmatmul.f32.gmra.mxu0 %v3146
  %v3391 = vpop.f32.mrf.mxu0
  %v3392 = vadd.f32 %v2994, %v3391
  %3393 = vmatmul.f32.gmra.mxu0 %v3149
  %v3394 = vpop.f32.mrf.mxu0
  %v3395 = vadd.f32 %v3019, %v3394
  %3396 = vmatmul.f32.gmra.mxu0 %v3152
  %v3397 = vpop.f32.mrf.mxu0
  %v3398 = vadd.f32 %v3044, %v3397
  %3399 = vmatmul.f32.gmra.mxu0 %v3155
  %v3400 = vpop.f32.mrf.mxu0
  %v3401 = vadd.f32 %v3069, %v3400
  %3402 = vmatmul.f32.gmra.mxu0 %v3158
  %v3403 = vpop.f32.mrf.mxu0
  %v3404 = vadd.f32 %v3094, %v3403
  %3405 = vmatmul.f32.gmra.mxu0 %v3161
  %v3406 = vpop.f32.mrf.mxu0
  %v3407 = vadd.f32 %v3119, %v3406
  %3408 = vdwg.mxu0
  %3409 = vmatpush.msra.mxu0 0.0
  %3410 = vmatpush.msra.mxu0 0.0
  %3411 = vmatpush.msra.mxu0 0.0
  %3412 = vmatpush.msra.mxu0 0.0
  %3413 = vmatpush.msra.mxu0 0.0
  %3414 = vmatpush.msra.mxu0 0.0
  %3415 = vmatpush.msra.mxu0 0.0
  %3416 = vmatpush.msra.mxu0 0.0
  %3417 = vmatpush.msra.mxu0 %v198
  %3418 = vmatpush.msra.mxu0 %v173
  %3419 = vmatpush.msra.mxu0 %v148
  %3420 = vmatpush.msra.mxu0 %v123
  %3421 = vmatpush.msra.mxu0 %v98
  %3422 = vmatpush.msra.mxu0 %v73
  %3423 = vmatpush.msra.mxu0 %v48
  %3424 = vmatpush.msra.mxu0 %v23
  %3425 = vmatmul.f32.gmra.mxu0 %v3140
  %v3426 = vpop.f32.mrf.mxu0
  %v3427 = vadd.f32 %v2945, %v3426
  %3428 = vmatmul.f32.gmra.mxu0 %v3143
  %v3429 = vpop.f32.mrf.mxu0
  %v3430 = vadd.f32 %v2970, %v3429
  %3431 = vmatmul.f32.gmra.mxu0 %v3146
  %v3432 = vpop.f32.mrf.mxu0
  %v3433 = vadd.f32 %v2995, %v3432
  %3434 = vmatmul.f32.gmra.mxu0 %v3149
  %v3435 = vpop.f32.mrf.mxu0
  %v3436 = vadd.f32 %v3020, %v3435
  %3437 = vmatmul.f32.gmra.mxu0 %v3152
  %v3438 = vpop.f32.mrf.mxu0
  %v3439 = vadd.f32 %v3045, %v3438
  %3440 = vmatmul.f32.gmra.mxu0 %v3155
  %v3441 = vpop.f32.mrf.mxu0
  %v3442 = vadd.f32 %v3070, %v3441
  %3443 = vmatmul.f32.gmra.mxu0 %v3158
  %v3444 = vpop.f32.mrf.mxu0
  %v3445 = vadd.f32 %v3095, %v3444
  %3446 = vmatmul.f32.gmra.mxu0 %v3161
  %v3447 = vpop.f32.mrf.mxu0
  %v3448 = vadd.f32 %v3120, %v3447
  %3449 = vdwg.mxu0
  %3450 = vmatpush.msra.mxu0 0.0
  %3451 = vmatpush.msra.mxu0 0.0
  %3452 = vmatpush.msra.mxu0 0.0
  %3453 = vmatpush.msra.mxu0 0.0
  %3454 = vmatpush.msra.mxu0 0.0
  %3455 = vmatpush.msra.mxu0 0.0
  %3456 = vmatpush.msra.mxu0 0.0
  %3457 = vmatpush.msra.mxu0 0.0
  %3458 = vmatpush.msra.mxu0 %v199
  %3459 = vmatpush.msra.mxu0 %v174
  %3460 = vmatpush.msra.mxu0 %v149
  %3461 = vmatpush.msra.mxu0 %v124
  %3462 = vmatpush.msra.mxu0 %v99
  %3463 = vmatpush.msra.mxu0 %v74
  %3464 = vmatpush.msra.mxu0 %v49
  %3465 = vmatpush.msra.mxu0 %v24
  %3466 = vmatmul.f32.gmra.mxu0 %v3140
  %v3467 = vpop.f32.mrf.mxu0
  %v3468 = vadd.f32 %v2946, %v3467
  %3469 = vmatmul.f32.gmra.mxu0 %v3143
  %v3470 = vpop.f32.mrf.mxu0
  %v3471 = vadd.f32 %v2971, %v3470
  %3472 = vmatmul.f32.gmra.mxu0 %v3146
  %v3473 = vpop.f32.mrf.mxu0
  %v3474 = vadd.f32 %v2996, %v3473
  %3475 = vmatmul.f32.gmra.mxu0 %v3149
  %v3476 = vpop.f32.mrf.mxu0
  %v3477 = vadd.f32 %v3021, %v3476
  %3478 = vmatmul.f32.gmra.mxu0 %v3152
  %v3479 = vpop.f32.mrf.mxu0
  %v3480 = vadd.f32 %v3046, %v3479
  %3481 = vmatmul.f32.gmra.mxu0 %v3155
  %v3482 = vpop.f32.mrf.mxu0
  %v3483 = vadd.f32 %v3071, %v3482
  %3484 = vmatmul.f32.gmra.mxu0 %v3158
  %v3485 = vpop.f32.mrf.mxu0
  %v3486 = vadd.f32 %v3096, %v3485
  %3487 = vmatmul.f32.gmra.mxu0 %v3161
  %v3488 = vpop.f32.mrf.mxu0
  %v3489 = vadd.f32 %v3121, %v3488
  %3490 = vdwg.mxu0
  %3491 = vmatpush.msra.mxu0 0.0
  %3492 = vmatpush.msra.mxu0 0.0
  %3493 = vmatpush.msra.mxu0 0.0
  %3494 = vmatpush.msra.mxu0 0.0
  %3495 = vmatpush.msra.mxu0 0.0
  %3496 = vmatpush.msra.mxu0 0.0
  %3497 = vmatpush.msra.mxu0 0.0
  %3498 = vmatpush.msra.mxu0 0.0
  %3499 = vmatpush.msra.mxu0 %v200
  %3500 = vmatpush.msra.mxu0 %v175
  %3501 = vmatpush.msra.mxu0 %v150
  %3502 = vmatpush.msra.mxu0 %v125
  %3503 = vmatpush.msra.mxu0 %v100
  %3504 = vmatpush.msra.mxu0 %v75
  %3505 = vmatpush.msra.mxu0 %v50
  %3506 = vmatpush.msra.mxu0 %v25
  %3507 = vmatmul.f32.gmra.mxu0 %v3140
  %v3508 = vpop.f32.mrf.mxu0
  %v3509 = vadd.f32 %v2947, %v3508
  %3510 = vmatmul.f32.gmra.mxu0 %v3143
  %v3511 = vpop.f32.mrf.mxu0
  %v3512 = vadd.f32 %v2972, %v3511
  %3513 = vmatmul.f32.gmra.mxu0 %v3146
  %v3514 = vpop.f32.mrf.mxu0
  %v3515 = vadd.f32 %v2997, %v3514
  %3516 = vmatmul.f32.gmra.mxu0 %v3149
  %v3517 = vpop.f32.mrf.mxu0
  %v3518 = vadd.f32 %v3022, %v3517
  %3519 = vmatmul.f32.gmra.mxu0 %v3152
  %v3520 = vpop.f32.mrf.mxu0
  %v3521 = vadd.f32 %v3047, %v3520
  %3522 = vmatmul.f32.gmra.mxu0 %v3155
  %v3523 = vpop.f32.mrf.mxu0
  %v3524 = vadd.f32 %v3072, %v3523
  %3525 = vmatmul.f32.gmra.mxu0 %v3158
  %v3526 = vpop.f32.mrf.mxu0
  %v3527 = vadd.f32 %v3097, %v3526
  %3528 = vmatmul.f32.gmra.mxu0 %v3161
  %v3529 = vpop.f32.mrf.mxu0
  %v3530 = vadd.f32 %v3122, %v3529
  %3531 = vdwg.mxu0
  %3532 = vmatpush.msra.mxu0 0.0
  %3533 = vmatpush.msra.mxu0 0.0
  %3534 = vmatpush.msra.mxu0 0.0
  %3535 = vmatpush.msra.mxu0 0.0
  %3536 = vmatpush.msra.mxu0 0.0
  %3537 = vmatpush.msra.mxu0 0.0
  %3538 = vmatpush.msra.mxu0 0.0
  %3539 = vmatpush.msra.mxu0 0.0
  %3540 = vmatpush.msra.mxu0 %v201
  %3541 = vmatpush.msra.mxu0 %v176
  %3542 = vmatpush.msra.mxu0 %v151
  %3543 = vmatpush.msra.mxu0 %v126
  %3544 = vmatpush.msra.mxu0 %v101
  %3545 = vmatpush.msra.mxu0 %v76
  %3546 = vmatpush.msra.mxu0 %v51
  %3547 = vmatpush.msra.mxu0 %v26
  %3548 = vmatmul.f32.gmra.mxu0 %v3140
  %v3549 = vpop.f32.mrf.mxu0
  %v3550 = vadd.f32 %v2948, %v3549
  %3551 = vmatmul.f32.gmra.mxu0 %v3143
  %v3552 = vpop.f32.mrf.mxu0
  %v3553 = vadd.f32 %v2973, %v3552
  %3554 = vmatmul.f32.gmra.mxu0 %v3146
  %v3555 = vpop.f32.mrf.mxu0
  %v3556 = vadd.f32 %v2998, %v3555
  %3557 = vmatmul.f32.gmra.mxu0 %v3149
  %v3558 = vpop.f32.mrf.mxu0
  %v3559 = vadd.f32 %v3023, %v3558
  %3560 = vmatmul.f32.gmra.mxu0 %v3152
  %v3561 = vpop.f32.mrf.mxu0
  %v3562 = vadd.f32 %v3048, %v3561
  %3563 = vmatmul.f32.gmra.mxu0 %v3155
  %v3564 = vpop.f32.mrf.mxu0
  %v3565 = vadd.f32 %v3073, %v3564
  %3566 = vmatmul.f32.gmra.mxu0 %v3158
  %v3567 = vpop.f32.mrf.mxu0
  %v3568 = vadd.f32 %v3098, %v3567
  %3569 = vmatmul.f32.gmra.mxu0 %v3161
  %v3570 = vpop.f32.mrf.mxu0
  %v3571 = vadd.f32 %v3123, %v3570
  %3572 = vdwg.mxu0
  %3573 = vmatpush.msra.mxu0 0.0
  %3574 = vmatpush.msra.mxu0 0.0
  %3575 = vmatpush.msra.mxu0 0.0
  %3576 = vmatpush.msra.mxu0 0.0
  %3577 = vmatpush.msra.mxu0 0.0
  %3578 = vmatpush.msra.mxu0 0.0
  %3579 = vmatpush.msra.mxu0 0.0
  %3580 = vmatpush.msra.mxu0 0.0
  %3581 = vmatpush.msra.mxu0 %v202
  %3582 = vmatpush.msra.mxu0 %v177
  %3583 = vmatpush.msra.mxu0 %v152
  %3584 = vmatpush.msra.mxu0 %v127
  %3585 = vmatpush.msra.mxu0 %v102
  %3586 = vmatpush.msra.mxu0 %v77
  %3587 = vmatpush.msra.mxu0 %v52
  %3588 = vmatpush.msra.mxu0 %v27
  %3589 = vmatmul.f32.gmra.mxu0 %v3140
  %v3590 = vpop.f32.mrf.mxu0
  %v3591 = vadd.f32 %v2949, %v3590
  %3592 = vmatmul.f32.gmra.mxu0 %v3143
  %v3593 = vpop.f32.mrf.mxu0
  %v3594 = vadd.f32 %v2974, %v3593
  %3595 = vmatmul.f32.gmra.mxu0 %v3146
  %v3596 = vpop.f32.mrf.mxu0
  %v3597 = vadd.f32 %v2999, %v3596
  %3598 = vmatmul.f32.gmra.mxu0 %v3149
  %v3599 = vpop.f32.mrf.mxu0
  %v3600 = vadd.f32 %v3024, %v3599
  %3601 = vmatmul.f32.gmra.mxu0 %v3152
  %v3602 = vpop.f32.mrf.mxu0
  %v3603 = vadd.f32 %v3049, %v3602
  %3604 = vmatmul.f32.gmra.mxu0 %v3155
  %v3605 = vpop.f32.mrf.mxu0
  %v3606 = vadd.f32 %v3074, %v3605
  %3607 = vmatmul.f32.gmra.mxu0 %v3158
  %v3608 = vpop.f32.mrf.mxu0
  %v3609 = vadd.f32 %v3099, %v3608
  %3610 = vmatmul.f32.gmra.mxu0 %v3161
  %v3611 = vpop.f32.mrf.mxu0
  %v3612 = vadd.f32 %v3124, %v3611
  %3613 = vdwg.mxu0
  %3614 = vmatpush.msra.mxu0 0.0
  %3615 = vmatpush.msra.mxu0 0.0
  %3616 = vmatpush.msra.mxu0 0.0
  %3617 = vmatpush.msra.mxu0 0.0
  %3618 = vmatpush.msra.mxu0 0.0
  %3619 = vmatpush.msra.mxu0 0.0
  %3620 = vmatpush.msra.mxu0 0.0
  %3621 = vmatpush.msra.mxu0 0.0
  %3622 = vmatpush.msra.mxu0 %v203
  %3623 = vmatpush.msra.mxu0 %v178
  %3624 = vmatpush.msra.mxu0 %v153
  %3625 = vmatpush.msra.mxu0 %v128
  %3626 = vmatpush.msra.mxu0 %v103
  %3627 = vmatpush.msra.mxu0 %v78
  %3628 = vmatpush.msra.mxu0 %v53
  %3629 = vmatpush.msra.mxu0 %v28
  %3630 = vmatmul.f32.gmra.mxu0 %v3140
  %v3631 = vpop.f32.mrf.mxu0
  %v3632 = vadd.f32 %v2950, %v3631
  %3633 = vmatmul.f32.gmra.mxu0 %v3143
  %v3634 = vpop.f32.mrf.mxu0
  %v3635 = vadd.f32 %v2975, %v3634
  %3636 = vmatmul.f32.gmra.mxu0 %v3146
  %v3637 = vpop.f32.mrf.mxu0
  %v3638 = vadd.f32 %v3000, %v3637
  %3639 = vmatmul.f32.gmra.mxu0 %v3149
  %v3640 = vpop.f32.mrf.mxu0
  %v3641 = vadd.f32 %v3025, %v3640
  %3642 = vmatmul.f32.gmra.mxu0 %v3152
  %v3643 = vpop.f32.mrf.mxu0
  %v3644 = vadd.f32 %v3050, %v3643
  %3645 = vmatmul.f32.gmra.mxu0 %v3155
  %v3646 = vpop.f32.mrf.mxu0
  %v3647 = vadd.f32 %v3075, %v3646
  %3648 = vmatmul.f32.gmra.mxu0 %v3158
  %v3649 = vpop.f32.mrf.mxu0
  %v3650 = vadd.f32 %v3100, %v3649
  %3651 = vmatmul.f32.gmra.mxu0 %v3161
  %v3652 = vpop.f32.mrf.mxu0
  %v3653 = vadd.f32 %v3125, %v3652
  %3654 = vdwg.mxu0
  %3655 = vmatpush.msra.mxu0 0.0
  %3656 = vmatpush.msra.mxu0 0.0
  %3657 = vmatpush.msra.mxu0 0.0
  %3658 = vmatpush.msra.mxu0 0.0
  %3659 = vmatpush.msra.mxu0 0.0
  %3660 = vmatpush.msra.mxu0 0.0
  %3661 = vmatpush.msra.mxu0 0.0
  %3662 = vmatpush.msra.mxu0 0.0
  %3663 = vmatpush.msra.mxu0 %v204
  %3664 = vmatpush.msra.mxu0 %v179
  %3665 = vmatpush.msra.mxu0 %v154
  %3666 = vmatpush.msra.mxu0 %v129
  %3667 = vmatpush.msra.mxu0 %v104
  %3668 = vmatpush.msra.mxu0 %v79
  %3669 = vmatpush.msra.mxu0 %v54
  %3670 = vmatpush.msra.mxu0 %v29
  %3671 = vmatmul.f32.gmra.mxu0 %v3140
  %v3672 = vpop.f32.mrf.mxu0
  %v3673 = vadd.f32 %v2951, %v3672
  %3674 = vmatmul.f32.gmra.mxu0 %v3143
  %v3675 = vpop.f32.mrf.mxu0
  %v3676 = vadd.f32 %v2976, %v3675
  %3677 = vmatmul.f32.gmra.mxu0 %v3146
  %v3678 = vpop.f32.mrf.mxu0
  %v3679 = vadd.f32 %v3001, %v3678
  %3680 = vmatmul.f32.gmra.mxu0 %v3149
  %v3681 = vpop.f32.mrf.mxu0
  %v3682 = vadd.f32 %v3026, %v3681
  %3683 = vmatmul.f32.gmra.mxu0 %v3152
  %v3684 = vpop.f32.mrf.mxu0
  %v3685 = vadd.f32 %v3051, %v3684
  %3686 = vmatmul.f32.gmra.mxu0 %v3155
  %v3687 = vpop.f32.mrf.mxu0
  %v3688 = vadd.f32 %v3076, %v3687
  %3689 = vmatmul.f32.gmra.mxu0 %v3158
  %v3690 = vpop.f32.mrf.mxu0
  %v3691 = vadd.f32 %v3101, %v3690
  %3692 = vmatmul.f32.gmra.mxu0 %v3161
  %v3693 = vpop.f32.mrf.mxu0
  %v3694 = vadd.f32 %v3126, %v3693
  %3695 = vdwg.mxu0
  %3696 = vmatpush.msra.mxu0 0.0
  %3697 = vmatpush.msra.mxu0 0.0
  %3698 = vmatpush.msra.mxu0 0.0
  %3699 = vmatpush.msra.mxu0 0.0
  %3700 = vmatpush.msra.mxu0 0.0
  %3701 = vmatpush.msra.mxu0 0.0
  %3702 = vmatpush.msra.mxu0 0.0
  %3703 = vmatpush.msra.mxu0 0.0
  %3704 = vmatpush.msra.mxu0 %v205
  %3705 = vmatpush.msra.mxu0 %v180
  %3706 = vmatpush.msra.mxu0 %v155
  %3707 = vmatpush.msra.mxu0 %v130
  %3708 = vmatpush.msra.mxu0 %v105
  %3709 = vmatpush.msra.mxu0 %v80
  %3710 = vmatpush.msra.mxu0 %v55
  %3711 = vmatpush.msra.mxu0 %v30
  %3712 = vmatmul.f32.gmra.mxu0 %v3140
  %v3713 = vpop.f32.mrf.mxu0
  %v3714 = vadd.f32 %v2952, %v3713
  %3715 = vmatmul.f32.gmra.mxu0 %v3143
  %v3716 = vpop.f32.mrf.mxu0
  %v3717 = vadd.f32 %v2977, %v3716
  %3718 = vmatmul.f32.gmra.mxu0 %v3146
  %v3719 = vpop.f32.mrf.mxu0
  %v3720 = vadd.f32 %v3002, %v3719
  %3721 = vmatmul.f32.gmra.mxu0 %v3149
  %v3722 = vpop.f32.mrf.mxu0
  %v3723 = vadd.f32 %v3027, %v3722
  %3724 = vmatmul.f32.gmra.mxu0 %v3152
  %v3725 = vpop.f32.mrf.mxu0
  %v3726 = vadd.f32 %v3052, %v3725
  %3727 = vmatmul.f32.gmra.mxu0 %v3155
  %v3728 = vpop.f32.mrf.mxu0
  %v3729 = vadd.f32 %v3077, %v3728
  %3730 = vmatmul.f32.gmra.mxu0 %v3158
  %v3731 = vpop.f32.mrf.mxu0
  %v3732 = vadd.f32 %v3102, %v3731
  %3733 = vmatmul.f32.gmra.mxu0 %v3161
  %v3734 = vpop.f32.mrf.mxu0
  %v3735 = vadd.f32 %v3127, %v3734
  %3736 = vdwg.mxu0
  %3737 = vmatpush.msra.mxu0 0.0
  %3738 = vmatpush.msra.mxu0 0.0
  %3739 = vmatpush.msra.mxu0 0.0
  %3740 = vmatpush.msra.mxu0 0.0
  %3741 = vmatpush.msra.mxu0 0.0
  %3742 = vmatpush.msra.mxu0 0.0
  %3743 = vmatpush.msra.mxu0 0.0
  %3744 = vmatpush.msra.mxu0 0.0
  %3745 = vmatpush.msra.mxu0 %v206
  %3746 = vmatpush.msra.mxu0 %v181
  %3747 = vmatpush.msra.mxu0 %v156
  %3748 = vmatpush.msra.mxu0 %v131
  %3749 = vmatpush.msra.mxu0 %v106
  %3750 = vmatpush.msra.mxu0 %v81
  %3751 = vmatpush.msra.mxu0 %v56
  %3752 = vmatpush.msra.mxu0 %v31
  %3753 = vmatmul.f32.gmra.mxu0 %v3140
  %v3754 = vpop.f32.mrf.mxu0
  %v3755 = vadd.f32 %v2953, %v3754
  %3756 = vmatmul.f32.gmra.mxu0 %v3143
  %v3757 = vpop.f32.mrf.mxu0
  %v3758 = vadd.f32 %v2978, %v3757
  %3759 = vmatmul.f32.gmra.mxu0 %v3146
  %v3760 = vpop.f32.mrf.mxu0
  %v3761 = vadd.f32 %v3003, %v3760
  %3762 = vmatmul.f32.gmra.mxu0 %v3149
  %v3763 = vpop.f32.mrf.mxu0
  %v3764 = vadd.f32 %v3028, %v3763
  %3765 = vmatmul.f32.gmra.mxu0 %v3152
  %v3766 = vpop.f32.mrf.mxu0
  %v3767 = vadd.f32 %v3053, %v3766
  %3768 = vmatmul.f32.gmra.mxu0 %v3155
  %v3769 = vpop.f32.mrf.mxu0
  %v3770 = vadd.f32 %v3078, %v3769
  %3771 = vmatmul.f32.gmra.mxu0 %v3158
  %v3772 = vpop.f32.mrf.mxu0
  %v3773 = vadd.f32 %v3103, %v3772
  %3774 = vmatmul.f32.gmra.mxu0 %v3161
  %v3775 = vpop.f32.mrf.mxu0
  %v3776 = vadd.f32 %v3128, %v3775
  %3777 = vdwg.mxu0
  %3778 = vmatpush.msra.mxu0 0.0
  %3779 = vmatpush.msra.mxu0 0.0
  %3780 = vmatpush.msra.mxu0 0.0
  %3781 = vmatpush.msra.mxu0 0.0
  %3782 = vmatpush.msra.mxu0 0.0
  %3783 = vmatpush.msra.mxu0 0.0
  %3784 = vmatpush.msra.mxu0 0.0
  %3785 = vmatpush.msra.mxu0 0.0
  %3786 = vmatpush.msra.mxu0 %v207
  %3787 = vmatpush.msra.mxu0 %v182
  %3788 = vmatpush.msra.mxu0 %v157
  %3789 = vmatpush.msra.mxu0 %v132
  %3790 = vmatpush.msra.mxu0 %v107
  %3791 = vmatpush.msra.mxu0 %v82
  %3792 = vmatpush.msra.mxu0 %v57
  %3793 = vmatpush.msra.mxu0 %v32
  %3794 = vmatmul.f32.gmra.mxu0 %v3140
  %v3795 = vpop.f32.mrf.mxu0
  %v3796 = vadd.f32 %v2954, %v3795
  %3797 = vmatmul.f32.gmra.mxu0 %v3143
  %v3798 = vpop.f32.mrf.mxu0
  %v3799 = vadd.f32 %v2979, %v3798
  %3800 = vmatmul.f32.gmra.mxu0 %v3146
  %v3801 = vpop.f32.mrf.mxu0
  %v3802 = vadd.f32 %v3004, %v3801
  %3803 = vmatmul.f32.gmra.mxu0 %v3149
  %v3804 = vpop.f32.mrf.mxu0
  %v3805 = vadd.f32 %v3029, %v3804
  %3806 = vmatmul.f32.gmra.mxu0 %v3152
  %v3807 = vpop.f32.mrf.mxu0
  %v3808 = vadd.f32 %v3054, %v3807
  %3809 = vmatmul.f32.gmra.mxu0 %v3155
  %v3810 = vpop.f32.mrf.mxu0
  %v3811 = vadd.f32 %v3079, %v3810
  %3812 = vmatmul.f32.gmra.mxu0 %v3158
  %v3813 = vpop.f32.mrf.mxu0
  %v3814 = vadd.f32 %v3104, %v3813
  %3815 = vmatmul.f32.gmra.mxu0 %v3161
  %v3816 = vpop.f32.mrf.mxu0
  %v3817 = vadd.f32 %v3129, %v3816
  %3818 = vdwg.mxu0
  %3819 = vmatpush.msra.mxu0 0.0
  %3820 = vmatpush.msra.mxu0 0.0
  %3821 = vmatpush.msra.mxu0 0.0
  %3822 = vmatpush.msra.mxu0 0.0
  %3823 = vmatpush.msra.mxu0 0.0
  %3824 = vmatpush.msra.mxu0 0.0
  %3825 = vmatpush.msra.mxu0 0.0
  %3826 = vmatpush.msra.mxu0 0.0
  %3827 = vmatpush.msra.mxu0 %v208
  %3828 = vmatpush.msra.mxu0 %v183
  %3829 = vmatpush.msra.mxu0 %v158
  %3830 = vmatpush.msra.mxu0 %v133
  %3831 = vmatpush.msra.mxu0 %v108
  %3832 = vmatpush.msra.mxu0 %v83
  %3833 = vmatpush.msra.mxu0 %v58
  %3834 = vmatpush.msra.mxu0 %v33
  %3835 = vmatmul.f32.gmra.mxu0 %v3140
  %v3836 = vpop.f32.mrf.mxu0
  %v3837 = vadd.f32 %v2955, %v3836
  %3838 = vmatmul.f32.gmra.mxu0 %v3143
  %v3839 = vpop.f32.mrf.mxu0
  %v3840 = vadd.f32 %v2980, %v3839
  %3841 = vmatmul.f32.gmra.mxu0 %v3146
  %v3842 = vpop.f32.mrf.mxu0
  %v3843 = vadd.f32 %v3005, %v3842
  %3844 = vmatmul.f32.gmra.mxu0 %v3149
  %v3845 = vpop.f32.mrf.mxu0
  %v3846 = vadd.f32 %v3030, %v3845
  %3847 = vmatmul.f32.gmra.mxu0 %v3152
  %v3848 = vpop.f32.mrf.mxu0
  %v3849 = vadd.f32 %v3055, %v3848
  %3850 = vmatmul.f32.gmra.mxu0 %v3155
  %v3851 = vpop.f32.mrf.mxu0
  %v3852 = vadd.f32 %v3080, %v3851
  %3853 = vmatmul.f32.gmra.mxu0 %v3158
  %v3854 = vpop.f32.mrf.mxu0
  %v3855 = vadd.f32 %v3105, %v3854
  %3856 = vmatmul.f32.gmra.mxu0 %v3161
  %v3857 = vpop.f32.mrf.mxu0
  %v3858 = vadd.f32 %v3130, %v3857
  %3859 = vdwg.mxu0
  %3860 = vmatpush.msra.mxu0 0.0
  %3861 = vmatpush.msra.mxu0 0.0
  %3862 = vmatpush.msra.mxu0 0.0
  %3863 = vmatpush.msra.mxu0 0.0
  %3864 = vmatpush.msra.mxu0 0.0
  %3865 = vmatpush.msra.mxu0 0.0
  %3866 = vmatpush.msra.mxu0 0.0
  %3867 = vmatpush.msra.mxu0 0.0
  %3868 = vmatpush.msra.mxu0 %v209
  %3869 = vmatpush.msra.mxu0 %v184
  %3870 = vmatpush.msra.mxu0 %v159
  %3871 = vmatpush.msra.mxu0 %v134
  %3872 = vmatpush.msra.mxu0 %v109
  %3873 = vmatpush.msra.mxu0 %v84
  %3874 = vmatpush.msra.mxu0 %v59
  %3875 = vmatpush.msra.mxu0 %v34
  %3876 = vmatmul.f32.gmra.mxu0 %v3140
  %v3877 = vpop.f32.mrf.mxu0
  %v3878 = vadd.f32 %v2956, %v3877
  %3879 = vmatmul.f32.gmra.mxu0 %v3143
  %v3880 = vpop.f32.mrf.mxu0
  %v3881 = vadd.f32 %v2981, %v3880
  %3882 = vmatmul.f32.gmra.mxu0 %v3146
  %v3883 = vpop.f32.mrf.mxu0
  %v3884 = vadd.f32 %v3006, %v3883
  %3885 = vmatmul.f32.gmra.mxu0 %v3149
  %v3886 = vpop.f32.mrf.mxu0
  %v3887 = vadd.f32 %v3031, %v3886
  %3888 = vmatmul.f32.gmra.mxu0 %v3152
  %v3889 = vpop.f32.mrf.mxu0
  %v3890 = vadd.f32 %v3056, %v3889
  %3891 = vmatmul.f32.gmra.mxu0 %v3155
  %v3892 = vpop.f32.mrf.mxu0
  %v3893 = vadd.f32 %v3081, %v3892
  %3894 = vmatmul.f32.gmra.mxu0 %v3158
  %v3895 = vpop.f32.mrf.mxu0
  %v3896 = vadd.f32 %v3106, %v3895
  %3897 = vmatmul.f32.gmra.mxu0 %v3161
  %v3898 = vpop.f32.mrf.mxu0
  %v3899 = vadd.f32 %v3131, %v3898
  %3900 = vdwg.mxu0
  %3901 = vmatpush.msra.mxu0 0.0
  %3902 = vmatpush.msra.mxu0 0.0
  %3903 = vmatpush.msra.mxu0 0.0
  %3904 = vmatpush.msra.mxu0 0.0
  %3905 = vmatpush.msra.mxu0 0.0
  %3906 = vmatpush.msra.mxu0 0.0
  %3907 = vmatpush.msra.mxu0 0.0
  %3908 = vmatpush.msra.mxu0 0.0
  %3909 = vmatpush.msra.mxu0 %v210
  %3910 = vmatpush.msra.mxu0 %v185
  %3911 = vmatpush.msra.mxu0 %v160
  %3912 = vmatpush.msra.mxu0 %v135
  %3913 = vmatpush.msra.mxu0 %v110
  %3914 = vmatpush.msra.mxu0 %v85
  %3915 = vmatpush.msra.mxu0 %v60
  %3916 = vmatpush.msra.mxu0 %v35
  %3917 = vmatmul.f32.gmra.mxu0 %v3140
  %v3918 = vpop.f32.mrf.mxu0
  %v3919 = vadd.f32 %v2957, %v3918
  %3920 = vmatmul.f32.gmra.mxu0 %v3143
  %v3921 = vpop.f32.mrf.mxu0
  %v3922 = vadd.f32 %v2982, %v3921
  %3923 = vmatmul.f32.gmra.mxu0 %v3146
  %v3924 = vpop.f32.mrf.mxu0
  %v3925 = vadd.f32 %v3007, %v3924
  %3926 = vmatmul.f32.gmra.mxu0 %v3149
  %v3927 = vpop.f32.mrf.mxu0
  %v3928 = vadd.f32 %v3032, %v3927
  %3929 = vmatmul.f32.gmra.mxu0 %v3152
  %v3930 = vpop.f32.mrf.mxu0
  %v3931 = vadd.f32 %v3057, %v3930
  %3932 = vmatmul.f32.gmra.mxu0 %v3155
  %v3933 = vpop.f32.mrf.mxu0
  %v3934 = vadd.f32 %v3082, %v3933
  %3935 = vmatmul.f32.gmra.mxu0 %v3158
  %v3936 = vpop.f32.mrf.mxu0
  %v3937 = vadd.f32 %v3107, %v3936
  %3938 = vmatmul.f32.gmra.mxu0 %v3161
  %v3939 = vpop.f32.mrf.mxu0
  %v3940 = vadd.f32 %v3132, %v3939
  %3941 = vdwg.mxu0
  %3942 = vmatpush.msra.mxu0 0.0
  %3943 = vmatpush.msra.mxu0 0.0
  %3944 = vmatpush.msra.mxu0 0.0
  %3945 = vmatpush.msra.mxu0 0.0
  %3946 = vmatpush.msra.mxu0 0.0
  %3947 = vmatpush.msra.mxu0 0.0
  %3948 = vmatpush.msra.mxu0 0.0
  %3949 = vmatpush.msra.mxu0 0.0
  %3950 = vmatpush.msra.mxu0 %v211
  %3951 = vmatpush.msra.mxu0 %v186
  %3952 = vmatpush.msra.mxu0 %v161
  %3953 = vmatpush.msra.mxu0 %v136
  %3954 = vmatpush.msra.mxu0 %v111
  %3955 = vmatpush.msra.mxu0 %v86
  %3956 = vmatpush.msra.mxu0 %v61
  %3957 = vmatpush.msra.mxu0 %v36
  %3958 = vmatmul.f32.gmra.mxu0 %v3140
  %v3959 = vpop.f32.mrf.mxu0
  %v3960 = vadd.f32 %v2958, %v3959
  %3961 = vmatmul.f32.gmra.mxu0 %v3143
  %v3962 = vpop.f32.mrf.mxu0
  %v3963 = vadd.f32 %v2983, %v3962
  %3964 = vmatmul.f32.gmra.mxu0 %v3146
  %v3965 = vpop.f32.mrf.mxu0
  %v3966 = vadd.f32 %v3008, %v3965
  %3967 = vmatmul.f32.gmra.mxu0 %v3149
  %v3968 = vpop.f32.mrf.mxu0
  %v3969 = vadd.f32 %v3033, %v3968
  %3970 = vmatmul.f32.gmra.mxu0 %v3152
  %v3971 = vpop.f32.mrf.mxu0
  %v3972 = vadd.f32 %v3058, %v3971
  %3973 = vmatmul.f32.gmra.mxu0 %v3155
  %v3974 = vpop.f32.mrf.mxu0
  %v3975 = vadd.f32 %v3083, %v3974
  %3976 = vmatmul.f32.gmra.mxu0 %v3158
  %v3977 = vpop.f32.mrf.mxu0
  %v3978 = vadd.f32 %v3108, %v3977
  %3979 = vmatmul.f32.gmra.mxu0 %v3161
  %v3980 = vpop.f32.mrf.mxu0
  %v3981 = vadd.f32 %v3133, %v3980
  %3982 = vdwg.mxu0
  %3983 = vmatpush.msra.mxu0 0.0
  %3984 = vmatpush.msra.mxu0 0.0
  %3985 = vmatpush.msra.mxu0 0.0
  %3986 = vmatpush.msra.mxu0 0.0
  %3987 = vmatpush.msra.mxu0 0.0
  %3988 = vmatpush.msra.mxu0 0.0
  %3989 = vmatpush.msra.mxu0 0.0
  %3990 = vmatpush.msra.mxu0 0.0
  %3991 = vmatpush.msra.mxu0 %v212
  %3992 = vmatpush.msra.mxu0 %v187
  %3993 = vmatpush.msra.mxu0 %v162
  %3994 = vmatpush.msra.mxu0 %v137
  %3995 = vmatpush.msra.mxu0 %v112
  %3996 = vmatpush.msra.mxu0 %v87
  %3997 = vmatpush.msra.mxu0 %v62
  %3998 = vmatpush.msra.mxu0 %v37
  %3999 = vmatmul.f32.gmra.mxu0 %v3140
  %v4000 = vpop.f32.mrf.mxu0
  %v4001 = vadd.f32 %v2959, %v4000
  %4002 = vmatmul.f32.gmra.mxu0 %v3143
  %v4003 = vpop.f32.mrf.mxu0
  %v4004 = vadd.f32 %v2984, %v4003
  %4005 = vmatmul.f32.gmra.mxu0 %v3146
  %v4006 = vpop.f32.mrf.mxu0
  %v4007 = vadd.f32 %v3009, %v4006
  %4008 = vmatmul.f32.gmra.mxu0 %v3149
  %v4009 = vpop.f32.mrf.mxu0
  %v4010 = vadd.f32 %v3034, %v4009
  %4011 = vmatmul.f32.gmra.mxu0 %v3152
  %v4012 = vpop.f32.mrf.mxu0
  %v4013 = vadd.f32 %v3059, %v4012
  %4014 = vmatmul.f32.gmra.mxu0 %v3155
  %v4015 = vpop.f32.mrf.mxu0
  %v4016 = vadd.f32 %v3084, %v4015
  %4017 = vmatmul.f32.gmra.mxu0 %v3158
  %v4018 = vpop.f32.mrf.mxu0
  %v4019 = vadd.f32 %v3109, %v4018
  %4020 = vmatmul.f32.gmra.mxu0 %v3161
  %v4021 = vpop.f32.mrf.mxu0
  %v4022 = vadd.f32 %v3134, %v4021
  %4023 = vdwg.mxu0
  %4024 = vmatpush.msra.mxu0 0.0
  %4025 = vmatpush.msra.mxu0 0.0
  %4026 = vmatpush.msra.mxu0 0.0
  %4027 = vmatpush.msra.mxu0 0.0
  %4028 = vmatpush.msra.mxu0 0.0
  %4029 = vmatpush.msra.mxu0 0.0
  %4030 = vmatpush.msra.mxu0 0.0
  %4031 = vmatpush.msra.mxu0 0.0
  %4032 = vmatpush.msra.mxu0 %v213
  %4033 = vmatpush.msra.mxu0 %v188
  %4034 = vmatpush.msra.mxu0 %v163
  %4035 = vmatpush.msra.mxu0 %v138
  %4036 = vmatpush.msra.mxu0 %v113
  %4037 = vmatpush.msra.mxu0 %v88
  %4038 = vmatpush.msra.mxu0 %v63
  %4039 = vmatpush.msra.mxu0 %v38
  %4040 = vmatmul.f32.gmra.mxu0 %v3140
  %v4041 = vpop.f32.mrf.mxu0
  %v4042 = vadd.f32 %v2960, %v4041
  %4043 = vmatmul.f32.gmra.mxu0 %v3143
  %v4044 = vpop.f32.mrf.mxu0
  %v4045 = vadd.f32 %v2985, %v4044
  %4046 = vmatmul.f32.gmra.mxu0 %v3146
  %v4047 = vpop.f32.mrf.mxu0
  %v4048 = vadd.f32 %v3010, %v4047
  %4049 = vmatmul.f32.gmra.mxu0 %v3149
  %v4050 = vpop.f32.mrf.mxu0
  %v4051 = vadd.f32 %v3035, %v4050
  %4052 = vmatmul.f32.gmra.mxu0 %v3152
  %v4053 = vpop.f32.mrf.mxu0
  %v4054 = vadd.f32 %v3060, %v4053
  %4055 = vmatmul.f32.gmra.mxu0 %v3155
  %v4056 = vpop.f32.mrf.mxu0
  %v4057 = vadd.f32 %v3085, %v4056
  %4058 = vmatmul.f32.gmra.mxu0 %v3158
  %v4059 = vpop.f32.mrf.mxu0
  %v4060 = vadd.f32 %v3110, %v4059
  %4061 = vmatmul.f32.gmra.mxu0 %v3161
  %v4062 = vpop.f32.mrf.mxu0
  %v4063 = vadd.f32 %v3135, %v4062
  %4064 = vdwg.mxu0
  %4065 = vmatpush.msra.mxu0 0.0
  %4066 = vmatpush.msra.mxu0 0.0
  %4067 = vmatpush.msra.mxu0 0.0
  %4068 = vmatpush.msra.mxu0 0.0
  %4069 = vmatpush.msra.mxu0 0.0
  %4070 = vmatpush.msra.mxu0 0.0
  %4071 = vmatpush.msra.mxu0 0.0
  %4072 = vmatpush.msra.mxu0 0.0
  %4073 = vmatpush.msra.mxu0 %v214
  %4074 = vmatpush.msra.mxu0 %v189
  %4075 = vmatpush.msra.mxu0 %v164
  %4076 = vmatpush.msra.mxu0 %v139
  %4077 = vmatpush.msra.mxu0 %v114
  %4078 = vmatpush.msra.mxu0 %v89
  %4079 = vmatpush.msra.mxu0 %v64
  %4080 = vmatpush.msra.mxu0 %v39
  %4081 = vmatmul.f32.gmra.mxu0 %v3140
  %v4082 = vpop.f32.mrf.mxu0
  %v4083 = vadd.f32 %v2961, %v4082
  %4084 = vmatmul.f32.gmra.mxu0 %v3143
  %v4085 = vpop.f32.mrf.mxu0
  %v4086 = vadd.f32 %v2986, %v4085
  %4087 = vmatmul.f32.gmra.mxu0 %v3146
  %v4088 = vpop.f32.mrf.mxu0
  %v4089 = vadd.f32 %v3011, %v4088
  %4090 = vmatmul.f32.gmra.mxu0 %v3149
  %v4091 = vpop.f32.mrf.mxu0
  %v4092 = vadd.f32 %v3036, %v4091
  %4093 = vmatmul.f32.gmra.mxu0 %v3152
  %v4094 = vpop.f32.mrf.mxu0
  %v4095 = vadd.f32 %v3061, %v4094
  %4096 = vmatmul.f32.gmra.mxu0 %v3155
  %v4097 = vpop.f32.mrf.mxu0
  %v4098 = vadd.f32 %v3086, %v4097
  %4099 = vmatmul.f32.gmra.mxu0 %v3158
  %v4100 = vpop.f32.mrf.mxu0
  %v4101 = vadd.f32 %v3111, %v4100
  %4102 = vmatmul.f32.gmra.mxu0 %v3161
  %v4103 = vpop.f32.mrf.mxu0
  %v4104 = vadd.f32 %v3136, %v4103
  %4105 = vdwg.mxu0
  %4106 = vmatpush.msra.mxu0 0.0
  %4107 = vmatpush.msra.mxu0 0.0
  %4108 = vmatpush.msra.mxu0 0.0
  %4109 = vmatpush.msra.mxu0 0.0
  %4110 = vmatpush.msra.mxu0 0.0
  %4111 = vmatpush.msra.mxu0 0.0
  %4112 = vmatpush.msra.mxu0 0.0
  %4113 = vmatpush.msra.mxu0 0.0
  %4114 = vmatpush.msra.mxu0 %v215
  %4115 = vmatpush.msra.mxu0 %v190
  %4116 = vmatpush.msra.mxu0 %v165
  %4117 = vmatpush.msra.mxu0 %v140
  %4118 = vmatpush.msra.mxu0 %v115
  %4119 = vmatpush.msra.mxu0 %v90
  %4120 = vmatpush.msra.mxu0 %v65
  %4121 = vmatpush.msra.mxu0 %v40
  %4122 = vmatmul.f32.gmra.mxu0 %v3140
  %v4123 = vpop.f32.mrf.mxu0
  %v4124 = vadd.f32 %v2962, %v4123
  %4125 = vmatmul.f32.gmra.mxu0 %v3143
  %v4126 = vpop.f32.mrf.mxu0
  %v4127 = vadd.f32 %v2987, %v4126
  %4128 = vmatmul.f32.gmra.mxu0 %v3146
  %v4129 = vpop.f32.mrf.mxu0
  %v4130 = vadd.f32 %v3012, %v4129
  %4131 = vmatmul.f32.gmra.mxu0 %v3149
  %v4132 = vpop.f32.mrf.mxu0
  %v4133 = vadd.f32 %v3037, %v4132
  %4134 = vmatmul.f32.gmra.mxu0 %v3152
  %v4135 = vpop.f32.mrf.mxu0
  %v4136 = vadd.f32 %v3062, %v4135
  %4137 = vmatmul.f32.gmra.mxu0 %v3155
  %v4138 = vpop.f32.mrf.mxu0
  %v4139 = vadd.f32 %v3087, %v4138
  %4140 = vmatmul.f32.gmra.mxu0 %v3158
  %v4141 = vpop.f32.mrf.mxu0
  %v4142 = vadd.f32 %v3112, %v4141
  %4143 = vmatmul.f32.gmra.mxu0 %v3161
  %v4144 = vpop.f32.mrf.mxu0
  %v4145 = vadd.f32 %v3137, %v4144
  %4146 = vdwg.mxu0
  %4147 = vmatpush.msra.mxu0 0.0
  %4148 = vmatpush.msra.mxu0 0.0
  %4149 = vmatpush.msra.mxu0 0.0
  %4150 = vmatpush.msra.mxu0 0.0
  %4151 = vmatpush.msra.mxu0 0.0
  %4152 = vmatpush.msra.mxu0 0.0
  %4153 = vmatpush.msra.mxu0 0.0
  %4154 = vmatpush.msra.mxu0 0.0
  %4155 = vmatpush.msra.mxu0 %v216
  %4156 = vmatpush.msra.mxu0 %v191
  %4157 = vmatpush.msra.mxu0 %v166
  %4158 = vmatpush.msra.mxu0 %v141
  %4159 = vmatpush.msra.mxu0 %v116
  %4160 = vmatpush.msra.mxu0 %v91
  %4161 = vmatpush.msra.mxu0 %v66
  %4162 = vmatpush.msra.mxu0 %v41
  %4163 = vmatmul.f32.gmra.mxu0 %v3140
  %v4164 = vpop.f32.mrf.mxu0
  %v4165 = vadd.f32 %v2963, %v4164
  %4166 = vmatmul.f32.gmra.mxu0 %v3143
  %v4167 = vpop.f32.mrf.mxu0
  %v4168 = vadd.f32 %v2988, %v4167
  %4169 = vmatmul.f32.gmra.mxu0 %v3146
  %v4170 = vpop.f32.mrf.mxu0
  %v4171 = vadd.f32 %v3013, %v4170
  %4172 = vmatmul.f32.gmra.mxu0 %v3149
  %v4173 = vpop.f32.mrf.mxu0
  %v4174 = vadd.f32 %v3038, %v4173
  %4175 = vmatmul.f32.gmra.mxu0 %v3152
  %v4176 = vpop.f32.mrf.mxu0
  %v4177 = vadd.f32 %v3063, %v4176
  %4178 = vmatmul.f32.gmra.mxu0 %v3155
  %v4179 = vpop.f32.mrf.mxu0
  %v4180 = vadd.f32 %v3088, %v4179
  %4181 = vmatmul.f32.gmra.mxu0 %v3158
  %v4182 = vpop.f32.mrf.mxu0
  %v4183 = vadd.f32 %v3113, %v4182
  %4184 = vmatmul.f32.gmra.mxu0 %v3161
  %v4185 = vpop.f32.mrf.mxu0
  %v4186 = vadd.f32 %v3138, %v4185
  %4187 = vdwg.mxu0
  %s4188 = scalar_lea.vmem %s1, 128
  %v4189 = vld [vmem:[%s4188] sm:$0xff]
  %v4190 = vld [vmem:[%s4188 + $0x8] sm:$0xff]
  %v4191 = vld [vmem:[%s4188 + $0x10] sm:$0xff]
  %v4192 = vld [vmem:[%s4188 + $0x18] sm:$0xff]
  %v4193 = vld [vmem:[%s4188 + $0x20] sm:$0xff]
  %v4194 = vld [vmem:[%s4188 + $0x28] sm:$0xff]
  %v4195 = vld [vmem:[%s4188 + $0x30] sm:$0xff]
  %v4196 = vld [vmem:[%s4188 + $0x38] sm:$0xff]
  %v4198 = vsel %vm234, %v4189, 0
  %v4201 = vsel %vm234, %v4190, 0
  %v4204 = vsel %vm234, %v4191, 0
  %v4207 = vsel %vm234, %v4192, 0
  %v4210 = vsel %vm234, %v4193, 0
  %v4213 = vsel %vm234, %v4194, 0
  %v4216 = vsel %vm234, %v4195, 0
  %v4219 = vsel %vm234, %v4196, 0
  %4221 = vmatpush.msra.mxu0 0.0
  %4222 = vmatpush.msra.mxu0 0.0
  %4223 = vmatpush.msra.mxu0 0.0
  %4224 = vmatpush.msra.mxu0 0.0
  %4225 = vmatpush.msra.mxu0 0.0
  %4226 = vmatpush.msra.mxu0 0.0
  %4227 = vmatpush.msra.mxu0 0.0
  %4228 = vmatpush.msra.mxu0 0.0
  %4229 = vmatpush.msra.mxu0 %v192
  %4230 = vmatpush.msra.mxu0 %v167
  %4231 = vmatpush.msra.mxu0 %v142
  %4232 = vmatpush.msra.mxu0 %v117
  %4233 = vmatpush.msra.mxu0 %v92
  %4234 = vmatpush.msra.mxu0 %v67
  %4235 = vmatpush.msra.mxu0 %v42
  %4236 = vmatpush.msra.mxu0 %v17
  %4237 = vmatmul.f32.gmra.mxu0 %v4198
  %v4238 = vpop.f32.mrf.mxu0
  %v4239 = vadd.f32 0.0, %v4238
  %4240 = vmatmul.f32.gmra.mxu0 %v4201
  %v4241 = vpop.f32.mrf.mxu0
  %v4242 = vadd.f32 0.0, %v4241
  %4243 = vmatmul.f32.gmra.mxu0 %v4204
  %v4244 = vpop.f32.mrf.mxu0
  %v4245 = vadd.f32 0.0, %v4244
  %4246 = vmatmul.f32.gmra.mxu0 %v4207
  %v4247 = vpop.f32.mrf.mxu0
  %v4248 = vadd.f32 0.0, %v4247
  %4249 = vmatmul.f32.gmra.mxu0 %v4210
  %v4250 = vpop.f32.mrf.mxu0
  %v4251 = vadd.f32 0.0, %v4250
  %4252 = vmatmul.f32.gmra.mxu0 %v4213
  %v4253 = vpop.f32.mrf.mxu0
  %v4254 = vadd.f32 0.0, %v4253
  %4255 = vmatmul.f32.gmra.mxu0 %v4216
  %v4256 = vpop.f32.mrf.mxu0
  %v4257 = vadd.f32 0.0, %v4256
  %4258 = vmatmul.f32.gmra.mxu0 %v4219
  %v4259 = vpop.f32.mrf.mxu0
  %v4260 = vadd.f32 0.0, %v4259
  %4261 = vdwg.mxu0
  %4262 = vmatpush.msra.mxu0 0.0
  %4263 = vmatpush.msra.mxu0 0.0
  %4264 = vmatpush.msra.mxu0 0.0
  %4265 = vmatpush.msra.mxu0 0.0
  %4266 = vmatpush.msra.mxu0 0.0
  %4267 = vmatpush.msra.mxu0 0.0
  %4268 = vmatpush.msra.mxu0 0.0
  %4269 = vmatpush.msra.mxu0 0.0
  %4270 = vmatpush.msra.mxu0 %v193
  %4271 = vmatpush.msra.mxu0 %v168
  %4272 = vmatpush.msra.mxu0 %v143
  %4273 = vmatpush.msra.mxu0 %v118
  %4274 = vmatpush.msra.mxu0 %v93
  %4275 = vmatpush.msra.mxu0 %v68
  %4276 = vmatpush.msra.mxu0 %v43
  %4277 = vmatpush.msra.mxu0 %v18
  %4278 = vmatmul.f32.gmra.mxu0 %v4198
  %v4279 = vpop.f32.mrf.mxu0
  %v4280 = vadd.f32 0.0, %v4279
  %4281 = vmatmul.f32.gmra.mxu0 %v4201
  %v4282 = vpop.f32.mrf.mxu0
  %v4283 = vadd.f32 0.0, %v4282
  %4284 = vmatmul.f32.gmra.mxu0 %v4204
  %v4285 = vpop.f32.mrf.mxu0
  %v4286 = vadd.f32 0.0, %v4285
  %4287 = vmatmul.f32.gmra.mxu0 %v4207
  %v4288 = vpop.f32.mrf.mxu0
  %v4289 = vadd.f32 0.0, %v4288
  %4290 = vmatmul.f32.gmra.mxu0 %v4210
  %v4291 = vpop.f32.mrf.mxu0
  %v4292 = vadd.f32 0.0, %v4291
  %4293 = vmatmul.f32.gmra.mxu0 %v4213
  %v4294 = vpop.f32.mrf.mxu0
  %v4295 = vadd.f32 0.0, %v4294
  %4296 = vmatmul.f32.gmra.mxu0 %v4216
  %v4297 = vpop.f32.mrf.mxu0
  %v4298 = vadd.f32 0.0, %v4297
  %4299 = vmatmul.f32.gmra.mxu0 %v4219
  %v4300 = vpop.f32.mrf.mxu0
  %v4301 = vadd.f32 0.0, %v4300
  %4302 = vdwg.mxu0
  %4303 = vmatpush.msra.mxu0 0.0
  %4304 = vmatpush.msra.mxu0 0.0
  %4305 = vmatpush.msra.mxu0 0.0
  %4306 = vmatpush.msra.mxu0 0.0
  %4307 = vmatpush.msra.mxu0 0.0
  %4308 = vmatpush.msra.mxu0 0.0
  %4309 = vmatpush.msra.mxu0 0.0
  %4310 = vmatpush.msra.mxu0 0.0
  %4311 = vmatpush.msra.mxu0 %v194
  %4312 = vmatpush.msra.mxu0 %v169
  %4313 = vmatpush.msra.mxu0 %v144
  %4314 = vmatpush.msra.mxu0 %v119
  %4315 = vmatpush.msra.mxu0 %v94
  %4316 = vmatpush.msra.mxu0 %v69
  %4317 = vmatpush.msra.mxu0 %v44
  %4318 = vmatpush.msra.mxu0 %v19
  %4319 = vmatmul.f32.gmra.mxu0 %v4198
  %v4320 = vpop.f32.mrf.mxu0
  %v4321 = vadd.f32 0.0, %v4320
  %4322 = vmatmul.f32.gmra.mxu0 %v4201
  %v4323 = vpop.f32.mrf.mxu0
  %v4324 = vadd.f32 0.0, %v4323
  %4325 = vmatmul.f32.gmra.mxu0 %v4204
  %v4326 = vpop.f32.mrf.mxu0
  %v4327 = vadd.f32 0.0, %v4326
  %4328 = vmatmul.f32.gmra.mxu0 %v4207
  %v4329 = vpop.f32.mrf.mxu0
  %v4330 = vadd.f32 0.0, %v4329
  %4331 = vmatmul.f32.gmra.mxu0 %v4210
  %v4332 = vpop.f32.mrf.mxu0
  %v4333 = vadd.f32 0.0, %v4332
  %4334 = vmatmul.f32.gmra.mxu0 %v4213
  %v4335 = vpop.f32.mrf.mxu0
  %v4336 = vadd.f32 0.0, %v4335
  %4337 = vmatmul.f32.gmra.mxu0 %v4216
  %v4338 = vpop.f32.mrf.mxu0
  %v4339 = vadd.f32 0.0, %v4338
  %4340 = vmatmul.f32.gmra.mxu0 %v4219
  %v4341 = vpop.f32.mrf.mxu0
  %v4342 = vadd.f32 0.0, %v4341
  %4343 = vdwg.mxu0
  %4344 = vmatpush.msra.mxu0 0.0
  %4345 = vmatpush.msra.mxu0 0.0
  %4346 = vmatpush.msra.mxu0 0.0
  %4347 = vmatpush.msra.mxu0 0.0
  %4348 = vmatpush.msra.mxu0 0.0
  %4349 = vmatpush.msra.mxu0 0.0
  %4350 = vmatpush.msra.mxu0 0.0
  %4351 = vmatpush.msra.mxu0 0.0
  %4352 = vmatpush.msra.mxu0 %v195
  %4353 = vmatpush.msra.mxu0 %v170
  %4354 = vmatpush.msra.mxu0 %v145
  %4355 = vmatpush.msra.mxu0 %v120
  %4356 = vmatpush.msra.mxu0 %v95
  %4357 = vmatpush.msra.mxu0 %v70
  %4358 = vmatpush.msra.mxu0 %v45
  %4359 = vmatpush.msra.mxu0 %v20
  %4360 = vmatmul.f32.gmra.mxu0 %v4198
  %v4361 = vpop.f32.mrf.mxu0
  %v4362 = vadd.f32 0.0, %v4361
  %4363 = vmatmul.f32.gmra.mxu0 %v4201
  %v4364 = vpop.f32.mrf.mxu0
  %v4365 = vadd.f32 0.0, %v4364
  %4366 = vmatmul.f32.gmra.mxu0 %v4204
  %v4367 = vpop.f32.mrf.mxu0
  %v4368 = vadd.f32 0.0, %v4367
  %4369 = vmatmul.f32.gmra.mxu0 %v4207
  %v4370 = vpop.f32.mrf.mxu0
  %v4371 = vadd.f32 0.0, %v4370
  %4372 = vmatmul.f32.gmra.mxu0 %v4210
  %v4373 = vpop.f32.mrf.mxu0
  %v4374 = vadd.f32 0.0, %v4373
  %4375 = vmatmul.f32.gmra.mxu0 %v4213
  %v4376 = vpop.f32.mrf.mxu0
  %v4377 = vadd.f32 0.0, %v4376
  %4378 = vmatmul.f32.gmra.mxu0 %v4216
  %v4379 = vpop.f32.mrf.mxu0
  %v4380 = vadd.f32 0.0, %v4379
  %4381 = vmatmul.f32.gmra.mxu0 %v4219
  %v4382 = vpop.f32.mrf.mxu0
  %v4383 = vadd.f32 0.0, %v4382
  %4384 = vdwg.mxu0
  %4385 = vmatpush.msra.mxu0 0.0
  %4386 = vmatpush.msra.mxu0 0.0
  %4387 = vmatpush.msra.mxu0 0.0
  %4388 = vmatpush.msra.mxu0 0.0
  %4389 = vmatpush.msra.mxu0 0.0
  %4390 = vmatpush.msra.mxu0 0.0
  %4391 = vmatpush.msra.mxu0 0.0
  %4392 = vmatpush.msra.mxu0 0.0
  %4393 = vmatpush.msra.mxu0 %v196
  %4394 = vmatpush.msra.mxu0 %v171
  %4395 = vmatpush.msra.mxu0 %v146
  %4396 = vmatpush.msra.mxu0 %v121
  %4397 = vmatpush.msra.mxu0 %v96
  %4398 = vmatpush.msra.mxu0 %v71
  %4399 = vmatpush.msra.mxu0 %v46
  %4400 = vmatpush.msra.mxu0 %v21
  %4401 = vmatmul.f32.gmra.mxu0 %v4198
  %v4402 = vpop.f32.mrf.mxu0
  %v4403 = vadd.f32 0.0, %v4402
  %4404 = vmatmul.f32.gmra.mxu0 %v4201
  %v4405 = vpop.f32.mrf.mxu0
  %v4406 = vadd.f32 0.0, %v4405
  %4407 = vmatmul.f32.gmra.mxu0 %v4204
  %v4408 = vpop.f32.mrf.mxu0
  %v4409 = vadd.f32 0.0, %v4408
  %4410 = vmatmul.f32.gmra.mxu0 %v4207
  %v4411 = vpop.f32.mrf.mxu0
  %v4412 = vadd.f32 0.0, %v4411
  %4413 = vmatmul.f32.gmra.mxu0 %v4210
  %v4414 = vpop.f32.mrf.mxu0
  %v4415 = vadd.f32 0.0, %v4414
  %4416 = vmatmul.f32.gmra.mxu0 %v4213
  %v4417 = vpop.f32.mrf.mxu0
  %v4418 = vadd.f32 0.0, %v4417
  %4419 = vmatmul.f32.gmra.mxu0 %v4216
  %v4420 = vpop.f32.mrf.mxu0
  %v4421 = vadd.f32 0.0, %v4420
  %4422 = vmatmul.f32.gmra.mxu0 %v4219
  %v4423 = vpop.f32.mrf.mxu0
  %v4424 = vadd.f32 0.0, %v4423
  %4425 = vdwg.mxu0
  %4426 = vmatpush.msra.mxu0 0.0
  %4427 = vmatpush.msra.mxu0 0.0
  %4428 = vmatpush.msra.mxu0 0.0
  %4429 = vmatpush.msra.mxu0 0.0
  %4430 = vmatpush.msra.mxu0 0.0
  %4431 = vmatpush.msra.mxu0 0.0
  %4432 = vmatpush.msra.mxu0 0.0
  %4433 = vmatpush.msra.mxu0 0.0
  %4434 = vmatpush.msra.mxu0 %v197
  %4435 = vmatpush.msra.mxu0 %v172
  %4436 = vmatpush.msra.mxu0 %v147
  %4437 = vmatpush.msra.mxu0 %v122
  %4438 = vmatpush.msra.mxu0 %v97
  %4439 = vmatpush.msra.mxu0 %v72
  %4440 = vmatpush.msra.mxu0 %v47
  %4441 = vmatpush.msra.mxu0 %v22
  %4442 = vmatmul.f32.gmra.mxu0 %v4198
  %v4443 = vpop.f32.mrf.mxu0
  %v4444 = vadd.f32 0.0, %v4443
  %4445 = vmatmul.f32.gmra.mxu0 %v4201
  %v4446 = vpop.f32.mrf.mxu0
  %v4447 = vadd.f32 0.0, %v4446
  %4448 = vmatmul.f32.gmra.mxu0 %v4204
  %v4449 = vpop.f32.mrf.mxu0
  %v4450 = vadd.f32 0.0, %v4449
  %4451 = vmatmul.f32.gmra.mxu0 %v4207
  %v4452 = vpop.f32.mrf.mxu0
  %v4453 = vadd.f32 0.0, %v4452
  %4454 = vmatmul.f32.gmra.mxu0 %v4210
  %v4455 = vpop.f32.mrf.mxu0
  %v4456 = vadd.f32 0.0, %v4455
  %4457 = vmatmul.f32.gmra.mxu0 %v4213
  %v4458 = vpop.f32.mrf.mxu0
  %v4459 = vadd.f32 0.0, %v4458
  %4460 = vmatmul.f32.gmra.mxu0 %v4216
  %v4461 = vpop.f32.mrf.mxu0
  %v4462 = vadd.f32 0.0, %v4461
  %4463 = vmatmul.f32.gmra.mxu0 %v4219
  %v4464 = vpop.f32.mrf.mxu0
  %v4465 = vadd.f32 0.0, %v4464
  %4466 = vdwg.mxu0
  %4467 = vmatpush.msra.mxu0 0.0
  %4468 = vmatpush.msra.mxu0 0.0
  %4469 = vmatpush.msra.mxu0 0.0
  %4470 = vmatpush.msra.mxu0 0.0
  %4471 = vmatpush.msra.mxu0 0.0
  %4472 = vmatpush.msra.mxu0 0.0
  %4473 = vmatpush.msra.mxu0 0.0
  %4474 = vmatpush.msra.mxu0 0.0
  %4475 = vmatpush.msra.mxu0 %v198
  %4476 = vmatpush.msra.mxu0 %v173
  %4477 = vmatpush.msra.mxu0 %v148
  %4478 = vmatpush.msra.mxu0 %v123
  %4479 = vmatpush.msra.mxu0 %v98
  %4480 = vmatpush.msra.mxu0 %v73
  %4481 = vmatpush.msra.mxu0 %v48
  %4482 = vmatpush.msra.mxu0 %v23
  %4483 = vmatmul.f32.gmra.mxu0 %v4198
  %v4484 = vpop.f32.mrf.mxu0
  %v4485 = vadd.f32 0.0, %v4484
  %4486 = vmatmul.f32.gmra.mxu0 %v4201
  %v4487 = vpop.f32.mrf.mxu0
  %v4488 = vadd.f32 0.0, %v4487
  %4489 = vmatmul.f32.gmra.mxu0 %v4204
  %v4490 = vpop.f32.mrf.mxu0
  %v4491 = vadd.f32 0.0, %v4490
  %4492 = vmatmul.f32.gmra.mxu0 %v4207
  %v4493 = vpop.f32.mrf.mxu0
  %v4494 = vadd.f32 0.0, %v4493
  %4495 = vmatmul.f32.gmra.mxu0 %v4210
  %v4496 = vpop.f32.mrf.mxu0
  %v4497 = vadd.f32 0.0, %v4496
  %4498 = vmatmul.f32.gmra.mxu0 %v4213
  %v4499 = vpop.f32.mrf.mxu0
  %v4500 = vadd.f32 0.0, %v4499
  %4501 = vmatmul.f32.gmra.mxu0 %v4216
  %v4502 = vpop.f32.mrf.mxu0
  %v4503 = vadd.f32 0.0, %v4502
  %4504 = vmatmul.f32.gmra.mxu0 %v4219
  %v4505 = vpop.f32.mrf.mxu0
  %v4506 = vadd.f32 0.0, %v4505
  %4507 = vdwg.mxu0
  %4508 = vmatpush.msra.mxu0 0.0
  %4509 = vmatpush.msra.mxu0 0.0
  %4510 = vmatpush.msra.mxu0 0.0
  %4511 = vmatpush.msra.mxu0 0.0
  %4512 = vmatpush.msra.mxu0 0.0
  %4513 = vmatpush.msra.mxu0 0.0
  %4514 = vmatpush.msra.mxu0 0.0
  %4515 = vmatpush.msra.mxu0 0.0
  %4516 = vmatpush.msra.mxu0 %v199
  %4517 = vmatpush.msra.mxu0 %v174
  %4518 = vmatpush.msra.mxu0 %v149
  %4519 = vmatpush.msra.mxu0 %v124
  %4520 = vmatpush.msra.mxu0 %v99
  %4521 = vmatpush.msra.mxu0 %v74
  %4522 = vmatpush.msra.mxu0 %v49
  %4523 = vmatpush.msra.mxu0 %v24
  %4524 = vmatmul.f32.gmra.mxu0 %v4198
  %v4525 = vpop.f32.mrf.mxu0
  %v4526 = vadd.f32 0.0, %v4525
  %4527 = vmatmul.f32.gmra.mxu0 %v4201
  %v4528 = vpop.f32.mrf.mxu0
  %v4529 = vadd.f32 0.0, %v4528
  %4530 = vmatmul.f32.gmra.mxu0 %v4204
  %v4531 = vpop.f32.mrf.mxu0
  %v4532 = vadd.f32 0.0, %v4531
  %4533 = vmatmul.f32.gmra.mxu0 %v4207
  %v4534 = vpop.f32.mrf.mxu0
  %v4535 = vadd.f32 0.0, %v4534
  %4536 = vmatmul.f32.gmra.mxu0 %v4210
  %v4537 = vpop.f32.mrf.mxu0
  %v4538 = vadd.f32 0.0, %v4537
  %4539 = vmatmul.f32.gmra.mxu0 %v4213
  %v4540 = vpop.f32.mrf.mxu0
  %v4541 = vadd.f32 0.0, %v4540
  %4542 = vmatmul.f32.gmra.mxu0 %v4216
  %v4543 = vpop.f32.mrf.mxu0
  %v4544 = vadd.f32 0.0, %v4543
  %4545 = vmatmul.f32.gmra.mxu0 %v4219
  %v4546 = vpop.f32.mrf.mxu0
  %v4547 = vadd.f32 0.0, %v4546
  %4548 = vdwg.mxu0
  %4549 = vmatpush.msra.mxu0 0.0
  %4550 = vmatpush.msra.mxu0 0.0
  %4551 = vmatpush.msra.mxu0 0.0
  %4552 = vmatpush.msra.mxu0 0.0
  %4553 = vmatpush.msra.mxu0 0.0
  %4554 = vmatpush.msra.mxu0 0.0
  %4555 = vmatpush.msra.mxu0 0.0
  %4556 = vmatpush.msra.mxu0 0.0
  %4557 = vmatpush.msra.mxu0 %v200
  %4558 = vmatpush.msra.mxu0 %v175
  %4559 = vmatpush.msra.mxu0 %v150
  %4560 = vmatpush.msra.mxu0 %v125
  %4561 = vmatpush.msra.mxu0 %v100
  %4562 = vmatpush.msra.mxu0 %v75
  %4563 = vmatpush.msra.mxu0 %v50
  %4564 = vmatpush.msra.mxu0 %v25
  %4565 = vmatmul.f32.gmra.mxu0 %v4198
  %v4566 = vpop.f32.mrf.mxu0
  %v4567 = vadd.f32 0.0, %v4566
  %4568 = vmatmul.f32.gmra.mxu0 %v4201
  %v4569 = vpop.f32.mrf.mxu0
  %v4570 = vadd.f32 0.0, %v4569
  %4571 = vmatmul.f32.gmra.mxu0 %v4204
  %v4572 = vpop.f32.mrf.mxu0
  %v4573 = vadd.f32 0.0, %v4572
  %4574 = vmatmul.f32.gmra.mxu0 %v4207
  %v4575 = vpop.f32.mrf.mxu0
  %v4576 = vadd.f32 0.0, %v4575
  %4577 = vmatmul.f32.gmra.mxu0 %v4210
  %v4578 = vpop.f32.mrf.mxu0
  %v4579 = vadd.f32 0.0, %v4578
  %4580 = vmatmul.f32.gmra.mxu0 %v4213
  %v4581 = vpop.f32.mrf.mxu0
  %v4582 = vadd.f32 0.0, %v4581
  %4583 = vmatmul.f32.gmra.mxu0 %v4216
  %v4584 = vpop.f32.mrf.mxu0
  %v4585 = vadd.f32 0.0, %v4584
  %4586 = vmatmul.f32.gmra.mxu0 %v4219
  %v4587 = vpop.f32.mrf.mxu0
  %v4588 = vadd.f32 0.0, %v4587
  %4589 = vdwg.mxu0
  %4590 = vmatpush.msra.mxu0 0.0
  %4591 = vmatpush.msra.mxu0 0.0
  %4592 = vmatpush.msra.mxu0 0.0
  %4593 = vmatpush.msra.mxu0 0.0
  %4594 = vmatpush.msra.mxu0 0.0
  %4595 = vmatpush.msra.mxu0 0.0
  %4596 = vmatpush.msra.mxu0 0.0
  %4597 = vmatpush.msra.mxu0 0.0
  %4598 = vmatpush.msra.mxu0 %v201
  %4599 = vmatpush.msra.mxu0 %v176
  %4600 = vmatpush.msra.mxu0 %v151
  %4601 = vmatpush.msra.mxu0 %v126
  %4602 = vmatpush.msra.mxu0 %v101
  %4603 = vmatpush.msra.mxu0 %v76
  %4604 = vmatpush.msra.mxu0 %v51
  %4605 = vmatpush.msra.mxu0 %v26
  %4606 = vmatmul.f32.gmra.mxu0 %v4198
  %v4607 = vpop.f32.mrf.mxu0
  %v4608 = vadd.f32 0.0, %v4607
  %4609 = vmatmul.f32.gmra.mxu0 %v4201
  %v4610 = vpop.f32.mrf.mxu0
  %v4611 = vadd.f32 0.0, %v4610
  %4612 = vmatmul.f32.gmra.mxu0 %v4204
  %v4613 = vpop.f32.mrf.mxu0
  %v4614 = vadd.f32 0.0, %v4613
  %4615 = vmatmul.f32.gmra.mxu0 %v4207
  %v4616 = vpop.f32.mrf.mxu0
  %v4617 = vadd.f32 0.0, %v4616
  %4618 = vmatmul.f32.gmra.mxu0 %v4210
  %v4619 = vpop.f32.mrf.mxu0
  %v4620 = vadd.f32 0.0, %v4619
  %4621 = vmatmul.f32.gmra.mxu0 %v4213
  %v4622 = vpop.f32.mrf.mxu0
  %v4623 = vadd.f32 0.0, %v4622
  %4624 = vmatmul.f32.gmra.mxu0 %v4216
  %v4625 = vpop.f32.mrf.mxu0
  %v4626 = vadd.f32 0.0, %v4625
  %4627 = vmatmul.f32.gmra.mxu0 %v4219
  %v4628 = vpop.f32.mrf.mxu0
  %v4629 = vadd.f32 0.0, %v4628
  %4630 = vdwg.mxu0
  %4631 = vmatpush.msra.mxu0 0.0
  %4632 = vmatpush.msra.mxu0 0.0
  %4633 = vmatpush.msra.mxu0 0.0
  %4634 = vmatpush.msra.mxu0 0.0
  %4635 = vmatpush.msra.mxu0 0.0
  %4636 = vmatpush.msra.mxu0 0.0
  %4637 = vmatpush.msra.mxu0 0.0
  %4638 = vmatpush.msra.mxu0 0.0
  %4639 = vmatpush.msra.mxu0 %v202
  %4640 = vmatpush.msra.mxu0 %v177
  %4641 = vmatpush.msra.mxu0 %v152
  %4642 = vmatpush.msra.mxu0 %v127
  %4643 = vmatpush.msra.mxu0 %v102
  %4644 = vmatpush.msra.mxu0 %v77
  %4645 = vmatpush.msra.mxu0 %v52
  %4646 = vmatpush.msra.mxu0 %v27
  %4647 = vmatmul.f32.gmra.mxu0 %v4198
  %v4648 = vpop.f32.mrf.mxu0
  %v4649 = vadd.f32 0.0, %v4648
  %4650 = vmatmul.f32.gmra.mxu0 %v4201
  %v4651 = vpop.f32.mrf.mxu0
  %v4652 = vadd.f32 0.0, %v4651
  %4653 = vmatmul.f32.gmra.mxu0 %v4204
  %v4654 = vpop.f32.mrf.mxu0
  %v4655 = vadd.f32 0.0, %v4654
  %4656 = vmatmul.f32.gmra.mxu0 %v4207
  %v4657 = vpop.f32.mrf.mxu0
  %v4658 = vadd.f32 0.0, %v4657
  %4659 = vmatmul.f32.gmra.mxu0 %v4210
  %v4660 = vpop.f32.mrf.mxu0
  %v4661 = vadd.f32 0.0, %v4660
  %4662 = vmatmul.f32.gmra.mxu0 %v4213
  %v4663 = vpop.f32.mrf.mxu0
  %v4664 = vadd.f32 0.0, %v4663
  %4665 = vmatmul.f32.gmra.mxu0 %v4216
  %v4666 = vpop.f32.mrf.mxu0
  %v4667 = vadd.f32 0.0, %v4666
  %4668 = vmatmul.f32.gmra.mxu0 %v4219
  %v4669 = vpop.f32.mrf.mxu0
  %v4670 = vadd.f32 0.0, %v4669
  %4671 = vdwg.mxu0
  %4672 = vmatpush.msra.mxu0 0.0
  %4673 = vmatpush.msra.mxu0 0.0
  %4674 = vmatpush.msra.mxu0 0.0
  %4675 = vmatpush.msra.mxu0 0.0
  %4676 = vmatpush.msra.mxu0 0.0
  %4677 = vmatpush.msra.mxu0 0.0
  %4678 = vmatpush.msra.mxu0 0.0
  %4679 = vmatpush.msra.mxu0 0.0
  %4680 = vmatpush.msra.mxu0 %v203
  %4681 = vmatpush.msra.mxu0 %v178
  %4682 = vmatpush.msra.mxu0 %v153
  %4683 = vmatpush.msra.mxu0 %v128
  %4684 = vmatpush.msra.mxu0 %v103
  %4685 = vmatpush.msra.mxu0 %v78
  %4686 = vmatpush.msra.mxu0 %v53
  %4687 = vmatpush.msra.mxu0 %v28
  %4688 = vmatmul.f32.gmra.mxu0 %v4198
  %v4689 = vpop.f32.mrf.mxu0
  %v4690 = vadd.f32 0.0, %v4689
  %4691 = vmatmul.f32.gmra.mxu0 %v4201
  %v4692 = vpop.f32.mrf.mxu0
  %v4693 = vadd.f32 0.0, %v4692
  %4694 = vmatmul.f32.gmra.mxu0 %v4204
  %v4695 = vpop.f32.mrf.mxu0
  %v4696 = vadd.f32 0.0, %v4695
  %4697 = vmatmul.f32.gmra.mxu0 %v4207
  %v4698 = vpop.f32.mrf.mxu0
  %v4699 = vadd.f32 0.0, %v4698
  %4700 = vmatmul.f32.gmra.mxu0 %v4210
  %v4701 = vpop.f32.mrf.mxu0
  %v4702 = vadd.f32 0.0, %v4701
  %4703 = vmatmul.f32.gmra.mxu0 %v4213
  %v4704 = vpop.f32.mrf.mxu0
  %v4705 = vadd.f32 0.0, %v4704
  %4706 = vmatmul.f32.gmra.mxu0 %v4216
  %v4707 = vpop.f32.mrf.mxu0
  %v4708 = vadd.f32 0.0, %v4707
  %4709 = vmatmul.f32.gmra.mxu0 %v4219
  %v4710 = vpop.f32.mrf.mxu0
  %v4711 = vadd.f32 0.0, %v4710
  %4712 = vdwg.mxu0
  %4713 = vmatpush.msra.mxu0 0.0
  %4714 = vmatpush.msra.mxu0 0.0
  %4715 = vmatpush.msra.mxu0 0.0
  %4716 = vmatpush.msra.mxu0 0.0
  %4717 = vmatpush.msra.mxu0 0.0
  %4718 = vmatpush.msra.mxu0 0.0
  %4719 = vmatpush.msra.mxu0 0.0
  %4720 = vmatpush.msra.mxu0 0.0
  %4721 = vmatpush.msra.mxu0 %v204
  %4722 = vmatpush.msra.mxu0 %v179
  %4723 = vmatpush.msra.mxu0 %v154
  %4724 = vmatpush.msra.mxu0 %v129
  %4725 = vmatpush.msra.mxu0 %v104
  %4726 = vmatpush.msra.mxu0 %v79
  %4727 = vmatpush.msra.mxu0 %v54
  %4728 = vmatpush.msra.mxu0 %v29
  %4729 = vmatmul.f32.gmra.mxu0 %v4198
  %v4730 = vpop.f32.mrf.mxu0
  %v4731 = vadd.f32 0.0, %v4730
  %4732 = vmatmul.f32.gmra.mxu0 %v4201
  %v4733 = vpop.f32.mrf.mxu0
  %v4734 = vadd.f32 0.0, %v4733
  %4735 = vmatmul.f32.gmra.mxu0 %v4204
  %v4736 = vpop.f32.mrf.mxu0
  %v4737 = vadd.f32 0.0, %v4736
  %4738 = vmatmul.f32.gmra.mxu0 %v4207
  %v4739 = vpop.f32.mrf.mxu0
  %v4740 = vadd.f32 0.0, %v4739
  %4741 = vmatmul.f32.gmra.mxu0 %v4210
  %v4742 = vpop.f32.mrf.mxu0
  %v4743 = vadd.f32 0.0, %v4742
  %4744 = vmatmul.f32.gmra.mxu0 %v4213
  %v4745 = vpop.f32.mrf.mxu0
  %v4746 = vadd.f32 0.0, %v4745
  %4747 = vmatmul.f32.gmra.mxu0 %v4216
  %v4748 = vpop.f32.mrf.mxu0
  %v4749 = vadd.f32 0.0, %v4748
  %4750 = vmatmul.f32.gmra.mxu0 %v4219
  %v4751 = vpop.f32.mrf.mxu0
  %v4752 = vadd.f32 0.0, %v4751
  %4753 = vdwg.mxu0
  %4754 = vmatpush.msra.mxu0 0.0
  %4755 = vmatpush.msra.mxu0 0.0
  %4756 = vmatpush.msra.mxu0 0.0
  %4757 = vmatpush.msra.mxu0 0.0
  %4758 = vmatpush.msra.mxu0 0.0
  %4759 = vmatpush.msra.mxu0 0.0
  %4760 = vmatpush.msra.mxu0 0.0
  %4761 = vmatpush.msra.mxu0 0.0
  %4762 = vmatpush.msra.mxu0 %v205
  %4763 = vmatpush.msra.mxu0 %v180
  %4764 = vmatpush.msra.mxu0 %v155
  %4765 = vmatpush.msra.mxu0 %v130
  %4766 = vmatpush.msra.mxu0 %v105
  %4767 = vmatpush.msra.mxu0 %v80
  %4768 = vmatpush.msra.mxu0 %v55
  %4769 = vmatpush.msra.mxu0 %v30
  %4770 = vmatmul.f32.gmra.mxu0 %v4198
  %v4771 = vpop.f32.mrf.mxu0
  %v4772 = vadd.f32 0.0, %v4771
  %4773 = vmatmul.f32.gmra.mxu0 %v4201
  %v4774 = vpop.f32.mrf.mxu0
  %v4775 = vadd.f32 0.0, %v4774
  %4776 = vmatmul.f32.gmra.mxu0 %v4204
  %v4777 = vpop.f32.mrf.mxu0
  %v4778 = vadd.f32 0.0, %v4777
  %4779 = vmatmul.f32.gmra.mxu0 %v4207
  %v4780 = vpop.f32.mrf.mxu0
  %v4781 = vadd.f32 0.0, %v4780
  %4782 = vmatmul.f32.gmra.mxu0 %v4210
  %v4783 = vpop.f32.mrf.mxu0
  %v4784 = vadd.f32 0.0, %v4783
  %4785 = vmatmul.f32.gmra.mxu0 %v4213
  %v4786 = vpop.f32.mrf.mxu0
  %v4787 = vadd.f32 0.0, %v4786
  %4788 = vmatmul.f32.gmra.mxu0 %v4216
  %v4789 = vpop.f32.mrf.mxu0
  %v4790 = vadd.f32 0.0, %v4789
  %4791 = vmatmul.f32.gmra.mxu0 %v4219
  %v4792 = vpop.f32.mrf.mxu0
  %v4793 = vadd.f32 0.0, %v4792
  %4794 = vdwg.mxu0
  %4795 = vmatpush.msra.mxu0 0.0
  %4796 = vmatpush.msra.mxu0 0.0
  %4797 = vmatpush.msra.mxu0 0.0
  %4798 = vmatpush.msra.mxu0 0.0
  %4799 = vmatpush.msra.mxu0 0.0
  %4800 = vmatpush.msra.mxu0 0.0
  %4801 = vmatpush.msra.mxu0 0.0
  %4802 = vmatpush.msra.mxu0 0.0
  %4803 = vmatpush.msra.mxu0 %v206
  %4804 = vmatpush.msra.mxu0 %v181
  %4805 = vmatpush.msra.mxu0 %v156
  %4806 = vmatpush.msra.mxu0 %v131
  %4807 = vmatpush.msra.mxu0 %v106
  %4808 = vmatpush.msra.mxu0 %v81
  %4809 = vmatpush.msra.mxu0 %v56
  %4810 = vmatpush.msra.mxu0 %v31
  %4811 = vmatmul.f32.gmra.mxu0 %v4198
  %v4812 = vpop.f32.mrf.mxu0
  %v4813 = vadd.f32 0.0, %v4812
  %4814 = vmatmul.f32.gmra.mxu0 %v4201
  %v4815 = vpop.f32.mrf.mxu0
  %v4816 = vadd.f32 0.0, %v4815
  %4817 = vmatmul.f32.gmra.mxu0 %v4204
  %v4818 = vpop.f32.mrf.mxu0
  %v4819 = vadd.f32 0.0, %v4818
  %4820 = vmatmul.f32.gmra.mxu0 %v4207
  %v4821 = vpop.f32.mrf.mxu0
  %v4822 = vadd.f32 0.0, %v4821
  %4823 = vmatmul.f32.gmra.mxu0 %v4210
  %v4824 = vpop.f32.mrf.mxu0
  %v4825 = vadd.f32 0.0, %v4824
  %4826 = vmatmul.f32.gmra.mxu0 %v4213
  %v4827 = vpop.f32.mrf.mxu0
  %v4828 = vadd.f32 0.0, %v4827
  %4829 = vmatmul.f32.gmra.mxu0 %v4216
  %v4830 = vpop.f32.mrf.mxu0
  %v4831 = vadd.f32 0.0, %v4830
  %4832 = vmatmul.f32.gmra.mxu0 %v4219
  %v4833 = vpop.f32.mrf.mxu0
  %v4834 = vadd.f32 0.0, %v4833
  %4835 = vdwg.mxu0
  %4836 = vmatpush.msra.mxu0 0.0
  %4837 = vmatpush.msra.mxu0 0.0
  %4838 = vmatpush.msra.mxu0 0.0
  %4839 = vmatpush.msra.mxu0 0.0
  %4840 = vmatpush.msra.mxu0 0.0
  %4841 = vmatpush.msra.mxu0 0.0
  %4842 = vmatpush.msra.mxu0 0.0
  %4843 = vmatpush.msra.mxu0 0.0
  %4844 = vmatpush.msra.mxu0 %v207
  %4845 = vmatpush.msra.mxu0 %v182
  %4846 = vmatpush.msra.mxu0 %v157
  %4847 = vmatpush.msra.mxu0 %v132
  %4848 = vmatpush.msra.mxu0 %v107
  %4849 = vmatpush.msra.mxu0 %v82
  %4850 = vmatpush.msra.mxu0 %v57
  %4851 = vmatpush.msra.mxu0 %v32
  %4852 = vmatmul.f32.gmra.mxu0 %v4198
  %v4853 = vpop.f32.mrf.mxu0
  %v4854 = vadd.f32 0.0, %v4853
  %4855 = vmatmul.f32.gmra.mxu0 %v4201
  %v4856 = vpop.f32.mrf.mxu0
  %v4857 = vadd.f32 0.0, %v4856
  %4858 = vmatmul.f32.gmra.mxu0 %v4204
  %v4859 = vpop.f32.mrf.mxu0
  %v4860 = vadd.f32 0.0, %v4859
  %4861 = vmatmul.f32.gmra.mxu0 %v4207
  %v4862 = vpop.f32.mrf.mxu0
  %v4863 = vadd.f32 0.0, %v4862
  %4864 = vmatmul.f32.gmra.mxu0 %v4210
  %v4865 = vpop.f32.mrf.mxu0
  %v4866 = vadd.f32 0.0, %v4865
  %4867 = vmatmul.f32.gmra.mxu0 %v4213
  %v4868 = vpop.f32.mrf.mxu0
  %v4869 = vadd.f32 0.0, %v4868
  %4870 = vmatmul.f32.gmra.mxu0 %v4216
  %v4871 = vpop.f32.mrf.mxu0
  %v4872 = vadd.f32 0.0, %v4871
  %4873 = vmatmul.f32.gmra.mxu0 %v4219
  %v4874 = vpop.f32.mrf.mxu0
  %v4875 = vadd.f32 0.0, %v4874
  %4876 = vdwg.mxu0
  %4877 = vmatpush.msra.mxu0 0.0
  %4878 = vmatpush.msra.mxu0 0.0
  %4879 = vmatpush.msra.mxu0 0.0
  %4880 = vmatpush.msra.mxu0 0.0
  %4881 = vmatpush.msra.mxu0 0.0
  %4882 = vmatpush.msra.mxu0 0.0
  %4883 = vmatpush.msra.mxu0 0.0
  %4884 = vmatpush.msra.mxu0 0.0
  %4885 = vmatpush.msra.mxu0 %v208
  %4886 = vmatpush.msra.mxu0 %v183
  %4887 = vmatpush.msra.mxu0 %v158
  %4888 = vmatpush.msra.mxu0 %v133
  %4889 = vmatpush.msra.mxu0 %v108
  %4890 = vmatpush.msra.mxu0 %v83
  %4891 = vmatpush.msra.mxu0 %v58
  %4892 = vmatpush.msra.mxu0 %v33
  %4893 = vmatmul.f32.gmra.mxu0 %v4198
  %v4894 = vpop.f32.mrf.mxu0
  %v4895 = vadd.f32 0.0, %v4894
  %4896 = vmatmul.f32.gmra.mxu0 %v4201
  %v4897 = vpop.f32.mrf.mxu0
  %v4898 = vadd.f32 0.0, %v4897
  %4899 = vmatmul.f32.gmra.mxu0 %v4204
  %v4900 = vpop.f32.mrf.mxu0
  %v4901 = vadd.f32 0.0, %v4900
  %4902 = vmatmul.f32.gmra.mxu0 %v4207
  %v4903 = vpop.f32.mrf.mxu0
  %v4904 = vadd.f32 0.0, %v4903
  %4905 = vmatmul.f32.gmra.mxu0 %v4210
  %v4906 = vpop.f32.mrf.mxu0
  %v4907 = vadd.f32 0.0, %v4906
  %4908 = vmatmul.f32.gmra.mxu0 %v4213
  %v4909 = vpop.f32.mrf.mxu0
  %v4910 = vadd.f32 0.0, %v4909
  %4911 = vmatmul.f32.gmra.mxu0 %v4216
  %v4912 = vpop.f32.mrf.mxu0
  %v4913 = vadd.f32 0.0, %v4912
  %4914 = vmatmul.f32.gmra.mxu0 %v4219
  %v4915 = vpop.f32.mrf.mxu0
  %v4916 = vadd.f32 0.0, %v4915
  %4917 = vdwg.mxu0
  %4918 = vmatpush.msra.mxu0 0.0
  %4919 = vmatpush.msra.mxu0 0.0
  %4920 = vmatpush.msra.mxu0 0.0
  %4921 = vmatpush.msra.mxu0 0.0
  %4922 = vmatpush.msra.mxu0 0.0
  %4923 = vmatpush.msra.mxu0 0.0
  %4924 = vmatpush.msra.mxu0 0.0
  %4925 = vmatpush.msra.mxu0 0.0
  %4926 = vmatpush.msra.mxu0 %v209
  %4927 = vmatpush.msra.mxu0 %v184
  %4928 = vmatpush.msra.mxu0 %v159
  %4929 = vmatpush.msra.mxu0 %v134
  %4930 = vmatpush.msra.mxu0 %v109
  %4931 = vmatpush.msra.mxu0 %v84
  %4932 = vmatpush.msra.mxu0 %v59
  %4933 = vmatpush.msra.mxu0 %v34
  %4934 = vmatmul.f32.gmra.mxu0 %v4198
  %v4935 = vpop.f32.mrf.mxu0
  %v4936 = vadd.f32 0.0, %v4935
  %4937 = vmatmul.f32.gmra.mxu0 %v4201
  %v4938 = vpop.f32.mrf.mxu0
  %v4939 = vadd.f32 0.0, %v4938
  %4940 = vmatmul.f32.gmra.mxu0 %v4204
  %v4941 = vpop.f32.mrf.mxu0
  %v4942 = vadd.f32 0.0, %v4941
  %4943 = vmatmul.f32.gmra.mxu0 %v4207
  %v4944 = vpop.f32.mrf.mxu0
  %v4945 = vadd.f32 0.0, %v4944
  %4946 = vmatmul.f32.gmra.mxu0 %v4210
  %v4947 = vpop.f32.mrf.mxu0
  %v4948 = vadd.f32 0.0, %v4947
  %4949 = vmatmul.f32.gmra.mxu0 %v4213
  %v4950 = vpop.f32.mrf.mxu0
  %v4951 = vadd.f32 0.0, %v4950
  %4952 = vmatmul.f32.gmra.mxu0 %v4216
  %v4953 = vpop.f32.mrf.mxu0
  %v4954 = vadd.f32 0.0, %v4953
  %4955 = vmatmul.f32.gmra.mxu0 %v4219
  %v4956 = vpop.f32.mrf.mxu0
  %v4957 = vadd.f32 0.0, %v4956
  %4958 = vdwg.mxu0
  %4959 = vmatpush.msra.mxu0 0.0
  %4960 = vmatpush.msra.mxu0 0.0
  %4961 = vmatpush.msra.mxu0 0.0
  %4962 = vmatpush.msra.mxu0 0.0
  %4963 = vmatpush.msra.mxu0 0.0
  %4964 = vmatpush.msra.mxu0 0.0
  %4965 = vmatpush.msra.mxu0 0.0
  %4966 = vmatpush.msra.mxu0 0.0
  %4967 = vmatpush.msra.mxu0 %v210
  %4968 = vmatpush.msra.mxu0 %v185
  %4969 = vmatpush.msra.mxu0 %v160
  %4970 = vmatpush.msra.mxu0 %v135
  %4971 = vmatpush.msra.mxu0 %v110
  %4972 = vmatpush.msra.mxu0 %v85
  %4973 = vmatpush.msra.mxu0 %v60
  %4974 = vmatpush.msra.mxu0 %v35
  %4975 = vmatmul.f32.gmra.mxu0 %v4198
  %v4976 = vpop.f32.mrf.mxu0
  %v4977 = vadd.f32 0.0, %v4976
  %4978 = vmatmul.f32.gmra.mxu0 %v4201
  %v4979 = vpop.f32.mrf.mxu0
  %v4980 = vadd.f32 0.0, %v4979
  %4981 = vmatmul.f32.gmra.mxu0 %v4204
  %v4982 = vpop.f32.mrf.mxu0
  %v4983 = vadd.f32 0.0, %v4982
  %4984 = vmatmul.f32.gmra.mxu0 %v4207
  %v4985 = vpop.f32.mrf.mxu0
  %v4986 = vadd.f32 0.0, %v4985
  %4987 = vmatmul.f32.gmra.mxu0 %v4210
  %v4988 = vpop.f32.mrf.mxu0
  %v4989 = vadd.f32 0.0, %v4988
  %4990 = vmatmul.f32.gmra.mxu0 %v4213
  %v4991 = vpop.f32.mrf.mxu0
  %v4992 = vadd.f32 0.0, %v4991
  %4993 = vmatmul.f32.gmra.mxu0 %v4216
  %v4994 = vpop.f32.mrf.mxu0
  %v4995 = vadd.f32 0.0, %v4994
  %4996 = vmatmul.f32.gmra.mxu0 %v4219
  %v4997 = vpop.f32.mrf.mxu0
  %v4998 = vadd.f32 0.0, %v4997
  %4999 = vdwg.mxu0
  %5000 = vmatpush.msra.mxu0 0.0
  %5001 = vmatpush.msra.mxu0 0.0
  %5002 = vmatpush.msra.mxu0 0.0
  %5003 = vmatpush.msra.mxu0 0.0
  %5004 = vmatpush.msra.mxu0 0.0
  %5005 = vmatpush.msra.mxu0 0.0
  %5006 = vmatpush.msra.mxu0 0.0
  %5007 = vmatpush.msra.mxu0 0.0
  %5008 = vmatpush.msra.mxu0 %v211
  %5009 = vmatpush.msra.mxu0 %v186
  %5010 = vmatpush.msra.mxu0 %v161
  %5011 = vmatpush.msra.mxu0 %v136
  %5012 = vmatpush.msra.mxu0 %v111
  %5013 = vmatpush.msra.mxu0 %v86
  %5014 = vmatpush.msra.mxu0 %v61
  %5015 = vmatpush.msra.mxu0 %v36
  %5016 = vmatmul.f32.gmra.mxu0 %v4198
  %v5017 = vpop.f32.mrf.mxu0
  %v5018 = vadd.f32 0.0, %v5017
  %5019 = vmatmul.f32.gmra.mxu0 %v4201
  %v5020 = vpop.f32.mrf.mxu0
  %v5021 = vadd.f32 0.0, %v5020
  %5022 = vmatmul.f32.gmra.mxu0 %v4204
  %v5023 = vpop.f32.mrf.mxu0
  %v5024 = vadd.f32 0.0, %v5023
  %5025 = vmatmul.f32.gmra.mxu0 %v4207
  %v5026 = vpop.f32.mrf.mxu0
  %v5027 = vadd.f32 0.0, %v5026
  %5028 = vmatmul.f32.gmra.mxu0 %v4210
  %v5029 = vpop.f32.mrf.mxu0
  %v5030 = vadd.f32 0.0, %v5029
  %5031 = vmatmul.f32.gmra.mxu0 %v4213
  %v5032 = vpop.f32.mrf.mxu0
  %v5033 = vadd.f32 0.0, %v5032
  %5034 = vmatmul.f32.gmra.mxu0 %v4216
  %v5035 = vpop.f32.mrf.mxu0
  %v5036 = vadd.f32 0.0, %v5035
  %5037 = vmatmul.f32.gmra.mxu0 %v4219
  %v5038 = vpop.f32.mrf.mxu0
  %v5039 = vadd.f32 0.0, %v5038
  %5040 = vdwg.mxu0
  %5041 = vmatpush.msra.mxu0 0.0
  %5042 = vmatpush.msra.mxu0 0.0
  %5043 = vmatpush.msra.mxu0 0.0
  %5044 = vmatpush.msra.mxu0 0.0
  %5045 = vmatpush.msra.mxu0 0.0
  %5046 = vmatpush.msra.mxu0 0.0
  %5047 = vmatpush.msra.mxu0 0.0
  %5048 = vmatpush.msra.mxu0 0.0
  %5049 = vmatpush.msra.mxu0 %v212
  %5050 = vmatpush.msra.mxu0 %v187
  %5051 = vmatpush.msra.mxu0 %v162
  %5052 = vmatpush.msra.mxu0 %v137
  %5053 = vmatpush.msra.mxu0 %v112
  %5054 = vmatpush.msra.mxu0 %v87
  %5055 = vmatpush.msra.mxu0 %v62
  %5056 = vmatpush.msra.mxu0 %v37
  %5057 = vmatmul.f32.gmra.mxu0 %v4198
  %v5058 = vpop.f32.mrf.mxu0
  %v5059 = vadd.f32 0.0, %v5058
  %5060 = vmatmul.f32.gmra.mxu0 %v4201
  %v5061 = vpop.f32.mrf.mxu0
  %v5062 = vadd.f32 0.0, %v5061
  %5063 = vmatmul.f32.gmra.mxu0 %v4204
  %v5064 = vpop.f32.mrf.mxu0
  %v5065 = vadd.f32 0.0, %v5064
  %5066 = vmatmul.f32.gmra.mxu0 %v4207
  %v5067 = vpop.f32.mrf.mxu0
  %v5068 = vadd.f32 0.0, %v5067
  %5069 = vmatmul.f32.gmra.mxu0 %v4210
  %v5070 = vpop.f32.mrf.mxu0
  %v5071 = vadd.f32 0.0, %v5070
  %5072 = vmatmul.f32.gmra.mxu0 %v4213
  %v5073 = vpop.f32.mrf.mxu0
  %v5074 = vadd.f32 0.0, %v5073
  %5075 = vmatmul.f32.gmra.mxu0 %v4216
  %v5076 = vpop.f32.mrf.mxu0
  %v5077 = vadd.f32 0.0, %v5076
  %5078 = vmatmul.f32.gmra.mxu0 %v4219
  %v5079 = vpop.f32.mrf.mxu0
  %v5080 = vadd.f32 0.0, %v5079
  %5081 = vdwg.mxu0
  %5082 = vmatpush.msra.mxu0 0.0
  %5083 = vmatpush.msra.mxu0 0.0
  %5084 = vmatpush.msra.mxu0 0.0
  %5085 = vmatpush.msra.mxu0 0.0
  %5086 = vmatpush.msra.mxu0 0.0
  %5087 = vmatpush.msra.mxu0 0.0
  %5088 = vmatpush.msra.mxu0 0.0
  %5089 = vmatpush.msra.mxu0 0.0
  %5090 = vmatpush.msra.mxu0 %v213
  %5091 = vmatpush.msra.mxu0 %v188
  %5092 = vmatpush.msra.mxu0 %v163
  %5093 = vmatpush.msra.mxu0 %v138
  %5094 = vmatpush.msra.mxu0 %v113
  %5095 = vmatpush.msra.mxu0 %v88
  %5096 = vmatpush.msra.mxu0 %v63
  %5097 = vmatpush.msra.mxu0 %v38
  %5098 = vmatmul.f32.gmra.mxu0 %v4198
  %v5099 = vpop.f32.mrf.mxu0
  %v5100 = vadd.f32 0.0, %v5099
  %5101 = vmatmul.f32.gmra.mxu0 %v4201
  %v5102 = vpop.f32.mrf.mxu0
  %v5103 = vadd.f32 0.0, %v5102
  %5104 = vmatmul.f32.gmra.mxu0 %v4204
  %v5105 = vpop.f32.mrf.mxu0
  %v5106 = vadd.f32 0.0, %v5105
  %5107 = vmatmul.f32.gmra.mxu0 %v4207
  %v5108 = vpop.f32.mrf.mxu0
  %v5109 = vadd.f32 0.0, %v5108
  %5110 = vmatmul.f32.gmra.mxu0 %v4210
  %v5111 = vpop.f32.mrf.mxu0
  %v5112 = vadd.f32 0.0, %v5111
  %5113 = vmatmul.f32.gmra.mxu0 %v4213
  %v5114 = vpop.f32.mrf.mxu0
  %v5115 = vadd.f32 0.0, %v5114
  %5116 = vmatmul.f32.gmra.mxu0 %v4216
  %v5117 = vpop.f32.mrf.mxu0
  %v5118 = vadd.f32 0.0, %v5117
  %5119 = vmatmul.f32.gmra.mxu0 %v4219
  %v5120 = vpop.f32.mrf.mxu0
  %v5121 = vadd.f32 0.0, %v5120
  %5122 = vdwg.mxu0
  %5123 = vmatpush.msra.mxu0 0.0
  %5124 = vmatpush.msra.mxu0 0.0
  %5125 = vmatpush.msra.mxu0 0.0
  %5126 = vmatpush.msra.mxu0 0.0
  %5127 = vmatpush.msra.mxu0 0.0
  %5128 = vmatpush.msra.mxu0 0.0
  %5129 = vmatpush.msra.mxu0 0.0
  %5130 = vmatpush.msra.mxu0 0.0
  %5131 = vmatpush.msra.mxu0 %v214
  %5132 = vmatpush.msra.mxu0 %v189
  %5133 = vmatpush.msra.mxu0 %v164
  %5134 = vmatpush.msra.mxu0 %v139
  %5135 = vmatpush.msra.mxu0 %v114
  %5136 = vmatpush.msra.mxu0 %v89
  %5137 = vmatpush.msra.mxu0 %v64
  %5138 = vmatpush.msra.mxu0 %v39
  %5139 = vmatmul.f32.gmra.mxu0 %v4198
  %v5140 = vpop.f32.mrf.mxu0
  %v5141 = vadd.f32 0.0, %v5140
  %5142 = vmatmul.f32.gmra.mxu0 %v4201
  %v5143 = vpop.f32.mrf.mxu0
  %v5144 = vadd.f32 0.0, %v5143
  %5145 = vmatmul.f32.gmra.mxu0 %v4204
  %v5146 = vpop.f32.mrf.mxu0
  %v5147 = vadd.f32 0.0, %v5146
  %5148 = vmatmul.f32.gmra.mxu0 %v4207
  %v5149 = vpop.f32.mrf.mxu0
  %v5150 = vadd.f32 0.0, %v5149
  %5151 = vmatmul.f32.gmra.mxu0 %v4210
  %v5152 = vpop.f32.mrf.mxu0
  %v5153 = vadd.f32 0.0, %v5152
  %5154 = vmatmul.f32.gmra.mxu0 %v4213
  %v5155 = vpop.f32.mrf.mxu0
  %v5156 = vadd.f32 0.0, %v5155
  %5157 = vmatmul.f32.gmra.mxu0 %v4216
  %v5158 = vpop.f32.mrf.mxu0
  %v5159 = vadd.f32 0.0, %v5158
  %5160 = vmatmul.f32.gmra.mxu0 %v4219
  %v5161 = vpop.f32.mrf.mxu0
  %v5162 = vadd.f32 0.0, %v5161
  %5163 = vdwg.mxu0
  %5164 = vmatpush.msra.mxu0 0.0
  %5165 = vmatpush.msra.mxu0 0.0
  %5166 = vmatpush.msra.mxu0 0.0
  %5167 = vmatpush.msra.mxu0 0.0
  %5168 = vmatpush.msra.mxu0 0.0
  %5169 = vmatpush.msra.mxu0 0.0
  %5170 = vmatpush.msra.mxu0 0.0
  %5171 = vmatpush.msra.mxu0 0.0
  %5172 = vmatpush.msra.mxu0 %v215
  %5173 = vmatpush.msra.mxu0 %v190
  %5174 = vmatpush.msra.mxu0 %v165
  %5175 = vmatpush.msra.mxu0 %v140
  %5176 = vmatpush.msra.mxu0 %v115
  %5177 = vmatpush.msra.mxu0 %v90
  %5178 = vmatpush.msra.mxu0 %v65
  %5179 = vmatpush.msra.mxu0 %v40
  %5180 = vmatmul.f32.gmra.mxu0 %v4198
  %v5181 = vpop.f32.mrf.mxu0
  %v5182 = vadd.f32 0.0, %v5181
  %5183 = vmatmul.f32.gmra.mxu0 %v4201
  %v5184 = vpop.f32.mrf.mxu0
  %v5185 = vadd.f32 0.0, %v5184
  %5186 = vmatmul.f32.gmra.mxu0 %v4204
  %v5187 = vpop.f32.mrf.mxu0
  %v5188 = vadd.f32 0.0, %v5187
  %5189 = vmatmul.f32.gmra.mxu0 %v4207
  %v5190 = vpop.f32.mrf.mxu0
  %v5191 = vadd.f32 0.0, %v5190
  %5192 = vmatmul.f32.gmra.mxu0 %v4210
  %v5193 = vpop.f32.mrf.mxu0
  %v5194 = vadd.f32 0.0, %v5193
  %5195 = vmatmul.f32.gmra.mxu0 %v4213
  %v5196 = vpop.f32.mrf.mxu0
  %v5197 = vadd.f32 0.0, %v5196
  %5198 = vmatmul.f32.gmra.mxu0 %v4216
  %v5199 = vpop.f32.mrf.mxu0
  %v5200 = vadd.f32 0.0, %v5199
  %5201 = vmatmul.f32.gmra.mxu0 %v4219
  %v5202 = vpop.f32.mrf.mxu0
  %v5203 = vadd.f32 0.0, %v5202
  %5204 = vdwg.mxu0
  %5205 = vmatpush.msra.mxu0 0.0
  %5206 = vmatpush.msra.mxu0 0.0
  %5207 = vmatpush.msra.mxu0 0.0
  %5208 = vmatpush.msra.mxu0 0.0
  %5209 = vmatpush.msra.mxu0 0.0
  %5210 = vmatpush.msra.mxu0 0.0
  %5211 = vmatpush.msra.mxu0 0.0
  %5212 = vmatpush.msra.mxu0 0.0
  %5213 = vmatpush.msra.mxu0 %v216
  %5214 = vmatpush.msra.mxu0 %v191
  %5215 = vmatpush.msra.mxu0 %v166
  %5216 = vmatpush.msra.mxu0 %v141
  %5217 = vmatpush.msra.mxu0 %v116
  %5218 = vmatpush.msra.mxu0 %v91
  %5219 = vmatpush.msra.mxu0 %v66
  %5220 = vmatpush.msra.mxu0 %v41
  %5221 = vmatmul.f32.gmra.mxu0 %v4198
  %v5222 = vpop.f32.mrf.mxu0
  %v5223 = vadd.f32 0.0, %v5222
  %5224 = vmatmul.f32.gmra.mxu0 %v4201
  %v5225 = vpop.f32.mrf.mxu0
  %v5226 = vadd.f32 0.0, %v5225
  %5227 = vmatmul.f32.gmra.mxu0 %v4204
  %v5228 = vpop.f32.mrf.mxu0
  %v5229 = vadd.f32 0.0, %v5228
  %5230 = vmatmul.f32.gmra.mxu0 %v4207
  %v5231 = vpop.f32.mrf.mxu0
  %v5232 = vadd.f32 0.0, %v5231
  %5233 = vmatmul.f32.gmra.mxu0 %v4210
  %v5234 = vpop.f32.mrf.mxu0
  %v5235 = vadd.f32 0.0, %v5234
  %5236 = vmatmul.f32.gmra.mxu0 %v4213
  %v5237 = vpop.f32.mrf.mxu0
  %v5238 = vadd.f32 0.0, %v5237
  %5239 = vmatmul.f32.gmra.mxu0 %v4216
  %v5240 = vpop.f32.mrf.mxu0
  %v5241 = vadd.f32 0.0, %v5240
  %5242 = vmatmul.f32.gmra.mxu0 %v4219
  %v5243 = vpop.f32.mrf.mxu0
  %v5244 = vadd.f32 0.0, %v5243
  %5245 = vdwg.mxu0
  %s5246 = scalar_lea.vmem %s3, 1
  %v5247 = vld [vmem:[%s5246] ss:$2 sm:$0xff]
  %s5248 = scalar_lea.vmem %s3, 17
  %v5249 = vld [vmem:[%s5248] ss:$2 sm:$0xff]
  %s5250 = scalar_lea.vmem %s3, 33
  %v5251 = vld [vmem:[%s5250] ss:$2 sm:$0xff]
  %s5252 = scalar_lea.vmem %s3, 49
  %v5253 = vld [vmem:[%s5252] ss:$2 sm:$0x1]
  %5254 = vrot.lane.b32.xlu0 %v4239, 64
  %v5255 = vpop.permute.xlu0 %5254
  %5256 = vrot.lane.b32.xlu0 %v4242, 64
  %v5257 = vpop.permute.xlu0 %5256
  %5258 = vrot.lane.b32.xlu0 %v4245, 64
  %v5259 = vpop.permute.xlu0 %5258
  %5260 = vrot.lane.b32.xlu0 %v4248, 64
  %v5261 = vpop.permute.xlu0 %5260
  %5262 = vrot.lane.b32.xlu0 %v4251, 64
  %v5263 = vpop.permute.xlu0 %5262
  %5264 = vrot.lane.b32.xlu0 %v4254, 64
  %v5265 = vpop.permute.xlu0 %5264
  %5266 = vrot.lane.b32.xlu0 %v4257, 64
  %v5267 = vpop.permute.xlu0 %5266
  %5268 = vrot.lane.b32.xlu0 %v4260, 64
  %v5269 = vpop.permute.xlu0 %5268
  %v5270 = vsel %vm1291, %v5255, %v5223
  %v5271 = vsel %vm1291, %v5257, %v5226
  %v5272 = vsel %vm1291, %v5259, %v5229
  %v5273 = vsel %vm1291, %v5261, %v5232
  %v5274 = vsel %vm1291, %v5263, %v5235
  %v5275 = vsel %vm1291, %v5265, %v5238
  %v5276 = vsel %vm1291, %v5267, %v5241
  %v5277 = vsel %vm1291, %v5269, %v5244
  %v5282 = vperm.slane %v5247, 0
  %v5283 = vperm.slane %v5247, 1
  %v5284 = vperm.slane %v5247, 2
  %v5285 = vperm.slane %v5247, 3
  %v5286 = vperm.slane %v5247, 4
  %v5287 = vperm.slane %v5247, 5
  %v5288 = vperm.slane %v5247, 6
  %v5289 = vperm.slane %v5247, 7
  %v5290 = vperm.slane %v5249, 0
  %v5291 = vperm.slane %v5249, 1
  %v5292 = vperm.slane %v5249, 2
  %v5293 = vperm.slane %v5249, 3
  %v5294 = vperm.slane %v5249, 4
  %v5295 = vperm.slane %v5249, 5
  %v5296 = vperm.slane %v5249, 6
  %v5297 = vperm.slane %v5249, 7
  %v5298 = vperm.slane %v5251, 0
  %v5299 = vperm.slane %v5251, 1
  %v5300 = vperm.slane %v5251, 2
  %v5301 = vperm.slane %v5251, 3
  %v5302 = vperm.slane %v5251, 4
  %v5303 = vperm.slane %v5251, 5
  %v5304 = vperm.slane %v5251, 6
  %v5305 = vperm.slane %v5251, 7
  %v5306 = vperm.slane %v5253, 0
  %5532 = vrot.lane.b32.xlu0 %v4239, 127
  %v5533 = vpop.permute.xlu0 %5532
  %5534 = vrot.lane.b32.xlu0 %v4280, 127
  %v5535 = vpop.permute.xlu0 %5534
  %5536 = vrot.lane.b32.xlu0 %v4321, 127
  %v5537 = vpop.permute.xlu0 %5536
  %5538 = vrot.lane.b32.xlu0 %v4362, 127
  %v5539 = vpop.permute.xlu0 %5538
  %5540 = vrot.lane.b32.xlu0 %v4403, 127
  %v5541 = vpop.permute.xlu0 %5540
  %5542 = vrot.lane.b32.xlu0 %v4444, 127
  %v5543 = vpop.permute.xlu0 %5542
  %5544 = vrot.lane.b32.xlu0 %v4485, 127
  %v5545 = vpop.permute.xlu0 %5544
  %5546 = vrot.lane.b32.xlu0 %v4526, 127
  %v5547 = vpop.permute.xlu0 %5546
  %5548 = vrot.lane.b32.xlu0 %v4567, 127
  %v5549 = vpop.permute.xlu0 %5548
  %5550 = vrot.lane.b32.xlu0 %v4608, 127
  %v5551 = vpop.permute.xlu0 %5550
  %5552 = vrot.lane.b32.xlu0 %v4649, 127
  %v5553 = vpop.permute.xlu0 %5552
  %5554 = vrot.lane.b32.xlu0 %v4690, 127
  %v5555 = vpop.permute.xlu0 %5554
  %5556 = vrot.lane.b32.xlu0 %v4731, 127
  %v5557 = vpop.permute.xlu0 %5556
  %5558 = vrot.lane.b32.xlu0 %v4772, 127
  %v5559 = vpop.permute.xlu0 %5558
  %5560 = vrot.lane.b32.xlu0 %v4813, 127
  %v5561 = vpop.permute.xlu0 %5560
  %5562 = vrot.lane.b32.xlu0 %v4854, 127
  %v5563 = vpop.permute.xlu0 %5562
  %5564 = vrot.lane.b32.xlu0 %v4895, 127
  %v5565 = vpop.permute.xlu0 %5564
  %5566 = vrot.lane.b32.xlu0 %v4936, 127
  %v5567 = vpop.permute.xlu0 %5566
  %5568 = vrot.lane.b32.xlu0 %v4977, 127
  %v5569 = vpop.permute.xlu0 %5568
  %5570 = vrot.lane.b32.xlu0 %v5018, 127
  %v5571 = vpop.permute.xlu0 %5570
  %5572 = vrot.lane.b32.xlu0 %v5059, 127
  %v5573 = vpop.permute.xlu0 %5572
  %5574 = vrot.lane.b32.xlu0 %v5100, 127
  %v5575 = vpop.permute.xlu0 %5574
  %5576 = vrot.lane.b32.xlu0 %v5141, 127
  %v5577 = vpop.permute.xlu0 %5576
  %5578 = vrot.lane.b32.xlu0 %v5182, 127
  %v5579 = vpop.permute.xlu0 %5578
  %5580 = vrot.lane.b32.xlu0 %v5270, 127
  %v5581 = vpop.permute.xlu0 %5580
  %5582 = vrot.lane.b32.xlu0 %v4242, 127
  %v5583 = vpop.permute.xlu0 %5582
  %5584 = vrot.lane.b32.xlu0 %v4283, 127
  %v5585 = vpop.permute.xlu0 %5584
  %5586 = vrot.lane.b32.xlu0 %v4324, 127
  %v5587 = vpop.permute.xlu0 %5586
  %5588 = vrot.lane.b32.xlu0 %v4365, 127
  %v5589 = vpop.permute.xlu0 %5588
  %5590 = vrot.lane.b32.xlu0 %v4406, 127
  %v5591 = vpop.permute.xlu0 %5590
  %5592 = vrot.lane.b32.xlu0 %v4447, 127
  %v5593 = vpop.permute.xlu0 %5592
  %5594 = vrot.lane.b32.xlu0 %v4488, 127
  %v5595 = vpop.permute.xlu0 %5594
  %5596 = vrot.lane.b32.xlu0 %v4529, 127
  %v5597 = vpop.permute.xlu0 %5596
  %5598 = vrot.lane.b32.xlu0 %v4570, 127
  %v5599 = vpop.permute.xlu0 %5598
  %5600 = vrot.lane.b32.xlu0 %v4611, 127
  %v5601 = vpop.permute.xlu0 %5600
  %5602 = vrot.lane.b32.xlu0 %v4652, 127
  %v5603 = vpop.permute.xlu0 %5602
  %5604 = vrot.lane.b32.xlu0 %v4693, 127
  %v5605 = vpop.permute.xlu0 %5604
  %5606 = vrot.lane.b32.xlu0 %v4734, 127
  %v5607 = vpop.permute.xlu0 %5606
  %5608 = vrot.lane.b32.xlu0 %v4775, 127
  %v5609 = vpop.permute.xlu0 %5608
  %5610 = vrot.lane.b32.xlu0 %v4816, 127
  %v5611 = vpop.permute.xlu0 %5610
  %5612 = vrot.lane.b32.xlu0 %v4857, 127
  %v5613 = vpop.permute.xlu0 %5612
  %5614 = vrot.lane.b32.xlu0 %v4898, 127
  %v5615 = vpop.permute.xlu0 %5614
  %5616 = vrot.lane.b32.xlu0 %v4939, 127
  %v5617 = vpop.permute.xlu0 %5616
  %5618 = vrot.lane.b32.xlu0 %v4980, 127
  %v5619 = vpop.permute.xlu0 %5618
  %5620 = vrot.lane.b32.xlu0 %v5021, 127
  %v5621 = vpop.permute.xlu0 %5620
  %5622 = vrot.lane.b32.xlu0 %v5062, 127
  %v5623 = vpop.permute.xlu0 %5622
  %5624 = vrot.lane.b32.xlu0 %v5103, 127
  %v5625 = vpop.permute.xlu0 %5624
  %5626 = vrot.lane.b32.xlu0 %v5144, 127
  %v5627 = vpop.permute.xlu0 %5626
  %5628 = vrot.lane.b32.xlu0 %v5185, 127
  %v5629 = vpop.permute.xlu0 %5628
  %5630 = vrot.lane.b32.xlu0 %v5271, 127
  %v5631 = vpop.permute.xlu0 %5630
  %5632 = vrot.lane.b32.xlu0 %v4245, 127
  %v5633 = vpop.permute.xlu0 %5632
  %5634 = vrot.lane.b32.xlu0 %v4286, 127
  %v5635 = vpop.permute.xlu0 %5634
  %5636 = vrot.lane.b32.xlu0 %v4327, 127
  %v5637 = vpop.permute.xlu0 %5636
  %5638 = vrot.lane.b32.xlu0 %v4368, 127
  %v5639 = vpop.permute.xlu0 %5638
  %5640 = vrot.lane.b32.xlu0 %v4409, 127
  %v5641 = vpop.permute.xlu0 %5640
  %5642 = vrot.lane.b32.xlu0 %v4450, 127
  %v5643 = vpop.permute.xlu0 %5642
  %5644 = vrot.lane.b32.xlu0 %v4491, 127
  %v5645 = vpop.permute.xlu0 %5644
  %5646 = vrot.lane.b32.xlu0 %v4532, 127
  %v5647 = vpop.permute.xlu0 %5646
  %5648 = vrot.lane.b32.xlu0 %v4573, 127
  %v5649 = vpop.permute.xlu0 %5648
  %5650 = vrot.lane.b32.xlu0 %v4614, 127
  %v5651 = vpop.permute.xlu0 %5650
  %5652 = vrot.lane.b32.xlu0 %v4655, 127
  %v5653 = vpop.permute.xlu0 %5652
  %5654 = vrot.lane.b32.xlu0 %v4696, 127
  %v5655 = vpop.permute.xlu0 %5654
  %5656 = vrot.lane.b32.xlu0 %v4737, 127
  %v5657 = vpop.permute.xlu0 %5656
  %5658 = vrot.lane.b32.xlu0 %v4778, 127
  %v5659 = vpop.permute.xlu0 %5658
  %5660 = vrot.lane.b32.xlu0 %v4819, 127
  %v5661 = vpop.permute.xlu0 %5660
  %5662 = vrot.lane.b32.xlu0 %v4860, 127
  %v5663 = vpop.permute.xlu0 %5662
  %5664 = vrot.lane.b32.xlu0 %v4901, 127
  %v5665 = vpop.permute.xlu0 %5664
  %5666 = vrot.lane.b32.xlu0 %v4942, 127
  %v5667 = vpop.permute.xlu0 %5666
  %5668 = vrot.lane.b32.xlu0 %v4983, 127
  %v5669 = vpop.permute.xlu0 %5668
  %5670 = vrot.lane.b32.xlu0 %v5024, 127
  %v5671 = vpop.permute.xlu0 %5670
  %5672 = vrot.lane.b32.xlu0 %v5065, 127
  %v5673 = vpop.permute.xlu0 %5672
  %5674 = vrot.lane.b32.xlu0 %v5106, 127
  %v5675 = vpop.permute.xlu0 %5674
  %5676 = vrot.lane.b32.xlu0 %v5147, 127
  %v5677 = vpop.permute.xlu0 %5676
  %5678 = vrot.lane.b32.xlu0 %v5188, 127
  %v5679 = vpop.permute.xlu0 %5678
  %5680 = vrot.lane.b32.xlu0 %v5272, 127
  %v5681 = vpop.permute.xlu0 %5680
  %5682 = vrot.lane.b32.xlu0 %v4248, 127
  %v5683 = vpop.permute.xlu0 %5682
  %5684 = vrot.lane.b32.xlu0 %v4289, 127
  %v5685 = vpop.permute.xlu0 %5684
  %5686 = vrot.lane.b32.xlu0 %v4330, 127
  %v5687 = vpop.permute.xlu0 %5686
  %5688 = vrot.lane.b32.xlu0 %v4371, 127
  %v5689 = vpop.permute.xlu0 %5688
  %5690 = vrot.lane.b32.xlu0 %v4412, 127
  %v5691 = vpop.permute.xlu0 %5690
  %5692 = vrot.lane.b32.xlu0 %v4453, 127
  %v5693 = vpop.permute.xlu0 %5692
  %5694 = vrot.lane.b32.xlu0 %v4494, 127
  %v5695 = vpop.permute.xlu0 %5694
  %5696 = vrot.lane.b32.xlu0 %v4535, 127
  %v5697 = vpop.permute.xlu0 %5696
  %5698 = vrot.lane.b32.xlu0 %v4576, 127
  %v5699 = vpop.permute.xlu0 %5698
  %5700 = vrot.lane.b32.xlu0 %v4617, 127
  %v5701 = vpop.permute.xlu0 %5700
  %5702 = vrot.lane.b32.xlu0 %v4658, 127
  %v5703 = vpop.permute.xlu0 %5702
  %5704 = vrot.lane.b32.xlu0 %v4699, 127
  %v5705 = vpop.permute.xlu0 %5704
  %5706 = vrot.lane.b32.xlu0 %v4740, 127
  %v5707 = vpop.permute.xlu0 %5706
  %5708 = vrot.lane.b32.xlu0 %v4781, 127
  %v5709 = vpop.permute.xlu0 %5708
  %5710 = vrot.lane.b32.xlu0 %v4822, 127
  %v5711 = vpop.permute.xlu0 %5710
  %5712 = vrot.lane.b32.xlu0 %v4863, 127
  %v5713 = vpop.permute.xlu0 %5712
  %5714 = vrot.lane.b32.xlu0 %v4904, 127
  %v5715 = vpop.permute.xlu0 %5714
  %5716 = vrot.lane.b32.xlu0 %v4945, 127
  %v5717 = vpop.permute.xlu0 %5716
  %5718 = vrot.lane.b32.xlu0 %v4986, 127
  %v5719 = vpop.permute.xlu0 %5718
  %5720 = vrot.lane.b32.xlu0 %v5027, 127
  %v5721 = vpop.permute.xlu0 %5720
  %5722 = vrot.lane.b32.xlu0 %v5068, 127
  %v5723 = vpop.permute.xlu0 %5722
  %5724 = vrot.lane.b32.xlu0 %v5109, 127
  %v5725 = vpop.permute.xlu0 %5724
  %5726 = vrot.lane.b32.xlu0 %v5150, 127
  %v5727 = vpop.permute.xlu0 %5726
  %5728 = vrot.lane.b32.xlu0 %v5191, 127
  %v5729 = vpop.permute.xlu0 %5728
  %5730 = vrot.lane.b32.xlu0 %v5273, 127
  %v5731 = vpop.permute.xlu0 %5730
  %5732 = vrot.lane.b32.xlu0 %v4251, 127
  %v5733 = vpop.permute.xlu0 %5732
  %5734 = vrot.lane.b32.xlu0 %v4292, 127
  %v5735 = vpop.permute.xlu0 %5734
  %5736 = vrot.lane.b32.xlu0 %v4333, 127
  %v5737 = vpop.permute.xlu0 %5736
  %5738 = vrot.lane.b32.xlu0 %v4374, 127
  %v5739 = vpop.permute.xlu0 %5738
  %5740 = vrot.lane.b32.xlu0 %v4415, 127
  %v5741 = vpop.permute.xlu0 %5740
  %5742 = vrot.lane.b32.xlu0 %v4456, 127
  %v5743 = vpop.permute.xlu0 %5742
  %5744 = vrot.lane.b32.xlu0 %v4497, 127
  %v5745 = vpop.permute.xlu0 %5744
  %5746 = vrot.lane.b32.xlu0 %v4538, 127
  %v5747 = vpop.permute.xlu0 %5746
  %5748 = vrot.lane.b32.xlu0 %v4579, 127
  %v5749 = vpop.permute.xlu0 %5748
  %5750 = vrot.lane.b32.xlu0 %v4620, 127
  %v5751 = vpop.permute.xlu0 %5750
  %5752 = vrot.lane.b32.xlu0 %v4661, 127
  %v5753 = vpop.permute.xlu0 %5752
  %5754 = vrot.lane.b32.xlu0 %v4702, 127
  %v5755 = vpop.permute.xlu0 %5754
  %5756 = vrot.lane.b32.xlu0 %v4743, 127
  %v5757 = vpop.permute.xlu0 %5756
  %5758 = vrot.lane.b32.xlu0 %v4784, 127
  %v5759 = vpop.permute.xlu0 %5758
  %5760 = vrot.lane.b32.xlu0 %v4825, 127
  %v5761 = vpop.permute.xlu0 %5760
  %5762 = vrot.lane.b32.xlu0 %v4866, 127
  %v5763 = vpop.permute.xlu0 %5762
  %5764 = vrot.lane.b32.xlu0 %v4907, 127
  %v5765 = vpop.permute.xlu0 %5764
  %5766 = vrot.lane.b32.xlu0 %v4948, 127
  %v5767 = vpop.permute.xlu0 %5766
  %5768 = vrot.lane.b32.xlu0 %v4989, 127
  %v5769 = vpop.permute.xlu0 %5768
  %5770 = vrot.lane.b32.xlu0 %v5030, 127
  %v5771 = vpop.permute.xlu0 %5770
  %5772 = vrot.lane.b32.xlu0 %v5071, 127
  %v5773 = vpop.permute.xlu0 %5772
  %5774 = vrot.lane.b32.xlu0 %v5112, 127
  %v5775 = vpop.permute.xlu0 %5774
  %5776 = vrot.lane.b32.xlu0 %v5153, 127
  %v5777 = vpop.permute.xlu0 %5776
  %5778 = vrot.lane.b32.xlu0 %v5194, 127
  %v5779 = vpop.permute.xlu0 %5778
  %5780 = vrot.lane.b32.xlu0 %v5274, 127
  %v5781 = vpop.permute.xlu0 %5780
  %5782 = vrot.lane.b32.xlu0 %v4254, 127
  %v5783 = vpop.permute.xlu0 %5782
  %5784 = vrot.lane.b32.xlu0 %v4295, 127
  %v5785 = vpop.permute.xlu0 %5784
  %5786 = vrot.lane.b32.xlu0 %v4336, 127
  %v5787 = vpop.permute.xlu0 %5786
  %5788 = vrot.lane.b32.xlu0 %v4377, 127
  %v5789 = vpop.permute.xlu0 %5788
  %5790 = vrot.lane.b32.xlu0 %v4418, 127
  %v5791 = vpop.permute.xlu0 %5790
  %5792 = vrot.lane.b32.xlu0 %v4459, 127
  %v5793 = vpop.permute.xlu0 %5792
  %5794 = vrot.lane.b32.xlu0 %v4500, 127
  %v5795 = vpop.permute.xlu0 %5794
  %5796 = vrot.lane.b32.xlu0 %v4541, 127
  %v5797 = vpop.permute.xlu0 %5796
  %5798 = vrot.lane.b32.xlu0 %v4582, 127
  %v5799 = vpop.permute.xlu0 %5798
  %5800 = vrot.lane.b32.xlu0 %v4623, 127
  %v5801 = vpop.permute.xlu0 %5800
  %5802 = vrot.lane.b32.xlu0 %v4664, 127
  %v5803 = vpop.permute.xlu0 %5802
  %5804 = vrot.lane.b32.xlu0 %v4705, 127
  %v5805 = vpop.permute.xlu0 %5804
  %5806 = vrot.lane.b32.xlu0 %v4746, 127
  %v5807 = vpop.permute.xlu0 %5806
  %5808 = vrot.lane.b32.xlu0 %v4787, 127
  %v5809 = vpop.permute.xlu0 %5808
  %5810 = vrot.lane.b32.xlu0 %v4828, 127
  %v5811 = vpop.permute.xlu0 %5810
  %5812 = vrot.lane.b32.xlu0 %v4869, 127
  %v5813 = vpop.permute.xlu0 %5812
  %5814 = vrot.lane.b32.xlu0 %v4910, 127
  %v5815 = vpop.permute.xlu0 %5814
  %5816 = vrot.lane.b32.xlu0 %v4951, 127
  %v5817 = vpop.permute.xlu0 %5816
  %5818 = vrot.lane.b32.xlu0 %v4992, 127
  %v5819 = vpop.permute.xlu0 %5818
  %5820 = vrot.lane.b32.xlu0 %v5033, 127
  %v5821 = vpop.permute.xlu0 %5820
  %5822 = vrot.lane.b32.xlu0 %v5074, 127
  %v5823 = vpop.permute.xlu0 %5822
  %5824 = vrot.lane.b32.xlu0 %v5115, 127
  %v5825 = vpop.permute.xlu0 %5824
  %5826 = vrot.lane.b32.xlu0 %v5156, 127
  %v5827 = vpop.permute.xlu0 %5826
  %5828 = vrot.lane.b32.xlu0 %v5197, 127
  %v5829 = vpop.permute.xlu0 %5828
  %5830 = vrot.lane.b32.xlu0 %v5275, 127
  %v5831 = vpop.permute.xlu0 %5830
  %5832 = vrot.lane.b32.xlu0 %v4257, 127
  %v5833 = vpop.permute.xlu0 %5832
  %5834 = vrot.lane.b32.xlu0 %v4298, 127
  %v5835 = vpop.permute.xlu0 %5834
  %5836 = vrot.lane.b32.xlu0 %v4339, 127
  %v5837 = vpop.permute.xlu0 %5836
  %5838 = vrot.lane.b32.xlu0 %v4380, 127
  %v5839 = vpop.permute.xlu0 %5838
  %5840 = vrot.lane.b32.xlu0 %v4421, 127
  %v5841 = vpop.permute.xlu0 %5840
  %5842 = vrot.lane.b32.xlu0 %v4462, 127
  %v5843 = vpop.permute.xlu0 %5842
  %5844 = vrot.lane.b32.xlu0 %v4503, 127
  %v5845 = vpop.permute.xlu0 %5844
  %5846 = vrot.lane.b32.xlu0 %v4544, 127
  %v5847 = vpop.permute.xlu0 %5846
  %5848 = vrot.lane.b32.xlu0 %v4585, 127
  %v5849 = vpop.permute.xlu0 %5848
  %5850 = vrot.lane.b32.xlu0 %v4626, 127
  %v5851 = vpop.permute.xlu0 %5850
  %5852 = vrot.lane.b32.xlu0 %v4667, 127
  %v5853 = vpop.permute.xlu0 %5852
  %5854 = vrot.lane.b32.xlu0 %v4708, 127
  %v5855 = vpop.permute.xlu0 %5854
  %5856 = vrot.lane.b32.xlu0 %v4749, 127
  %v5857 = vpop.permute.xlu0 %5856
  %5858 = vrot.lane.b32.xlu0 %v4790, 127
  %v5859 = vpop.permute.xlu0 %5858
  %5860 = vrot.lane.b32.xlu0 %v4831, 127
  %v5861 = vpop.permute.xlu0 %5860
  %5862 = vrot.lane.b32.xlu0 %v4872, 127
  %v5863 = vpop.permute.xlu0 %5862
  %5864 = vrot.lane.b32.xlu0 %v4913, 127
  %v5865 = vpop.permute.xlu0 %5864
  %5866 = vrot.lane.b32.xlu0 %v4954, 127
  %v5867 = vpop.permute.xlu0 %5866
  %5868 = vrot.lane.b32.xlu0 %v4995, 127
  %v5869 = vpop.permute.xlu0 %5868
  %5870 = vrot.lane.b32.xlu0 %v5036, 127
  %v5871 = vpop.permute.xlu0 %5870
  %5872 = vrot.lane.b32.xlu0 %v5077, 127
  %v5873 = vpop.permute.xlu0 %5872
  %5874 = vrot.lane.b32.xlu0 %v5118, 127
  %v5875 = vpop.permute.xlu0 %5874
  %5876 = vrot.lane.b32.xlu0 %v5159, 127
  %v5877 = vpop.permute.xlu0 %5876
  %5878 = vrot.lane.b32.xlu0 %v5200, 127
  %v5879 = vpop.permute.xlu0 %5878
  %5880 = vrot.lane.b32.xlu0 %v5276, 127
  %v5881 = vpop.permute.xlu0 %5880
  %5882 = vrot.lane.b32.xlu0 %v4260, 127
  %v5883 = vpop.permute.xlu0 %5882
  %5884 = vrot.lane.b32.xlu0 %v4301, 127
  %v5885 = vpop.permute.xlu0 %5884
  %5886 = vrot.lane.b32.xlu0 %v4342, 127
  %v5887 = vpop.permute.xlu0 %5886
  %5888 = vrot.lane.b32.xlu0 %v4383, 127
  %v5889 = vpop.permute.xlu0 %5888
  %5890 = vrot.lane.b32.xlu0 %v4424, 127
  %v5891 = vpop.permute.xlu0 %5890
  %5892 = vrot.lane.b32.xlu0 %v4465, 127
  %v5893 = vpop.permute.xlu0 %5892
  %5894 = vrot.lane.b32.xlu0 %v4506, 127
  %v5895 = vpop.permute.xlu0 %5894
  %5896 = vrot.lane.b32.xlu0 %v4547, 127
  %v5897 = vpop.permute.xlu0 %5896
  %5898 = vrot.lane.b32.xlu0 %v4588, 127
  %v5899 = vpop.permute.xlu0 %5898
  %5900 = vrot.lane.b32.xlu0 %v4629, 127
  %v5901 = vpop.permute.xlu0 %5900
  %5902 = vrot.lane.b32.xlu0 %v4670, 127
  %v5903 = vpop.permute.xlu0 %5902
  %5904 = vrot.lane.b32.xlu0 %v4711, 127
  %v5905 = vpop.permute.xlu0 %5904
  %5906 = vrot.lane.b32.xlu0 %v4752, 127
  %v5907 = vpop.permute.xlu0 %5906
  %5908 = vrot.lane.b32.xlu0 %v4793, 127
  %v5909 = vpop.permute.xlu0 %5908
  %5910 = vrot.lane.b32.xlu0 %v4834, 127
  %v5911 = vpop.permute.xlu0 %5910
  %5912 = vrot.lane.b32.xlu0 %v4875, 127
  %v5913 = vpop.permute.xlu0 %5912
  %5914 = vrot.lane.b32.xlu0 %v4916, 127
  %v5915 = vpop.permute.xlu0 %5914
  %5916 = vrot.lane.b32.xlu0 %v4957, 127
  %v5917 = vpop.permute.xlu0 %5916
  %5918 = vrot.lane.b32.xlu0 %v4998, 127
  %v5919 = vpop.permute.xlu0 %5918
  %5920 = vrot.lane.b32.xlu0 %v5039, 127
  %v5921 = vpop.permute.xlu0 %5920
  %5922 = vrot.lane.b32.xlu0 %v5080, 127
  %v5923 = vpop.permute.xlu0 %5922
  %5924 = vrot.lane.b32.xlu0 %v5121, 127
  %v5925 = vpop.permute.xlu0 %5924
  %5926 = vrot.lane.b32.xlu0 %v5162, 127
  %v5927 = vpop.permute.xlu0 %5926
  %5928 = vrot.lane.b32.xlu0 %v5203, 127
  %v5929 = vpop.permute.xlu0 %5928
  %5930 = vrot.lane.b32.xlu0 %v5277, 127
  %v5931 = vpop.permute.xlu0 %5930
  %vm5932 = vcmask 1039360
  %v5933 = vsel %vm5932, %v5533, %v5535
  %v5934 = vsel %vm5932, %v5535, %v5537
  %v5935 = vsel %vm5932, %v5537, %v5539
  %v5936 = vsel %vm5932, %v5539, %v5541
  %v5937 = vsel %vm5932, %v5541, %v5543
  %v5938 = vsel %vm5932, %v5543, %v5545
  %v5939 = vsel %vm5932, %v5545, %v5547
  %v5940 = vsel %vm5932, %v5547, %v5549
  %v5941 = vsel %vm5932, %v5549, %v5551
  %v5942 = vsel %vm5932, %v5551, %v5553
  %v5943 = vsel %vm5932, %v5553, %v5555
  %v5944 = vsel %vm5932, %v5555, %v5557
  %v5945 = vsel %vm5932, %v5557, %v5559
  %v5946 = vsel %vm5932, %v5559, %v5561
  %v5947 = vsel %vm5932, %v5561, %v5563
  %v5948 = vsel %vm5932, %v5563, %v5565
  %v5949 = vsel %vm5932, %v5565, %v5567
  %v5950 = vsel %vm5932, %v5567, %v5569
  %v5951 = vsel %vm5932, %v5569, %v5571
  %v5952 = vsel %vm5932, %v5571, %v5573
  %v5953 = vsel %vm5932, %v5573, %v5575
  %v5954 = vsel %vm5932, %v5575, %v5577
  %v5955 = vsel %vm5932, %v5577, %v5579
  %v5956 = vsel %vm5932, %v5579, %v5581
  %v5957 = vsel %vm5932, %v5583, %v5585
  %v5958 = vsel %vm5932, %v5585, %v5587
  %v5959 = vsel %vm5932, %v5587, %v5589
  %v5960 = vsel %vm5932, %v5589, %v5591
  %v5961 = vsel %vm5932, %v5591, %v5593
  %v5962 = vsel %vm5932, %v5593, %v5595
  %v5963 = vsel %vm5932, %v5595, %v5597
  %v5964 = vsel %vm5932, %v5597, %v5599
  %v5965 = vsel %vm5932, %v5599, %v5601
  %v5966 = vsel %vm5932, %v5601, %v5603
  %v5967 = vsel %vm5932, %v5603, %v5605
  %v5968 = vsel %vm5932, %v5605, %v5607
  %v5969 = vsel %vm5932, %v5607, %v5609
  %v5970 = vsel %vm5932, %v5609, %v5611
  %v5971 = vsel %vm5932, %v5611, %v5613
  %v5972 = vsel %vm5932, %v5613, %v5615
  %v5973 = vsel %vm5932, %v5615, %v5617
  %v5974 = vsel %vm5932, %v5617, %v5619
  %v5975 = vsel %vm5932, %v5619, %v5621
  %v5976 = vsel %vm5932, %v5621, %v5623
  %v5977 = vsel %vm5932, %v5623, %v5625
  %v5978 = vsel %vm5932, %v5625, %v5627
  %v5979 = vsel %vm5932, %v5627, %v5629
  %v5980 = vsel %vm5932, %v5629, %v5631
  %v5981 = vsel %vm5932, %v5633, %v5635
  %v5982 = vsel %vm5932, %v5635, %v5637
  %v5983 = vsel %vm5932, %v5637, %v5639
  %v5984 = vsel %vm5932, %v5639, %v5641
  %v5985 = vsel %vm5932, %v5641, %v5643
  %v5986 = vsel %vm5932, %v5643, %v5645
  %v5987 = vsel %vm5932, %v5645, %v5647
  %v5988 = vsel %vm5932, %v5647, %v5649
  %v5989 = vsel %vm5932, %v5649, %v5651
  %v5990 = vsel %vm5932, %v5651, %v5653
  %v5991 = vsel %vm5932, %v5653, %v5655
  %v5992 = vsel %vm5932, %v5655, %v5657
  %v5993 = vsel %vm5932, %v5657, %v5659
  %v5994 = vsel %vm5932, %v5659, %v5661
  %v5995 = vsel %vm5932, %v5661, %v5663
  %v5996 = vsel %vm5932, %v5663, %v5665
  %v5997 = vsel %vm5932, %v5665, %v5667
  %v5998 = vsel %vm5932, %v5667, %v5669
  %v5999 = vsel %vm5932, %v5669, %v5671
  %v6000 = vsel %vm5932, %v5671, %v5673
  %v6001 = vsel %vm5932, %v5673, %v5675
  %v6002 = vsel %vm5932, %v5675, %v5677
  %v6003 = vsel %vm5932, %v5677, %v5679
  %v6004 = vsel %vm5932, %v5679, %v5681
  %v6005 = vsel %vm5932, %v5683, %v5685
  %v6006 = vsel %vm5932, %v5685, %v5687
  %v6007 = vsel %vm5932, %v5687, %v5689
  %v6008 = vsel %vm5932, %v5689, %v5691
  %v6009 = vsel %vm5932, %v5691, %v5693
  %v6010 = vsel %vm5932, %v5693, %v5695
  %v6011 = vsel %vm5932, %v5695, %v5697
  %v6012 = vsel %vm5932, %v5697, %v5699
  %v6013 = vsel %vm5932, %v5699, %v5701
  %v6014 = vsel %vm5932, %v5701, %v5703
  %v6015 = vsel %vm5932, %v5703, %v5705
  %v6016 = vsel %vm5932, %v5705, %v5707
  %v6017 = vsel %vm5932, %v5707, %v5709
  %v6018 = vsel %vm5932, %v5709, %v5711
  %v6019 = vsel %vm5932, %v5711, %v5713
  %v6020 = vsel %vm5932, %v5713, %v5715
  %v6021 = vsel %vm5932, %v5715, %v5717
  %v6022 = vsel %vm5932, %v5717, %v5719
  %v6023 = vsel %vm5932, %v5719, %v5721
  %v6024 = vsel %vm5932, %v5721, %v5723
  %v6025 = vsel %vm5932, %v5723, %v5725
  %v6026 = vsel %vm5932, %v5725, %v5727
  %v6027 = vsel %vm5932, %v5727, %v5729
  %v6028 = vsel %vm5932, %v5729, %v5731
  %v6029 = vsel %vm5932, %v5733, %v5735
  %v6030 = vsel %vm5932, %v5735, %v5737
  %v6031 = vsel %vm5932, %v5737, %v5739
  %v6032 = vsel %vm5932, %v5739, %v5741
  %v6033 = vsel %vm5932, %v5741, %v5743
  %v6034 = vsel %vm5932, %v5743, %v5745
  %v6035 = vsel %vm5932, %v5745, %v5747
  %v6036 = vsel %vm5932, %v5747, %v5749
  %v6037 = vsel %vm5932, %v5749, %v5751
  %v6038 = vsel %vm5932, %v5751, %v5753
  %v6039 = vsel %vm5932, %v5753, %v5755
  %v6040 = vsel %vm5932, %v5755, %v5757
  %v6041 = vsel %vm5932, %v5757, %v5759
  %v6042 = vsel %vm5932, %v5759, %v5761
  %v6043 = vsel %vm5932, %v5761, %v5763
  %v6044 = vsel %vm5932, %v5763, %v5765
  %v6045 = vsel %vm5932, %v5765, %v5767
  %v6046 = vsel %vm5932, %v5767, %v5769
  %v6047 = vsel %vm5932, %v5769, %v5771
  %v6048 = vsel %vm5932, %v5771, %v5773
  %v6049 = vsel %vm5932, %v5773, %v5775
  %v6050 = vsel %vm5932, %v5775, %v5777
  %v6051 = vsel %vm5932, %v5777, %v5779
  %v6052 = vsel %vm5932, %v5779, %v5781
  %v6053 = vsel %vm5932, %v5783, %v5785
  %v6054 = vsel %vm5932, %v5785, %v5787
  %v6055 = vsel %vm5932, %v5787, %v5789
  %v6056 = vsel %vm5932, %v5789, %v5791
  %v6057 = vsel %vm5932, %v5791, %v5793
  %v6058 = vsel %vm5932, %v5793, %v5795
  %v6059 = vsel %vm5932, %v5795, %v5797
  %v6060 = vsel %vm5932, %v5797, %v5799
  %v6061 = vsel %vm5932, %v5799, %v5801
  %v6062 = vsel %vm5932, %v5801, %v5803
  %v6063 = vsel %vm5932, %v5803, %v5805
  %v6064 = vsel %vm5932, %v5805, %v5807
  %v6065 = vsel %vm5932, %v5807, %v5809
  %v6066 = vsel %vm5932, %v5809, %v5811
  %v6067 = vsel %vm5932, %v5811, %v5813
  %v6068 = vsel %vm5932, %v5813, %v5815
  %v6069 = vsel %vm5932, %v5815, %v5817
  %v6070 = vsel %vm5932, %v5817, %v5819
  %v6071 = vsel %vm5932, %v5819, %v5821
  %v6072 = vsel %vm5932, %v5821, %v5823
  %v6073 = vsel %vm5932, %v5823, %v5825
  %v6074 = vsel %vm5932, %v5825, %v5827
  %v6075 = vsel %vm5932, %v5827, %v5829
  %v6076 = vsel %vm5932, %v5829, %v5831
  %v6077 = vsel %vm5932, %v5833, %v5835
  %v6078 = vsel %vm5932, %v5835, %v5837
  %v6079 = vsel %vm5932, %v5837, %v5839
  %v6080 = vsel %vm5932, %v5839, %v5841
  %v6081 = vsel %vm5932, %v5841, %v5843
  %v6082 = vsel %vm5932, %v5843, %v5845
  %v6083 = vsel %vm5932, %v5845, %v5847
  %v6084 = vsel %vm5932, %v5847, %v5849
  %v6085 = vsel %vm5932, %v5849, %v5851
  %v6086 = vsel %vm5932, %v5851, %v5853
  %v6087 = vsel %vm5932, %v5853, %v5855
  %v6088 = vsel %vm5932, %v5855, %v5857
  %v6089 = vsel %vm5932, %v5857, %v5859
  %v6090 = vsel %vm5932, %v5859, %v5861
  %v6091 = vsel %vm5932, %v5861, %v5863
  %v6092 = vsel %vm5932, %v5863, %v5865
  %v6093 = vsel %vm5932, %v5865, %v5867
  %v6094 = vsel %vm5932, %v5867, %v5869
  %v6095 = vsel %vm5932, %v5869, %v5871
  %v6096 = vsel %vm5932, %v5871, %v5873
  %v6097 = vsel %vm5932, %v5873, %v5875
  %v6098 = vsel %vm5932, %v5875, %v5877
  %v6099 = vsel %vm5932, %v5877, %v5879
  %v6100 = vsel %vm5932, %v5879, %v5881
  %v6101 = vsel %vm5932, %v5883, %v5885
  %v6102 = vsel %vm5932, %v5885, %v5887
  %v6103 = vsel %vm5932, %v5887, %v5889
  %v6104 = vsel %vm5932, %v5889, %v5891
  %v6105 = vsel %vm5932, %v5891, %v5893
  %v6106 = vsel %vm5932, %v5893, %v5895
  %v6107 = vsel %vm5932, %v5895, %v5897
  %v6108 = vsel %vm5932, %v5897, %v5899
  %v6109 = vsel %vm5932, %v5899, %v5901
  %v6110 = vsel %vm5932, %v5901, %v5903
  %v6111 = vsel %vm5932, %v5903, %v5905
  %v6112 = vsel %vm5932, %v5905, %v5907
  %v6113 = vsel %vm5932, %v5907, %v5909
  %v6114 = vsel %vm5932, %v5909, %v5911
  %v6115 = vsel %vm5932, %v5911, %v5913
  %v6116 = vsel %vm5932, %v5913, %v5915
  %v6117 = vsel %vm5932, %v5915, %v5917
  %v6118 = vsel %vm5932, %v5917, %v5919
  %v6119 = vsel %vm5932, %v5919, %v5921
  %v6120 = vsel %vm5932, %v5921, %v5923
  %v6121 = vsel %vm5932, %v5923, %v5925
  %v6122 = vsel %vm5932, %v5925, %v5927
  %v6123 = vsel %vm5932, %v5927, %v5929
  %v6124 = vsel %vm5932, %v5929, %v5931
  %v6325 = vmul.f32 %v5282, %v5933
  %v6326 = vmul.f32 %v5283, %v5934
  %v6327 = vmul.f32 %v5284, %v5935
  %v6328 = vmul.f32 %v5285, %v5936
  %v6329 = vmul.f32 %v5286, %v5937
  %v6330 = vmul.f32 %v5287, %v5938
  %v6331 = vmul.f32 %v5288, %v5939
  %v6332 = vmul.f32 %v5289, %v5940
  %v6333 = vmul.f32 %v5290, %v5941
  %v6334 = vmul.f32 %v5291, %v5942
  %v6335 = vmul.f32 %v5292, %v5943
  %v6336 = vmul.f32 %v5293, %v5944
  %v6337 = vmul.f32 %v5294, %v5945
  %v6338 = vmul.f32 %v5295, %v5946
  %v6339 = vmul.f32 %v5296, %v5947
  %v6340 = vmul.f32 %v5297, %v5948
  %v6341 = vmul.f32 %v5298, %v5949
  %v6342 = vmul.f32 %v5299, %v5950
  %v6343 = vmul.f32 %v5300, %v5951
  %v6344 = vmul.f32 %v5301, %v5952
  %v6345 = vmul.f32 %v5302, %v5953
  %v6346 = vmul.f32 %v5303, %v5954
  %v6347 = vmul.f32 %v5304, %v5955
  %v6348 = vmul.f32 %v5305, %v5956
  %v6349 = vmul.f32 %v5306, %v5581
  %v6350 = vmul.f32 %v5282, %v5957
  %v6351 = vmul.f32 %v5283, %v5958
  %v6352 = vmul.f32 %v5284, %v5959
  %v6353 = vmul.f32 %v5285, %v5960
  %v6354 = vmul.f32 %v5286, %v5961
  %v6355 = vmul.f32 %v5287, %v5962
  %v6356 = vmul.f32 %v5288, %v5963
  %v6357 = vmul.f32 %v5289, %v5964
  %v6358 = vmul.f32 %v5290, %v5965
  %v6359 = vmul.f32 %v5291, %v5966
  %v6360 = vmul.f32 %v5292, %v5967
  %v6361 = vmul.f32 %v5293, %v5968
  %v6362 = vmul.f32 %v5294, %v5969
  %v6363 = vmul.f32 %v5295, %v5970
  %v6364 = vmul.f32 %v5296, %v5971
  %v6365 = vmul.f32 %v5297, %v5972
  %v6366 = vmul.f32 %v5298, %v5973
  %v6367 = vmul.f32 %v5299, %v5974
  %v6368 = vmul.f32 %v5300, %v5975
  %v6369 = vmul.f32 %v5301, %v5976
  %v6370 = vmul.f32 %v5302, %v5977
  %v6371 = vmul.f32 %v5303, %v5978
  %v6372 = vmul.f32 %v5304, %v5979
  %v6373 = vmul.f32 %v5305, %v5980
  %v6374 = vmul.f32 %v5306, %v5631
  %v6375 = vmul.f32 %v5282, %v5981
  %v6376 = vmul.f32 %v5283, %v5982
  %v6377 = vmul.f32 %v5284, %v5983
  %v6378 = vmul.f32 %v5285, %v5984
  %v6379 = vmul.f32 %v5286, %v5985
  %v6380 = vmul.f32 %v5287, %v5986
  %v6381 = vmul.f32 %v5288, %v5987
  %v6382 = vmul.f32 %v5289, %v5988
  %v6383 = vmul.f32 %v5290, %v5989
  %v6384 = vmul.f32 %v5291, %v5990
  %v6385 = vmul.f32 %v5292, %v5991
  %v6386 = vmul.f32 %v5293, %v5992
  %v6387 = vmul.f32 %v5294, %v5993
  %v6388 = vmul.f32 %v5295, %v5994
  %v6389 = vmul.f32 %v5296, %v5995
  %v6390 = vmul.f32 %v5297, %v5996
  %v6391 = vmul.f32 %v5298, %v5997
  %v6392 = vmul.f32 %v5299, %v5998
  %v6393 = vmul.f32 %v5300, %v5999
  %v6394 = vmul.f32 %v5301, %v6000
  %v6395 = vmul.f32 %v5302, %v6001
  %v6396 = vmul.f32 %v5303, %v6002
  %v6397 = vmul.f32 %v5304, %v6003
  %v6398 = vmul.f32 %v5305, %v6004
  %v6399 = vmul.f32 %v5306, %v5681
  %v6400 = vmul.f32 %v5282, %v6005
  %v6401 = vmul.f32 %v5283, %v6006
  %v6402 = vmul.f32 %v5284, %v6007
  %v6403 = vmul.f32 %v5285, %v6008
  %v6404 = vmul.f32 %v5286, %v6009
  %v6405 = vmul.f32 %v5287, %v6010
  %v6406 = vmul.f32 %v5288, %v6011
  %v6407 = vmul.f32 %v5289, %v6012
  %v6408 = vmul.f32 %v5290, %v6013
  %v6409 = vmul.f32 %v5291, %v6014
  %v6410 = vmul.f32 %v5292, %v6015
  %v6411 = vmul.f32 %v5293, %v6016
  %v6412 = vmul.f32 %v5294, %v6017
  %v6413 = vmul.f32 %v5295, %v6018
  %v6414 = vmul.f32 %v5296, %v6019
  %v6415 = vmul.f32 %v5297, %v6020
  %v6416 = vmul.f32 %v5298, %v6021
  %v6417 = vmul.f32 %v5299, %v6022
  %v6418 = vmul.f32 %v5300, %v6023
  %v6419 = vmul.f32 %v5301, %v6024
  %v6420 = vmul.f32 %v5302, %v6025
  %v6421 = vmul.f32 %v5303, %v6026
  %v6422 = vmul.f32 %v5304, %v6027
  %v6423 = vmul.f32 %v5305, %v6028
  %v6424 = vmul.f32 %v5306, %v5731
  %v6425 = vmul.f32 %v5282, %v6029
  %v6426 = vmul.f32 %v5283, %v6030
  %v6427 = vmul.f32 %v5284, %v6031
  %v6428 = vmul.f32 %v5285, %v6032
  %v6429 = vmul.f32 %v5286, %v6033
  %v6430 = vmul.f32 %v5287, %v6034
  %v6431 = vmul.f32 %v5288, %v6035
  %v6432 = vmul.f32 %v5289, %v6036
  %v6433 = vmul.f32 %v5290, %v6037
  %v6434 = vmul.f32 %v5291, %v6038
  %v6435 = vmul.f32 %v5292, %v6039
  %v6436 = vmul.f32 %v5293, %v6040
  %v6437 = vmul.f32 %v5294, %v6041
  %v6438 = vmul.f32 %v5295, %v6042
  %v6439 = vmul.f32 %v5296, %v6043
  %v6440 = vmul.f32 %v5297, %v6044
  %v6441 = vmul.f32 %v5298, %v6045
  %v6442 = vmul.f32 %v5299, %v6046
  %v6443 = vmul.f32 %v5300, %v6047
  %v6444 = vmul.f32 %v5301, %v6048
  %v6445 = vmul.f32 %v5302, %v6049
  %v6446 = vmul.f32 %v5303, %v6050
  %v6447 = vmul.f32 %v5304, %v6051
  %v6448 = vmul.f32 %v5305, %v6052
  %v6449 = vmul.f32 %v5306, %v5781
  %v6450 = vmul.f32 %v5282, %v6053
  %v6451 = vmul.f32 %v5283, %v6054
  %v6452 = vmul.f32 %v5284, %v6055
  %v6453 = vmul.f32 %v5285, %v6056
  %v6454 = vmul.f32 %v5286, %v6057
  %v6455 = vmul.f32 %v5287, %v6058
  %v6456 = vmul.f32 %v5288, %v6059
  %v6457 = vmul.f32 %v5289, %v6060
  %v6458 = vmul.f32 %v5290, %v6061
  %v6459 = vmul.f32 %v5291, %v6062
  %v6460 = vmul.f32 %v5292, %v6063
  %v6461 = vmul.f32 %v5293, %v6064
  %v6462 = vmul.f32 %v5294, %v6065
  %v6463 = vmul.f32 %v5295, %v6066
  %v6464 = vmul.f32 %v5296, %v6067
  %v6465 = vmul.f32 %v5297, %v6068
  %v6466 = vmul.f32 %v5298, %v6069
  %v6467 = vmul.f32 %v5299, %v6070
  %v6468 = vmul.f32 %v5300, %v6071
  %v6469 = vmul.f32 %v5301, %v6072
  %v6470 = vmul.f32 %v5302, %v6073
  %v6471 = vmul.f32 %v5303, %v6074
  %v6472 = vmul.f32 %v5304, %v6075
  %v6473 = vmul.f32 %v5305, %v6076
  %v6474 = vmul.f32 %v5306, %v5831
  %v6475 = vmul.f32 %v5282, %v6077
  %v6476 = vmul.f32 %v5283, %v6078
  %v6477 = vmul.f32 %v5284, %v6079
  %v6478 = vmul.f32 %v5285, %v6080
  %v6479 = vmul.f32 %v5286, %v6081
  %v6480 = vmul.f32 %v5287, %v6082
  %v6481 = vmul.f32 %v5288, %v6083
  %v6482 = vmul.f32 %v5289, %v6084
  %v6483 = vmul.f32 %v5290, %v6085
  %v6484 = vmul.f32 %v5291, %v6086
  %v6485 = vmul.f32 %v5292, %v6087
  %v6486 = vmul.f32 %v5293, %v6088
  %v6487 = vmul.f32 %v5294, %v6089
  %v6488 = vmul.f32 %v5295, %v6090
  %v6489 = vmul.f32 %v5296, %v6091
  %v6490 = vmul.f32 %v5297, %v6092
  %v6491 = vmul.f32 %v5298, %v6093
  %v6492 = vmul.f32 %v5299, %v6094
  %v6493 = vmul.f32 %v5300, %v6095
  %v6494 = vmul.f32 %v5301, %v6096
  %v6495 = vmul.f32 %v5302, %v6097
  %v6496 = vmul.f32 %v5303, %v6098
  %v6497 = vmul.f32 %v5304, %v6099
  %v6498 = vmul.f32 %v5305, %v6100
  %v6499 = vmul.f32 %v5306, %v5881
  %v6500 = vmul.f32 %v5282, %v6101
  %v6501 = vmul.f32 %v5283, %v6102
  %v6502 = vmul.f32 %v5284, %v6103
  %v6503 = vmul.f32 %v5285, %v6104
  %v6504 = vmul.f32 %v5286, %v6105
  %v6505 = vmul.f32 %v5287, %v6106
  %v6506 = vmul.f32 %v5288, %v6107
  %v6507 = vmul.f32 %v5289, %v6108
  %v6508 = vmul.f32 %v5290, %v6109
  %v6509 = vmul.f32 %v5291, %v6110
  %v6510 = vmul.f32 %v5292, %v6111
  %v6511 = vmul.f32 %v5293, %v6112
  %v6512 = vmul.f32 %v5294, %v6113
  %v6513 = vmul.f32 %v5295, %v6114
  %v6514 = vmul.f32 %v5296, %v6115
  %v6515 = vmul.f32 %v5297, %v6116
  %v6516 = vmul.f32 %v5298, %v6117
  %v6517 = vmul.f32 %v5299, %v6118
  %v6518 = vmul.f32 %v5300, %v6119
  %v6519 = vmul.f32 %v5301, %v6120
  %v6520 = vmul.f32 %v5302, %v6121
  %v6521 = vmul.f32 %v5303, %v6122
  %v6522 = vmul.f32 %v5304, %v6123
  %v6523 = vmul.f32 %v5305, %v6124
  %v6524 = vmul.f32 %v5306, %v5931
  %v6525 = vadd.f32 %v3181, %v6325
  %v6526 = vadd.f32 %v3222, %v6326
  %v6527 = vadd.f32 %v3263, %v6327
  %v6528 = vadd.f32 %v3304, %v6328
  %v6529 = vadd.f32 %v3345, %v6329
  %v6530 = vadd.f32 %v3386, %v6330
  %v6531 = vadd.f32 %v3427, %v6331
  %v6532 = vadd.f32 %v3468, %v6332
  %v6533 = vadd.f32 %v3509, %v6333
  %v6534 = vadd.f32 %v3550, %v6334
  %v6535 = vadd.f32 %v3591, %v6335
  %v6536 = vadd.f32 %v3632, %v6336
  %v6537 = vadd.f32 %v3673, %v6337
  %v6538 = vadd.f32 %v3714, %v6338
  %v6539 = vadd.f32 %v3755, %v6339
  %v6540 = vadd.f32 %v3796, %v6340
  %v6541 = vadd.f32 %v3837, %v6341
  %v6542 = vadd.f32 %v3878, %v6342
  %v6543 = vadd.f32 %v3919, %v6343
  %v6544 = vadd.f32 %v3960, %v6344
  %v6545 = vadd.f32 %v4001, %v6345
  %v6546 = vadd.f32 %v4042, %v6346
  %v6547 = vadd.f32 %v4083, %v6347
  %v6548 = vadd.f32 %v4124, %v6348
  %v6549 = vadd.f32 %v4165, %v6349
  %v6550 = vadd.f32 %v3184, %v6350
  %v6551 = vadd.f32 %v3225, %v6351
  %v6552 = vadd.f32 %v3266, %v6352
  %v6553 = vadd.f32 %v3307, %v6353
  %v6554 = vadd.f32 %v3348, %v6354
  %v6555 = vadd.f32 %v3389, %v6355
  %v6556 = vadd.f32 %v3430, %v6356
  %v6557 = vadd.f32 %v3471, %v6357
  %v6558 = vadd.f32 %v3512, %v6358
  %v6559 = vadd.f32 %v3553, %v6359
  %v6560 = vadd.f32 %v3594, %v6360
  %v6561 = vadd.f32 %v3635, %v6361
  %v6562 = vadd.f32 %v3676, %v6362
  %v6563 = vadd.f32 %v3717, %v6363
  %v6564 = vadd.f32 %v3758, %v6364
  %v6565 = vadd.f32 %v3799, %v6365
  %v6566 = vadd.f32 %v3840, %v6366
  %v6567 = vadd.f32 %v3881, %v6367
  %v6568 = vadd.f32 %v3922, %v6368
  %v6569 = vadd.f32 %v3963, %v6369
  %v6570 = vadd.f32 %v4004, %v6370
  %v6571 = vadd.f32 %v4045, %v6371
  %v6572 = vadd.f32 %v4086, %v6372
  %v6573 = vadd.f32 %v4127, %v6373
  %v6574 = vadd.f32 %v4168, %v6374
  %v6575 = vadd.f32 %v3187, %v6375
  %v6576 = vadd.f32 %v3228, %v6376
  %v6577 = vadd.f32 %v3269, %v6377
  %v6578 = vadd.f32 %v3310, %v6378
  %v6579 = vadd.f32 %v3351, %v6379
  %v6580 = vadd.f32 %v3392, %v6380
  %v6581 = vadd.f32 %v3433, %v6381
  %v6582 = vadd.f32 %v3474, %v6382
  %v6583 = vadd.f32 %v3515, %v6383
  %v6584 = vadd.f32 %v3556, %v6384
  %v6585 = vadd.f32 %v3597, %v6385
  %v6586 = vadd.f32 %v3638, %v6386
  %v6587 = vadd.f32 %v3679, %v6387
  %v6588 = vadd.f32 %v3720, %v6388
  %v6589 = vadd.f32 %v3761, %v6389
  %v6590 = vadd.f32 %v3802, %v6390
  %v6591 = vadd.f32 %v3843, %v6391
  %v6592 = vadd.f32 %v3884, %v6392
  %v6593 = vadd.f32 %v3925, %v6393
  %v6594 = vadd.f32 %v3966, %v6394
  %v6595 = vadd.f32 %v4007, %v6395
  %v6596 = vadd.f32 %v4048, %v6396
  %v6597 = vadd.f32 %v4089, %v6397
  %v6598 = vadd.f32 %v4130, %v6398
  %v6599 = vadd.f32 %v4171, %v6399
  %v6600 = vadd.f32 %v3190, %v6400
  %v6601 = vadd.f32 %v3231, %v6401
  %v6602 = vadd.f32 %v3272, %v6402
  %v6603 = vadd.f32 %v3313, %v6403
  %v6604 = vadd.f32 %v3354, %v6404
  %v6605 = vadd.f32 %v3395, %v6405
  %v6606 = vadd.f32 %v3436, %v6406
  %v6607 = vadd.f32 %v3477, %v6407
  %v6608 = vadd.f32 %v3518, %v6408
  %v6609 = vadd.f32 %v3559, %v6409
  %v6610 = vadd.f32 %v3600, %v6410
  %v6611 = vadd.f32 %v3641, %v6411
  %v6612 = vadd.f32 %v3682, %v6412
  %v6613 = vadd.f32 %v3723, %v6413
  %v6614 = vadd.f32 %v3764, %v6414
  %v6615 = vadd.f32 %v3805, %v6415
  %v6616 = vadd.f32 %v3846, %v6416
  %v6617 = vadd.f32 %v3887, %v6417
  %v6618 = vadd.f32 %v3928, %v6418
  %v6619 = vadd.f32 %v3969, %v6419
  %v6620 = vadd.f32 %v4010, %v6420
  %v6621 = vadd.f32 %v4051, %v6421
  %v6622 = vadd.f32 %v4092, %v6422
  %v6623 = vadd.f32 %v4133, %v6423
  %v6624 = vadd.f32 %v4174, %v6424
  %v6625 = vadd.f32 %v3193, %v6425
  %v6626 = vadd.f32 %v3234, %v6426
  %v6627 = vadd.f32 %v3275, %v6427
  %v6628 = vadd.f32 %v3316, %v6428
  %v6629 = vadd.f32 %v3357, %v6429
  %v6630 = vadd.f32 %v3398, %v6430
  %v6631 = vadd.f32 %v3439, %v6431
  %v6632 = vadd.f32 %v3480, %v6432
  %v6633 = vadd.f32 %v3521, %v6433
  %v6634 = vadd.f32 %v3562, %v6434
  %v6635 = vadd.f32 %v3603, %v6435
  %v6636 = vadd.f32 %v3644, %v6436
  %v6637 = vadd.f32 %v3685, %v6437
  %v6638 = vadd.f32 %v3726, %v6438
  %v6639 = vadd.f32 %v3767, %v6439
  %v6640 = vadd.f32 %v3808, %v6440
  %v6641 = vadd.f32 %v3849, %v6441
  %v6642 = vadd.f32 %v3890, %v6442
  %v6643 = vadd.f32 %v3931, %v6443
  %v6644 = vadd.f32 %v3972, %v6444
  %v6645 = vadd.f32 %v4013, %v6445
  %v6646 = vadd.f32 %v4054, %v6446
  %v6647 = vadd.f32 %v4095, %v6447
  %v6648 = vadd.f32 %v4136, %v6448
  %v6649 = vadd.f32 %v4177, %v6449
  %v6650 = vadd.f32 %v3196, %v6450
  %v6651 = vadd.f32 %v3237, %v6451
  %v6652 = vadd.f32 %v3278, %v6452
  %v6653 = vadd.f32 %v3319, %v6453
  %v6654 = vadd.f32 %v3360, %v6454
  %v6655 = vadd.f32 %v3401, %v6455
  %v6656 = vadd.f32 %v3442, %v6456
  %v6657 = vadd.f32 %v3483, %v6457
  %v6658 = vadd.f32 %v3524, %v6458
  %v6659 = vadd.f32 %v3565, %v6459
  %v6660 = vadd.f32 %v3606, %v6460
  %v6661 = vadd.f32 %v3647, %v6461
  %v6662 = vadd.f32 %v3688, %v6462
  %v6663 = vadd.f32 %v3729, %v6463
  %v6664 = vadd.f32 %v3770, %v6464
  %v6665 = vadd.f32 %v3811, %v6465
  %v6666 = vadd.f32 %v3852, %v6466
  %v6667 = vadd.f32 %v3893, %v6467
  %v6668 = vadd.f32 %v3934, %v6468
  %v6669 = vadd.f32 %v3975, %v6469
  %v6670 = vadd.f32 %v4016, %v6470
  %v6671 = vadd.f32 %v4057, %v6471
  %v6672 = vadd.f32 %v4098, %v6472
  %v6673 = vadd.f32 %v4139, %v6473
  %v6674 = vadd.f32 %v4180, %v6474
  %v6675 = vadd.f32 %v3199, %v6475
  %v6676 = vadd.f32 %v3240, %v6476
  %v6677 = vadd.f32 %v3281, %v6477
  %v6678 = vadd.f32 %v3322, %v6478
  %v6679 = vadd.f32 %v3363, %v6479
  %v6680 = vadd.f32 %v3404, %v6480
  %v6681 = vadd.f32 %v3445, %v6481
  %v6682 = vadd.f32 %v3486, %v6482
  %v6683 = vadd.f32 %v3527, %v6483
  %v6684 = vadd.f32 %v3568, %v6484
  %v6685 = vadd.f32 %v3609, %v6485
  %v6686 = vadd.f32 %v3650, %v6486
  %v6687 = vadd.f32 %v3691, %v6487
  %v6688 = vadd.f32 %v3732, %v6488
  %v6689 = vadd.f32 %v3773, %v6489
  %v6690 = vadd.f32 %v3814, %v6490
  %v6691 = vadd.f32 %v3855, %v6491
  %v6692 = vadd.f32 %v3896, %v6492
  %v6693 = vadd.f32 %v3937, %v6493
  %v6694 = vadd.f32 %v3978, %v6494
  %v6695 = vadd.f32 %v4019, %v6495
  %v6696 = vadd.f32 %v4060, %v6496
  %v6697 = vadd.f32 %v4101, %v6497
  %v6698 = vadd.f32 %v4142, %v6498
  %v6699 = vadd.f32 %v4183, %v6499
  %v6700 = vadd.f32 %v3202, %v6500
  %v6701 = vadd.f32 %v3243, %v6501
  %v6702 = vadd.f32 %v3284, %v6502
  %v6703 = vadd.f32 %v3325, %v6503
  %v6704 = vadd.f32 %v3366, %v6504
  %v6705 = vadd.f32 %v3407, %v6505
  %v6706 = vadd.f32 %v3448, %v6506
  %v6707 = vadd.f32 %v3489, %v6507
  %v6708 = vadd.f32 %v3530, %v6508
  %v6709 = vadd.f32 %v3571, %v6509
  %v6710 = vadd.f32 %v3612, %v6510
  %v6711 = vadd.f32 %v3653, %v6511
  %v6712 = vadd.f32 %v3694, %v6512
  %v6713 = vadd.f32 %v3735, %v6513
  %v6714 = vadd.f32 %v3776, %v6514
  %v6715 = vadd.f32 %v3817, %v6515
  %v6716 = vadd.f32 %v3858, %v6516
  %v6717 = vadd.f32 %v3899, %v6517
  %v6718 = vadd.f32 %v3940, %v6518
  %v6719 = vadd.f32 %v3981, %v6519
  %v6720 = vadd.f32 %v4022, %v6520
  %v6721 = vadd.f32 %v4063, %v6521
  %v6722 = vadd.f32 %v4104, %v6522
  %v6723 = vadd.f32 %v4145, %v6523
  %v6724 = vadd.f32 %v4186, %v6524
  %6725 = vrot.lane.b32.xlu0 %v6525, 64
  %v6726 = vpop.permute.xlu0 %6725
  %v6727 = vsel %vm1291, %v6726, %v6549
  %6728 = vrot.lane.b32.xlu0 %v6550, 64
  %v6729 = vpop.permute.xlu0 %6728
  %v6730 = vsel %vm1291, %v6729, %v6574
  %6731 = vrot.lane.b32.xlu0 %v6575, 64
  %v6732 = vpop.permute.xlu0 %6731
  %v6733 = vsel %vm1291, %v6732, %v6599
  %6734 = vrot.lane.b32.xlu0 %v6600, 64
  %v6735 = vpop.permute.xlu0 %6734
  %v6736 = vsel %vm1291, %v6735, %v6624
  %6737 = vrot.lane.b32.xlu0 %v6625, 64
  %v6738 = vpop.permute.xlu0 %6737
  %v6739 = vsel %vm1291, %v6738, %v6649
  %6740 = vrot.lane.b32.xlu0 %v6650, 64
  %v6741 = vpop.permute.xlu0 %6740
  %v6742 = vsel %vm1291, %v6741, %v6674
  %6743 = vrot.lane.b32.xlu0 %v6675, 64
  %v6744 = vpop.permute.xlu0 %6743
  %v6745 = vsel %vm1291, %v6744, %v6699
  %6746 = vrot.lane.b32.xlu0 %v6700, 64
  %v6747 = vpop.permute.xlu0 %6746
  %v6748 = vsel %vm1291, %v6747, %v6724
  %6749 = vrot.lane.b32.xlu0 %v6526, 64
  %v6750 = vpop.permute.xlu0 %6749
  %6751 = vrot.lane.b32.xlu0 %v6551, 64
  %v6752 = vpop.permute.xlu0 %6751
  %6753 = vrot.lane.b32.xlu0 %v6576, 64
  %v6754 = vpop.permute.xlu0 %6753
  %6755 = vrot.lane.b32.xlu0 %v6601, 64
  %v6756 = vpop.permute.xlu0 %6755
  %6757 = vrot.lane.b32.xlu0 %v6626, 64
  %v6758 = vpop.permute.xlu0 %6757
  %6759 = vrot.lane.b32.xlu0 %v6651, 64
  %v6760 = vpop.permute.xlu0 %6759
  %6761 = vrot.lane.b32.xlu0 %v6676, 64
  %v6762 = vpop.permute.xlu0 %6761
  %6763 = vrot.lane.b32.xlu0 %v6701, 64
  %v6764 = vpop.permute.xlu0 %6763
  %6765 = vrot.lane.b32.xlu0 %v6527, 64
  %v6766 = vpop.permute.xlu0 %6765
  %6767 = vrot.lane.b32.xlu0 %v6552, 64
  %v6768 = vpop.permute.xlu0 %6767
  %6769 = vrot.lane.b32.xlu0 %v6577, 64
  %v6770 = vpop.permute.xlu0 %6769
  %6771 = vrot.lane.b32.xlu0 %v6602, 64
  %v6772 = vpop.permute.xlu0 %6771
  %6773 = vrot.lane.b32.xlu0 %v6627, 64
  %v6774 = vpop.permute.xlu0 %6773
  %6775 = vrot.lane.b32.xlu0 %v6652, 64
  %v6776 = vpop.permute.xlu0 %6775
  %6777 = vrot.lane.b32.xlu0 %v6677, 64
  %v6778 = vpop.permute.xlu0 %6777
  %6779 = vrot.lane.b32.xlu0 %v6702, 64
  %v6780 = vpop.permute.xlu0 %6779
  %6781 = vrot.lane.b32.xlu0 %v6528, 64
  %v6782 = vpop.permute.xlu0 %6781
  %6783 = vrot.lane.b32.xlu0 %v6553, 64
  %v6784 = vpop.permute.xlu0 %6783
  %6785 = vrot.lane.b32.xlu0 %v6578, 64
  %v6786 = vpop.permute.xlu0 %6785
  %6787 = vrot.lane.b32.xlu0 %v6603, 64
  %v6788 = vpop.permute.xlu0 %6787
  %6789 = vrot.lane.b32.xlu0 %v6628, 64
  %v6790 = vpop.permute.xlu0 %6789
  %6791 = vrot.lane.b32.xlu0 %v6653, 64
  %v6792 = vpop.permute.xlu0 %6791
  %6793 = vrot.lane.b32.xlu0 %v6678, 64
  %v6794 = vpop.permute.xlu0 %6793
  %6795 = vrot.lane.b32.xlu0 %v6703, 64
  %v6796 = vpop.permute.xlu0 %6795
  %6797 = vrot.lane.b32.xlu0 %v6529, 64
  %v6798 = vpop.permute.xlu0 %6797
  %6799 = vrot.lane.b32.xlu0 %v6554, 64
  %v6800 = vpop.permute.xlu0 %6799
  %6801 = vrot.lane.b32.xlu0 %v6579, 64
  %v6802 = vpop.permute.xlu0 %6801
  %6803 = vrot.lane.b32.xlu0 %v6604, 64
  %v6804 = vpop.permute.xlu0 %6803
  %6805 = vrot.lane.b32.xlu0 %v6629, 64
  %v6806 = vpop.permute.xlu0 %6805
  %6807 = vrot.lane.b32.xlu0 %v6654, 64
  %v6808 = vpop.permute.xlu0 %6807
  %6809 = vrot.lane.b32.xlu0 %v6679, 64
  %v6810 = vpop.permute.xlu0 %6809
  %6811 = vrot.lane.b32.xlu0 %v6704, 64
  %v6812 = vpop.permute.xlu0 %6811
  %6813 = vrot.lane.b32.xlu0 %v6530, 64
  %v6814 = vpop.permute.xlu0 %6813
  %6815 = vrot.lane.b32.xlu0 %v6555, 64
  %v6816 = vpop.permute.xlu0 %6815
  %6817 = vrot.lane.b32.xlu0 %v6580, 64
  %v6818 = vpop.permute.xlu0 %6817
  %6819 = vrot.lane.b32.xlu0 %v6605, 64
  %v6820 = vpop.permute.xlu0 %6819
  %6821 = vrot.lane.b32.xlu0 %v6630, 64
  %v6822 = vpop.permute.xlu0 %6821
  %6823 = vrot.lane.b32.xlu0 %v6655, 64
  %v6824 = vpop.permute.xlu0 %6823
  %6825 = vrot.lane.b32.xlu0 %v6680, 64
  %v6826 = vpop.permute.xlu0 %6825
  %6827 = vrot.lane.b32.xlu0 %v6705, 64
  %v6828 = vpop.permute.xlu0 %6827
  %6829 = vrot.lane.b32.xlu0 %v6531, 64
  %v6830 = vpop.permute.xlu0 %6829
  %6831 = vrot.lane.b32.xlu0 %v6556, 64
  %v6832 = vpop.permute.xlu0 %6831
  %6833 = vrot.lane.b32.xlu0 %v6581, 64
  %v6834 = vpop.permute.xlu0 %6833
  %6835 = vrot.lane.b32.xlu0 %v6606, 64
  %v6836 = vpop.permute.xlu0 %6835
  %6837 = vrot.lane.b32.xlu0 %v6631, 64
  %v6838 = vpop.permute.xlu0 %6837
  %6839 = vrot.lane.b32.xlu0 %v6656, 64
  %v6840 = vpop.permute.xlu0 %6839
  %6841 = vrot.lane.b32.xlu0 %v6681, 64
  %v6842 = vpop.permute.xlu0 %6841
  %6843 = vrot.lane.b32.xlu0 %v6706, 64
  %v6844 = vpop.permute.xlu0 %6843
  %6845 = vrot.lane.b32.xlu0 %v6532, 64
  %v6846 = vpop.permute.xlu0 %6845
  %6847 = vrot.lane.b32.xlu0 %v6557, 64
  %v6848 = vpop.permute.xlu0 %6847
  %6849 = vrot.lane.b32.xlu0 %v6582, 64
  %v6850 = vpop.permute.xlu0 %6849
  %6851 = vrot.lane.b32.xlu0 %v6607, 64
  %v6852 = vpop.permute.xlu0 %6851
  %6853 = vrot.lane.b32.xlu0 %v6632, 64
  %v6854 = vpop.permute.xlu0 %6853
  %6855 = vrot.lane.b32.xlu0 %v6657, 64
  %v6856 = vpop.permute.xlu0 %6855
  %6857 = vrot.lane.b32.xlu0 %v6682, 64
  %v6858 = vpop.permute.xlu0 %6857
  %6859 = vrot.lane.b32.xlu0 %v6707, 64
  %v6860 = vpop.permute.xlu0 %6859
  %6861 = vrot.lane.b32.xlu0 %v6533, 64
  %v6862 = vpop.permute.xlu0 %6861
  %6863 = vrot.lane.b32.xlu0 %v6558, 64
  %v6864 = vpop.permute.xlu0 %6863
  %6865 = vrot.lane.b32.xlu0 %v6583, 64
  %v6866 = vpop.permute.xlu0 %6865
  %6867 = vrot.lane.b32.xlu0 %v6608, 64
  %v6868 = vpop.permute.xlu0 %6867
  %6869 = vrot.lane.b32.xlu0 %v6633, 64
  %v6870 = vpop.permute.xlu0 %6869
  %6871 = vrot.lane.b32.xlu0 %v6658, 64
  %v6872 = vpop.permute.xlu0 %6871
  %6873 = vrot.lane.b32.xlu0 %v6683, 64
  %v6874 = vpop.permute.xlu0 %6873
  %6875 = vrot.lane.b32.xlu0 %v6708, 64
  %v6876 = vpop.permute.xlu0 %6875
  %6877 = vrot.lane.b32.xlu0 %v6534, 64
  %v6878 = vpop.permute.xlu0 %6877
  %6879 = vrot.lane.b32.xlu0 %v6559, 64
  %v6880 = vpop.permute.xlu0 %6879
  %6881 = vrot.lane.b32.xlu0 %v6584, 64
  %v6882 = vpop.permute.xlu0 %6881
  %6883 = vrot.lane.b32.xlu0 %v6609, 64
  %v6884 = vpop.permute.xlu0 %6883
  %6885 = vrot.lane.b32.xlu0 %v6634, 64
  %v6886 = vpop.permute.xlu0 %6885
  %6887 = vrot.lane.b32.xlu0 %v6659, 64
  %v6888 = vpop.permute.xlu0 %6887
  %6889 = vrot.lane.b32.xlu0 %v6684, 64
  %v6890 = vpop.permute.xlu0 %6889
  %6891 = vrot.lane.b32.xlu0 %v6709, 64
  %v6892 = vpop.permute.xlu0 %6891
  %6893 = vrot.lane.b32.xlu0 %v6535, 64
  %v6894 = vpop.permute.xlu0 %6893
  %6895 = vrot.lane.b32.xlu0 %v6560, 64
  %v6896 = vpop.permute.xlu0 %6895
  %6897 = vrot.lane.b32.xlu0 %v6585, 64
  %v6898 = vpop.permute.xlu0 %6897
  %6899 = vrot.lane.b32.xlu0 %v6610, 64
  %v6900 = vpop.permute.xlu0 %6899
  %6901 = vrot.lane.b32.xlu0 %v6635, 64
  %v6902 = vpop.permute.xlu0 %6901
  %6903 = vrot.lane.b32.xlu0 %v6660, 64
  %v6904 = vpop.permute.xlu0 %6903
  %6905 = vrot.lane.b32.xlu0 %v6685, 64
  %v6906 = vpop.permute.xlu0 %6905
  %6907 = vrot.lane.b32.xlu0 %v6710, 64
  %v6908 = vpop.permute.xlu0 %6907
  %6909 = vrot.lane.b32.xlu0 %v6536, 64
  %v6910 = vpop.permute.xlu0 %6909
  %6911 = vrot.lane.b32.xlu0 %v6561, 64
  %v6912 = vpop.permute.xlu0 %6911
  %6913 = vrot.lane.b32.xlu0 %v6586, 64
  %v6914 = vpop.permute.xlu0 %6913
  %6915 = vrot.lane.b32.xlu0 %v6611, 64
  %v6916 = vpop.permute.xlu0 %6915
  %6917 = vrot.lane.b32.xlu0 %v6636, 64
  %v6918 = vpop.permute.xlu0 %6917
  %6919 = vrot.lane.b32.xlu0 %v6661, 64
  %v6920 = vpop.permute.xlu0 %6919
  %6921 = vrot.lane.b32.xlu0 %v6686, 64
  %v6922 = vpop.permute.xlu0 %6921
  %6923 = vrot.lane.b32.xlu0 %v6711, 64
  %v6924 = vpop.permute.xlu0 %6923
  %6925 = vrot.lane.b32.xlu0 %v6537, 64
  %v6926 = vpop.permute.xlu0 %6925
  %6927 = vrot.lane.b32.xlu0 %v6562, 64
  %v6928 = vpop.permute.xlu0 %6927
  %6929 = vrot.lane.b32.xlu0 %v6587, 64
  %v6930 = vpop.permute.xlu0 %6929
  %6931 = vrot.lane.b32.xlu0 %v6612, 64
  %v6932 = vpop.permute.xlu0 %6931
  %6933 = vrot.lane.b32.xlu0 %v6637, 64
  %v6934 = vpop.permute.xlu0 %6933
  %6935 = vrot.lane.b32.xlu0 %v6662, 64
  %v6936 = vpop.permute.xlu0 %6935
  %6937 = vrot.lane.b32.xlu0 %v6687, 64
  %v6938 = vpop.permute.xlu0 %6937
  %6939 = vrot.lane.b32.xlu0 %v6712, 64
  %v6940 = vpop.permute.xlu0 %6939
  %6941 = vrot.lane.b32.xlu0 %v6538, 64
  %v6942 = vpop.permute.xlu0 %6941
  %6943 = vrot.lane.b32.xlu0 %v6563, 64
  %v6944 = vpop.permute.xlu0 %6943
  %6945 = vrot.lane.b32.xlu0 %v6588, 64
  %v6946 = vpop.permute.xlu0 %6945
  %6947 = vrot.lane.b32.xlu0 %v6613, 64
  %v6948 = vpop.permute.xlu0 %6947
  %6949 = vrot.lane.b32.xlu0 %v6638, 64
  %v6950 = vpop.permute.xlu0 %6949
  %6951 = vrot.lane.b32.xlu0 %v6663, 64
  %v6952 = vpop.permute.xlu0 %6951
  %6953 = vrot.lane.b32.xlu0 %v6688, 64
  %v6954 = vpop.permute.xlu0 %6953
  %6955 = vrot.lane.b32.xlu0 %v6713, 64
  %v6956 = vpop.permute.xlu0 %6955
  %6957 = vrot.lane.b32.xlu0 %v6539, 64
  %v6958 = vpop.permute.xlu0 %6957
  %6959 = vrot.lane.b32.xlu0 %v6564, 64
  %v6960 = vpop.permute.xlu0 %6959
  %6961 = vrot.lane.b32.xlu0 %v6589, 64
  %v6962 = vpop.permute.xlu0 %6961
  %6963 = vrot.lane.b32.xlu0 %v6614, 64
  %v6964 = vpop.permute.xlu0 %6963
  %6965 = vrot.lane.b32.xlu0 %v6639, 64
  %v6966 = vpop.permute.xlu0 %6965
  %6967 = vrot.lane.b32.xlu0 %v6664, 64
  %v6968 = vpop.permute.xlu0 %6967
  %6969 = vrot.lane.b32.xlu0 %v6689, 64
  %v6970 = vpop.permute.xlu0 %6969
  %6971 = vrot.lane.b32.xlu0 %v6714, 64
  %v6972 = vpop.permute.xlu0 %6971
  %6973 = vrot.lane.b32.xlu0 %v6540, 64
  %v6974 = vpop.permute.xlu0 %6973
  %6975 = vrot.lane.b32.xlu0 %v6565, 64
  %v6976 = vpop.permute.xlu0 %6975
  %6977 = vrot.lane.b32.xlu0 %v6590, 64
  %v6978 = vpop.permute.xlu0 %6977
  %6979 = vrot.lane.b32.xlu0 %v6615, 64
  %v6980 = vpop.permute.xlu0 %6979
  %6981 = vrot.lane.b32.xlu0 %v6640, 64
  %v6982 = vpop.permute.xlu0 %6981
  %6983 = vrot.lane.b32.xlu0 %v6665, 64
  %v6984 = vpop.permute.xlu0 %6983
  %6985 = vrot.lane.b32.xlu0 %v6690, 64
  %v6986 = vpop.permute.xlu0 %6985
  %6987 = vrot.lane.b32.xlu0 %v6715, 64
  %v6988 = vpop.permute.xlu0 %6987
  %6989 = vrot.lane.b32.xlu0 %v6541, 64
  %v6990 = vpop.permute.xlu0 %6989
  %6991 = vrot.lane.b32.xlu0 %v6566, 64
  %v6992 = vpop.permute.xlu0 %6991
  %6993 = vrot.lane.b32.xlu0 %v6591, 64
  %v6994 = vpop.permute.xlu0 %6993
  %6995 = vrot.lane.b32.xlu0 %v6616, 64
  %v6996 = vpop.permute.xlu0 %6995
  %6997 = vrot.lane.b32.xlu0 %v6641, 64
  %v6998 = vpop.permute.xlu0 %6997
  %6999 = vrot.lane.b32.xlu0 %v6666, 64
  %v7000 = vpop.permute.xlu0 %6999
  %7001 = vrot.lane.b32.xlu0 %v6691, 64
  %v7002 = vpop.permute.xlu0 %7001
  %7003 = vrot.lane.b32.xlu0 %v6716, 64
  %v7004 = vpop.permute.xlu0 %7003
  %7005 = vrot.lane.b32.xlu0 %v6542, 64
  %v7006 = vpop.permute.xlu0 %7005
  %7007 = vrot.lane.b32.xlu0 %v6567, 64
  %v7008 = vpop.permute.xlu0 %7007
  %7009 = vrot.lane.b32.xlu0 %v6592, 64
  %v7010 = vpop.permute.xlu0 %7009
  %7011 = vrot.lane.b32.xlu0 %v6617, 64
  %v7012 = vpop.permute.xlu0 %7011
  %7013 = vrot.lane.b32.xlu0 %v6642, 64
  %v7014 = vpop.permute.xlu0 %7013
  %7015 = vrot.lane.b32.xlu0 %v6667, 64
  %v7016 = vpop.permute.xlu0 %7015
  %7017 = vrot.lane.b32.xlu0 %v6692, 64
  %v7018 = vpop.permute.xlu0 %7017
  %7019 = vrot.lane.b32.xlu0 %v6717, 64
  %v7020 = vpop.permute.xlu0 %7019
  %7021 = vrot.lane.b32.xlu0 %v6543, 64
  %v7022 = vpop.permute.xlu0 %7021
  %7023 = vrot.lane.b32.xlu0 %v6568, 64
  %v7024 = vpop.permute.xlu0 %7023
  %7025 = vrot.lane.b32.xlu0 %v6593, 64
  %v7026 = vpop.permute.xlu0 %7025
  %7027 = vrot.lane.b32.xlu0 %v6618, 64
  %v7028 = vpop.permute.xlu0 %7027
  %7029 = vrot.lane.b32.xlu0 %v6643, 64
  %v7030 = vpop.permute.xlu0 %7029
  %7031 = vrot.lane.b32.xlu0 %v6668, 64
  %v7032 = vpop.permute.xlu0 %7031
  %7033 = vrot.lane.b32.xlu0 %v6693, 64
  %v7034 = vpop.permute.xlu0 %7033
  %7035 = vrot.lane.b32.xlu0 %v6718, 64
  %v7036 = vpop.permute.xlu0 %7035
  %7037 = vrot.lane.b32.xlu0 %v6544, 64
  %v7038 = vpop.permute.xlu0 %7037
  %7039 = vrot.lane.b32.xlu0 %v6569, 64
  %v7040 = vpop.permute.xlu0 %7039
  %7041 = vrot.lane.b32.xlu0 %v6594, 64
  %v7042 = vpop.permute.xlu0 %7041
  %7043 = vrot.lane.b32.xlu0 %v6619, 64
  %v7044 = vpop.permute.xlu0 %7043
  %7045 = vrot.lane.b32.xlu0 %v6644, 64
  %v7046 = vpop.permute.xlu0 %7045
  %7047 = vrot.lane.b32.xlu0 %v6669, 64
  %v7048 = vpop.permute.xlu0 %7047
  %7049 = vrot.lane.b32.xlu0 %v6694, 64
  %v7050 = vpop.permute.xlu0 %7049
  %7051 = vrot.lane.b32.xlu0 %v6719, 64
  %v7052 = vpop.permute.xlu0 %7051
  %7053 = vrot.lane.b32.xlu0 %v6545, 64
  %v7054 = vpop.permute.xlu0 %7053
  %7055 = vrot.lane.b32.xlu0 %v6570, 64
  %v7056 = vpop.permute.xlu0 %7055
  %7057 = vrot.lane.b32.xlu0 %v6595, 64
  %v7058 = vpop.permute.xlu0 %7057
  %7059 = vrot.lane.b32.xlu0 %v6620, 64
  %v7060 = vpop.permute.xlu0 %7059
  %7061 = vrot.lane.b32.xlu0 %v6645, 64
  %v7062 = vpop.permute.xlu0 %7061
  %7063 = vrot.lane.b32.xlu0 %v6670, 64
  %v7064 = vpop.permute.xlu0 %7063
  %7065 = vrot.lane.b32.xlu0 %v6695, 64
  %v7066 = vpop.permute.xlu0 %7065
  %7067 = vrot.lane.b32.xlu0 %v6720, 64
  %v7068 = vpop.permute.xlu0 %7067
  %7069 = vrot.lane.b32.xlu0 %v6546, 64
  %v7070 = vpop.permute.xlu0 %7069
  %7071 = vrot.lane.b32.xlu0 %v6571, 64
  %v7072 = vpop.permute.xlu0 %7071
  %7073 = vrot.lane.b32.xlu0 %v6596, 64
  %v7074 = vpop.permute.xlu0 %7073
  %7075 = vrot.lane.b32.xlu0 %v6621, 64
  %v7076 = vpop.permute.xlu0 %7075
  %7077 = vrot.lane.b32.xlu0 %v6646, 64
  %v7078 = vpop.permute.xlu0 %7077
  %7079 = vrot.lane.b32.xlu0 %v6671, 64
  %v7080 = vpop.permute.xlu0 %7079
  %7081 = vrot.lane.b32.xlu0 %v6696, 64
  %v7082 = vpop.permute.xlu0 %7081
  %7083 = vrot.lane.b32.xlu0 %v6721, 64
  %v7084 = vpop.permute.xlu0 %7083
  %7085 = vrot.lane.b32.xlu0 %v6547, 64
  %v7086 = vpop.permute.xlu0 %7085
  %7087 = vrot.lane.b32.xlu0 %v6572, 64
  %v7088 = vpop.permute.xlu0 %7087
  %7089 = vrot.lane.b32.xlu0 %v6597, 64
  %v7090 = vpop.permute.xlu0 %7089
  %7091 = vrot.lane.b32.xlu0 %v6622, 64
  %v7092 = vpop.permute.xlu0 %7091
  %7093 = vrot.lane.b32.xlu0 %v6647, 64
  %v7094 = vpop.permute.xlu0 %7093
  %7095 = vrot.lane.b32.xlu0 %v6672, 64
  %v7096 = vpop.permute.xlu0 %7095
  %7097 = vrot.lane.b32.xlu0 %v6697, 64
  %v7098 = vpop.permute.xlu0 %7097
  %7099 = vrot.lane.b32.xlu0 %v6722, 64
  %v7100 = vpop.permute.xlu0 %7099
  %7101 = vrot.lane.b32.xlu0 %v6548, 64
  %v7102 = vpop.permute.xlu0 %7101
  %7103 = vrot.lane.b32.xlu0 %v6573, 64
  %v7104 = vpop.permute.xlu0 %7103
  %7105 = vrot.lane.b32.xlu0 %v6598, 64
  %v7106 = vpop.permute.xlu0 %7105
  %7107 = vrot.lane.b32.xlu0 %v6623, 64
  %v7108 = vpop.permute.xlu0 %7107
  %7109 = vrot.lane.b32.xlu0 %v6648, 64
  %v7110 = vpop.permute.xlu0 %7109
  %7111 = vrot.lane.b32.xlu0 %v6673, 64
  %v7112 = vpop.permute.xlu0 %7111
  %7113 = vrot.lane.b32.xlu0 %v6698, 64
  %v7114 = vpop.permute.xlu0 %7113
  %7115 = vrot.lane.b32.xlu0 %v6723, 64
  %v7116 = vpop.permute.xlu0 %7115
  %7117 = vrot.lane.b32.xlu0 %v6727, 64
  %v7118 = vpop.permute.xlu0 %7117
  %7119 = vrot.lane.b32.xlu0 %v6730, 64
  %v7120 = vpop.permute.xlu0 %7119
  %7121 = vrot.lane.b32.xlu0 %v6733, 64
  %v7122 = vpop.permute.xlu0 %7121
  %7123 = vrot.lane.b32.xlu0 %v6736, 64
  %v7124 = vpop.permute.xlu0 %7123
  %7125 = vrot.lane.b32.xlu0 %v6739, 64
  %v7126 = vpop.permute.xlu0 %7125
  %7127 = vrot.lane.b32.xlu0 %v6742, 64
  %v7128 = vpop.permute.xlu0 %7127
  %7129 = vrot.lane.b32.xlu0 %v6745, 64
  %v7130 = vpop.permute.xlu0 %7129
  %7131 = vrot.lane.b32.xlu0 %v6748, 64
  %v7132 = vpop.permute.xlu0 %7131
  %v7133 = vsel %vm1291, %v6750, %v6726
  %v7134 = vsel %vm1291, %v6752, %v6729
  %v7135 = vsel %vm1291, %v6754, %v6732
  %v7136 = vsel %vm1291, %v6756, %v6735
  %v7137 = vsel %vm1291, %v6758, %v6738
  %v7138 = vsel %vm1291, %v6760, %v6741
  %v7139 = vsel %vm1291, %v6762, %v6744
  %v7140 = vsel %vm1291, %v6764, %v6747
  %v7141 = vsel %vm1291, %v6766, %v6750
  %v7142 = vsel %vm1291, %v6768, %v6752
  %v7143 = vsel %vm1291, %v6770, %v6754
  %v7144 = vsel %vm1291, %v6772, %v6756
  %v7145 = vsel %vm1291, %v6774, %v6758
  %v7146 = vsel %vm1291, %v6776, %v6760
  %v7147 = vsel %vm1291, %v6778, %v6762
  %v7148 = vsel %vm1291, %v6780, %v6764
  %v7149 = vsel %vm1291, %v6782, %v6766
  %v7150 = vsel %vm1291, %v6784, %v6768
  %v7151 = vsel %vm1291, %v6786, %v6770
  %v7152 = vsel %vm1291, %v6788, %v6772
  %v7153 = vsel %vm1291, %v6790, %v6774
  %v7154 = vsel %vm1291, %v6792, %v6776
  %v7155 = vsel %vm1291, %v6794, %v6778
  %v7156 = vsel %vm1291, %v6796, %v6780
  %v7157 = vsel %vm1291, %v6798, %v6782
  %v7158 = vsel %vm1291, %v6800, %v6784
  %v7159 = vsel %vm1291, %v6802, %v6786
  %v7160 = vsel %vm1291, %v6804, %v6788
  %v7161 = vsel %vm1291, %v6806, %v6790
  %v7162 = vsel %vm1291, %v6808, %v6792
  %v7163 = vsel %vm1291, %v6810, %v6794
  %v7164 = vsel %vm1291, %v6812, %v6796
  %v7165 = vsel %vm1291, %v6814, %v6798
  %v7166 = vsel %vm1291, %v6816, %v6800
  %v7167 = vsel %vm1291, %v6818, %v6802
  %v7168 = vsel %vm1291, %v6820, %v6804
  %v7169 = vsel %vm1291, %v6822, %v6806
  %v7170 = vsel %vm1291, %v6824, %v6808
  %v7171 = vsel %vm1291, %v6826, %v6810
  %v7172 = vsel %vm1291, %v6828, %v6812
  %v7173 = vsel %vm1291, %v6830, %v6814
  %v7174 = vsel %vm1291, %v6832, %v6816
  %v7175 = vsel %vm1291, %v6834, %v6818
  %v7176 = vsel %vm1291, %v6836, %v6820
  %v7177 = vsel %vm1291, %v6838, %v6822
  %v7178 = vsel %vm1291, %v6840, %v6824
  %v7179 = vsel %vm1291, %v6842, %v6826
  %v7180 = vsel %vm1291, %v6844, %v6828
  %v7181 = vsel %vm1291, %v6846, %v6830
  %v7182 = vsel %vm1291, %v6848, %v6832
  %v7183 = vsel %vm1291, %v6850, %v6834
  %v7184 = vsel %vm1291, %v6852, %v6836
  %v7185 = vsel %vm1291, %v6854, %v6838
  %v7186 = vsel %vm1291, %v6856, %v6840
  %v7187 = vsel %vm1291, %v6858, %v6842
  %v7188 = vsel %vm1291, %v6860, %v6844
  %v7189 = vsel %vm1291, %v6862, %v6846
  %v7190 = vsel %vm1291, %v6864, %v6848
  %v7191 = vsel %vm1291, %v6866, %v6850
  %v7192 = vsel %vm1291, %v6868, %v6852
  %v7193 = vsel %vm1291, %v6870, %v6854
  %v7194 = vsel %vm1291, %v6872, %v6856
  %v7195 = vsel %vm1291, %v6874, %v6858
  %v7196 = vsel %vm1291, %v6876, %v6860
  %v7197 = vsel %vm1291, %v6878, %v6862
  %v7198 = vsel %vm1291, %v6880, %v6864
  %v7199 = vsel %vm1291, %v6882, %v6866
  %v7200 = vsel %vm1291, %v6884, %v6868
  %v7201 = vsel %vm1291, %v6886, %v6870
  %v7202 = vsel %vm1291, %v6888, %v6872
  %v7203 = vsel %vm1291, %v6890, %v6874
  %v7204 = vsel %vm1291, %v6892, %v6876
  %v7205 = vsel %vm1291, %v6894, %v6878
  %v7206 = vsel %vm1291, %v6896, %v6880
  %v7207 = vsel %vm1291, %v6898, %v6882
  %v7208 = vsel %vm1291, %v6900, %v6884
  %v7209 = vsel %vm1291, %v6902, %v6886
  %v7210 = vsel %vm1291, %v6904, %v6888
  %v7211 = vsel %vm1291, %v6906, %v6890
  %v7212 = vsel %vm1291, %v6908, %v6892
  %v7213 = vsel %vm1291, %v6910, %v6894
  %v7214 = vsel %vm1291, %v6912, %v6896
  %v7215 = vsel %vm1291, %v6914, %v6898
  %v7216 = vsel %vm1291, %v6916, %v6900
  %v7217 = vsel %vm1291, %v6918, %v6902
  %v7218 = vsel %vm1291, %v6920, %v6904
  %v7219 = vsel %vm1291, %v6922, %v6906
  %v7220 = vsel %vm1291, %v6924, %v6908
  %v7221 = vsel %vm1291, %v6926, %v6910
  %v7222 = vsel %vm1291, %v6928, %v6912
  %v7223 = vsel %vm1291, %v6930, %v6914
  %v7224 = vsel %vm1291, %v6932, %v6916
  %v7225 = vsel %vm1291, %v6934, %v6918
  %v7226 = vsel %vm1291, %v6936, %v6920
  %v7227 = vsel %vm1291, %v6938, %v6922
  %v7228 = vsel %vm1291, %v6940, %v6924
  %v7229 = vsel %vm1291, %v6942, %v6926
  %v7230 = vsel %vm1291, %v6944, %v6928
  %v7231 = vsel %vm1291, %v6946, %v6930
  %v7232 = vsel %vm1291, %v6948, %v6932
  %v7233 = vsel %vm1291, %v6950, %v6934
  %v7234 = vsel %vm1291, %v6952, %v6936
  %v7235 = vsel %vm1291, %v6954, %v6938
  %v7236 = vsel %vm1291, %v6956, %v6940
  %v7237 = vsel %vm1291, %v6958, %v6942
  %v7238 = vsel %vm1291, %v6960, %v6944
  %v7239 = vsel %vm1291, %v6962, %v6946
  %v7240 = vsel %vm1291, %v6964, %v6948
  %v7241 = vsel %vm1291, %v6966, %v6950
  %v7242 = vsel %vm1291, %v6968, %v6952
  %v7243 = vsel %vm1291, %v6970, %v6954
  %v7244 = vsel %vm1291, %v6972, %v6956
  %v7245 = vsel %vm1291, %v6974, %v6958
  %v7246 = vsel %vm1291, %v6976, %v6960
  %v7247 = vsel %vm1291, %v6978, %v6962
  %v7248 = vsel %vm1291, %v6980, %v6964
  %v7249 = vsel %vm1291, %v6982, %v6966
  %v7250 = vsel %vm1291, %v6984, %v6968
  %v7251 = vsel %vm1291, %v6986, %v6970
  %v7252 = vsel %vm1291, %v6988, %v6972
  %v7253 = vsel %vm1291, %v6990, %v6974
  %v7254 = vsel %vm1291, %v6992, %v6976
  %v7255 = vsel %vm1291, %v6994, %v6978
  %v7256 = vsel %vm1291, %v6996, %v6980
  %v7257 = vsel %vm1291, %v6998, %v6982
  %v7258 = vsel %vm1291, %v7000, %v6984
  %v7259 = vsel %vm1291, %v7002, %v6986
  %v7260 = vsel %vm1291, %v7004, %v6988
  %v7261 = vsel %vm1291, %v7006, %v6990
  %v7262 = vsel %vm1291, %v7008, %v6992
  %v7263 = vsel %vm1291, %v7010, %v6994
  %v7264 = vsel %vm1291, %v7012, %v6996
  %v7265 = vsel %vm1291, %v7014, %v6998
  %v7266 = vsel %vm1291, %v7016, %v7000
  %v7267 = vsel %vm1291, %v7018, %v7002
  %v7268 = vsel %vm1291, %v7020, %v7004
  %v7269 = vsel %vm1291, %v7022, %v7006
  %v7270 = vsel %vm1291, %v7024, %v7008
  %v7271 = vsel %vm1291, %v7026, %v7010
  %v7272 = vsel %vm1291, %v7028, %v7012
  %v7273 = vsel %vm1291, %v7030, %v7014
  %v7274 = vsel %vm1291, %v7032, %v7016
  %v7275 = vsel %vm1291, %v7034, %v7018
  %v7276 = vsel %vm1291, %v7036, %v7020
  %v7277 = vsel %vm1291, %v7038, %v7022
  %v7278 = vsel %vm1291, %v7040, %v7024
  %v7279 = vsel %vm1291, %v7042, %v7026
  %v7280 = vsel %vm1291, %v7044, %v7028
  %v7281 = vsel %vm1291, %v7046, %v7030
  %v7282 = vsel %vm1291, %v7048, %v7032
  %v7283 = vsel %vm1291, %v7050, %v7034
  %v7284 = vsel %vm1291, %v7052, %v7036
  %v7285 = vsel %vm1291, %v7054, %v7038
  %v7286 = vsel %vm1291, %v7056, %v7040
  %v7287 = vsel %vm1291, %v7058, %v7042
  %v7288 = vsel %vm1291, %v7060, %v7044
  %v7289 = vsel %vm1291, %v7062, %v7046
  %v7290 = vsel %vm1291, %v7064, %v7048
  %v7291 = vsel %vm1291, %v7066, %v7050
  %v7292 = vsel %vm1291, %v7068, %v7052
  %v7293 = vsel %vm1291, %v7070, %v7054
  %v7294 = vsel %vm1291, %v7072, %v7056
  %v7295 = vsel %vm1291, %v7074, %v7058
  %v7296 = vsel %vm1291, %v7076, %v7060
  %v7297 = vsel %vm1291, %v7078, %v7062
  %v7298 = vsel %vm1291, %v7080, %v7064
  %v7299 = vsel %vm1291, %v7082, %v7066
  %v7300 = vsel %vm1291, %v7084, %v7068
  %v7301 = vsel %vm1291, %v7086, %v7070
  %v7302 = vsel %vm1291, %v7088, %v7072
  %v7303 = vsel %vm1291, %v7090, %v7074
  %v7304 = vsel %vm1291, %v7092, %v7076
  %v7305 = vsel %vm1291, %v7094, %v7078
  %v7306 = vsel %vm1291, %v7096, %v7080
  %v7307 = vsel %vm1291, %v7098, %v7082
  %v7308 = vsel %vm1291, %v7100, %v7084
  %v7309 = vsel %vm1291, %v7102, %v7086
  %v7310 = vsel %vm1291, %v7104, %v7088
  %v7311 = vsel %vm1291, %v7106, %v7090
  %v7312 = vsel %vm1291, %v7108, %v7092
  %v7313 = vsel %vm1291, %v7110, %v7094
  %v7314 = vsel %vm1291, %v7112, %v7096
  %v7315 = vsel %vm1291, %v7114, %v7098
  %v7316 = vsel %vm1291, %v7116, %v7100
  %v7317 = vsel %vm1291, %v7118, %v7102
  %v7318 = vsel %vm1291, %v7120, %v7104
  %v7319 = vsel %vm1291, %v7122, %v7106
  %v7320 = vsel %vm1291, %v7124, %v7108
  %v7321 = vsel %vm1291, %v7126, %v7110
  %v7322 = vsel %vm1291, %v7128, %v7112
  %v7323 = vsel %vm1291, %v7130, %v7114
  %v7324 = vsel %vm1291, %v7132, %v7116
  %v7325 = vld [vmem:[%s2] sm:$0xff]
  %v7326 = vld [vmem:[%s2 + $0x8] sm:$0xff]
  %v7327 = vld [vmem:[%s2 + $0x10] sm:$0xff]
  %v7328 = vld [vmem:[%s2 + $0x18] sm:$0xff]
  %v7329 = vld [vmem:[%s2 + $0x20] sm:$0xff]
  %v7330 = vld [vmem:[%s2 + $0x28] sm:$0xff]
  %v7331 = vld [vmem:[%s2 + $0x30] sm:$0xff]
  %v7332 = vld [vmem:[%s2 + $0x38] sm:$0xff]
  %7334 = vset.pattern.permute.xlu0 0
  %7335 = vperm.xlu0 %7334, %v7325
  %v7336 = vpop.permute.xlu0 %7335
  %7339 = vset.pattern.permute.xlu0 0
  %7340 = vperm.xlu0 %7339, %v7326
  %v7341 = vpop.permute.xlu0 %7340
  %7344 = vset.pattern.permute.xlu0 0
  %7345 = vperm.xlu0 %7344, %v7327
  %v7346 = vpop.permute.xlu0 %7345
  %7349 = vset.pattern.permute.xlu0 0
  %7350 = vperm.xlu0 %7349, %v7328
  %v7351 = vpop.permute.xlu0 %7350
  %7354 = vset.pattern.permute.xlu0 0
  %7355 = vperm.xlu0 %7354, %v7329
  %v7356 = vpop.permute.xlu0 %7355
  %7359 = vset.pattern.permute.xlu0 0
  %7360 = vperm.xlu0 %7359, %v7330
  %v7361 = vpop.permute.xlu0 %7360
  %7364 = vset.pattern.permute.xlu0 0
  %7365 = vperm.xlu0 %7364, %v7331
  %v7366 = vpop.permute.xlu0 %7365
  %7369 = vset.pattern.permute.xlu0 0
  %7370 = vperm.xlu0 %7369, %v7332
  %v7371 = vpop.permute.xlu0 %7370
  %v7373 = vmul.f32 %v6727, %v7336
  %v7374 = vmul.f32 %v7133, %v7336
  %v7375 = vmul.f32 %v7141, %v7336
  %v7376 = vmul.f32 %v7149, %v7336
  %v7377 = vmul.f32 %v7157, %v7336
  %v7378 = vmul.f32 %v7165, %v7336
  %v7379 = vmul.f32 %v7173, %v7336
  %v7380 = vmul.f32 %v7181, %v7336
  %v7381 = vmul.f32 %v7189, %v7336
  %v7382 = vmul.f32 %v7197, %v7336
  %v7383 = vmul.f32 %v7205, %v7336
  %v7384 = vmul.f32 %v7213, %v7336
  %v7385 = vmul.f32 %v7221, %v7336
  %v7386 = vmul.f32 %v7229, %v7336
  %v7387 = vmul.f32 %v7237, %v7336
  %v7388 = vmul.f32 %v7245, %v7336
  %v7389 = vmul.f32 %v7253, %v7336
  %v7390 = vmul.f32 %v7261, %v7336
  %v7391 = vmul.f32 %v7269, %v7336
  %v7392 = vmul.f32 %v7277, %v7336
  %v7393 = vmul.f32 %v7285, %v7336
  %v7394 = vmul.f32 %v7293, %v7336
  %v7395 = vmul.f32 %v7301, %v7336
  %v7396 = vmul.f32 %v7309, %v7336
  %v7397 = vmul.f32 %v7317, %v7336
  %v7398 = vmul.f32 %v6730, %v7341
  %v7399 = vmul.f32 %v7134, %v7341
  %v7400 = vmul.f32 %v7142, %v7341
  %v7401 = vmul.f32 %v7150, %v7341
  %v7402 = vmul.f32 %v7158, %v7341
  %v7403 = vmul.f32 %v7166, %v7341
  %v7404 = vmul.f32 %v7174, %v7341
  %v7405 = vmul.f32 %v7182, %v7341
  %v7406 = vmul.f32 %v7190, %v7341
  %v7407 = vmul.f32 %v7198, %v7341
  %v7408 = vmul.f32 %v7206, %v7341
  %v7409 = vmul.f32 %v7214, %v7341
  %v7410 = vmul.f32 %v7222, %v7341
  %v7411 = vmul.f32 %v7230, %v7341
  %v7412 = vmul.f32 %v7238, %v7341
  %v7413 = vmul.f32 %v7246, %v7341
  %v7414 = vmul.f32 %v7254, %v7341
  %v7415 = vmul.f32 %v7262, %v7341
  %v7416 = vmul.f32 %v7270, %v7341
  %v7417 = vmul.f32 %v7278, %v7341
  %v7418 = vmul.f32 %v7286, %v7341
  %v7419 = vmul.f32 %v7294, %v7341
  %v7420 = vmul.f32 %v7302, %v7341
  %v7421 = vmul.f32 %v7310, %v7341
  %v7422 = vmul.f32 %v7318, %v7341
  %v7423 = vmul.f32 %v6733, %v7346
  %v7424 = vmul.f32 %v7135, %v7346
  %v7425 = vmul.f32 %v7143, %v7346
  %v7426 = vmul.f32 %v7151, %v7346
  %v7427 = vmul.f32 %v7159, %v7346
  %v7428 = vmul.f32 %v7167, %v7346
  %v7429 = vmul.f32 %v7175, %v7346
  %v7430 = vmul.f32 %v7183, %v7346
  %v7431 = vmul.f32 %v7191, %v7346
  %v7432 = vmul.f32 %v7199, %v7346
  %v7433 = vmul.f32 %v7207, %v7346
  %v7434 = vmul.f32 %v7215, %v7346
  %v7435 = vmul.f32 %v7223, %v7346
  %v7436 = vmul.f32 %v7231, %v7346
  %v7437 = vmul.f32 %v7239, %v7346
  %v7438 = vmul.f32 %v7247, %v7346
  %v7439 = vmul.f32 %v7255, %v7346
  %v7440 = vmul.f32 %v7263, %v7346
  %v7441 = vmul.f32 %v7271, %v7346
  %v7442 = vmul.f32 %v7279, %v7346
  %v7443 = vmul.f32 %v7287, %v7346
  %v7444 = vmul.f32 %v7295, %v7346
  %v7445 = vmul.f32 %v7303, %v7346
  %v7446 = vmul.f32 %v7311, %v7346
  %v7447 = vmul.f32 %v7319, %v7346
  %v7448 = vmul.f32 %v6736, %v7351
  %v7449 = vmul.f32 %v7136, %v7351
  %v7450 = vmul.f32 %v7144, %v7351
  %v7451 = vmul.f32 %v7152, %v7351
  %v7452 = vmul.f32 %v7160, %v7351
  %v7453 = vmul.f32 %v7168, %v7351
  %v7454 = vmul.f32 %v7176, %v7351
  %v7455 = vmul.f32 %v7184, %v7351
  %v7456 = vmul.f32 %v7192, %v7351
  %v7457 = vmul.f32 %v7200, %v7351
  %v7458 = vmul.f32 %v7208, %v7351
  %v7459 = vmul.f32 %v7216, %v7351
  %v7460 = vmul.f32 %v7224, %v7351
  %v7461 = vmul.f32 %v7232, %v7351
  %v7462 = vmul.f32 %v7240, %v7351
  %v7463 = vmul.f32 %v7248, %v7351
  %v7464 = vmul.f32 %v7256, %v7351
  %v7465 = vmul.f32 %v7264, %v7351
  %v7466 = vmul.f32 %v7272, %v7351
  %v7467 = vmul.f32 %v7280, %v7351
  %v7468 = vmul.f32 %v7288, %v7351
  %v7469 = vmul.f32 %v7296, %v7351
  %v7470 = vmul.f32 %v7304, %v7351
  %v7471 = vmul.f32 %v7312, %v7351
  %v7472 = vmul.f32 %v7320, %v7351
  %v7473 = vmul.f32 %v6739, %v7356
  %v7474 = vmul.f32 %v7137, %v7356
  %v7475 = vmul.f32 %v7145, %v7356
  %v7476 = vmul.f32 %v7153, %v7356
  %v7477 = vmul.f32 %v7161, %v7356
  %v7478 = vmul.f32 %v7169, %v7356
  %v7479 = vmul.f32 %v7177, %v7356
  %v7480 = vmul.f32 %v7185, %v7356
  %v7481 = vmul.f32 %v7193, %v7356
  %v7482 = vmul.f32 %v7201, %v7356
  %v7483 = vmul.f32 %v7209, %v7356
  %v7484 = vmul.f32 %v7217, %v7356
  %v7485 = vmul.f32 %v7225, %v7356
  %v7486 = vmul.f32 %v7233, %v7356
  %v7487 = vmul.f32 %v7241, %v7356
  %v7488 = vmul.f32 %v7249, %v7356
  %v7489 = vmul.f32 %v7257, %v7356
  %v7490 = vmul.f32 %v7265, %v7356
  %v7491 = vmul.f32 %v7273, %v7356
  %v7492 = vmul.f32 %v7281, %v7356
  %v7493 = vmul.f32 %v7289, %v7356
  %v7494 = vmul.f32 %v7297, %v7356
  %v7495 = vmul.f32 %v7305, %v7356
  %v7496 = vmul.f32 %v7313, %v7356
  %v7497 = vmul.f32 %v7321, %v7356
  %v7498 = vmul.f32 %v6742, %v7361
  %v7499 = vmul.f32 %v7138, %v7361
  %v7500 = vmul.f32 %v7146, %v7361
  %v7501 = vmul.f32 %v7154, %v7361
  %v7502 = vmul.f32 %v7162, %v7361
  %v7503 = vmul.f32 %v7170, %v7361
  %v7504 = vmul.f32 %v7178, %v7361
  %v7505 = vmul.f32 %v7186, %v7361
  %v7506 = vmul.f32 %v7194, %v7361
  %v7507 = vmul.f32 %v7202, %v7361
  %v7508 = vmul.f32 %v7210, %v7361
  %v7509 = vmul.f32 %v7218, %v7361
  %v7510 = vmul.f32 %v7226, %v7361
  %v7511 = vmul.f32 %v7234, %v7361
  %v7512 = vmul.f32 %v7242, %v7361
  %v7513 = vmul.f32 %v7250, %v7361
  %v7514 = vmul.f32 %v7258, %v7361
  %v7515 = vmul.f32 %v7266, %v7361
  %v7516 = vmul.f32 %v7274, %v7361
  %v7517 = vmul.f32 %v7282, %v7361
  %v7518 = vmul.f32 %v7290, %v7361
  %v7519 = vmul.f32 %v7298, %v7361
  %v7520 = vmul.f32 %v7306, %v7361
  %v7521 = vmul.f32 %v7314, %v7361
  %v7522 = vmul.f32 %v7322, %v7361
  %v7523 = vmul.f32 %v6745, %v7366
  %v7524 = vmul.f32 %v7139, %v7366
  %v7525 = vmul.f32 %v7147, %v7366
  %v7526 = vmul.f32 %v7155, %v7366
  %v7527 = vmul.f32 %v7163, %v7366
  %v7528 = vmul.f32 %v7171, %v7366
  %v7529 = vmul.f32 %v7179, %v7366
  %v7530 = vmul.f32 %v7187, %v7366
  %v7531 = vmul.f32 %v7195, %v7366
  %v7532 = vmul.f32 %v7203, %v7366
  %v7533 = vmul.f32 %v7211, %v7366
  %v7534 = vmul.f32 %v7219, %v7366
  %v7535 = vmul.f32 %v7227, %v7366
  %v7536 = vmul.f32 %v7235, %v7366
  %v7537 = vmul.f32 %v7243, %v7366
  %v7538 = vmul.f32 %v7251, %v7366
  %v7539 = vmul.f32 %v7259, %v7366
  %v7540 = vmul.f32 %v7267, %v7366
  %v7541 = vmul.f32 %v7275, %v7366
  %v7542 = vmul.f32 %v7283, %v7366
  %v7543 = vmul.f32 %v7291, %v7366
  %v7544 = vmul.f32 %v7299, %v7366
  %v7545 = vmul.f32 %v7307, %v7366
  %v7546 = vmul.f32 %v7315, %v7366
  %v7547 = vmul.f32 %v7323, %v7366
  %v7548 = vmul.f32 %v6748, %v7371
  %v7549 = vmul.f32 %v7140, %v7371
  %v7550 = vmul.f32 %v7148, %v7371
  %v7551 = vmul.f32 %v7156, %v7371
  %v7552 = vmul.f32 %v7164, %v7371
  %v7553 = vmul.f32 %v7172, %v7371
  %v7554 = vmul.f32 %v7180, %v7371
  %v7555 = vmul.f32 %v7188, %v7371
  %v7556 = vmul.f32 %v7196, %v7371
  %v7557 = vmul.f32 %v7204, %v7371
  %v7558 = vmul.f32 %v7212, %v7371
  %v7559 = vmul.f32 %v7220, %v7371
  %v7560 = vmul.f32 %v7228, %v7371
  %v7561 = vmul.f32 %v7236, %v7371
  %v7562 = vmul.f32 %v7244, %v7371
  %v7563 = vmul.f32 %v7252, %v7371
  %v7564 = vmul.f32 %v7260, %v7371
  %v7565 = vmul.f32 %v7268, %v7371
  %v7566 = vmul.f32 %v7276, %v7371
  %v7567 = vmul.f32 %v7284, %v7371
  %v7568 = vmul.f32 %v7292, %v7371
  %v7569 = vmul.f32 %v7300, %v7371
  %v7570 = vmul.f32 %v7308, %v7371
  %v7571 = vmul.f32 %v7316, %v7371
  %v7572 = vmul.f32 %v7324, %v7371
  %7573 = vset.pattern.permute.xlu0 1
  %7574 = vperm.xlu0 %7573, %v7325
  %v7575 = vpop.permute.xlu0 %7574
  %7577 = vset.pattern.permute.xlu0 1
  %7578 = vperm.xlu0 %7577, %v7326
  %v7579 = vpop.permute.xlu0 %7578
  %7581 = vset.pattern.permute.xlu0 1
  %7582 = vperm.xlu0 %7581, %v7327
  %v7583 = vpop.permute.xlu0 %7582
  %7585 = vset.pattern.permute.xlu0 1
  %7586 = vperm.xlu0 %7585, %v7328
  %v7587 = vpop.permute.xlu0 %7586
  %7589 = vset.pattern.permute.xlu0 1
  %7590 = vperm.xlu0 %7589, %v7329
  %v7591 = vpop.permute.xlu0 %7590
  %7593 = vset.pattern.permute.xlu0 1
  %7594 = vperm.xlu0 %7593, %v7330
  %v7595 = vpop.permute.xlu0 %7594
  %7597 = vset.pattern.permute.xlu0 1
  %7598 = vperm.xlu0 %7597, %v7331
  %v7599 = vpop.permute.xlu0 %7598
  %7601 = vset.pattern.permute.xlu0 1
  %7602 = vperm.xlu0 %7601, %v7332
  %v7603 = vpop.permute.xlu0 %7602
  %v7605 = vmul.f32 %v6548, %v7575
  %v7606 = vmul.f32 %v6727, %v7575
  %v7607 = vmul.f32 %v7133, %v7575
  %v7608 = vmul.f32 %v7141, %v7575
  %v7609 = vmul.f32 %v7149, %v7575
  %v7610 = vmul.f32 %v7157, %v7575
  %v7611 = vmul.f32 %v7165, %v7575
  %v7612 = vmul.f32 %v7173, %v7575
  %v7613 = vmul.f32 %v7181, %v7575
  %v7614 = vmul.f32 %v7189, %v7575
  %v7615 = vmul.f32 %v7197, %v7575
  %v7616 = vmul.f32 %v7205, %v7575
  %v7617 = vmul.f32 %v7213, %v7575
  %v7618 = vmul.f32 %v7221, %v7575
  %v7619 = vmul.f32 %v7229, %v7575
  %v7620 = vmul.f32 %v7237, %v7575
  %v7621 = vmul.f32 %v7245, %v7575
  %v7622 = vmul.f32 %v7253, %v7575
  %v7623 = vmul.f32 %v7261, %v7575
  %v7624 = vmul.f32 %v7269, %v7575
  %v7625 = vmul.f32 %v7277, %v7575
  %v7626 = vmul.f32 %v7285, %v7575
  %v7627 = vmul.f32 %v7293, %v7575
  %v7628 = vmul.f32 %v7301, %v7575
  %v7629 = vmul.f32 %v7309, %v7575
  %v7630 = vmul.f32 %v7317, %v7575
  %v7631 = vmul.f32 %v6573, %v7579
  %v7632 = vmul.f32 %v6730, %v7579
  %v7633 = vmul.f32 %v7134, %v7579
  %v7634 = vmul.f32 %v7142, %v7579
  %v7635 = vmul.f32 %v7150, %v7579
  %v7636 = vmul.f32 %v7158, %v7579
  %v7637 = vmul.f32 %v7166, %v7579
  %v7638 = vmul.f32 %v7174, %v7579
  %v7639 = vmul.f32 %v7182, %v7579
  %v7640 = vmul.f32 %v7190, %v7579
  %v7641 = vmul.f32 %v7198, %v7579
  %v7642 = vmul.f32 %v7206, %v7579
  %v7643 = vmul.f32 %v7214, %v7579
  %v7644 = vmul.f32 %v7222, %v7579
  %v7645 = vmul.f32 %v7230, %v7579
  %v7646 = vmul.f32 %v7238, %v7579
  %v7647 = vmul.f32 %v7246, %v7579
  %v7648 = vmul.f32 %v7254, %v7579
  %v7649 = vmul.f32 %v7262, %v7579
  %v7650 = vmul.f32 %v7270, %v7579
  %v7651 = vmul.f32 %v7278, %v7579
  %v7652 = vmul.f32 %v7286, %v7579
  %v7653 = vmul.f32 %v7294, %v7579
  %v7654 = vmul.f32 %v7302, %v7579
  %v7655 = vmul.f32 %v7310, %v7579
  %v7656 = vmul.f32 %v7318, %v7579
  %v7657 = vmul.f32 %v6598, %v7583
  %v7658 = vmul.f32 %v6733, %v7583
  %v7659 = vmul.f32 %v7135, %v7583
  %v7660 = vmul.f32 %v7143, %v7583
  %v7661 = vmul.f32 %v7151, %v7583
  %v7662 = vmul.f32 %v7159, %v7583
  %v7663 = vmul.f32 %v7167, %v7583
  %v7664 = vmul.f32 %v7175, %v7583
  %v7665 = vmul.f32 %v7183, %v7583
  %v7666 = vmul.f32 %v7191, %v7583
  %v7667 = vmul.f32 %v7199, %v7583
  %v7668 = vmul.f32 %v7207, %v7583
  %v7669 = vmul.f32 %v7215, %v7583
  %v7670 = vmul.f32 %v7223, %v7583
  %v7671 = vmul.f32 %v7231, %v7583
  %v7672 = vmul.f32 %v7239, %v7583
  %v7673 = vmul.f32 %v7247, %v7583
  %v7674 = vmul.f32 %v7255, %v7583
  %v7675 = vmul.f32 %v7263, %v7583
  %v7676 = vmul.f32 %v7271, %v7583
  %v7677 = vmul.f32 %v7279, %v7583
  %v7678 = vmul.f32 %v7287, %v7583
  %v7679 = vmul.f32 %v7295, %v7583
  %v7680 = vmul.f32 %v7303, %v7583
  %v7681 = vmul.f32 %v7311, %v7583
  %v7682 = vmul.f32 %v7319, %v7583
  %v7683 = vmul.f32 %v6623, %v7587
  %v7684 = vmul.f32 %v6736, %v7587
  %v7685 = vmul.f32 %v7136, %v7587
  %v7686 = vmul.f32 %v7144, %v7587
  %v7687 = vmul.f32 %v7152, %v7587
  %v7688 = vmul.f32 %v7160, %v7587
  %v7689 = vmul.f32 %v7168, %v7587
  %v7690 = vmul.f32 %v7176, %v7587
  %v7691 = vmul.f32 %v7184, %v7587
  %v7692 = vmul.f32 %v7192, %v7587
  %v7693 = vmul.f32 %v7200, %v7587
  %v7694 = vmul.f32 %v7208, %v7587
  %v7695 = vmul.f32 %v7216, %v7587
  %v7696 = vmul.f32 %v7224, %v7587
  %v7697 = vmul.f32 %v7232, %v7587
  %v7698 = vmul.f32 %v7240, %v7587
  %v7699 = vmul.f32 %v7248, %v7587
  %v7700 = vmul.f32 %v7256, %v7587
  %v7701 = vmul.f32 %v7264, %v7587
  %v7702 = vmul.f32 %v7272, %v7587
  %v7703 = vmul.f32 %v7280, %v7587
  %v7704 = vmul.f32 %v7288, %v7587
  %v7705 = vmul.f32 %v7296, %v7587
  %v7706 = vmul.f32 %v7304, %v7587
  %v7707 = vmul.f32 %v7312, %v7587
  %v7708 = vmul.f32 %v7320, %v7587
  %v7709 = vmul.f32 %v6648, %v7591
  %v7710 = vmul.f32 %v6739, %v7591
  %v7711 = vmul.f32 %v7137, %v7591
  %v7712 = vmul.f32 %v7145, %v7591
  %v7713 = vmul.f32 %v7153, %v7591
  %v7714 = vmul.f32 %v7161, %v7591
  %v7715 = vmul.f32 %v7169, %v7591
  %v7716 = vmul.f32 %v7177, %v7591
  %v7717 = vmul.f32 %v7185, %v7591
  %v7718 = vmul.f32 %v7193, %v7591
  %v7719 = vmul.f32 %v7201, %v7591
  %v7720 = vmul.f32 %v7209, %v7591
  %v7721 = vmul.f32 %v7217, %v7591
  %v7722 = vmul.f32 %v7225, %v7591
  %v7723 = vmul.f32 %v7233, %v7591
  %v7724 = vmul.f32 %v7241, %v7591
  %v7725 = vmul.f32 %v7249, %v7591
  %v7726 = vmul.f32 %v7257, %v7591
  %v7727 = vmul.f32 %v7265, %v7591
  %v7728 = vmul.f32 %v7273, %v7591
  %v7729 = vmul.f32 %v7281, %v7591
  %v7730 = vmul.f32 %v7289, %v7591
  %v7731 = vmul.f32 %v7297, %v7591
  %v7732 = vmul.f32 %v7305, %v7591
  %v7733 = vmul.f32 %v7313, %v7591
  %v7734 = vmul.f32 %v7321, %v7591
  %v7735 = vmul.f32 %v6673, %v7595
  %v7736 = vmul.f32 %v6742, %v7595
  %v7737 = vmul.f32 %v7138, %v7595
  %v7738 = vmul.f32 %v7146, %v7595
  %v7739 = vmul.f32 %v7154, %v7595
  %v7740 = vmul.f32 %v7162, %v7595
  %v7741 = vmul.f32 %v7170, %v7595
  %v7742 = vmul.f32 %v7178, %v7595
  %v7743 = vmul.f32 %v7186, %v7595
  %v7744 = vmul.f32 %v7194, %v7595
  %v7745 = vmul.f32 %v7202, %v7595
  %v7746 = vmul.f32 %v7210, %v7595
  %v7747 = vmul.f32 %v7218, %v7595
  %v7748 = vmul.f32 %v7226, %v7595
  %v7749 = vmul.f32 %v7234, %v7595
  %v7750 = vmul.f32 %v7242, %v7595
  %v7751 = vmul.f32 %v7250, %v7595
  %v7752 = vmul.f32 %v7258, %v7595
  %v7753 = vmul.f32 %v7266, %v7595
  %v7754 = vmul.f32 %v7274, %v7595
  %v7755 = vmul.f32 %v7282, %v7595
  %v7756 = vmul.f32 %v7290, %v7595
  %v7757 = vmul.f32 %v7298, %v7595
  %v7758 = vmul.f32 %v7306, %v7595
  %v7759 = vmul.f32 %v7314, %v7595
  %v7760 = vmul.f32 %v7322, %v7595
  %v7761 = vmul.f32 %v6698, %v7599
  %v7762 = vmul.f32 %v6745, %v7599
  %v7763 = vmul.f32 %v7139, %v7599
  %v7764 = vmul.f32 %v7147, %v7599
  %v7765 = vmul.f32 %v7155, %v7599
  %v7766 = vmul.f32 %v7163, %v7599
  %v7767 = vmul.f32 %v7171, %v7599
  %v7768 = vmul.f32 %v7179, %v7599
  %v7769 = vmul.f32 %v7187, %v7599
  %v7770 = vmul.f32 %v7195, %v7599
  %v7771 = vmul.f32 %v7203, %v7599
  %v7772 = vmul.f32 %v7211, %v7599
  %v7773 = vmul.f32 %v7219, %v7599
  %v7774 = vmul.f32 %v7227, %v7599
  %v7775 = vmul.f32 %v7235, %v7599
  %v7776 = vmul.f32 %v7243, %v7599
  %v7777 = vmul.f32 %v7251, %v7599
  %v7778 = vmul.f32 %v7259, %v7599
  %v7779 = vmul.f32 %v7267, %v7599
  %v7780 = vmul.f32 %v7275, %v7599
  %v7781 = vmul.f32 %v7283, %v7599
  %v7782 = vmul.f32 %v7291, %v7599
  %v7783 = vmul.f32 %v7299, %v7599
  %v7784 = vmul.f32 %v7307, %v7599
  %v7785 = vmul.f32 %v7315, %v7599
  %v7786 = vmul.f32 %v7323, %v7599
  %v7787 = vmul.f32 %v6723, %v7603
  %v7788 = vmul.f32 %v6748, %v7603
  %v7789 = vmul.f32 %v7140, %v7603
  %v7790 = vmul.f32 %v7148, %v7603
  %v7791 = vmul.f32 %v7156, %v7603
  %v7792 = vmul.f32 %v7164, %v7603
  %v7793 = vmul.f32 %v7172, %v7603
  %v7794 = vmul.f32 %v7180, %v7603
  %v7795 = vmul.f32 %v7188, %v7603
  %v7796 = vmul.f32 %v7196, %v7603
  %v7797 = vmul.f32 %v7204, %v7603
  %v7798 = vmul.f32 %v7212, %v7603
  %v7799 = vmul.f32 %v7220, %v7603
  %v7800 = vmul.f32 %v7228, %v7603
  %v7801 = vmul.f32 %v7236, %v7603
  %v7802 = vmul.f32 %v7244, %v7603
  %v7803 = vmul.f32 %v7252, %v7603
  %v7804 = vmul.f32 %v7260, %v7603
  %v7805 = vmul.f32 %v7268, %v7603
  %v7806 = vmul.f32 %v7276, %v7603
  %v7807 = vmul.f32 %v7284, %v7603
  %v7808 = vmul.f32 %v7292, %v7603
  %v7809 = vmul.f32 %v7300, %v7603
  %v7810 = vmul.f32 %v7308, %v7603
  %v7811 = vmul.f32 %v7316, %v7603
  %v7812 = vmul.f32 %v7324, %v7603
  %8021 = vrot.lane.b32.xlu0 %v7605, 56
  %v8022 = vpop.permute.xlu0 %8021
  %8023 = vrot.lane.b32.xlu0 %v7606, 56
  %v8024 = vpop.permute.xlu0 %8023
  %8025 = vrot.lane.b32.xlu0 %v7607, 56
  %v8026 = vpop.permute.xlu0 %8025
  %8027 = vrot.lane.b32.xlu0 %v7608, 56
  %v8028 = vpop.permute.xlu0 %8027
  %8029 = vrot.lane.b32.xlu0 %v7609, 56
  %v8030 = vpop.permute.xlu0 %8029
  %8031 = vrot.lane.b32.xlu0 %v7610, 56
  %v8032 = vpop.permute.xlu0 %8031
  %8033 = vrot.lane.b32.xlu0 %v7611, 56
  %v8034 = vpop.permute.xlu0 %8033
  %8035 = vrot.lane.b32.xlu0 %v7612, 56
  %v8036 = vpop.permute.xlu0 %8035
  %8037 = vrot.lane.b32.xlu0 %v7613, 56
  %v8038 = vpop.permute.xlu0 %8037
  %8039 = vrot.lane.b32.xlu0 %v7614, 56
  %v8040 = vpop.permute.xlu0 %8039
  %8041 = vrot.lane.b32.xlu0 %v7615, 56
  %v8042 = vpop.permute.xlu0 %8041
  %8043 = vrot.lane.b32.xlu0 %v7616, 56
  %v8044 = vpop.permute.xlu0 %8043
  %8045 = vrot.lane.b32.xlu0 %v7617, 56
  %v8046 = vpop.permute.xlu0 %8045
  %8047 = vrot.lane.b32.xlu0 %v7618, 56
  %v8048 = vpop.permute.xlu0 %8047
  %8049 = vrot.lane.b32.xlu0 %v7619, 56
  %v8050 = vpop.permute.xlu0 %8049
  %8051 = vrot.lane.b32.xlu0 %v7620, 56
  %v8052 = vpop.permute.xlu0 %8051
  %8053 = vrot.lane.b32.xlu0 %v7621, 56
  %v8054 = vpop.permute.xlu0 %8053
  %8055 = vrot.lane.b32.xlu0 %v7622, 56
  %v8056 = vpop.permute.xlu0 %8055
  %8057 = vrot.lane.b32.xlu0 %v7623, 56
  %v8058 = vpop.permute.xlu0 %8057
  %8059 = vrot.lane.b32.xlu0 %v7624, 56
  %v8060 = vpop.permute.xlu0 %8059
  %8061 = vrot.lane.b32.xlu0 %v7625, 56
  %v8062 = vpop.permute.xlu0 %8061
  %8063 = vrot.lane.b32.xlu0 %v7626, 56
  %v8064 = vpop.permute.xlu0 %8063
  %8065 = vrot.lane.b32.xlu0 %v7627, 56
  %v8066 = vpop.permute.xlu0 %8065
  %8067 = vrot.lane.b32.xlu0 %v7628, 56
  %v8068 = vpop.permute.xlu0 %8067
  %8069 = vrot.lane.b32.xlu0 %v7629, 56
  %v8070 = vpop.permute.xlu0 %8069
  %8071 = vrot.lane.b32.xlu0 %v7630, 56
  %v8072 = vpop.permute.xlu0 %8071
  %8073 = vrot.lane.b32.xlu0 %v7631, 56
  %v8074 = vpop.permute.xlu0 %8073
  %8075 = vrot.lane.b32.xlu0 %v7632, 56
  %v8076 = vpop.permute.xlu0 %8075
  %8077 = vrot.lane.b32.xlu0 %v7633, 56
  %v8078 = vpop.permute.xlu0 %8077
  %8079 = vrot.lane.b32.xlu0 %v7634, 56
  %v8080 = vpop.permute.xlu0 %8079
  %8081 = vrot.lane.b32.xlu0 %v7635, 56
  %v8082 = vpop.permute.xlu0 %8081
  %8083 = vrot.lane.b32.xlu0 %v7636, 56
  %v8084 = vpop.permute.xlu0 %8083
  %8085 = vrot.lane.b32.xlu0 %v7637, 56
  %v8086 = vpop.permute.xlu0 %8085
  %8087 = vrot.lane.b32.xlu0 %v7638, 56
  %v8088 = vpop.permute.xlu0 %8087
  %8089 = vrot.lane.b32.xlu0 %v7639, 56
  %v8090 = vpop.permute.xlu0 %8089
  %8091 = vrot.lane.b32.xlu0 %v7640, 56
  %v8092 = vpop.permute.xlu0 %8091
  %8093 = vrot.lane.b32.xlu0 %v7641, 56
  %v8094 = vpop.permute.xlu0 %8093
  %8095 = vrot.lane.b32.xlu0 %v7642, 56
  %v8096 = vpop.permute.xlu0 %8095
  %8097 = vrot.lane.b32.xlu0 %v7643, 56
  %v8098 = vpop.permute.xlu0 %8097
  %8099 = vrot.lane.b32.xlu0 %v7644, 56
  %v8100 = vpop.permute.xlu0 %8099
  %8101 = vrot.lane.b32.xlu0 %v7645, 56
  %v8102 = vpop.permute.xlu0 %8101
  %8103 = vrot.lane.b32.xlu0 %v7646, 56
  %v8104 = vpop.permute.xlu0 %8103
  %8105 = vrot.lane.b32.xlu0 %v7647, 56
  %v8106 = vpop.permute.xlu0 %8105
  %8107 = vrot.lane.b32.xlu0 %v7648, 56
  %v8108 = vpop.permute.xlu0 %8107
  %8109 = vrot.lane.b32.xlu0 %v7649, 56
  %v8110 = vpop.permute.xlu0 %8109
  %8111 = vrot.lane.b32.xlu0 %v7650, 56
  %v8112 = vpop.permute.xlu0 %8111
  %8113 = vrot.lane.b32.xlu0 %v7651, 56
  %v8114 = vpop.permute.xlu0 %8113
  %8115 = vrot.lane.b32.xlu0 %v7652, 56
  %v8116 = vpop.permute.xlu0 %8115
  %8117 = vrot.lane.b32.xlu0 %v7653, 56
  %v8118 = vpop.permute.xlu0 %8117
  %8119 = vrot.lane.b32.xlu0 %v7654, 56
  %v8120 = vpop.permute.xlu0 %8119
  %8121 = vrot.lane.b32.xlu0 %v7655, 56
  %v8122 = vpop.permute.xlu0 %8121
  %8123 = vrot.lane.b32.xlu0 %v7656, 56
  %v8124 = vpop.permute.xlu0 %8123
  %8125 = vrot.lane.b32.xlu0 %v7657, 56
  %v8126 = vpop.permute.xlu0 %8125
  %8127 = vrot.lane.b32.xlu0 %v7658, 56
  %v8128 = vpop.permute.xlu0 %8127
  %8129 = vrot.lane.b32.xlu0 %v7659, 56
  %v8130 = vpop.permute.xlu0 %8129
  %8131 = vrot.lane.b32.xlu0 %v7660, 56
  %v8132 = vpop.permute.xlu0 %8131
  %8133 = vrot.lane.b32.xlu0 %v7661, 56
  %v8134 = vpop.permute.xlu0 %8133
  %8135 = vrot.lane.b32.xlu0 %v7662, 56
  %v8136 = vpop.permute.xlu0 %8135
  %8137 = vrot.lane.b32.xlu0 %v7663, 56
  %v8138 = vpop.permute.xlu0 %8137
  %8139 = vrot.lane.b32.xlu0 %v7664, 56
  %v8140 = vpop.permute.xlu0 %8139
  %8141 = vrot.lane.b32.xlu0 %v7665, 56
  %v8142 = vpop.permute.xlu0 %8141
  %8143 = vrot.lane.b32.xlu0 %v7666, 56
  %v8144 = vpop.permute.xlu0 %8143
  %8145 = vrot.lane.b32.xlu0 %v7667, 56
  %v8146 = vpop.permute.xlu0 %8145
  %8147 = vrot.lane.b32.xlu0 %v7668, 56
  %v8148 = vpop.permute.xlu0 %8147
  %8149 = vrot.lane.b32.xlu0 %v7669, 56
  %v8150 = vpop.permute.xlu0 %8149
  %8151 = vrot.lane.b32.xlu0 %v7670, 56
  %v8152 = vpop.permute.xlu0 %8151
  %8153 = vrot.lane.b32.xlu0 %v7671, 56
  %v8154 = vpop.permute.xlu0 %8153
  %8155 = vrot.lane.b32.xlu0 %v7672, 56
  %v8156 = vpop.permute.xlu0 %8155
  %8157 = vrot.lane.b32.xlu0 %v7673, 56
  %v8158 = vpop.permute.xlu0 %8157
  %8159 = vrot.lane.b32.xlu0 %v7674, 56
  %v8160 = vpop.permute.xlu0 %8159
  %8161 = vrot.lane.b32.xlu0 %v7675, 56
  %v8162 = vpop.permute.xlu0 %8161
  %8163 = vrot.lane.b32.xlu0 %v7676, 56
  %v8164 = vpop.permute.xlu0 %8163
  %8165 = vrot.lane.b32.xlu0 %v7677, 56
  %v8166 = vpop.permute.xlu0 %8165
  %8167 = vrot.lane.b32.xlu0 %v7678, 56
  %v8168 = vpop.permute.xlu0 %8167
  %8169 = vrot.lane.b32.xlu0 %v7679, 56
  %v8170 = vpop.permute.xlu0 %8169
  %8171 = vrot.lane.b32.xlu0 %v7680, 56
  %v8172 = vpop.permute.xlu0 %8171
  %8173 = vrot.lane.b32.xlu0 %v7681, 56
  %v8174 = vpop.permute.xlu0 %8173
  %8175 = vrot.lane.b32.xlu0 %v7682, 56
  %v8176 = vpop.permute.xlu0 %8175
  %8177 = vrot.lane.b32.xlu0 %v7683, 56
  %v8178 = vpop.permute.xlu0 %8177
  %8179 = vrot.lane.b32.xlu0 %v7684, 56
  %v8180 = vpop.permute.xlu0 %8179
  %8181 = vrot.lane.b32.xlu0 %v7685, 56
  %v8182 = vpop.permute.xlu0 %8181
  %8183 = vrot.lane.b32.xlu0 %v7686, 56
  %v8184 = vpop.permute.xlu0 %8183
  %8185 = vrot.lane.b32.xlu0 %v7687, 56
  %v8186 = vpop.permute.xlu0 %8185
  %8187 = vrot.lane.b32.xlu0 %v7688, 56
  %v8188 = vpop.permute.xlu0 %8187
  %8189 = vrot.lane.b32.xlu0 %v7689, 56
  %v8190 = vpop.permute.xlu0 %8189
  %8191 = vrot.lane.b32.xlu0 %v7690, 56
  %v8192 = vpop.permute.xlu0 %8191
  %8193 = vrot.lane.b32.xlu0 %v7691, 56
  %v8194 = vpop.permute.xlu0 %8193
  %8195 = vrot.lane.b32.xlu0 %v7692, 56
  %v8196 = vpop.permute.xlu0 %8195
  %8197 = vrot.lane.b32.xlu0 %v7693, 56
  %v8198 = vpop.permute.xlu0 %8197
  %8199 = vrot.lane.b32.xlu0 %v7694, 56
  %v8200 = vpop.permute.xlu0 %8199
  %8201 = vrot.lane.b32.xlu0 %v7695, 56
  %v8202 = vpop.permute.xlu0 %8201
  %8203 = vrot.lane.b32.xlu0 %v7696, 56
  %v8204 = vpop.permute.xlu0 %8203
  %8205 = vrot.lane.b32.xlu0 %v7697, 56
  %v8206 = vpop.permute.xlu0 %8205
  %8207 = vrot.lane.b32.xlu0 %v7698, 56
  %v8208 = vpop.permute.xlu0 %8207
  %8209 = vrot.lane.b32.xlu0 %v7699, 56
  %v8210 = vpop.permute.xlu0 %8209
  %8211 = vrot.lane.b32.xlu0 %v7700, 56
  %v8212 = vpop.permute.xlu0 %8211
  %8213 = vrot.lane.b32.xlu0 %v7701, 56
  %v8214 = vpop.permute.xlu0 %8213
  %8215 = vrot.lane.b32.xlu0 %v7702, 56
  %v8216 = vpop.permute.xlu0 %8215
  %8217 = vrot.lane.b32.xlu0 %v7703, 56
  %v8218 = vpop.permute.xlu0 %8217
  %8219 = vrot.lane.b32.xlu0 %v7704, 56
  %v8220 = vpop.permute.xlu0 %8219
  %8221 = vrot.lane.b32.xlu0 %v7705, 56
  %v8222 = vpop.permute.xlu0 %8221
  %8223 = vrot.lane.b32.xlu0 %v7706, 56
  %v8224 = vpop.permute.xlu0 %8223
  %8225 = vrot.lane.b32.xlu0 %v7707, 56
  %v8226 = vpop.permute.xlu0 %8225
  %8227 = vrot.lane.b32.xlu0 %v7708, 56
  %v8228 = vpop.permute.xlu0 %8227
  %8229 = vrot.lane.b32.xlu0 %v7709, 56
  %v8230 = vpop.permute.xlu0 %8229
  %8231 = vrot.lane.b32.xlu0 %v7710, 56
  %v8232 = vpop.permute.xlu0 %8231
  %8233 = vrot.lane.b32.xlu0 %v7711, 56
  %v8234 = vpop.permute.xlu0 %8233
  %8235 = vrot.lane.b32.xlu0 %v7712, 56
  %v8236 = vpop.permute.xlu0 %8235
  %8237 = vrot.lane.b32.xlu0 %v7713, 56
  %v8238 = vpop.permute.xlu0 %8237
  %8239 = vrot.lane.b32.xlu0 %v7714, 56
  %v8240 = vpop.permute.xlu0 %8239
  %8241 = vrot.lane.b32.xlu0 %v7715, 56
  %v8242 = vpop.permute.xlu0 %8241
  %8243 = vrot.lane.b32.xlu0 %v7716, 56
  %v8244 = vpop.permute.xlu0 %8243
  %8245 = vrot.lane.b32.xlu0 %v7717, 56
  %v8246 = vpop.permute.xlu0 %8245
  %8247 = vrot.lane.b32.xlu0 %v7718, 56
  %v8248 = vpop.permute.xlu0 %8247
  %8249 = vrot.lane.b32.xlu0 %v7719, 56
  %v8250 = vpop.permute.xlu0 %8249
  %8251 = vrot.lane.b32.xlu0 %v7720, 56
  %v8252 = vpop.permute.xlu0 %8251
  %8253 = vrot.lane.b32.xlu0 %v7721, 56
  %v8254 = vpop.permute.xlu0 %8253
  %8255 = vrot.lane.b32.xlu0 %v7722, 56
  %v8256 = vpop.permute.xlu0 %8255
  %8257 = vrot.lane.b32.xlu0 %v7723, 56
  %v8258 = vpop.permute.xlu0 %8257
  %8259 = vrot.lane.b32.xlu0 %v7724, 56
  %v8260 = vpop.permute.xlu0 %8259
  %8261 = vrot.lane.b32.xlu0 %v7725, 56
  %v8262 = vpop.permute.xlu0 %8261
  %8263 = vrot.lane.b32.xlu0 %v7726, 56
  %v8264 = vpop.permute.xlu0 %8263
  %8265 = vrot.lane.b32.xlu0 %v7727, 56
  %v8266 = vpop.permute.xlu0 %8265
  %8267 = vrot.lane.b32.xlu0 %v7728, 56
  %v8268 = vpop.permute.xlu0 %8267
  %8269 = vrot.lane.b32.xlu0 %v7729, 56
  %v8270 = vpop.permute.xlu0 %8269
  %8271 = vrot.lane.b32.xlu0 %v7730, 56
  %v8272 = vpop.permute.xlu0 %8271
  %8273 = vrot.lane.b32.xlu0 %v7731, 56
  %v8274 = vpop.permute.xlu0 %8273
  %8275 = vrot.lane.b32.xlu0 %v7732, 56
  %v8276 = vpop.permute.xlu0 %8275
  %8277 = vrot.lane.b32.xlu0 %v7733, 56
  %v8278 = vpop.permute.xlu0 %8277
  %8279 = vrot.lane.b32.xlu0 %v7734, 56
  %v8280 = vpop.permute.xlu0 %8279
  %8281 = vrot.lane.b32.xlu0 %v7735, 56
  %v8282 = vpop.permute.xlu0 %8281
  %8283 = vrot.lane.b32.xlu0 %v7736, 56
  %v8284 = vpop.permute.xlu0 %8283
  %8285 = vrot.lane.b32.xlu0 %v7737, 56
  %v8286 = vpop.permute.xlu0 %8285
  %8287 = vrot.lane.b32.xlu0 %v7738, 56
  %v8288 = vpop.permute.xlu0 %8287
  %8289 = vrot.lane.b32.xlu0 %v7739, 56
  %v8290 = vpop.permute.xlu0 %8289
  %8291 = vrot.lane.b32.xlu0 %v7740, 56
  %v8292 = vpop.permute.xlu0 %8291
  %8293 = vrot.lane.b32.xlu0 %v7741, 56
  %v8294 = vpop.permute.xlu0 %8293
  %8295 = vrot.lane.b32.xlu0 %v7742, 56
  %v8296 = vpop.permute.xlu0 %8295
  %8297 = vrot.lane.b32.xlu0 %v7743, 56
  %v8298 = vpop.permute.xlu0 %8297
  %8299 = vrot.lane.b32.xlu0 %v7744, 56
  %v8300 = vpop.permute.xlu0 %8299
  %8301 = vrot.lane.b32.xlu0 %v7745, 56
  %v8302 = vpop.permute.xlu0 %8301
  %8303 = vrot.lane.b32.xlu0 %v7746, 56
  %v8304 = vpop.permute.xlu0 %8303
  %8305 = vrot.lane.b32.xlu0 %v7747, 56
  %v8306 = vpop.permute.xlu0 %8305
  %8307 = vrot.lane.b32.xlu0 %v7748, 56
  %v8308 = vpop.permute.xlu0 %8307
  %8309 = vrot.lane.b32.xlu0 %v7749, 56
  %v8310 = vpop.permute.xlu0 %8309
  %8311 = vrot.lane.b32.xlu0 %v7750, 56
  %v8312 = vpop.permute.xlu0 %8311
  %8313 = vrot.lane.b32.xlu0 %v7751, 56
  %v8314 = vpop.permute.xlu0 %8313
  %8315 = vrot.lane.b32.xlu0 %v7752, 56
  %v8316 = vpop.permute.xlu0 %8315
  %8317 = vrot.lane.b32.xlu0 %v7753, 56
  %v8318 = vpop.permute.xlu0 %8317
  %8319 = vrot.lane.b32.xlu0 %v7754, 56
  %v8320 = vpop.permute.xlu0 %8319
  %8321 = vrot.lane.b32.xlu0 %v7755, 56
  %v8322 = vpop.permute.xlu0 %8321
  %8323 = vrot.lane.b32.xlu0 %v7756, 56
  %v8324 = vpop.permute.xlu0 %8323
  %8325 = vrot.lane.b32.xlu0 %v7757, 56
  %v8326 = vpop.permute.xlu0 %8325
  %8327 = vrot.lane.b32.xlu0 %v7758, 56
  %v8328 = vpop.permute.xlu0 %8327
  %8329 = vrot.lane.b32.xlu0 %v7759, 56
  %v8330 = vpop.permute.xlu0 %8329
  %8331 = vrot.lane.b32.xlu0 %v7760, 56
  %v8332 = vpop.permute.xlu0 %8331
  %8333 = vrot.lane.b32.xlu0 %v7761, 56
  %v8334 = vpop.permute.xlu0 %8333
  %8335 = vrot.lane.b32.xlu0 %v7762, 56
  %v8336 = vpop.permute.xlu0 %8335
  %8337 = vrot.lane.b32.xlu0 %v7763, 56
  %v8338 = vpop.permute.xlu0 %8337
  %8339 = vrot.lane.b32.xlu0 %v7764, 56
  %v8340 = vpop.permute.xlu0 %8339
  %8341 = vrot.lane.b32.xlu0 %v7765, 56
  %v8342 = vpop.permute.xlu0 %8341
  %8343 = vrot.lane.b32.xlu0 %v7766, 56
  %v8344 = vpop.permute.xlu0 %8343
  %8345 = vrot.lane.b32.xlu0 %v7767, 56
  %v8346 = vpop.permute.xlu0 %8345
  %8347 = vrot.lane.b32.xlu0 %v7768, 56
  %v8348 = vpop.permute.xlu0 %8347
  %8349 = vrot.lane.b32.xlu0 %v7769, 56
  %v8350 = vpop.permute.xlu0 %8349
  %8351 = vrot.lane.b32.xlu0 %v7770, 56
  %v8352 = vpop.permute.xlu0 %8351
  %8353 = vrot.lane.b32.xlu0 %v7771, 56
  %v8354 = vpop.permute.xlu0 %8353
  %8355 = vrot.lane.b32.xlu0 %v7772, 56
  %v8356 = vpop.permute.xlu0 %8355
  %8357 = vrot.lane.b32.xlu0 %v7773, 56
  %v8358 = vpop.permute.xlu0 %8357
  %8359 = vrot.lane.b32.xlu0 %v7774, 56
  %v8360 = vpop.permute.xlu0 %8359
  %8361 = vrot.lane.b32.xlu0 %v7775, 56
  %v8362 = vpop.permute.xlu0 %8361
  %8363 = vrot.lane.b32.xlu0 %v7776, 56
  %v8364 = vpop.permute.xlu0 %8363
  %8365 = vrot.lane.b32.xlu0 %v7777, 56
  %v8366 = vpop.permute.xlu0 %8365
  %8367 = vrot.lane.b32.xlu0 %v7778, 56
  %v8368 = vpop.permute.xlu0 %8367
  %8369 = vrot.lane.b32.xlu0 %v7779, 56
  %v8370 = vpop.permute.xlu0 %8369
  %8371 = vrot.lane.b32.xlu0 %v7780, 56
  %v8372 = vpop.permute.xlu0 %8371
  %8373 = vrot.lane.b32.xlu0 %v7781, 56
  %v8374 = vpop.permute.xlu0 %8373
  %8375 = vrot.lane.b32.xlu0 %v7782, 56
  %v8376 = vpop.permute.xlu0 %8375
  %8377 = vrot.lane.b32.xlu0 %v7783, 56
  %v8378 = vpop.permute.xlu0 %8377
  %8379 = vrot.lane.b32.xlu0 %v7784, 56
  %v8380 = vpop.permute.xlu0 %8379
  %8381 = vrot.lane.b32.xlu0 %v7785, 56
  %v8382 = vpop.permute.xlu0 %8381
  %8383 = vrot.lane.b32.xlu0 %v7786, 56
  %v8384 = vpop.permute.xlu0 %8383
  %8385 = vrot.lane.b32.xlu0 %v7787, 56
  %v8386 = vpop.permute.xlu0 %8385
  %8387 = vrot.lane.b32.xlu0 %v7788, 56
  %v8388 = vpop.permute.xlu0 %8387
  %8389 = vrot.lane.b32.xlu0 %v7789, 56
  %v8390 = vpop.permute.xlu0 %8389
  %8391 = vrot.lane.b32.xlu0 %v7790, 56
  %v8392 = vpop.permute.xlu0 %8391
  %8393 = vrot.lane.b32.xlu0 %v7791, 56
  %v8394 = vpop.permute.xlu0 %8393
  %8395 = vrot.lane.b32.xlu0 %v7792, 56
  %v8396 = vpop.permute.xlu0 %8395
  %8397 = vrot.lane.b32.xlu0 %v7793, 56
  %v8398 = vpop.permute.xlu0 %8397
  %8399 = vrot.lane.b32.xlu0 %v7794, 56
  %v8400 = vpop.permute.xlu0 %8399
  %8401 = vrot.lane.b32.xlu0 %v7795, 56
  %v8402 = vpop.permute.xlu0 %8401
  %8403 = vrot.lane.b32.xlu0 %v7796, 56
  %v8404 = vpop.permute.xlu0 %8403
  %8405 = vrot.lane.b32.xlu0 %v7797, 56
  %v8406 = vpop.permute.xlu0 %8405
  %8407 = vrot.lane.b32.xlu0 %v7798, 56
  %v8408 = vpop.permute.xlu0 %8407
  %8409 = vrot.lane.b32.xlu0 %v7799, 56
  %v8410 = vpop.permute.xlu0 %8409
  %8411 = vrot.lane.b32.xlu0 %v7800, 56
  %v8412 = vpop.permute.xlu0 %8411
  %8413 = vrot.lane.b32.xlu0 %v7801, 56
  %v8414 = vpop.permute.xlu0 %8413
  %8415 = vrot.lane.b32.xlu0 %v7802, 56
  %v8416 = vpop.permute.xlu0 %8415
  %8417 = vrot.lane.b32.xlu0 %v7803, 56
  %v8418 = vpop.permute.xlu0 %8417
  %8419 = vrot.lane.b32.xlu0 %v7804, 56
  %v8420 = vpop.permute.xlu0 %8419
  %8421 = vrot.lane.b32.xlu0 %v7805, 56
  %v8422 = vpop.permute.xlu0 %8421
  %8423 = vrot.lane.b32.xlu0 %v7806, 56
  %v8424 = vpop.permute.xlu0 %8423
  %8425 = vrot.lane.b32.xlu0 %v7807, 56
  %v8426 = vpop.permute.xlu0 %8425
  %8427 = vrot.lane.b32.xlu0 %v7808, 56
  %v8428 = vpop.permute.xlu0 %8427
  %8429 = vrot.lane.b32.xlu0 %v7809, 56
  %v8430 = vpop.permute.xlu0 %8429
  %8431 = vrot.lane.b32.xlu0 %v7810, 56
  %v8432 = vpop.permute.xlu0 %8431
  %8433 = vrot.lane.b32.xlu0 %v7811, 56
  %v8434 = vpop.permute.xlu0 %8433
  %8435 = vrot.lane.b32.xlu0 %v7812, 56
  %v8436 = vpop.permute.xlu0 %8435
  %vm8437 = vcmask 457728
  %v8438 = vsel %vm8437, %v8022, %v8024
  %v8439 = vsel %vm8437, %v8024, %v8026
  %v8440 = vsel %vm8437, %v8026, %v8028
  %v8441 = vsel %vm8437, %v8028, %v8030
  %v8442 = vsel %vm8437, %v8030, %v8032
  %v8443 = vsel %vm8437, %v8032, %v8034
  %v8444 = vsel %vm8437, %v8034, %v8036
  %v8445 = vsel %vm8437, %v8036, %v8038
  %v8446 = vsel %vm8437, %v8038, %v8040
  %v8447 = vsel %vm8437, %v8040, %v8042
  %v8448 = vsel %vm8437, %v8042, %v8044
  %v8449 = vsel %vm8437, %v8044, %v8046
  %v8450 = vsel %vm8437, %v8046, %v8048
  %v8451 = vsel %vm8437, %v8048, %v8050
  %v8452 = vsel %vm8437, %v8050, %v8052
  %v8453 = vsel %vm8437, %v8052, %v8054
  %v8454 = vsel %vm8437, %v8054, %v8056
  %v8455 = vsel %vm8437, %v8056, %v8058
  %v8456 = vsel %vm8437, %v8058, %v8060
  %v8457 = vsel %vm8437, %v8060, %v8062
  %v8458 = vsel %vm8437, %v8062, %v8064
  %v8459 = vsel %vm8437, %v8064, %v8066
  %v8460 = vsel %vm8437, %v8066, %v8068
  %v8461 = vsel %vm8437, %v8068, %v8070
  %v8462 = vsel %vm8437, %v8070, %v8072
  %v8463 = vsel %vm8437, %v8074, %v8076
  %v8464 = vsel %vm8437, %v8076, %v8078
  %v8465 = vsel %vm8437, %v8078, %v8080
  %v8466 = vsel %vm8437, %v8080, %v8082
  %v8467 = vsel %vm8437, %v8082, %v8084
  %v8468 = vsel %vm8437, %v8084, %v8086
  %v8469 = vsel %vm8437, %v8086, %v8088
  %v8470 = vsel %vm8437, %v8088, %v8090
  %v8471 = vsel %vm8437, %v8090, %v8092
  %v8472 = vsel %vm8437, %v8092, %v8094
  %v8473 = vsel %vm8437, %v8094, %v8096
  %v8474 = vsel %vm8437, %v8096, %v8098
  %v8475 = vsel %vm8437, %v8098, %v8100
  %v8476 = vsel %vm8437, %v8100, %v8102
  %v8477 = vsel %vm8437, %v8102, %v8104
  %v8478 = vsel %vm8437, %v8104, %v8106
  %v8479 = vsel %vm8437, %v8106, %v8108
  %v8480 = vsel %vm8437, %v8108, %v8110
  %v8481 = vsel %vm8437, %v8110, %v8112
  %v8482 = vsel %vm8437, %v8112, %v8114
  %v8483 = vsel %vm8437, %v8114, %v8116
  %v8484 = vsel %vm8437, %v8116, %v8118
  %v8485 = vsel %vm8437, %v8118, %v8120
  %v8486 = vsel %vm8437, %v8120, %v8122
  %v8487 = vsel %vm8437, %v8122, %v8124
  %v8488 = vsel %vm8437, %v8126, %v8128
  %v8489 = vsel %vm8437, %v8128, %v8130
  %v8490 = vsel %vm8437, %v8130, %v8132
  %v8491 = vsel %vm8437, %v8132, %v8134
  %v8492 = vsel %vm8437, %v8134, %v8136
  %v8493 = vsel %vm8437, %v8136, %v8138
  %v8494 = vsel %vm8437, %v8138, %v8140
  %v8495 = vsel %vm8437, %v8140, %v8142
  %v8496 = vsel %vm8437, %v8142, %v8144
  %v8497 = vsel %vm8437, %v8144, %v8146
  %v8498 = vsel %vm8437, %v8146, %v8148
  %v8499 = vsel %vm8437, %v8148, %v8150
  %v8500 = vsel %vm8437, %v8150, %v8152
  %v8501 = vsel %vm8437, %v8152, %v8154
  %v8502 = vsel %vm8437, %v8154, %v8156
  %v8503 = vsel %vm8437, %v8156, %v8158
  %v8504 = vsel %vm8437, %v8158, %v8160
  %v8505 = vsel %vm8437, %v8160, %v8162
  %v8506 = vsel %vm8437, %v8162, %v8164
  %v8507 = vsel %vm8437, %v8164, %v8166
  %v8508 = vsel %vm8437, %v8166, %v8168
  %v8509 = vsel %vm8437, %v8168, %v8170
  %v8510 = vsel %vm8437, %v8170, %v8172
  %v8511 = vsel %vm8437, %v8172, %v8174
  %v8512 = vsel %vm8437, %v8174, %v8176
  %v8513 = vsel %vm8437, %v8178, %v8180
  %v8514 = vsel %vm8437, %v8180, %v8182
  %v8515 = vsel %vm8437, %v8182, %v8184
  %v8516 = vsel %vm8437, %v8184, %v8186
  %v8517 = vsel %vm8437, %v8186, %v8188
  %v8518 = vsel %vm8437, %v8188, %v8190
  %v8519 = vsel %vm8437, %v8190, %v8192
  %v8520 = vsel %vm8437, %v8192, %v8194
  %v8521 = vsel %vm8437, %v8194, %v8196
  %v8522 = vsel %vm8437, %v8196, %v8198
  %v8523 = vsel %vm8437, %v8198, %v8200
  %v8524 = vsel %vm8437, %v8200, %v8202
  %v8525 = vsel %vm8437, %v8202, %v8204
  %v8526 = vsel %vm8437, %v8204, %v8206
  %v8527 = vsel %vm8437, %v8206, %v8208
  %v8528 = vsel %vm8437, %v8208, %v8210
  %v8529 = vsel %vm8437, %v8210, %v8212
  %v8530 = vsel %vm8437, %v8212, %v8214
  %v8531 = vsel %vm8437, %v8214, %v8216
  %v8532 = vsel %vm8437, %v8216, %v8218
  %v8533 = vsel %vm8437, %v8218, %v8220
  %v8534 = vsel %vm8437, %v8220, %v8222
  %v8535 = vsel %vm8437, %v8222, %v8224
  %v8536 = vsel %vm8437, %v8224, %v8226
  %v8537 = vsel %vm8437, %v8226, %v8228
  %v8538 = vsel %vm8437, %v8230, %v8232
  %v8539 = vsel %vm8437, %v8232, %v8234
  %v8540 = vsel %vm8437, %v8234, %v8236
  %v8541 = vsel %vm8437, %v8236, %v8238
  %v8542 = vsel %vm8437, %v8238, %v8240
  %v8543 = vsel %vm8437, %v8240, %v8242
  %v8544 = vsel %vm8437, %v8242, %v8244
  %v8545 = vsel %vm8437, %v8244, %v8246
  %v8546 = vsel %vm8437, %v8246, %v8248
  %v8547 = vsel %vm8437, %v8248, %v8250
  %v8548 = vsel %vm8437, %v8250, %v8252
  %v8549 = vsel %vm8437, %v8252, %v8254
  %v8550 = vsel %vm8437, %v8254, %v8256
  %v8551 = vsel %vm8437, %v8256, %v8258
  %v8552 = vsel %vm8437, %v8258, %v8260
  %v8553 = vsel %vm8437, %v8260, %v8262
  %v8554 = vsel %vm8437, %v8262, %v8264
  %v8555 = vsel %vm8437, %v8264, %v8266
  %v8556 = vsel %vm8437, %v8266, %v8268
  %v8557 = vsel %vm8437, %v8268, %v8270
  %v8558 = vsel %vm8437, %v8270, %v8272
  %v8559 = vsel %vm8437, %v8272, %v8274
  %v8560 = vsel %vm8437, %v8274, %v8276
  %v8561 = vsel %vm8437, %v8276, %v8278
  %v8562 = vsel %vm8437, %v8278, %v8280
  %v8563 = vsel %vm8437, %v8282, %v8284
  %v8564 = vsel %vm8437, %v8284, %v8286
  %v8565 = vsel %vm8437, %v8286, %v8288
  %v8566 = vsel %vm8437, %v8288, %v8290
  %v8567 = vsel %vm8437, %v8290, %v8292
  %v8568 = vsel %vm8437, %v8292, %v8294
  %v8569 = vsel %vm8437, %v8294, %v8296
  %v8570 = vsel %vm8437, %v8296, %v8298
  %v8571 = vsel %vm8437, %v8298, %v8300
  %v8572 = vsel %vm8437, %v8300, %v8302
  %v8573 = vsel %vm8437, %v8302, %v8304
  %v8574 = vsel %vm8437, %v8304, %v8306
  %v8575 = vsel %vm8437, %v8306, %v8308
  %v8576 = vsel %vm8437, %v8308, %v8310
  %v8577 = vsel %vm8437, %v8310, %v8312
  %v8578 = vsel %vm8437, %v8312, %v8314
  %v8579 = vsel %vm8437, %v8314, %v8316
  %v8580 = vsel %vm8437, %v8316, %v8318
  %v8581 = vsel %vm8437, %v8318, %v8320
  %v8582 = vsel %vm8437, %v8320, %v8322
  %v8583 = vsel %vm8437, %v8322, %v8324
  %v8584 = vsel %vm8437, %v8324, %v8326
  %v8585 = vsel %vm8437, %v8326, %v8328
  %v8586 = vsel %vm8437, %v8328, %v8330
  %v8587 = vsel %vm8437, %v8330, %v8332
  %v8588 = vsel %vm8437, %v8334, %v8336
  %v8589 = vsel %vm8437, %v8336, %v8338
  %v8590 = vsel %vm8437, %v8338, %v8340
  %v8591 = vsel %vm8437, %v8340, %v8342
  %v8592 = vsel %vm8437, %v8342, %v8344
  %v8593 = vsel %vm8437, %v8344, %v8346
  %v8594 = vsel %vm8437, %v8346, %v8348
  %v8595 = vsel %vm8437, %v8348, %v8350
  %v8596 = vsel %vm8437, %v8350, %v8352
  %v8597 = vsel %vm8437, %v8352, %v8354
  %v8598 = vsel %vm8437, %v8354, %v8356
  %v8599 = vsel %vm8437, %v8356, %v8358
  %v8600 = vsel %vm8437, %v8358, %v8360
  %v8601 = vsel %vm8437, %v8360, %v8362
  %v8602 = vsel %vm8437, %v8362, %v8364
  %v8603 = vsel %vm8437, %v8364, %v8366
  %v8604 = vsel %vm8437, %v8366, %v8368
  %v8605 = vsel %vm8437, %v8368, %v8370
  %v8606 = vsel %vm8437, %v8370, %v8372
  %v8607 = vsel %vm8437, %v8372, %v8374
  %v8608 = vsel %vm8437, %v8374, %v8376
  %v8609 = vsel %vm8437, %v8376, %v8378
  %v8610 = vsel %vm8437, %v8378, %v8380
  %v8611 = vsel %vm8437, %v8380, %v8382
  %v8612 = vsel %vm8437, %v8382, %v8384
  %v8613 = vsel %vm8437, %v8386, %v8388
  %v8614 = vsel %vm8437, %v8388, %v8390
  %v8615 = vsel %vm8437, %v8390, %v8392
  %v8616 = vsel %vm8437, %v8392, %v8394
  %v8617 = vsel %vm8437, %v8394, %v8396
  %v8618 = vsel %vm8437, %v8396, %v8398
  %v8619 = vsel %vm8437, %v8398, %v8400
  %v8620 = vsel %vm8437, %v8400, %v8402
  %v8621 = vsel %vm8437, %v8402, %v8404
  %v8622 = vsel %vm8437, %v8404, %v8406
  %v8623 = vsel %vm8437, %v8406, %v8408
  %v8624 = vsel %vm8437, %v8408, %v8410
  %v8625 = vsel %vm8437, %v8410, %v8412
  %v8626 = vsel %vm8437, %v8412, %v8414
  %v8627 = vsel %vm8437, %v8414, %v8416
  %v8628 = vsel %vm8437, %v8416, %v8418
  %v8629 = vsel %vm8437, %v8418, %v8420
  %v8630 = vsel %vm8437, %v8420, %v8422
  %v8631 = vsel %vm8437, %v8422, %v8424
  %v8632 = vsel %vm8437, %v8424, %v8426
  %v8633 = vsel %vm8437, %v8426, %v8428
  %v8634 = vsel %vm8437, %v8428, %v8430
  %v8635 = vsel %vm8437, %v8430, %v8432
  %v8636 = vsel %vm8437, %v8432, %v8434
  %v8637 = vsel %vm8437, %v8434, %v8436
  %v8838 = vadd.f32 %v7373, %v8438
  %v8839 = vadd.f32 %v7374, %v8439
  %v8840 = vadd.f32 %v7375, %v8440
  %v8841 = vadd.f32 %v7376, %v8441
  %v8842 = vadd.f32 %v7377, %v8442
  %v8843 = vadd.f32 %v7378, %v8443
  %v8844 = vadd.f32 %v7379, %v8444
  %v8845 = vadd.f32 %v7380, %v8445
  %v8846 = vadd.f32 %v7381, %v8446
  %v8847 = vadd.f32 %v7382, %v8447
  %v8848 = vadd.f32 %v7383, %v8448
  %v8849 = vadd.f32 %v7384, %v8449
  %v8850 = vadd.f32 %v7385, %v8450
  %v8851 = vadd.f32 %v7386, %v8451
  %v8852 = vadd.f32 %v7387, %v8452
  %v8853 = vadd.f32 %v7388, %v8453
  %v8854 = vadd.f32 %v7389, %v8454
  %v8855 = vadd.f32 %v7390, %v8455
  %v8856 = vadd.f32 %v7391, %v8456
  %v8857 = vadd.f32 %v7392, %v8457
  %v8858 = vadd.f32 %v7393, %v8458
  %v8859 = vadd.f32 %v7394, %v8459
  %v8860 = vadd.f32 %v7395, %v8460
  %v8861 = vadd.f32 %v7396, %v8461
  %v8862 = vadd.f32 %v7397, %v8462
  %v8863 = vadd.f32 %v7398, %v8463
  %v8864 = vadd.f32 %v7399, %v8464
  %v8865 = vadd.f32 %v7400, %v8465
  %v8866 = vadd.f32 %v7401, %v8466
  %v8867 = vadd.f32 %v7402, %v8467
  %v8868 = vadd.f32 %v7403, %v8468
  %v8869 = vadd.f32 %v7404, %v8469
  %v8870 = vadd.f32 %v7405, %v8470
  %v8871 = vadd.f32 %v7406, %v8471
  %v8872 = vadd.f32 %v7407, %v8472
  %v8873 = vadd.f32 %v7408, %v8473
  %v8874 = vadd.f32 %v7409, %v8474
  %v8875 = vadd.f32 %v7410, %v8475
  %v8876 = vadd.f32 %v7411, %v8476
  %v8877 = vadd.f32 %v7412, %v8477
  %v8878 = vadd.f32 %v7413, %v8478
  %v8879 = vadd.f32 %v7414, %v8479
  %v8880 = vadd.f32 %v7415, %v8480
  %v8881 = vadd.f32 %v7416, %v8481
  %v8882 = vadd.f32 %v7417, %v8482
  %v8883 = vadd.f32 %v7418, %v8483
  %v8884 = vadd.f32 %v7419, %v8484
  %v8885 = vadd.f32 %v7420, %v8485
  %v8886 = vadd.f32 %v7421, %v8486
  %v8887 = vadd.f32 %v7422, %v8487
  %v8888 = vadd.f32 %v7423, %v8488
  %v8889 = vadd.f32 %v7424, %v8489
  %v8890 = vadd.f32 %v7425, %v8490
  %v8891 = vadd.f32 %v7426, %v8491
  %v8892 = vadd.f32 %v7427, %v8492
  %v8893 = vadd.f32 %v7428, %v8493
  %v8894 = vadd.f32 %v7429, %v8494
  %v8895 = vadd.f32 %v7430, %v8495
  %v8896 = vadd.f32 %v7431, %v8496
  %v8897 = vadd.f32 %v7432, %v8497
  %v8898 = vadd.f32 %v7433, %v8498
  %v8899 = vadd.f32 %v7434, %v8499
  %v8900 = vadd.f32 %v7435, %v8500
  %v8901 = vadd.f32 %v7436, %v8501
  %v8902 = vadd.f32 %v7437, %v8502
  %v8903 = vadd.f32 %v7438, %v8503
  %v8904 = vadd.f32 %v7439, %v8504
  %v8905 = vadd.f32 %v7440, %v8505
  %v8906 = vadd.f32 %v7441, %v8506
  %v8907 = vadd.f32 %v7442, %v8507
  %v8908 = vadd.f32 %v7443, %v8508
  %v8909 = vadd.f32 %v7444, %v8509
  %v8910 = vadd.f32 %v7445, %v8510
  %v8911 = vadd.f32 %v7446, %v8511
  %v8912 = vadd.f32 %v7447, %v8512
  %v8913 = vadd.f32 %v7448, %v8513
  %v8914 = vadd.f32 %v7449, %v8514
  %v8915 = vadd.f32 %v7450, %v8515
  %v8916 = vadd.f32 %v7451, %v8516
  %v8917 = vadd.f32 %v7452, %v8517
  %v8918 = vadd.f32 %v7453, %v8518
  %v8919 = vadd.f32 %v7454, %v8519
  %v8920 = vadd.f32 %v7455, %v8520
  %v8921 = vadd.f32 %v7456, %v8521
  %v8922 = vadd.f32 %v7457, %v8522
  %v8923 = vadd.f32 %v7458, %v8523
  %v8924 = vadd.f32 %v7459, %v8524
  %v8925 = vadd.f32 %v7460, %v8525
  %v8926 = vadd.f32 %v7461, %v8526
  %v8927 = vadd.f32 %v7462, %v8527
  %v8928 = vadd.f32 %v7463, %v8528
  %v8929 = vadd.f32 %v7464, %v8529
  %v8930 = vadd.f32 %v7465, %v8530
  %v8931 = vadd.f32 %v7466, %v8531
  %v8932 = vadd.f32 %v7467, %v8532
  %v8933 = vadd.f32 %v7468, %v8533
  %v8934 = vadd.f32 %v7469, %v8534
  %v8935 = vadd.f32 %v7470, %v8535
  %v8936 = vadd.f32 %v7471, %v8536
  %v8937 = vadd.f32 %v7472, %v8537
  %v8938 = vadd.f32 %v7473, %v8538
  %v8939 = vadd.f32 %v7474, %v8539
  %v8940 = vadd.f32 %v7475, %v8540
  %v8941 = vadd.f32 %v7476, %v8541
  %v8942 = vadd.f32 %v7477, %v8542
  %v8943 = vadd.f32 %v7478, %v8543
  %v8944 = vadd.f32 %v7479, %v8544
  %v8945 = vadd.f32 %v7480, %v8545
  %v8946 = vadd.f32 %v7481, %v8546
  %v8947 = vadd.f32 %v7482, %v8547
  %v8948 = vadd.f32 %v7483, %v8548
  %v8949 = vadd.f32 %v7484, %v8549
  %v8950 = vadd.f32 %v7485, %v8550
  %v8951 = vadd.f32 %v7486, %v8551
  %v8952 = vadd.f32 %v7487, %v8552
  %v8953 = vadd.f32 %v7488, %v8553
  %v8954 = vadd.f32 %v7489, %v8554
  %v8955 = vadd.f32 %v7490, %v8555
  %v8956 = vadd.f32 %v7491, %v8556
  %v8957 = vadd.f32 %v7492, %v8557
  %v8958 = vadd.f32 %v7493, %v8558
  %v8959 = vadd.f32 %v7494, %v8559
  %v8960 = vadd.f32 %v7495, %v8560
  %v8961 = vadd.f32 %v7496, %v8561
  %v8962 = vadd.f32 %v7497, %v8562
  %v8963 = vadd.f32 %v7498, %v8563
  %v8964 = vadd.f32 %v7499, %v8564
  %v8965 = vadd.f32 %v7500, %v8565
  %v8966 = vadd.f32 %v7501, %v8566
  %v8967 = vadd.f32 %v7502, %v8567
  %v8968 = vadd.f32 %v7503, %v8568
  %v8969 = vadd.f32 %v7504, %v8569
  %v8970 = vadd.f32 %v7505, %v8570
  %v8971 = vadd.f32 %v7506, %v8571
  %v8972 = vadd.f32 %v7507, %v8572
  %v8973 = vadd.f32 %v7508, %v8573
  %v8974 = vadd.f32 %v7509, %v8574
  %v8975 = vadd.f32 %v7510, %v8575
  %v8976 = vadd.f32 %v7511, %v8576
  %v8977 = vadd.f32 %v7512, %v8577
  %v8978 = vadd.f32 %v7513, %v8578
  %v8979 = vadd.f32 %v7514, %v8579
  %v8980 = vadd.f32 %v7515, %v8580
  %v8981 = vadd.f32 %v7516, %v8581
  %v8982 = vadd.f32 %v7517, %v8582
  %v8983 = vadd.f32 %v7518, %v8583
  %v8984 = vadd.f32 %v7519, %v8584
  %v8985 = vadd.f32 %v7520, %v8585
  %v8986 = vadd.f32 %v7521, %v8586
  %v8987 = vadd.f32 %v7522, %v8587
  %v8988 = vadd.f32 %v7523, %v8588
  %v8989 = vadd.f32 %v7524, %v8589
  %v8990 = vadd.f32 %v7525, %v8590
  %v8991 = vadd.f32 %v7526, %v8591
  %v8992 = vadd.f32 %v7527, %v8592
  %v8993 = vadd.f32 %v7528, %v8593
  %v8994 = vadd.f32 %v7529, %v8594
  %v8995 = vadd.f32 %v7530, %v8595
  %v8996 = vadd.f32 %v7531, %v8596
  %v8997 = vadd.f32 %v7532, %v8597
  %v8998 = vadd.f32 %v7533, %v8598
  %v8999 = vadd.f32 %v7534, %v8599
  %v9000 = vadd.f32 %v7535, %v8600
  %v9001 = vadd.f32 %v7536, %v8601
  %v9002 = vadd.f32 %v7537, %v8602
  %v9003 = vadd.f32 %v7538, %v8603
  %v9004 = vadd.f32 %v7539, %v8604
  %v9005 = vadd.f32 %v7540, %v8605
  %v9006 = vadd.f32 %v7541, %v8606
  %v9007 = vadd.f32 %v7542, %v8607
  %v9008 = vadd.f32 %v7543, %v8608
  %v9009 = vadd.f32 %v7544, %v8609
  %v9010 = vadd.f32 %v7545, %v8610
  %v9011 = vadd.f32 %v7546, %v8611
  %v9012 = vadd.f32 %v7547, %v8612
  %v9013 = vadd.f32 %v7548, %v8613
  %v9014 = vadd.f32 %v7549, %v8614
  %v9015 = vadd.f32 %v7550, %v8615
  %v9016 = vadd.f32 %v7551, %v8616
  %v9017 = vadd.f32 %v7552, %v8617
  %v9018 = vadd.f32 %v7553, %v8618
  %v9019 = vadd.f32 %v7554, %v8619
  %v9020 = vadd.f32 %v7555, %v8620
  %v9021 = vadd.f32 %v7556, %v8621
  %v9022 = vadd.f32 %v7557, %v8622
  %v9023 = vadd.f32 %v7558, %v8623
  %v9024 = vadd.f32 %v7559, %v8624
  %v9025 = vadd.f32 %v7560, %v8625
  %v9026 = vadd.f32 %v7561, %v8626
  %v9027 = vadd.f32 %v7562, %v8627
  %v9028 = vadd.f32 %v7563, %v8628
  %v9029 = vadd.f32 %v7564, %v8629
  %v9030 = vadd.f32 %v7565, %v8630
  %v9031 = vadd.f32 %v7566, %v8631
  %v9032 = vadd.f32 %v7567, %v8632
  %v9033 = vadd.f32 %v7568, %v8633
  %v9034 = vadd.f32 %v7569, %v8634
  %v9035 = vadd.f32 %v7570, %v8635
  %v9036 = vadd.f32 %v7571, %v8636
  %v9037 = vadd.f32 %v7572, %v8637
  %9238 = vrot.lane.b32.xlu0 %v8838, 120
  %v9239 = vpop.permute.xlu0 %9238
  %9240 = vrot.lane.b32.xlu0 %v8839, 120
  %v9241 = vpop.permute.xlu0 %9240
  %9242 = vrot.lane.b32.xlu0 %v8840, 120
  %v9243 = vpop.permute.xlu0 %9242
  %9244 = vrot.lane.b32.xlu0 %v8841, 120
  %v9245 = vpop.permute.xlu0 %9244
  %9246 = vrot.lane.b32.xlu0 %v8842, 120
  %v9247 = vpop.permute.xlu0 %9246
  %9248 = vrot.lane.b32.xlu0 %v8843, 120
  %v9249 = vpop.permute.xlu0 %9248
  %9250 = vrot.lane.b32.xlu0 %v8844, 120
  %v9251 = vpop.permute.xlu0 %9250
  %9252 = vrot.lane.b32.xlu0 %v8845, 120
  %v9253 = vpop.permute.xlu0 %9252
  %9254 = vrot.lane.b32.xlu0 %v8846, 120
  %v9255 = vpop.permute.xlu0 %9254
  %9256 = vrot.lane.b32.xlu0 %v8847, 120
  %v9257 = vpop.permute.xlu0 %9256
  %9258 = vrot.lane.b32.xlu0 %v8848, 120
  %v9259 = vpop.permute.xlu0 %9258
  %9260 = vrot.lane.b32.xlu0 %v8849, 120
  %v9261 = vpop.permute.xlu0 %9260
  %9262 = vrot.lane.b32.xlu0 %v8850, 120
  %v9263 = vpop.permute.xlu0 %9262
  %9264 = vrot.lane.b32.xlu0 %v8851, 120
  %v9265 = vpop.permute.xlu0 %9264
  %9266 = vrot.lane.b32.xlu0 %v8852, 120
  %v9267 = vpop.permute.xlu0 %9266
  %9268 = vrot.lane.b32.xlu0 %v8853, 120
  %v9269 = vpop.permute.xlu0 %9268
  %9270 = vrot.lane.b32.xlu0 %v8854, 120
  %v9271 = vpop.permute.xlu0 %9270
  %9272 = vrot.lane.b32.xlu0 %v8855, 120
  %v9273 = vpop.permute.xlu0 %9272
  %9274 = vrot.lane.b32.xlu0 %v8856, 120
  %v9275 = vpop.permute.xlu0 %9274
  %9276 = vrot.lane.b32.xlu0 %v8857, 120
  %v9277 = vpop.permute.xlu0 %9276
  %9278 = vrot.lane.b32.xlu0 %v8858, 120
  %v9279 = vpop.permute.xlu0 %9278
  %9280 = vrot.lane.b32.xlu0 %v8859, 120
  %v9281 = vpop.permute.xlu0 %9280
  %9282 = vrot.lane.b32.xlu0 %v8860, 120
  %v9283 = vpop.permute.xlu0 %9282
  %9284 = vrot.lane.b32.xlu0 %v8861, 120
  %v9285 = vpop.permute.xlu0 %9284
  %9286 = vrot.lane.b32.xlu0 %v8862, 120
  %v9287 = vpop.permute.xlu0 %9286
  %9288 = vrot.lane.b32.xlu0 %v8863, 120
  %v9289 = vpop.permute.xlu0 %9288
  %9290 = vrot.lane.b32.xlu0 %v8864, 120
  %v9291 = vpop.permute.xlu0 %9290
  %9292 = vrot.lane.b32.xlu0 %v8865, 120
  %v9293 = vpop.permute.xlu0 %9292
  %9294 = vrot.lane.b32.xlu0 %v8866, 120
  %v9295 = vpop.permute.xlu0 %9294
  %9296 = vrot.lane.b32.xlu0 %v8867, 120
  %v9297 = vpop.permute.xlu0 %9296
  %9298 = vrot.lane.b32.xlu0 %v8868, 120
  %v9299 = vpop.permute.xlu0 %9298
  %9300 = vrot.lane.b32.xlu0 %v8869, 120
  %v9301 = vpop.permute.xlu0 %9300
  %9302 = vrot.lane.b32.xlu0 %v8870, 120
  %v9303 = vpop.permute.xlu0 %9302
  %9304 = vrot.lane.b32.xlu0 %v8871, 120
  %v9305 = vpop.permute.xlu0 %9304
  %9306 = vrot.lane.b32.xlu0 %v8872, 120
  %v9307 = vpop.permute.xlu0 %9306
  %9308 = vrot.lane.b32.xlu0 %v8873, 120
  %v9309 = vpop.permute.xlu0 %9308
  %9310 = vrot.lane.b32.xlu0 %v8874, 120
  %v9311 = vpop.permute.xlu0 %9310
  %9312 = vrot.lane.b32.xlu0 %v8875, 120
  %v9313 = vpop.permute.xlu0 %9312
  %9314 = vrot.lane.b32.xlu0 %v8876, 120
  %v9315 = vpop.permute.xlu0 %9314
  %9316 = vrot.lane.b32.xlu0 %v8877, 120
  %v9317 = vpop.permute.xlu0 %9316
  %9318 = vrot.lane.b32.xlu0 %v8878, 120
  %v9319 = vpop.permute.xlu0 %9318
  %9320 = vrot.lane.b32.xlu0 %v8879, 120
  %v9321 = vpop.permute.xlu0 %9320
  %9322 = vrot.lane.b32.xlu0 %v8880, 120
  %v9323 = vpop.permute.xlu0 %9322
  %9324 = vrot.lane.b32.xlu0 %v8881, 120
  %v9325 = vpop.permute.xlu0 %9324
  %9326 = vrot.lane.b32.xlu0 %v8882, 120
  %v9327 = vpop.permute.xlu0 %9326
  %9328 = vrot.lane.b32.xlu0 %v8883, 120
  %v9329 = vpop.permute.xlu0 %9328
  %9330 = vrot.lane.b32.xlu0 %v8884, 120
  %v9331 = vpop.permute.xlu0 %9330
  %9332 = vrot.lane.b32.xlu0 %v8885, 120
  %v9333 = vpop.permute.xlu0 %9332
  %9334 = vrot.lane.b32.xlu0 %v8886, 120
  %v9335 = vpop.permute.xlu0 %9334
  %9336 = vrot.lane.b32.xlu0 %v8887, 120
  %v9337 = vpop.permute.xlu0 %9336
  %9338 = vrot.lane.b32.xlu0 %v8888, 120
  %v9339 = vpop.permute.xlu0 %9338
  %9340 = vrot.lane.b32.xlu0 %v8889, 120
  %v9341 = vpop.permute.xlu0 %9340
  %9342 = vrot.lane.b32.xlu0 %v8890, 120
  %v9343 = vpop.permute.xlu0 %9342
  %9344 = vrot.lane.b32.xlu0 %v8891, 120
  %v9345 = vpop.permute.xlu0 %9344
  %9346 = vrot.lane.b32.xlu0 %v8892, 120
  %v9347 = vpop.permute.xlu0 %9346
  %9348 = vrot.lane.b32.xlu0 %v8893, 120
  %v9349 = vpop.permute.xlu0 %9348
  %9350 = vrot.lane.b32.xlu0 %v8894, 120
  %v9351 = vpop.permute.xlu0 %9350
  %9352 = vrot.lane.b32.xlu0 %v8895, 120
  %v9353 = vpop.permute.xlu0 %9352
  %9354 = vrot.lane.b32.xlu0 %v8896, 120
  %v9355 = vpop.permute.xlu0 %9354
  %9356 = vrot.lane.b32.xlu0 %v8897, 120
  %v9357 = vpop.permute.xlu0 %9356
  %9358 = vrot.lane.b32.xlu0 %v8898, 120
  %v9359 = vpop.permute.xlu0 %9358
  %9360 = vrot.lane.b32.xlu0 %v8899, 120
  %v9361 = vpop.permute.xlu0 %9360
  %9362 = vrot.lane.b32.xlu0 %v8900, 120
  %v9363 = vpop.permute.xlu0 %9362
  %9364 = vrot.lane.b32.xlu0 %v8901, 120
  %v9365 = vpop.permute.xlu0 %9364
  %9366 = vrot.lane.b32.xlu0 %v8902, 120
  %v9367 = vpop.permute.xlu0 %9366
  %9368 = vrot.lane.b32.xlu0 %v8903, 120
  %v9369 = vpop.permute.xlu0 %9368
  %9370 = vrot.lane.b32.xlu0 %v8904, 120
  %v9371 = vpop.permute.xlu0 %9370
  %9372 = vrot.lane.b32.xlu0 %v8905, 120
  %v9373 = vpop.permute.xlu0 %9372
  %9374 = vrot.lane.b32.xlu0 %v8906, 120
  %v9375 = vpop.permute.xlu0 %9374
  %9376 = vrot.lane.b32.xlu0 %v8907, 120
  %v9377 = vpop.permute.xlu0 %9376
  %9378 = vrot.lane.b32.xlu0 %v8908, 120
  %v9379 = vpop.permute.xlu0 %9378
  %9380 = vrot.lane.b32.xlu0 %v8909, 120
  %v9381 = vpop.permute.xlu0 %9380
  %9382 = vrot.lane.b32.xlu0 %v8910, 120
  %v9383 = vpop.permute.xlu0 %9382
  %9384 = vrot.lane.b32.xlu0 %v8911, 120
  %v9385 = vpop.permute.xlu0 %9384
  %9386 = vrot.lane.b32.xlu0 %v8912, 120
  %v9387 = vpop.permute.xlu0 %9386
  %9388 = vrot.lane.b32.xlu0 %v8913, 120
  %v9389 = vpop.permute.xlu0 %9388
  %9390 = vrot.lane.b32.xlu0 %v8914, 120
  %v9391 = vpop.permute.xlu0 %9390
  %9392 = vrot.lane.b32.xlu0 %v8915, 120
  %v9393 = vpop.permute.xlu0 %9392
  %9394 = vrot.lane.b32.xlu0 %v8916, 120
  %v9395 = vpop.permute.xlu0 %9394
  %9396 = vrot.lane.b32.xlu0 %v8917, 120
  %v9397 = vpop.permute.xlu0 %9396
  %9398 = vrot.lane.b32.xlu0 %v8918, 120
  %v9399 = vpop.permute.xlu0 %9398
  %9400 = vrot.lane.b32.xlu0 %v8919, 120
  %v9401 = vpop.permute.xlu0 %9400
  %9402 = vrot.lane.b32.xlu0 %v8920, 120
  %v9403 = vpop.permute.xlu0 %9402
  %9404 = vrot.lane.b32.xlu0 %v8921, 120
  %v9405 = vpop.permute.xlu0 %9404
  %9406 = vrot.lane.b32.xlu0 %v8922, 120
  %v9407 = vpop.permute.xlu0 %9406
  %9408 = vrot.lane.b32.xlu0 %v8923, 120
  %v9409 = vpop.permute.xlu0 %9408
  %9410 = vrot.lane.b32.xlu0 %v8924, 120
  %v9411 = vpop.permute.xlu0 %9410
  %9412 = vrot.lane.b32.xlu0 %v8925, 120
  %v9413 = vpop.permute.xlu0 %9412
  %9414 = vrot.lane.b32.xlu0 %v8926, 120
  %v9415 = vpop.permute.xlu0 %9414
  %9416 = vrot.lane.b32.xlu0 %v8927, 120
  %v9417 = vpop.permute.xlu0 %9416
  %9418 = vrot.lane.b32.xlu0 %v8928, 120
  %v9419 = vpop.permute.xlu0 %9418
  %9420 = vrot.lane.b32.xlu0 %v8929, 120
  %v9421 = vpop.permute.xlu0 %9420
  %9422 = vrot.lane.b32.xlu0 %v8930, 120
  %v9423 = vpop.permute.xlu0 %9422
  %9424 = vrot.lane.b32.xlu0 %v8931, 120
  %v9425 = vpop.permute.xlu0 %9424
  %9426 = vrot.lane.b32.xlu0 %v8932, 120
  %v9427 = vpop.permute.xlu0 %9426
  %9428 = vrot.lane.b32.xlu0 %v8933, 120
  %v9429 = vpop.permute.xlu0 %9428
  %9430 = vrot.lane.b32.xlu0 %v8934, 120
  %v9431 = vpop.permute.xlu0 %9430
  %9432 = vrot.lane.b32.xlu0 %v8935, 120
  %v9433 = vpop.permute.xlu0 %9432
  %9434 = vrot.lane.b32.xlu0 %v8936, 120
  %v9435 = vpop.permute.xlu0 %9434
  %9436 = vrot.lane.b32.xlu0 %v8937, 120
  %v9437 = vpop.permute.xlu0 %9436
  %9438 = vrot.lane.b32.xlu0 %v8938, 120
  %v9439 = vpop.permute.xlu0 %9438
  %9440 = vrot.lane.b32.xlu0 %v8939, 120
  %v9441 = vpop.permute.xlu0 %9440
  %9442 = vrot.lane.b32.xlu0 %v8940, 120
  %v9443 = vpop.permute.xlu0 %9442
  %9444 = vrot.lane.b32.xlu0 %v8941, 120
  %v9445 = vpop.permute.xlu0 %9444
  %9446 = vrot.lane.b32.xlu0 %v8942, 120
  %v9447 = vpop.permute.xlu0 %9446
  %9448 = vrot.lane.b32.xlu0 %v8943, 120
  %v9449 = vpop.permute.xlu0 %9448
  %9450 = vrot.lane.b32.xlu0 %v8944, 120
  %v9451 = vpop.permute.xlu0 %9450
  %9452 = vrot.lane.b32.xlu0 %v8945, 120
  %v9453 = vpop.permute.xlu0 %9452
  %9454 = vrot.lane.b32.xlu0 %v8946, 120
  %v9455 = vpop.permute.xlu0 %9454
  %9456 = vrot.lane.b32.xlu0 %v8947, 120
  %v9457 = vpop.permute.xlu0 %9456
  %9458 = vrot.lane.b32.xlu0 %v8948, 120
  %v9459 = vpop.permute.xlu0 %9458
  %9460 = vrot.lane.b32.xlu0 %v8949, 120
  %v9461 = vpop.permute.xlu0 %9460
  %9462 = vrot.lane.b32.xlu0 %v8950, 120
  %v9463 = vpop.permute.xlu0 %9462
  %9464 = vrot.lane.b32.xlu0 %v8951, 120
  %v9465 = vpop.permute.xlu0 %9464
  %9466 = vrot.lane.b32.xlu0 %v8952, 120
  %v9467 = vpop.permute.xlu0 %9466
  %9468 = vrot.lane.b32.xlu0 %v8953, 120
  %v9469 = vpop.permute.xlu0 %9468
  %9470 = vrot.lane.b32.xlu0 %v8954, 120
  %v9471 = vpop.permute.xlu0 %9470
  %9472 = vrot.lane.b32.xlu0 %v8955, 120
  %v9473 = vpop.permute.xlu0 %9472
  %9474 = vrot.lane.b32.xlu0 %v8956, 120
  %v9475 = vpop.permute.xlu0 %9474
  %9476 = vrot.lane.b32.xlu0 %v8957, 120
  %v9477 = vpop.permute.xlu0 %9476
  %9478 = vrot.lane.b32.xlu0 %v8958, 120
  %v9479 = vpop.permute.xlu0 %9478
  %9480 = vrot.lane.b32.xlu0 %v8959, 120
  %v9481 = vpop.permute.xlu0 %9480
  %9482 = vrot.lane.b32.xlu0 %v8960, 120
  %v9483 = vpop.permute.xlu0 %9482
  %9484 = vrot.lane.b32.xlu0 %v8961, 120
  %v9485 = vpop.permute.xlu0 %9484
  %9486 = vrot.lane.b32.xlu0 %v8962, 120
  %v9487 = vpop.permute.xlu0 %9486
  %9488 = vrot.lane.b32.xlu0 %v8963, 120
  %v9489 = vpop.permute.xlu0 %9488
  %9490 = vrot.lane.b32.xlu0 %v8964, 120
  %v9491 = vpop.permute.xlu0 %9490
  %9492 = vrot.lane.b32.xlu0 %v8965, 120
  %v9493 = vpop.permute.xlu0 %9492
  %9494 = vrot.lane.b32.xlu0 %v8966, 120
  %v9495 = vpop.permute.xlu0 %9494
  %9496 = vrot.lane.b32.xlu0 %v8967, 120
  %v9497 = vpop.permute.xlu0 %9496
  %9498 = vrot.lane.b32.xlu0 %v8968, 120
  %v9499 = vpop.permute.xlu0 %9498
  %9500 = vrot.lane.b32.xlu0 %v8969, 120
  %v9501 = vpop.permute.xlu0 %9500
  %9502 = vrot.lane.b32.xlu0 %v8970, 120
  %v9503 = vpop.permute.xlu0 %9502
  %9504 = vrot.lane.b32.xlu0 %v8971, 120
  %v9505 = vpop.permute.xlu0 %9504
  %9506 = vrot.lane.b32.xlu0 %v8972, 120
  %v9507 = vpop.permute.xlu0 %9506
  %9508 = vrot.lane.b32.xlu0 %v8973, 120
  %v9509 = vpop.permute.xlu0 %9508
  %9510 = vrot.lane.b32.xlu0 %v8974, 120
  %v9511 = vpop.permute.xlu0 %9510
  %9512 = vrot.lane.b32.xlu0 %v8975, 120
  %v9513 = vpop.permute.xlu0 %9512
  %9514 = vrot.lane.b32.xlu0 %v8976, 120
  %v9515 = vpop.permute.xlu0 %9514
  %9516 = vrot.lane.b32.xlu0 %v8977, 120
  %v9517 = vpop.permute.xlu0 %9516
  %9518 = vrot.lane.b32.xlu0 %v8978, 120
  %v9519 = vpop.permute.xlu0 %9518
  %9520 = vrot.lane.b32.xlu0 %v8979, 120
  %v9521 = vpop.permute.xlu0 %9520
  %9522 = vrot.lane.b32.xlu0 %v8980, 120
  %v9523 = vpop.permute.xlu0 %9522
  %9524 = vrot.lane.b32.xlu0 %v8981, 120
  %v9525 = vpop.permute.xlu0 %9524
  %9526 = vrot.lane.b32.xlu0 %v8982, 120
  %v9527 = vpop.permute.xlu0 %9526
  %9528 = vrot.lane.b32.xlu0 %v8983, 120
  %v9529 = vpop.permute.xlu0 %9528
  %9530 = vrot.lane.b32.xlu0 %v8984, 120
  %v9531 = vpop.permute.xlu0 %9530
  %9532 = vrot.lane.b32.xlu0 %v8985, 120
  %v9533 = vpop.permute.xlu0 %9532
  %9534 = vrot.lane.b32.xlu0 %v8986, 120
  %v9535 = vpop.permute.xlu0 %9534
  %9536 = vrot.lane.b32.xlu0 %v8987, 120
  %v9537 = vpop.permute.xlu0 %9536
  %9538 = vrot.lane.b32.xlu0 %v8988, 120
  %v9539 = vpop.permute.xlu0 %9538
  %9540 = vrot.lane.b32.xlu0 %v8989, 120
  %v9541 = vpop.permute.xlu0 %9540
  %9542 = vrot.lane.b32.xlu0 %v8990, 120
  %v9543 = vpop.permute.xlu0 %9542
  %9544 = vrot.lane.b32.xlu0 %v8991, 120
  %v9545 = vpop.permute.xlu0 %9544
  %9546 = vrot.lane.b32.xlu0 %v8992, 120
  %v9547 = vpop.permute.xlu0 %9546
  %9548 = vrot.lane.b32.xlu0 %v8993, 120
  %v9549 = vpop.permute.xlu0 %9548
  %9550 = vrot.lane.b32.xlu0 %v8994, 120
  %v9551 = vpop.permute.xlu0 %9550
  %9552 = vrot.lane.b32.xlu0 %v8995, 120
  %v9553 = vpop.permute.xlu0 %9552
  %9554 = vrot.lane.b32.xlu0 %v8996, 120
  %v9555 = vpop.permute.xlu0 %9554
  %9556 = vrot.lane.b32.xlu0 %v8997, 120
  %v9557 = vpop.permute.xlu0 %9556
  %9558 = vrot.lane.b32.xlu0 %v8998, 120
  %v9559 = vpop.permute.xlu0 %9558
  %9560 = vrot.lane.b32.xlu0 %v8999, 120
  %v9561 = vpop.permute.xlu0 %9560
  %9562 = vrot.lane.b32.xlu0 %v9000, 120
  %v9563 = vpop.permute.xlu0 %9562
  %9564 = vrot.lane.b32.xlu0 %v9001, 120
  %v9565 = vpop.permute.xlu0 %9564
  %9566 = vrot.lane.b32.xlu0 %v9002, 120
  %v9567 = vpop.permute.xlu0 %9566
  %9568 = vrot.lane.b32.xlu0 %v9003, 120
  %v9569 = vpop.permute.xlu0 %9568
  %9570 = vrot.lane.b32.xlu0 %v9004, 120
  %v9571 = vpop.permute.xlu0 %9570
  %9572 = vrot.lane.b32.xlu0 %v9005, 120
  %v9573 = vpop.permute.xlu0 %9572
  %9574 = vrot.lane.b32.xlu0 %v9006, 120
  %v9575 = vpop.permute.xlu0 %9574
  %9576 = vrot.lane.b32.xlu0 %v9007, 120
  %v9577 = vpop.permute.xlu0 %9576
  %9578 = vrot.lane.b32.xlu0 %v9008, 120
  %v9579 = vpop.permute.xlu0 %9578
  %9580 = vrot.lane.b32.xlu0 %v9009, 120
  %v9581 = vpop.permute.xlu0 %9580
  %9582 = vrot.lane.b32.xlu0 %v9010, 120
  %v9583 = vpop.permute.xlu0 %9582
  %9584 = vrot.lane.b32.xlu0 %v9011, 120
  %v9585 = vpop.permute.xlu0 %9584
  %9586 = vrot.lane.b32.xlu0 %v9012, 120
  %v9587 = vpop.permute.xlu0 %9586
  %9588 = vrot.lane.b32.xlu0 %v9013, 120
  %v9589 = vpop.permute.xlu0 %9588
  %9590 = vrot.lane.b32.xlu0 %v9014, 120
  %v9591 = vpop.permute.xlu0 %9590
  %9592 = vrot.lane.b32.xlu0 %v9015, 120
  %v9593 = vpop.permute.xlu0 %9592
  %9594 = vrot.lane.b32.xlu0 %v9016, 120
  %v9595 = vpop.permute.xlu0 %9594
  %9596 = vrot.lane.b32.xlu0 %v9017, 120
  %v9597 = vpop.permute.xlu0 %9596
  %9598 = vrot.lane.b32.xlu0 %v9018, 120
  %v9599 = vpop.permute.xlu0 %9598
  %9600 = vrot.lane.b32.xlu0 %v9019, 120
  %v9601 = vpop.permute.xlu0 %9600
  %9602 = vrot.lane.b32.xlu0 %v9020, 120
  %v9603 = vpop.permute.xlu0 %9602
  %9604 = vrot.lane.b32.xlu0 %v9021, 120
  %v9605 = vpop.permute.xlu0 %9604
  %9606 = vrot.lane.b32.xlu0 %v9022, 120
  %v9607 = vpop.permute.xlu0 %9606
  %9608 = vrot.lane.b32.xlu0 %v9023, 120
  %v9609 = vpop.permute.xlu0 %9608
  %9610 = vrot.lane.b32.xlu0 %v9024, 120
  %v9611 = vpop.permute.xlu0 %9610
  %9612 = vrot.lane.b32.xlu0 %v9025, 120
  %v9613 = vpop.permute.xlu0 %9612
  %9614 = vrot.lane.b32.xlu0 %v9026, 120
  %v9615 = vpop.permute.xlu0 %9614
  %9616 = vrot.lane.b32.xlu0 %v9027, 120
  %v9617 = vpop.permute.xlu0 %9616
  %9618 = vrot.lane.b32.xlu0 %v9028, 120
  %v9619 = vpop.permute.xlu0 %9618
  %9620 = vrot.lane.b32.xlu0 %v9029, 120
  %v9621 = vpop.permute.xlu0 %9620
  %9622 = vrot.lane.b32.xlu0 %v9030, 120
  %v9623 = vpop.permute.xlu0 %9622
  %9624 = vrot.lane.b32.xlu0 %v9031, 120
  %v9625 = vpop.permute.xlu0 %9624
  %9626 = vrot.lane.b32.xlu0 %v9032, 120
  %v9627 = vpop.permute.xlu0 %9626
  %9628 = vrot.lane.b32.xlu0 %v9033, 120
  %v9629 = vpop.permute.xlu0 %9628
  %9630 = vrot.lane.b32.xlu0 %v9034, 120
  %v9631 = vpop.permute.xlu0 %9630
  %9632 = vrot.lane.b32.xlu0 %v9035, 120
  %v9633 = vpop.permute.xlu0 %9632
  %9634 = vrot.lane.b32.xlu0 %v9036, 120
  %v9635 = vpop.permute.xlu0 %9634
  %9636 = vrot.lane.b32.xlu0 %v9037, 120
  %v9637 = vpop.permute.xlu0 %9636
  %vm9638 = vcmask 982016
  %v9639 = vsel %vm9638, %v9239, %v9241
  %v9640 = vsel %vm9638, %v9241, %v9243
  %v9641 = vsel %vm9638, %v9243, %v9245
  %v9642 = vsel %vm9638, %v9245, %v9247
  %v9643 = vsel %vm9638, %v9247, %v9249
  %v9644 = vsel %vm9638, %v9249, %v9251
  %v9645 = vsel %vm9638, %v9251, %v9253
  %v9646 = vsel %vm9638, %v9253, %v9255
  %v9647 = vsel %vm9638, %v9255, %v9257
  %v9648 = vsel %vm9638, %v9257, %v9259
  %v9649 = vsel %vm9638, %v9259, %v9261
  %v9650 = vsel %vm9638, %v9261, %v9263
  %v9651 = vsel %vm9638, %v9263, %v9265
  %v9652 = vsel %vm9638, %v9265, %v9267
  %v9653 = vsel %vm9638, %v9267, %v9269
  %v9654 = vsel %vm9638, %v9269, %v9271
  %v9655 = vsel %vm9638, %v9271, %v9273
  %v9656 = vsel %vm9638, %v9273, %v9275
  %v9657 = vsel %vm9638, %v9275, %v9277
  %v9658 = vsel %vm9638, %v9277, %v9279
  %v9659 = vsel %vm9638, %v9279, %v9281
  %v9660 = vsel %vm9638, %v9281, %v9283
  %v9661 = vsel %vm9638, %v9283, %v9285
  %v9662 = vsel %vm9638, %v9285, %v9287
  %v9663 = vsel %vm9638, %v9289, %v9291
  %v9664 = vsel %vm9638, %v9291, %v9293
  %v9665 = vsel %vm9638, %v9293, %v9295
  %v9666 = vsel %vm9638, %v9295, %v9297
  %v9667 = vsel %vm9638, %v9297, %v9299
  %v9668 = vsel %vm9638, %v9299, %v9301
  %v9669 = vsel %vm9638, %v9301, %v9303
  %v9670 = vsel %vm9638, %v9303, %v9305
  %v9671 = vsel %vm9638, %v9305, %v9307
  %v9672 = vsel %vm9638, %v9307, %v9309
  %v9673 = vsel %vm9638, %v9309, %v9311
  %v9674 = vsel %vm9638, %v9311, %v9313
  %v9675 = vsel %vm9638, %v9313, %v9315
  %v9676 = vsel %vm9638, %v9315, %v9317
  %v9677 = vsel %vm9638, %v9317, %v9319
  %v9678 = vsel %vm9638, %v9319, %v9321
  %v9679 = vsel %vm9638, %v9321, %v9323
  %v9680 = vsel %vm9638, %v9323, %v9325
  %v9681 = vsel %vm9638, %v9325, %v9327
  %v9682 = vsel %vm9638, %v9327, %v9329
  %v9683 = vsel %vm9638, %v9329, %v9331
  %v9684 = vsel %vm9638, %v9331, %v9333
  %v9685 = vsel %vm9638, %v9333, %v9335
  %v9686 = vsel %vm9638, %v9335, %v9337
  %v9687 = vsel %vm9638, %v9339, %v9341
  %v9688 = vsel %vm9638, %v9341, %v9343
  %v9689 = vsel %vm9638, %v9343, %v9345
  %v9690 = vsel %vm9638, %v9345, %v9347
  %v9691 = vsel %vm9638, %v9347, %v9349
  %v9692 = vsel %vm9638, %v9349, %v9351
  %v9693 = vsel %vm9638, %v9351, %v9353
  %v9694 = vsel %vm9638, %v9353, %v9355
  %v9695 = vsel %vm9638, %v9355, %v9357
  %v9696 = vsel %vm9638, %v9357, %v9359
  %v9697 = vsel %vm9638, %v9359, %v9361
  %v9698 = vsel %vm9638, %v9361, %v9363
  %v9699 = vsel %vm9638, %v9363, %v9365
  %v9700 = vsel %vm9638, %v9365, %v9367
  %v9701 = vsel %vm9638, %v9367, %v9369
  %v9702 = vsel %vm9638, %v9369, %v9371
  %v9703 = vsel %vm9638, %v9371, %v9373
  %v9704 = vsel %vm9638, %v9373, %v9375
  %v9705 = vsel %vm9638, %v9375, %v9377
  %v9706 = vsel %vm9638, %v9377, %v9379
  %v9707 = vsel %vm9638, %v9379, %v9381
  %v9708 = vsel %vm9638, %v9381, %v9383
  %v9709 = vsel %vm9638, %v9383, %v9385
  %v9710 = vsel %vm9638, %v9385, %v9387
  %v9711 = vsel %vm9638, %v9389, %v9391
  %v9712 = vsel %vm9638, %v9391, %v9393
  %v9713 = vsel %vm9638, %v9393, %v9395
  %v9714 = vsel %vm9638, %v9395, %v9397
  %v9715 = vsel %vm9638, %v9397, %v9399
  %v9716 = vsel %vm9638, %v9399, %v9401
  %v9717 = vsel %vm9638, %v9401, %v9403
  %v9718 = vsel %vm9638, %v9403, %v9405
  %v9719 = vsel %vm9638, %v9405, %v9407
  %v9720 = vsel %vm9638, %v9407, %v9409
  %v9721 = vsel %vm9638, %v9409, %v9411
  %v9722 = vsel %vm9638, %v9411, %v9413
  %v9723 = vsel %vm9638, %v9413, %v9415
  %v9724 = vsel %vm9638, %v9415, %v9417
  %v9725 = vsel %vm9638, %v9417, %v9419
  %v9726 = vsel %vm9638, %v9419, %v9421
  %v9727 = vsel %vm9638, %v9421, %v9423
  %v9728 = vsel %vm9638, %v9423, %v9425
  %v9729 = vsel %vm9638, %v9425, %v9427
  %v9730 = vsel %vm9638, %v9427, %v9429
  %v9731 = vsel %vm9638, %v9429, %v9431
  %v9732 = vsel %vm9638, %v9431, %v9433
  %v9733 = vsel %vm9638, %v9433, %v9435
  %v9734 = vsel %vm9638, %v9435, %v9437
  %v9735 = vsel %vm9638, %v9439, %v9441
  %v9736 = vsel %vm9638, %v9441, %v9443
  %v9737 = vsel %vm9638, %v9443, %v9445
  %v9738 = vsel %vm9638, %v9445, %v9447
  %v9739 = vsel %vm9638, %v9447, %v9449
  %v9740 = vsel %vm9638, %v9449, %v9451
  %v9741 = vsel %vm9638, %v9451, %v9453
  %v9742 = vsel %vm9638, %v9453, %v9455
  %v9743 = vsel %vm9638, %v9455, %v9457
  %v9744 = vsel %vm9638, %v9457, %v9459
  %v9745 = vsel %vm9638, %v9459, %v9461
  %v9746 = vsel %vm9638, %v9461, %v9463
  %v9747 = vsel %vm9638, %v9463, %v9465
  %v9748 = vsel %vm9638, %v9465, %v9467
  %v9749 = vsel %vm9638, %v9467, %v9469
  %v9750 = vsel %vm9638, %v9469, %v9471
  %v9751 = vsel %vm9638, %v9471, %v9473
  %v9752 = vsel %vm9638, %v9473, %v9475
  %v9753 = vsel %vm9638, %v9475, %v9477
  %v9754 = vsel %vm9638, %v9477, %v9479
  %v9755 = vsel %vm9638, %v9479, %v9481
  %v9756 = vsel %vm9638, %v9481, %v9483
  %v9757 = vsel %vm9638, %v9483, %v9485
  %v9758 = vsel %vm9638, %v9485, %v9487
  %v9759 = vsel %vm9638, %v9489, %v9491
  %v9760 = vsel %vm9638, %v9491, %v9493
  %v9761 = vsel %vm9638, %v9493, %v9495
  %v9762 = vsel %vm9638, %v9495, %v9497
  %v9763 = vsel %vm9638, %v9497, %v9499
  %v9764 = vsel %vm9638, %v9499, %v9501
  %v9765 = vsel %vm9638, %v9501, %v9503
  %v9766 = vsel %vm9638, %v9503, %v9505
  %v9767 = vsel %vm9638, %v9505, %v9507
  %v9768 = vsel %vm9638, %v9507, %v9509
  %v9769 = vsel %vm9638, %v9509, %v9511
  %v9770 = vsel %vm9638, %v9511, %v9513
  %v9771 = vsel %vm9638, %v9513, %v9515
  %v9772 = vsel %vm9638, %v9515, %v9517
  %v9773 = vsel %vm9638, %v9517, %v9519
  %v9774 = vsel %vm9638, %v9519, %v9521
  %v9775 = vsel %vm9638, %v9521, %v9523
  %v9776 = vsel %vm9638, %v9523, %v9525
  %v9777 = vsel %vm9638, %v9525, %v9527
  %v9778 = vsel %vm9638, %v9527, %v9529
  %v9779 = vsel %vm9638, %v9529, %v9531
  %v9780 = vsel %vm9638, %v9531, %v9533
  %v9781 = vsel %vm9638, %v9533, %v9535
  %v9782 = vsel %vm9638, %v9535, %v9537
  %v9783 = vsel %vm9638, %v9539, %v9541
  %v9784 = vsel %vm9638, %v9541, %v9543
  %v9785 = vsel %vm9638, %v9543, %v9545
  %v9786 = vsel %vm9638, %v9545, %v9547
  %v9787 = vsel %vm9638, %v9547, %v9549
  %v9788 = vsel %vm9638, %v9549, %v9551
  %v9789 = vsel %vm9638, %v9551, %v9553
  %v9790 = vsel %vm9638, %v9553, %v9555
  %v9791 = vsel %vm9638, %v9555, %v9557
  %v9792 = vsel %vm9638, %v9557, %v9559
  %v9793 = vsel %vm9638, %v9559, %v9561
  %v9794 = vsel %vm9638, %v9561, %v9563
  %v9795 = vsel %vm9638, %v9563, %v9565
  %v9796 = vsel %vm9638, %v9565, %v9567
  %v9797 = vsel %vm9638, %v9567, %v9569
  %v9798 = vsel %vm9638, %v9569, %v9571
  %v9799 = vsel %vm9638, %v9571, %v9573
  %v9800 = vsel %vm9638, %v9573, %v9575
  %v9801 = vsel %vm9638, %v9575, %v9577
  %v9802 = vsel %vm9638, %v9577, %v9579
  %v9803 = vsel %vm9638, %v9579, %v9581
  %v9804 = vsel %vm9638, %v9581, %v9583
  %v9805 = vsel %vm9638, %v9583, %v9585
  %v9806 = vsel %vm9638, %v9585, %v9587
  %v9807 = vsel %vm9638, %v9589, %v9591
  %v9808 = vsel %vm9638, %v9591, %v9593
  %v9809 = vsel %vm9638, %v9593, %v9595
  %v9810 = vsel %vm9638, %v9595, %v9597
  %v9811 = vsel %vm9638, %v9597, %v9599
  %v9812 = vsel %vm9638, %v9599, %v9601
  %v9813 = vsel %vm9638, %v9601, %v9603
  %v9814 = vsel %vm9638, %v9603, %v9605
  %v9815 = vsel %vm9638, %v9605, %v9607
  %v9816 = vsel %vm9638, %v9607, %v9609
  %v9817 = vsel %vm9638, %v9609, %v9611
  %v9818 = vsel %vm9638, %v9611, %v9613
  %v9819 = vsel %vm9638, %v9613, %v9615
  %v9820 = vsel %vm9638, %v9615, %v9617
  %v9821 = vsel %vm9638, %v9617, %v9619
  %v9822 = vsel %vm9638, %v9619, %v9621
  %v9823 = vsel %vm9638, %v9621, %v9623
  %v9824 = vsel %vm9638, %v9623, %v9625
  %v9825 = vsel %vm9638, %v9625, %v9627
  %v9826 = vsel %vm9638, %v9627, %v9629
  %v9827 = vsel %vm9638, %v9629, %v9631
  %v9828 = vsel %vm9638, %v9631, %v9633
  %v9829 = vsel %vm9638, %v9633, %v9635
  %v9830 = vsel %vm9638, %v9635, %v9637
  %10031 = vst [vmem:[%s4] sm:$0xff] %v9639
  %10032 = vst [vmem:[%s4 + $0x8] sm:$0xff] %v9640
  %10033 = vst [vmem:[%s4 + $0x10] sm:$0xff] %v9641
  %10034 = vst [vmem:[%s4 + $0x18] sm:$0xff] %v9642
  %10035 = vst [vmem:[%s4 + $0x20] sm:$0xff] %v9643
  %10036 = vst [vmem:[%s4 + $0x28] sm:$0xff] %v9644
  %10037 = vst [vmem:[%s4 + $0x30] sm:$0xff] %v9645
  %10038 = vst [vmem:[%s4 + $0x38] sm:$0xff] %v9646
  %10039 = vst [vmem:[%s4 + $0x40] sm:$0xff] %v9647
  %10040 = vst [vmem:[%s4 + $0x48] sm:$0xff] %v9648
  %10041 = vst [vmem:[%s4 + $0x50] sm:$0xff] %v9649
  %10042 = vst [vmem:[%s4 + $0x58] sm:$0xff] %v9650
  %10043 = vst [vmem:[%s4 + $0x60] sm:$0xff] %v9651
  %10044 = vst [vmem:[%s4 + $0x68] sm:$0xff] %v9652
  %10045 = vst [vmem:[%s4 + $0x70] sm:$0xff] %v9653
  %10046 = vst [vmem:[%s4 + $0x78] sm:$0xff] %v9654
  %10047 = vst [vmem:[%s4 + $0x80] sm:$0xff] %v9655
  %10048 = vst [vmem:[%s4 + $0x88] sm:$0xff] %v9656
  %10049 = vst [vmem:[%s4 + $0x90] sm:$0xff] %v9657
  %10050 = vst [vmem:[%s4 + $0x98] sm:$0xff] %v9658
  %10051 = vst [vmem:[%s4 + $0xa0] sm:$0xff] %v9659
  %10052 = vst [vmem:[%s4 + $0xa8] sm:$0xff] %v9660
  %10053 = vst [vmem:[%s4 + $0xb0] sm:$0xff] %v9661
  %10054 = vst [vmem:[%s4 + $0xb8] sm:$0xff] %v9662
  %10055 = vst.msk [vmem:[%s4 + $0xc0] sm:$0xff] %vm234, %v9287
  %10056 = vst [vmem:[%s4 + $0xc8] sm:$0xff] %v9663
  %10057 = vst [vmem:[%s4 + $0xd0] sm:$0xff] %v9664
  %10058 = vst [vmem:[%s4 + $0xd8] sm:$0xff] %v9665
  %10059 = vst [vmem:[%s4 + $0xe0] sm:$0xff] %v9666
  %10060 = vst [vmem:[%s4 + $0xe8] sm:$0xff] %v9667
  %10061 = vst [vmem:[%s4 + $0xf0] sm:$0xff] %v9668
  %10062 = vst [vmem:[%s4 + $0xf8] sm:$0xff] %v9669
  %10063 = vst [vmem:[%s4 + $0x100] sm:$0xff] %v9670
  %10064 = vst [vmem:[%s4 + $0x108] sm:$0xff] %v9671
  %10065 = vst [vmem:[%s4 + $0x110] sm:$0xff] %v9672
  %10066 = vst [vmem:[%s4 + $0x118] sm:$0xff] %v9673
  %10067 = vst [vmem:[%s4 + $0x120] sm:$0xff] %v9674
  %10068 = vst [vmem:[%s4 + $0x128] sm:$0xff] %v9675
  %10069 = vst [vmem:[%s4 + $0x130] sm:$0xff] %v9676
  %10070 = vst [vmem:[%s4 + $0x138] sm:$0xff] %v9677
  %10071 = vst [vmem:[%s4 + $0x140] sm:$0xff] %v9678
  %10072 = vst [vmem:[%s4 + $0x148] sm:$0xff] %v9679
  %10073 = vst [vmem:[%s4 + $0x150] sm:$0xff] %v9680
  %10074 = vst [vmem:[%s4 + $0x158] sm:$0xff] %v9681
  %10075 = vst [vmem:[%s4 + $0x160] sm:$0xff] %v9682
  %10076 = vst [vmem:[%s4 + $0x168] sm:$0xff] %v9683
  %10077 = vst [vmem:[%s4 + $0x170] sm:$0xff] %v9684
  %10078 = vst [vmem:[%s4 + $0x178] sm:$0xff] %v9685
  %10079 = vst [vmem:[%s4 + $0x180] sm:$0xff] %v9686
  %10080 = vst.msk [vmem:[%s4 + $0x188] sm:$0xff] %vm234, %v9337
  %10081 = vst [vmem:[%s4 + $0x190] sm:$0xff] %v9687
  %10082 = vst [vmem:[%s4 + $0x198] sm:$0xff] %v9688
  %10083 = vst [vmem:[%s4 + $0x1a0] sm:$0xff] %v9689
  %10084 = vst [vmem:[%s4 + $0x1a8] sm:$0xff] %v9690
  %10085 = vst [vmem:[%s4 + $0x1b0] sm:$0xff] %v9691
  %10086 = vst [vmem:[%s4 + $0x1b8] sm:$0xff] %v9692
  %10087 = vst [vmem:[%s4 + $0x1c0] sm:$0xff] %v9693
  %10088 = vst [vmem:[%s4 + $0x1c8] sm:$0xff] %v9694
  %10089 = vst [vmem:[%s4 + $0x1d0] sm:$0xff] %v9695
  %10090 = vst [vmem:[%s4 + $0x1d8] sm:$0xff] %v9696
  %10091 = vst [vmem:[%s4 + $0x1e0] sm:$0xff] %v9697
  %10092 = vst [vmem:[%s4 + $0x1e8] sm:$0xff] %v9698
  %10093 = vst [vmem:[%s4 + $0x1f0] sm:$0xff] %v9699
  %10094 = vst [vmem:[%s4 + $0x1f8] sm:$0xff] %v9700
  %10095 = vst [vmem:[%s4 + $0x200] sm:$0xff] %v9701
  %10096 = vst [vmem:[%s4 + $0x208] sm:$0xff] %v9702
  %10097 = vst [vmem:[%s4 + $0x210] sm:$0xff] %v9703
  %10098 = vst [vmem:[%s4 + $0x218] sm:$0xff] %v9704
  %10099 = vst [vmem:[%s4 + $0x220] sm:$0xff] %v9705
  %10100 = vst [vmem:[%s4 + $0x228] sm:$0xff] %v9706
  %10101 = vst [vmem:[%s4 + $0x230] sm:$0xff] %v9707
  %10102 = vst [vmem:[%s4 + $0x238] sm:$0xff] %v9708
  %10103 = vst [vmem:[%s4 + $0x240] sm:$0xff] %v9709
  %10104 = vst [vmem:[%s4 + $0x248] sm:$0xff] %v9710
  %10105 = vst.msk [vmem:[%s4 + $0x250] sm:$0xff] %vm234, %v9387
  %10106 = vst [vmem:[%s4 + $0x258] sm:$0xff] %v9711
  %10107 = vst [vmem:[%s4 + $0x260] sm:$0xff] %v9712
  %10108 = vst [vmem:[%s4 + $0x268] sm:$0xff] %v9713
  %10109 = vst [vmem:[%s4 + $0x270] sm:$0xff] %v9714
  %10110 = vst [vmem:[%s4 + $0x278] sm:$0xff] %v9715
  %10111 = vst [vmem:[%s4 + $0x280] sm:$0xff] %v9716
  %10112 = vst [vmem:[%s4 + $0x288] sm:$0xff] %v9717
  %10113 = vst [vmem:[%s4 + $0x290] sm:$0xff] %v9718
  %10114 = vst [vmem:[%s4 + $0x298] sm:$0xff] %v9719
  %10115 = vst [vmem:[%s4 + $0x2a0] sm:$0xff] %v9720
  %10116 = vst [vmem:[%s4 + $0x2a8] sm:$0xff] %v9721
  %10117 = vst [vmem:[%s4 + $0x2b0] sm:$0xff] %v9722
  %10118 = vst [vmem:[%s4 + $0x2b8] sm:$0xff] %v9723
  %10119 = vst [vmem:[%s4 + $0x2c0] sm:$0xff] %v9724
  %10120 = vst [vmem:[%s4 + $0x2c8] sm:$0xff] %v9725
  %10121 = vst [vmem:[%s4 + $0x2d0] sm:$0xff] %v9726
  %10122 = vst [vmem:[%s4 + $0x2d8] sm:$0xff] %v9727
  %10123 = vst [vmem:[%s4 + $0x2e0] sm:$0xff] %v9728
  %10124 = vst [vmem:[%s4 + $0x2e8] sm:$0xff] %v9729
  %10125 = vst [vmem:[%s4 + $0x2f0] sm:$0xff] %v9730
  %10126 = vst [vmem:[%s4 + $0x2f8] sm:$0xff] %v9731
  %10127 = vst [vmem:[%s4 + $0x300] sm:$0xff] %v9732
  %10128 = vst [vmem:[%s4 + $0x308] sm:$0xff] %v9733
  %10129 = vst [vmem:[%s4 + $0x310] sm:$0xff] %v9734
  %10130 = vst.msk [vmem:[%s4 + $0x318] sm:$0xff] %vm234, %v9437
  %10131 = vst [vmem:[%s4 + $0x320] sm:$0xff] %v9735
  %10132 = vst [vmem:[%s4 + $0x328] sm:$0xff] %v9736
  %10133 = vst [vmem:[%s4 + $0x330] sm:$0xff] %v9737
  %10134 = vst [vmem:[%s4 + $0x338] sm:$0xff] %v9738
  %10135 = vst [vmem:[%s4 + $0x340] sm:$0xff] %v9739
  %10136 = vst [vmem:[%s4 + $0x348] sm:$0xff] %v9740
  %10137 = vst [vmem:[%s4 + $0x350] sm:$0xff] %v9741
  %10138 = vst [vmem:[%s4 + $0x358] sm:$0xff] %v9742
  %10139 = vst [vmem:[%s4 + $0x360] sm:$0xff] %v9743
  %10140 = vst [vmem:[%s4 + $0x368] sm:$0xff] %v9744
  %10141 = vst [vmem:[%s4 + $0x370] sm:$0xff] %v9745
  %10142 = vst [vmem:[%s4 + $0x378] sm:$0xff] %v9746
  %10143 = vst [vmem:[%s4 + $0x380] sm:$0xff] %v9747
  %10144 = vst [vmem:[%s4 + $0x388] sm:$0xff] %v9748
  %10145 = vst [vmem:[%s4 + $0x390] sm:$0xff] %v9749
  %10146 = vst [vmem:[%s4 + $0x398] sm:$0xff] %v9750
  %10147 = vst [vmem:[%s4 + $0x3a0] sm:$0xff] %v9751
  %10148 = vst [vmem:[%s4 + $0x3a8] sm:$0xff] %v9752
  %10149 = vst [vmem:[%s4 + $0x3b0] sm:$0xff] %v9753
  %10150 = vst [vmem:[%s4 + $0x3b8] sm:$0xff] %v9754
  %10151 = vst [vmem:[%s4 + $0x3c0] sm:$0xff] %v9755
  %10152 = vst [vmem:[%s4 + $0x3c8] sm:$0xff] %v9756
  %10153 = vst [vmem:[%s4 + $0x3d0] sm:$0xff] %v9757
  %10154 = vst [vmem:[%s4 + $0x3d8] sm:$0xff] %v9758
  %10155 = vst.msk [vmem:[%s4 + $0x3e0] sm:$0xff] %vm234, %v9487
  %10156 = vst [vmem:[%s4 + $0x3e8] sm:$0xff] %v9759
  %10157 = vst [vmem:[%s4 + $0x3f0] sm:$0xff] %v9760
  %10158 = vst [vmem:[%s4 + $0x3f8] sm:$0xff] %v9761
  %10159 = vst [vmem:[%s4 + $0x400] sm:$0xff] %v9762
  %10160 = vst [vmem:[%s4 + $0x408] sm:$0xff] %v9763
  %10161 = vst [vmem:[%s4 + $0x410] sm:$0xff] %v9764
  %10162 = vst [vmem:[%s4 + $0x418] sm:$0xff] %v9765
  %10163 = vst [vmem:[%s4 + $0x420] sm:$0xff] %v9766
  %10164 = vst [vmem:[%s4 + $0x428] sm:$0xff] %v9767
  %10165 = vst [vmem:[%s4 + $0x430] sm:$0xff] %v9768
  %10166 = vst [vmem:[%s4 + $0x438] sm:$0xff] %v9769
  %10167 = vst [vmem:[%s4 + $0x440] sm:$0xff] %v9770
  %10168 = vst [vmem:[%s4 + $0x448] sm:$0xff] %v9771
  %10169 = vst [vmem:[%s4 + $0x450] sm:$0xff] %v9772
  %10170 = vst [vmem:[%s4 + $0x458] sm:$0xff] %v9773
  %10171 = vst [vmem:[%s4 + $0x460] sm:$0xff] %v9774
  %10172 = vst [vmem:[%s4 + $0x468] sm:$0xff] %v9775
  %10173 = vst [vmem:[%s4 + $0x470] sm:$0xff] %v9776
  %10174 = vst [vmem:[%s4 + $0x478] sm:$0xff] %v9777
  %10175 = vst [vmem:[%s4 + $0x480] sm:$0xff] %v9778
  %10176 = vst [vmem:[%s4 + $0x488] sm:$0xff] %v9779
  %10177 = vst [vmem:[%s4 + $0x490] sm:$0xff] %v9780
  %10178 = vst [vmem:[%s4 + $0x498] sm:$0xff] %v9781
  %10179 = vst [vmem:[%s4 + $0x4a0] sm:$0xff] %v9782
  %10180 = vst.msk [vmem:[%s4 + $0x4a8] sm:$0xff] %vm234, %v9537
  %10181 = vst [vmem:[%s4 + $0x4b0] sm:$0xff] %v9783
  %10182 = vst [vmem:[%s4 + $0x4b8] sm:$0xff] %v9784
  %10183 = vst [vmem:[%s4 + $0x4c0] sm:$0xff] %v9785
  %10184 = vst [vmem:[%s4 + $0x4c8] sm:$0xff] %v9786
  %10185 = vst [vmem:[%s4 + $0x4d0] sm:$0xff] %v9787
  %10186 = vst [vmem:[%s4 + $0x4d8] sm:$0xff] %v9788
  %10187 = vst [vmem:[%s4 + $0x4e0] sm:$0xff] %v9789
  %10188 = vst [vmem:[%s4 + $0x4e8] sm:$0xff] %v9790
  %10189 = vst [vmem:[%s4 + $0x4f0] sm:$0xff] %v9791
  %10190 = vst [vmem:[%s4 + $0x4f8] sm:$0xff] %v9792
  %10191 = vst [vmem:[%s4 + $0x500] sm:$0xff] %v9793
  %10192 = vst [vmem:[%s4 + $0x508] sm:$0xff] %v9794
  %10193 = vst [vmem:[%s4 + $0x510] sm:$0xff] %v9795
  %10194 = vst [vmem:[%s4 + $0x518] sm:$0xff] %v9796
  %10195 = vst [vmem:[%s4 + $0x520] sm:$0xff] %v9797
  %10196 = vst [vmem:[%s4 + $0x528] sm:$0xff] %v9798
  %10197 = vst [vmem:[%s4 + $0x530] sm:$0xff] %v9799
  %10198 = vst [vmem:[%s4 + $0x538] sm:$0xff] %v9800
  %10199 = vst [vmem:[%s4 + $0x540] sm:$0xff] %v9801
  %10200 = vst [vmem:[%s4 + $0x548] sm:$0xff] %v9802
  %10201 = vst [vmem:[%s4 + $0x550] sm:$0xff] %v9803
  %10202 = vst [vmem:[%s4 + $0x558] sm:$0xff] %v9804
  %10203 = vst [vmem:[%s4 + $0x560] sm:$0xff] %v9805
  %10204 = vst [vmem:[%s4 + $0x568] sm:$0xff] %v9806
  %10205 = vst.msk [vmem:[%s4 + $0x570] sm:$0xff] %vm234, %v9587
  %10206 = vst [vmem:[%s4 + $0x578] sm:$0xff] %v9807
  %10207 = vst [vmem:[%s4 + $0x580] sm:$0xff] %v9808
  %10208 = vst [vmem:[%s4 + $0x588] sm:$0xff] %v9809
  %10209 = vst [vmem:[%s4 + $0x590] sm:$0xff] %v9810
  %10210 = vst [vmem:[%s4 + $0x598] sm:$0xff] %v9811
  %10211 = vst [vmem:[%s4 + $0x5a0] sm:$0xff] %v9812
  %10212 = vst [vmem:[%s4 + $0x5a8] sm:$0xff] %v9813
  %10213 = vst [vmem:[%s4 + $0x5b0] sm:$0xff] %v9814
  %10214 = vst [vmem:[%s4 + $0x5b8] sm:$0xff] %v9815
  %10215 = vst [vmem:[%s4 + $0x5c0] sm:$0xff] %v9816
  %10216 = vst [vmem:[%s4 + $0x5c8] sm:$0xff] %v9817
  %10217 = vst [vmem:[%s4 + $0x5d0] sm:$0xff] %v9818
  %10218 = vst [vmem:[%s4 + $0x5d8] sm:$0xff] %v9819
  %10219 = vst [vmem:[%s4 + $0x5e0] sm:$0xff] %v9820
  %10220 = vst [vmem:[%s4 + $0x5e8] sm:$0xff] %v9821
  %10221 = vst [vmem:[%s4 + $0x5f0] sm:$0xff] %v9822
  %10222 = vst [vmem:[%s4 + $0x5f8] sm:$0xff] %v9823
  %10223 = vst [vmem:[%s4 + $0x600] sm:$0xff] %v9824
  %10224 = vst [vmem:[%s4 + $0x608] sm:$0xff] %v9825
  %10225 = vst [vmem:[%s4 + $0x610] sm:$0xff] %v9826
  %10226 = vst [vmem:[%s4 + $0x618] sm:$0xff] %v9827
  %10227 = vst [vmem:[%s4 + $0x620] sm:$0xff] %v9828
  %10228 = vst [vmem:[%s4 + $0x628] sm:$0xff] %v9829
  %10229 = vst [vmem:[%s4 + $0x630] sm:$0xff] %v9830
  %10230 = vst.msk [vmem:[%s4 + $0x638] sm:$0xff] %vm234, %v9637
  // Predicated region
  $region18: #{kernel_generated_0_forward.1} parent=0 // pred_check
    _
  $region19: #{kernel_generated_0_forward.1} parent=0 // pred_check_branch
    %10232 = sbr.rel (0) target = $region21
  $region20: #{kernel_generated_0_forward.1} parent=0 // pred_region
    _
  $region21: #{kernel_generated_0_forward.1} parent=0 // pred_fallthru
    _
  // Predicated region
  $region22: #{kernel_generated_0_forward.1} parent=0 // pred_check
    _
  $region23: #{kernel_generated_0_forward.1} parent=0 // pred_check_branch
    %10234 = sbr.rel (0) target = $region25
  $region24: #{kernel_generated_0_forward.1} parent=0 // pred_region
    _
  $region25: #{kernel_generated_0_forward.1} parent=0 // pred_fallthru
    _

</llo_original>
